<compile_context>
chip_gen: v7x
topology: tpu7x:2x2x1
jax: 0.10.0
libtpu: 0.0.40
codegen_flags: <defaults>
</compile_context>

<pallas_src>
import functools

import jax
import jax.numpy as jnp
from jax.experimental import pallas as pl
from jax.experimental.pallas import tpu as pltpu

VMEM_LIMIT = 32 * 1024 * 1024  # explicit scoped-VMEM budget; tiles below are far under it


def _pick_tm(m, cap=512):
    """Largest divisor of m <= cap, preferring multiples of 8, with >=2 grid steps."""
    cap = max(1, min(cap, m))
    if m >= 2:
        cap = min(cap, max(1, m // 2))  # >=2 grid steps keeps both v7x TensorCores busy
    fallback = 1
    for t in range(cap, 0, -1):
        if m % t == 0:
            if t % 8 == 0:
                return t
            if fallback == 1:
                fallback = t
    return fallback


# ---------------------------------------------------------------------------
# Pallas kernels
# ---------------------------------------------------------------------------
def _mm_bias_act_kernel(a_ref, w_ref, b_ref, alpha_ref, o_ref, *, act):
    """(tile of A)[bf16] @ W[bf16] -> f32 acc, + bias, + activation, -> o_ref dtype."""
    y = jnp.dot(a_ref[...], w_ref[...], preferred_element_type=jnp.float32)
    y = y + b_ref[...]                       # (1, N) f32 broadcast over rows
    alpha = alpha_ref[0]                     # learned PReLU slope / leaky slope / ELU alpha
    if act in ("leaky", "prelu"):
        y = jnp.where(y > 0, y, alpha * y)
    elif act == "elu":
        y = jnp.where(y > 0, y, alpha * (jnp.exp(jnp.minimum(y, 0.0)) - 1.0))
    o_ref[...] = y.astype(o_ref.dtype)


def _maxpool_kernel(x_ref, o_ref):
    """x_ref: (tr, 2, Wo, 2*C) -> 2x2 max -> o_ref: (tr, Wo, C).

    dim 1 holds the two pooled image rows; the last dim interleaves the two pooled
    columns as [w-even channels | w-odd channels]."""
    c = o_ref.shape[-1]
    v = jnp.maximum(x_ref[:, 0, :, :], x_ref[:, 1, :, :])   # vertical max, (tr, Wo, 2C)
    o_ref[...] = jnp.maximum(v[:, :, :c], v[:, :, c:])      # horizontal max


def _fc_fused_kernel(x_ref, w1_ref, b1_ref, w2_ref, b2_ref, o_ref):
    """fc1 (+bias +LeakyReLU(0.01)) and fc2 (+bias) fused in one kernel."""
    h = jnp.dot(x_ref[...], w1_ref[...], preferred_element_type=jnp.float32)
    h = h + b1_ref[...]
    h = jnp.where(h > 0, h, 0.01 * h)
    y = jnp.dot(h.astype(w2_ref.dtype), w2_ref[...], preferred_element_type=jnp.float32)
    o_ref[...] = y + b2_ref[...]


# ---------------------------------------------------------------------------
# Wrappers around pallas_call
# ---------------------------------------------------------------------------
def matmul_bias_act(a, w, b, alpha, act, out_dtype):
    """a: (M, K) bf16, w: (K, N) bf16, b: (1, N) f32, alpha: (1,) f32 -> (M, N)."""
    m, k = a.shape
    _, n = w.shape
    tm = _pick_tm(m, cap=512)
    kernel = functools.partial(_mm_bias_act_kernel, act=act)
    return pl.pallas_call(
        kernel,
        out_shape=jax.ShapeDtypeStruct((m, n), out_dtype),
        grid=(m // tm,),
        in_specs=[
            pl.BlockSpec((tm, k), lambda i: (i, 0)),
            pl.BlockSpec((k, n), lambda i: (0, 0)),      # weight resident across tiles
            pl.BlockSpec((1, n), lambda i: (0, 0)),      # bias resident
            pl.BlockSpec(memory_space=pltpu.MemorySpace.SMEM),  # activation slope scalar
        ],
        out_specs=pl.BlockSpec((tm, n), lambda i: (i, 0)),
        compiler_params=pltpu.CompilerParams(
            dimension_semantics=("parallel",),
            vmem_limit_bytes=VMEM_LIMIT),
    )(a, w, b, alpha)


def maxpool2x2(x):
    """x: NHWC (B, H, W, C) -> (B, H//2, W//2, C), 2x2 max pool, stride 2."""
    b, h, w, c = x.shape
    ho, wo = h // 2, w // 2
    # Free row-major reshape (no transpose): (B*Ho, 2, Wo, 2*C); last dim packs the two
    # pooled columns as [C channels of even w | C channels of odd w].
    xr = x.reshape(b * ho, 2, wo, 2 * c)
    m = b * ho
    tr = _pick_tm(m, cap=256)
    out = pl.pallas_call(
        _maxpool_kernel,
        out_shape=jax.ShapeDtypeStruct((m, wo, c), x.dtype),
        grid=(m // tr,),
        in_specs=[pl.BlockSpec((tr, 2, wo, 2 * c), lambda i: (i, 0, 0, 0))],
        out_specs=pl.BlockSpec((tr, wo, c), lambda i: (i, 0, 0)),
        compiler_params=pltpu.CompilerParams(
            dimension_semantics=("parallel",),
            vmem_limit_bytes=VMEM_LIMIT),
    )(xr)
    return out.reshape(b, ho, wo, c)


def _im2col_3x3_pad1(x, k_total):
    """x: NHWC (B, H, W, C) bf16 -> (B, H, W, k_total), patch order (ky, kx, cin)."""
    b, h, w, c = x.shape
    xp = jnp.pad(x, ((0, 0), (1, 1), (1, 1), (0, 0)))
    cols = [xp[:, ky:ky + h, kx:kx + w, :] for ky in range(3) for kx in range(3)]
    p = jnp.concatenate(cols, axis=-1)
    if k_total > 9 * c:                      # zero-pad K (conv1: 27 -> 32)
        p = jnp.pad(p, ((0, 0), (0, 0), (0, 0), (0, k_total - 9 * c)))
    return p


def conv3x3_bias_act(x, w_kn, b, alpha, act):
    """3x3 conv, padding=1, stride=1 via bf16 im2col + fused Pallas matmul+bias+act."""
    bsz, h, w, _ = x.shape
    k, cout = w_kn.shape
    # TODO(synk): fold im2col (and the following 2x2 pool) into the conv kernel via 9
    # in-kernel taps over a halo'd NHWC tile to drop the 9x patch materialization at
    # larger batch sizes; at batch=2 the bf16 patch stream is already small.
    patches = _im2col_3x3_pad1(x, k).reshape(bsz * h * w, k)
    out = matmul_bias_act(patches, w_kn, b, alpha, act, out_dtype=jnp.bfloat16)
    return out.reshape(bsz, h, w, cout)


def fc_fused(x, w1, b1, w2, b2):
    """x: (B, 4096) bf16; w1: (4096, 512) bf16; w2: (512, 128) bf16 -> (B, 128) f32."""
    bsz, k = x.shape
    n1 = w1.shape[1]
    n2 = w2.shape[1]
    return pl.pallas_call(
        _fc_fused_kernel,
        out_shape=jax.ShapeDtypeStruct((bsz, n2), jnp.float32),
        grid=(1,),
        in_specs=[
            pl.BlockSpec((bsz, k), lambda i: (0, 0)),
            pl.BlockSpec((k, n1), lambda i: (0, 0)),
            pl.BlockSpec((1, n1), lambda i: (0, 0)),
            pl.BlockSpec((n1, n2), lambda i: (0, 0)),
            pl.BlockSpec((1, n2), lambda i: (0, 0)),
        ],
        out_specs=pl.BlockSpec((bsz, n2), lambda i: (0, 0)),
        compiler_params=pltpu.CompilerParams(
            dimension_semantics=("arbitrary",),
            vmem_limit_bytes=VMEM_LIMIT),
    )(x, w1, b1, w2, b2)


# ---------------------------------------------------------------------------
# Parameters: PyTorch-shaped init + one-time packing into kernel-ready layout
# ---------------------------------------------------------------------------
def init_params(key):
    """PyTorch-shaped parameters (OIHW convs, (out,in) linears, PReLU weight)."""
    ks = jax.random.split(key, 10)

    def u(k, shape, fan_in):
        bound = 1.0 / jnp.sqrt(fan_in)
        return jax.random.uniform(k, shape, jnp.float32, -bound, bound)

    return {
        "conv1_w": u(ks[0], (64, 3, 3, 3), 3 * 9),
        "conv1_b": u(ks[1], (64,), 3 * 9),
        "conv2_w": u(ks[2], (128, 64, 3, 3), 64 * 9),
        "conv2_b": u(ks[3], (128,), 64 * 9),
        "conv3_w": u(ks[4], (256, 128, 3, 3), 128 * 9),
        "conv3_b": u(ks[5], (256,), 128 * 9),
        "fc1_w": u(ks[6], (512, 256 * 4 * 4), 256 * 4 * 4),   # PyTorch (out, in)
        "fc1_b": u(ks[7], (512,), 256 * 4 * 4),
        "fc2_w": u(ks[8], (10, 512), 512),
        "fc2_b": u(ks[9], (10,), 512),
        "prelu_w": jnp.full((1,), 0.25, jnp.float32),          # nn.PReLU() default
    }


def _pack_conv_w(w_oihw, k_pad=None):
    cout, cin = w_oihw.shape[0], w_oihw.shape[1]
    # (Cout, Cin, 3, 3) -> (ky, kx, cin) rows x Cout cols, matching im2col patch order.
    w = jnp.transpose(w_oihw, (2, 3, 1, 0)).reshape(9 * cin, cout)
    if k_pad is not None and k_pad > 9 * cin:
        w = jnp.pad(w, ((0, k_pad - 9 * cin), (0, 0)))
    return w.astype(jnp.bfloat16)


def pack_params(p):
    """One-time re-layout into matmul-ready form (runs at init, NOT per forward)."""
    # fc1: fold PyTorch's (C,H,W) flatten into the row order so the NHWC flatten in the
    # forward needs no transpose: rows ordered (h, w, c).
    fc1 = p["fc1_w"].reshape(512, 256, 4, 4)                       # (out, c, h, w)
    fc1 = jnp.transpose(fc1, (2, 3, 1, 0)).reshape(4 * 4 * 256, 512)
    # fc2: transpose and zero-pad N from 10 to 128 for lane-dense stores.
    fc2 = jnp.pad(p["fc2_w"].T, ((0, 0), (0, 128 - 10)))
    fc2_b = jnp.pad(p["fc2_b"], (0, 128 - 10))
    return {
        "conv1_w": _pack_conv_w(p["conv1_w"], k_pad=32),           # K 27 -> 32
        "conv1_b": p["conv1_b"].reshape(1, -1),
        "conv2_w": _pack_conv_w(p["conv2_w"]),
        "conv2_b": p["conv2_b"].reshape(1, -1),
        "conv3_w": _pack_conv_w(p["conv3_w"]),
        "conv3_b": p["conv3_b"].reshape(1, -1),
        "fc1_w": fc1.astype(jnp.bfloat16),
        "fc1_b": p["fc1_b"].reshape(1, -1),
        "fc2_w": fc2.astype(jnp.bfloat16),
        "fc2_b": fc2_b.reshape(1, -1),
        "prelu_w": p["prelu_w"].reshape(1).astype(jnp.float32),    # learned PReLU slope
        "leaky_alpha": jnp.full((1,), 0.01, jnp.float32),
        "elu_alpha": jnp.full((1,), 1.0, jnp.float32),
    }


# ---------------------------------------------------------------------------
# Forward pass
# ---------------------------------------------------------------------------
@jax.jit
def cifar10net_forward(x_nchw, p):
    # NCHW (PyTorch) -> NHWC (kernel layout); bf16 MXU operands, f32 accumulation.
    x = jnp.transpose(x_nchw, (0, 2, 3, 1)).astype(jnp.bfloat16)

    x = conv3x3_bias_act(x, p["conv1_w"], p["conv1_b"], p["leaky_alpha"], "leaky")
    x = maxpool2x2(x)                                  # (B, 16, 16, 64)
    x = conv3x3_bias_act(x, p["conv2_w"], p["conv2_b"], p["prelu_w"], "prelu")
    x = maxpool2x2(x)                                  # (B, 8, 8, 128)
    x = conv3x3_bias_act(x, p["conv3_w"], p["conv3_b"], p["elu_alpha"], "elu")
    x = maxpool2x2(x)                                  # (B, 4, 4, 256)

    bsz = x.shape[0]
    flat = x.reshape(bsz, 4 * 4 * 256)   # NHWC flatten; fc1 rows were pre-permuted to match
    logits = fc_fused(flat, p["fc1_w"], p["fc1_b"], p["fc2_w"], p["fc2_b"])
    return logits[:, :10]                # drop the zero-padded logit columns


if __name__ == "__main__":
    key = jax.random.PRNGKey(0)
    k_x, k_p = jax.random.split(key)
    # fc1 hard-codes 256*4*4, so spatial must be 32x32 (CIFAR-10); batch=2.
    x = jax.random.normal(k_x, (2, 3, 32, 32), dtype=jnp.float32)
    params = pack_params(init_params(k_p))

    out = cifar10net_forward(x, params)
    jax.block_until_ready(out)
    assert out.shape == (2, 10) and out.dtype == jnp.float32
    print("KERNEL_OK")
</pallas_src>

<mosaic_0001>
module attributes {stable_mosaic.version = 11 : i64} {
  func.func @_mm_bias_act_kernel(%arg0: i32, %arg1: memref<512x32xbf16, #tpu.memory_space<vmem>>, %arg2: memref<32x64xbf16, #tpu.memory_space<vmem>>, %arg3: memref<1x64xf32, #tpu.memory_space<vmem>>, %arg4: memref<1xf32, #tpu.memory_space<smem>>, %arg5: memref<512x64xbf16, #tpu.memory_space<vmem>>) attributes {dimension_semantics = [#tpu.dimension_semantics<parallel>], iteration_bounds = array<i64: 4>, scalar_prefetch = 0 : i64, scratch_operands = 0 : i64, tpu.core_type = #tpu.core_type<tc>, window_params = [{transform_indices = @transform_0, window_bounds = array<i64: 512, 32>}, {pipeline_mode = #tpu.pipeline_mode<synchronous>, transform_indices = @transform_1, window_bounds = array<i64: 32, 64>}, {pipeline_mode = #tpu.pipeline_mode<synchronous>, transform_indices = @transform_2, window_bounds = array<i64: 1, 64>}, {transform_indices = @transform_3, window_bounds = array<i64: 1>}, {transform_indices = @transform_4, window_bounds = array<i64: 512, 64>}]} {
    %c0 = arith.constant 0 : index
    %c0_0 = arith.constant 0 : index
    %0 = vector.load %arg1[%c0, %c0_0] : memref<512x32xbf16, #tpu.memory_space<vmem>>, vector<512x32xbf16>
    %c0_1 = arith.constant 0 : index
    %c0_2 = arith.constant 0 : index
    %1 = vector.load %arg2[%c0_1, %c0_2] : memref<32x64xbf16, #tpu.memory_space<vmem>>, vector<32x64xbf16>
    %cst = arith.constant dense<0.000000e+00> : vector<512x64xf32>
    %2 = tpu.matmul %0, %1, %cst {dimension_numbers = #tpu.dot_dimension_numbers<[1], [0], [0], [1], [0, 0, 1, 1], [], []>} : vector<512x32xbf16>, vector<32x64xbf16>, vector<512x64xf32> -> vector<512x64xf32>
    %c0_3 = arith.constant 0 : index
    %c0_4 = arith.constant 0 : index
    %3 = vector.load %arg3[%c0_3, %c0_4] : memref<1x64xf32, #tpu.memory_space<vmem>>, vector<1x64xf32>
    %4 = vector.broadcast %3 : vector<1x64xf32> to vector<512x64xf32>
    %5 = arith.addf %2, %4 : vector<512x64xf32>
    %c0_5 = arith.constant 0 : index
    %6 = memref.load %arg4[%c0_5] : memref<1xf32, #tpu.memory_space<smem>>
    %cst_6 = arith.constant 0.000000e+00 : f32
    %7 = vector.broadcast %cst_6 : f32 to vector<512x64xf32>
    %8 = arith.cmpf ogt, %5, %7 : vector<512x64xf32>
    %9 = vector.broadcast %6 : f32 to vector<512x64xf32>
    %10 = arith.mulf %9, %5 : vector<512x64xf32>
    %11 = arith.select %8, %5, %10 : vector<512x64xi1>, vector<512x64xf32>
    %12 = arith.truncf %11 : vector<512x64xf32> to vector<512x64xbf16>
    %c0_7 = arith.constant 0 : index
    %c0_8 = arith.constant 0 : index
    %13 = vector.load %arg5[%c0_7, %c0_8] : memref<512x64xbf16, #tpu.memory_space<vmem>>, vector<512x64xbf16>
    tpu.vector_store %arg5[%c0_7, %c0_8], %12 {strides = array<i32>} : memref<512x64xbf16, #tpu.memory_space<vmem>>, vector<512x64xbf16>,
    return
  }
  func.func @transform_0(%arg0: i32) -> (i32, i32) {
    %c0_i32 = arith.constant 0 : i32
    %c0_i32_0 = arith.constant 0 : i32
    return %arg0, %c0_i32 : i32, i32
  }
  func.func @transform_1(%arg0: i32) -> (i32, i32) {
    %c0_i32 = arith.constant 0 : i32
    %c0_i32_0 = arith.constant 0 : i32
    %c0_i32_1 = arith.constant 0 : i32
    return %c0_i32, %c0_i32_0 : i32, i32
  }
  func.func @transform_2(%arg0: i32) -> (i32, i32) {
    %c0_i32 = arith.constant 0 : i32
    %c0_i32_0 = arith.constant 0 : i32
    %c0_i32_1 = arith.constant 0 : i32
    return %c0_i32, %c0_i32_0 : i32, i32
  }
  func.func @transform_3(%arg0: i32) -> i32 {
    %c0_i32 = arith.constant 0 : i32
    %c0_i32_0 = arith.constant 0 : i32
    return %c0_i32 : i32
  }
  func.func @transform_4(%arg0: i32) -> (i32, i32) {
    %c0_i32 = arith.constant 0 : i32
    %c0_i32_0 = arith.constant 0 : i32
    return %arg0, %c0_i32 : i32, i32
  }
}

module attributes {stable_mosaic.version = 11 : i64} {
  func.func @_maxpool_kernel(%arg0: i32, %arg1: memref<16x2x16x128xbf16, #tpu.memory_space<vmem>>, %arg2: memref<16x16x64xbf16, #tpu.memory_space<vmem>>) attributes {dimension_semantics = [#tpu.dimension_semantics<parallel>], iteration_bounds = array<i64: 2>, scalar_prefetch = 0 : i64, scratch_operands = 0 : i64, tpu.core_type = #tpu.core_type<tc>, window_params = [{transform_indices = @transform_0, window_bounds = array<i64: 16, 2, 16, 128>}, {transform_indices = @transform_1, window_bounds = array<i64: 16, 16, 64>}]} {
    %c0 = arith.constant 0 : index
    %c0_0 = arith.constant 0 : index
    %c0_1 = arith.constant 0 : index
    %c0_2 = arith.constant 0 : index
    %0 = vector.load %arg1[%c0, %c0_0, %c0_1, %c0_2] : memref<16x2x16x128xbf16, #tpu.memory_space<vmem>>, vector<16x1x16x128xbf16>
    %1 = vector.shape_cast %0 : vector<16x1x16x128xbf16> to vector<16x16x128xbf16>
    %c0_3 = arith.constant 0 : index
    %c1 = arith.constant 1 : index
    %c0_4 = arith.constant 0 : index
    %c0_5 = arith.constant 0 : index
    %2 = vector.load %arg1[%c0_3, %c1, %c0_4, %c0_5] : memref<16x2x16x128xbf16, #tpu.memory_space<vmem>>, vector<16x1x16x128xbf16>
    %3 = vector.shape_cast %2 : vector<16x1x16x128xbf16> to vector<16x16x128xbf16>
    %4 = arith.maximumf %1, %3 : vector<16x16x128xbf16>
    %5 = vector.extract_strided_slice %4 {offsets = [0, 0, 0], sizes = [16, 16, 64], strides = [1, 1, 1]} : vector<16x16x128xbf16> to vector<16x16x64xbf16>
    %6 = vector.extract_strided_slice %4 {offsets = [0, 0, 64], sizes = [16, 16, 64], strides = [1, 1, 1]} : vector<16x16x128xbf16> to vector<16x16x64xbf16>
    %7 = arith.maximumf %5, %6 : vector<16x16x64xbf16>
    %c0_6 = arith.constant 0 : index
    %c0_7 = arith.constant 0 : index
    %c0_8 = arith.constant 0 : index
    %8 = vector.load %arg2[%c0_6, %c0_7, %c0_8] : memref<16x16x64xbf16, #tpu.memory_space<vmem>>, vector<16x16x64xbf16>
    tpu.vector_store %arg2[%c0_6, %c0_7, %c0_8], %7 {strides = array<i32>} : memref<16x16x64xbf16, #tpu.memory_space<vmem>>, vector<16x16x64xbf16>,
    return
  }
  func.func @transform_0(%arg0: i32) -> (i32, i32, i32, i32) {
    %c0_i32 = arith.constant 0 : i32
    %c0_i32_0 = arith.constant 0 : i32
    %c0_i32_1 = arith.constant 0 : i32
    %c0_i32_2 = arith.constant 0 : i32
    return %arg0, %c0_i32, %c0_i32_0, %c0_i32_1 : i32, i32, i32, i32
  }
  func.func @transform_1(%arg0: i32) -> (i32, i32, i32) {
    %c0_i32 = arith.constant 0 : i32
    %c0_i32_0 = arith.constant 0 : i32
    %c0_i32_1 = arith.constant 0 : i32
    return %arg0, %c0_i32, %c0_i32_0 : i32, i32, i32
  }
}

module attributes {stable_mosaic.version = 11 : i64} {
  func.func @_mm_bias_act_kernel(%arg0: i32, %arg1: memref<256x576xbf16, #tpu.memory_space<vmem>>, %arg2: memref<576x128xbf16, #tpu.memory_space<vmem>>, %arg3: memref<1x128xf32, #tpu.memory_space<vmem>>, %arg4: memref<1xf32, #tpu.memory_space<smem>>, %arg5: memref<256x128xbf16, #tpu.memory_space<vmem>>) attributes {dimension_semantics = [#tpu.dimension_semantics<parallel>], iteration_bounds = array<i64: 2>, scalar_prefetch = 0 : i64, scratch_operands = 0 : i64, tpu.core_type = #tpu.core_type<tc>, window_params = [{transform_indices = @transform_0, window_bounds = array<i64: 256, 576>}, {pipeline_mode = #tpu.pipeline_mode<synchronous>, transform_indices = @transform_1, window_bounds = array<i64: 576, 128>}, {pipeline_mode = #tpu.pipeline_mode<synchronous>, transform_indices = @transform_2, window_bounds = array<i64: 1, 128>}, {transform_indices = @transform_3, window_bounds = array<i64: 1>}, {transform_indices = @transform_4, window_bounds = array<i64: 256, 128>}]} {
    %c0 = arith.constant 0 : index
    %c0_0 = arith.constant 0 : index
    %0 = vector.load %arg1[%c0, %c0_0] : memref<256x576xbf16, #tpu.memory_space<vmem>>, vector<256x576xbf16>
    %c0_1 = arith.constant 0 : index
    %c0_2 = arith.constant 0 : index
    %1 = vector.load %arg2[%c0_1, %c0_2] : memref<576x128xbf16, #tpu.memory_space<vmem>>, vector<576x128xbf16>
    %cst = arith.constant dense<0.000000e+00> : vector<256x128xf32>
    %2 = tpu.matmul %0, %1, %cst {dimension_numbers = #tpu.dot_dimension_numbers<[1], [0], [0], [1], [0, 0, 1, 1], [], []>} : vector<256x576xbf16>, vector<576x128xbf16>, vector<256x128xf32> -> vector<256x128xf32>
    %c0_3 = arith.constant 0 : index
    %c0_4 = arith.constant 0 : index
    %3 = vector.load %arg3[%c0_3, %c0_4] : memref<1x128xf32, #tpu.memory_space<vmem>>, vector<1x128xf32>
    %4 = vector.broadcast %3 : vector<1x128xf32> to vector<256x128xf32>
    %5 = arith.addf %2, %4 : vector<256x128xf32>
    %c0_5 = arith.constant 0 : index
    %6 = memref.load %arg4[%c0_5] : memref<1xf32, #tpu.memory_space<smem>>
    %cst_6 = arith.constant 0.000000e+00 : f32
    %7 = vector.broadcast %cst_6 : f32 to vector<256x128xf32>
    %8 = arith.cmpf ogt, %5, %7 : vector<256x128xf32>
    %9 = vector.broadcast %6 : f32 to vector<256x128xf32>
    %10 = arith.mulf %9, %5 : vector<256x128xf32>
    %11 = arith.select %8, %5, %10 : vector<256x128xi1>, vector<256x128xf32>
    %12 = arith.truncf %11 : vector<256x128xf32> to vector<256x128xbf16>
    %c0_7 = arith.constant 0 : index
    %c0_8 = arith.constant 0 : index
    %13 = vector.load %arg5[%c0_7, %c0_8] : memref<256x128xbf16, #tpu.memory_space<vmem>>, vector<256x128xbf16>
    tpu.vector_store %arg5[%c0_7, %c0_8], %12 {strides = array<i32>} : memref<256x128xbf16, #tpu.memory_space<vmem>>, vector<256x128xbf16>,
    return
  }
  func.func @transform_0(%arg0: i32) -> (i32, i32) {
    %c0_i32 = arith.constant 0 : i32
    %c0_i32_0 = arith.constant 0 : i32
    return %arg0, %c0_i32 : i32, i32
  }
  func.func @transform_1(%arg0: i32) -> (i32, i32) {
    %c0_i32 = arith.constant 0 : i32
    %c0_i32_0 = arith.constant 0 : i32
    %c0_i32_1 = arith.constant 0 : i32
    return %c0_i32, %c0_i32_0 : i32, i32
  }
  func.func @transform_2(%arg0: i32) -> (i32, i32) {
    %c0_i32 = arith.constant 0 : i32
    %c0_i32_0 = arith.constant 0 : i32
    %c0_i32_1 = arith.constant 0 : i32
    return %c0_i32, %c0_i32_0 : i32, i32
  }
  func.func @transform_3(%arg0: i32) -> i32 {
    %c0_i32 = arith.constant 0 : i32
    %c0_i32_0 = arith.constant 0 : i32
    return %c0_i32 : i32
  }
  func.func @transform_4(%arg0: i32) -> (i32, i32) {
    %c0_i32 = arith.constant 0 : i32
    %c0_i32_0 = arith.constant 0 : i32
    return %arg0, %c0_i32 : i32, i32
  }
}

module attributes {stable_mosaic.version = 11 : i64} {
  func.func @_maxpool_kernel(%arg0: i32, %arg1: memref<8x2x8x256xbf16, #tpu.memory_space<vmem>>, %arg2: memref<8x8x128xbf16, #tpu.memory_space<vmem>>) attributes {dimension_semantics = [#tpu.dimension_semantics<parallel>], iteration_bounds = array<i64: 2>, scalar_prefetch = 0 : i64, scratch_operands = 0 : i64, tpu.core_type = #tpu.core_type<tc>, window_params = [{transform_indices = @transform_0, window_bounds = array<i64: 8, 2, 8, 256>}, {transform_indices = @transform_1, window_bounds = array<i64: 8, 8, 128>}]} {
    %c0 = arith.constant 0 : index
    %c0_0 = arith.constant 0 : index
    %c0_1 = arith.constant 0 : index
    %c0_2 = arith.constant 0 : index
    %0 = vector.load %arg1[%c0, %c0_0, %c0_1, %c0_2] : memref<8x2x8x256xbf16, #tpu.memory_space<vmem>>, vector<8x1x8x256xbf16>
    %1 = vector.shape_cast %0 : vector<8x1x8x256xbf16> to vector<8x8x256xbf16>
    %c0_3 = arith.constant 0 : index
    %c1 = arith.constant 1 : index
    %c0_4 = arith.constant 0 : index
    %c0_5 = arith.constant 0 : index
    %2 = vector.load %arg1[%c0_3, %c1, %c0_4, %c0_5] : memref<8x2x8x256xbf16, #tpu.memory_space<vmem>>, vector<8x1x8x256xbf16>
    %3 = vector.shape_cast %2 : vector<8x1x8x256xbf16> to vector<8x8x256xbf16>
    %4 = arith.maximumf %1, %3 : vector<8x8x256xbf16>
    %5 = vector.extract_strided_slice %4 {offsets = [0, 0, 0], sizes = [8, 8, 128], strides = [1, 1, 1]} : vector<8x8x256xbf16> to vector<8x8x128xbf16>
    %6 = vector.extract_strided_slice %4 {offsets = [0, 0, 128], sizes = [8, 8, 128], strides = [1, 1, 1]} : vector<8x8x256xbf16> to vector<8x8x128xbf16>
    %7 = arith.maximumf %5, %6 : vector<8x8x128xbf16>
    %c0_6 = arith.constant 0 : index
    %c0_7 = arith.constant 0 : index
    %c0_8 = arith.constant 0 : index
    %8 = vector.load %arg2[%c0_6, %c0_7, %c0_8] : memref<8x8x128xbf16, #tpu.memory_space<vmem>>, vector<8x8x128xbf16>
    tpu.vector_store %arg2[%c0_6, %c0_7, %c0_8], %7 {strides = array<i32>} : memref<8x8x128xbf16, #tpu.memory_space<vmem>>, vector<8x8x128xbf16>,
    return
  }
  func.func @transform_0(%arg0: i32) -> (i32, i32, i32, i32) {
    %c0_i32 = arith.constant 0 : i32
    %c0_i32_0 = arith.constant 0 : i32
    %c0_i32_1 = arith.constant 0 : i32
    %c0_i32_2 = arith.constant 0 : i32
    return %arg0, %c0_i32, %c0_i32_0, %c0_i32_1 : i32, i32, i32, i32
  }
  func.func @transform_1(%arg0: i32) -> (i32, i32, i32) {
    %c0_i32 = arith.constant 0 : i32
    %c0_i32_0 = arith.constant 0 : i32
    %c0_i32_1 = arith.constant 0 : i32
    return %arg0, %c0_i32, %c0_i32_0 : i32, i32, i32
  }
}

module attributes {stable_mosaic.version = 11 : i64} {
  func.func @_mm_bias_act_kernel(%arg0: i32, %arg1: memref<64x1152xbf16, #tpu.memory_space<vmem>>, %arg2: memref<1152x256xbf16, #tpu.memory_space<vmem>>, %arg3: memref<1x256xf32, #tpu.memory_space<vmem>>, %arg4: memref<1xf32, #tpu.memory_space<smem>>, %arg5: memref<64x256xbf16, #tpu.memory_space<vmem>>) attributes {dimension_semantics = [#tpu.dimension_semantics<parallel>], iteration_bounds = array<i64: 2>, scalar_prefetch = 0 : i64, scratch_operands = 0 : i64, tpu.core_type = #tpu.core_type<tc>, window_params = [{transform_indices = @transform_0, window_bounds = array<i64: 64, 1152>}, {pipeline_mode = #tpu.pipeline_mode<synchronous>, transform_indices = @transform_1, window_bounds = array<i64: 1152, 256>}, {pipeline_mode = #tpu.pipeline_mode<synchronous>, transform_indices = @transform_2, window_bounds = array<i64: 1, 256>}, {transform_indices = @transform_3, window_bounds = array<i64: 1>}, {transform_indices = @transform_4, window_bounds = array<i64: 64, 256>}]} {
    %c0 = arith.constant 0 : index
    %c0_0 = arith.constant 0 : index
    %0 = vector.load %arg1[%c0, %c0_0] : memref<64x1152xbf16, #tpu.memory_space<vmem>>, vector<64x1152xbf16>
    %c0_1 = arith.constant 0 : index
    %c0_2 = arith.constant 0 : index
    %1 = vector.load %arg2[%c0_1, %c0_2] : memref<1152x256xbf16, #tpu.memory_space<vmem>>, vector<1152x256xbf16>
    %cst = arith.constant dense<0.000000e+00> : vector<64x256xf32>
    %2 = tpu.matmul %0, %1, %cst {dimension_numbers = #tpu.dot_dimension_numbers<[1], [0], [0], [1], [0, 0, 1, 1], [], []>} : vector<64x1152xbf16>, vector<1152x256xbf16>, vector<64x256xf32> -> vector<64x256xf32>
    %c0_3 = arith.constant 0 : index
    %c0_4 = arith.constant 0 : index
    %3 = vector.load %arg3[%c0_3, %c0_4] : memref<1x256xf32, #tpu.memory_space<vmem>>, vector<1x256xf32>
    %4 = vector.broadcast %3 : vector<1x256xf32> to vector<64x256xf32>
    %5 = arith.addf %2, %4 : vector<64x256xf32>
    %c0_5 = arith.constant 0 : index
    %6 = memref.load %arg4[%c0_5] : memref<1xf32, #tpu.memory_space<smem>>
    %cst_6 = arith.constant 0.000000e+00 : f32
    %7 = vector.broadcast %cst_6 : f32 to vector<64x256xf32>
    %8 = arith.cmpf ogt, %5, %7 : vector<64x256xf32>
    %cst_7 = arith.constant 0.000000e+00 : f32
    %9 = vector.broadcast %cst_7 : f32 to vector<64x256xf32>
    %10 = arith.minimumf %5, %9 : vector<64x256xf32>
    %11 = math.exp %10 : vector<64x256xf32>
    %cst_8 = arith.constant 1.000000e+00 : f32
    %12 = vector.broadcast %cst_8 : f32 to vector<64x256xf32>
    %13 = arith.subf %11, %12 : vector<64x256xf32>
    %14 = vector.broadcast %6 : f32 to vector<64x256xf32>
    %15 = arith.mulf %14, %13 : vector<64x256xf32>
    %16 = arith.select %8, %5, %15 : vector<64x256xi1>, vector<64x256xf32>
    %17 = arith.truncf %16 : vector<64x256xf32> to vector<64x256xbf16>
    %c0_9 = arith.constant 0 : index
    %c0_10 = arith.constant 0 : index
    %18 = vector.load %arg5[%c0_9, %c0_10] : memref<64x256xbf16, #tpu.memory_space<vmem>>, vector<64x256xbf16>
    tpu.vector_store %arg5[%c0_9, %c0_10], %17 {strides = array<i32>} : memref<64x256xbf16, #tpu.memory_space<vmem>>, vector<64x256xbf16>,
    return
  }
  func.func @transform_0(%arg0: i32) -> (i32, i32) {
    %c0_i32 = arith.constant 0 : i32
    %c0_i32_0 = arith.constant 0 : i32
    return %arg0, %c0_i32 : i32, i32
  }
  func.func @transform_1(%arg0: i32) -> (i32, i32) {
    %c0_i32 = arith.constant 0 : i32
    %c0_i32_0 = arith.constant 0 : i32
    %c0_i32_1 = arith.constant 0 : i32
    return %c0_i32, %c0_i32_0 : i32, i32
  }
  func.func @transform_2(%arg0: i32) -> (i32, i32) {
    %c0_i32 = arith.constant 0 : i32
    %c0_i32_0 = arith.constant 0 : i32
    %c0_i32_1 = arith.constant 0 : i32
    return %c0_i32, %c0_i32_0 : i32, i32
  }
  func.func @transform_3(%arg0: i32) -> i32 {
    %c0_i32 = arith.constant 0 : i32
    %c0_i32_0 = arith.constant 0 : i32
    return %c0_i32 : i32
  }
  func.func @transform_4(%arg0: i32) -> (i32, i32) {
    %c0_i32 = arith.constant 0 : i32
    %c0_i32_0 = arith.constant 0 : i32
    return %arg0, %c0_i32 : i32, i32
  }
}

module attributes {stable_mosaic.version = 11 : i64} {
  func.func @_maxpool_kernel(%arg0: i32, %arg1: memref<4x2x4x512xbf16, #tpu.memory_space<vmem>>, %arg2: memref<4x4x256xbf16, #tpu.memory_space<vmem>>) attributes {dimension_semantics = [#tpu.dimension_semantics<parallel>], iteration_bounds = array<i64: 2>, scalar_prefetch = 0 : i64, scratch_operands = 0 : i64, tpu.core_type = #tpu.core_type<tc>, window_params = [{transform_indices = @transform_0, window_bounds = array<i64: 4, 2, 4, 512>}, {transform_indices = @transform_1, window_bounds = array<i64: 4, 4, 256>}]} {
    %c0 = arith.constant 0 : index
    %c0_0 = arith.constant 0 : index
    %c0_1 = arith.constant 0 : index
    %c0_2 = arith.constant 0 : index
    %0 = vector.load %arg1[%c0, %c0_0, %c0_1, %c0_2] : memref<4x2x4x512xbf16, #tpu.memory_space<vmem>>, vector<4x1x4x512xbf16>
    %1 = vector.shape_cast %0 : vector<4x1x4x512xbf16> to vector<4x4x512xbf16>
    %c0_3 = arith.constant 0 : index
    %c1 = arith.constant 1 : index
    %c0_4 = arith.constant 0 : index
    %c0_5 = arith.constant 0 : index
    %2 = vector.load %arg1[%c0_3, %c1, %c0_4, %c0_5] : memref<4x2x4x512xbf16, #tpu.memory_space<vmem>>, vector<4x1x4x512xbf16>
    %3 = vector.shape_cast %2 : vector<4x1x4x512xbf16> to vector<4x4x512xbf16>
    %4 = arith.maximumf %1, %3 : vector<4x4x512xbf16>
    %5 = vector.extract_strided_slice %4 {offsets = [0, 0, 0], sizes = [4, 4, 256], strides = [1, 1, 1]} : vector<4x4x512xbf16> to vector<4x4x256xbf16>
    %6 = vector.extract_strided_slice %4 {offsets = [0, 0, 256], sizes = [4, 4, 256], strides = [1, 1, 1]} : vector<4x4x512xbf16> to vector<4x4x256xbf16>
    %7 = arith.maximumf %5, %6 : vector<4x4x256xbf16>
    %c0_6 = arith.constant 0 : index
    %c0_7 = arith.constant 0 : index
    %c0_8 = arith.constant 0 : index
    %8 = vector.load %arg2[%c0_6, %c0_7, %c0_8] : memref<4x4x256xbf16, #tpu.memory_space<vmem>>, vector<4x4x256xbf16>
    tpu.vector_store %arg2[%c0_6, %c0_7, %c0_8], %7 {strides = array<i32>} : memref<4x4x256xbf16, #tpu.memory_space<vmem>>, vector<4x4x256xbf16>,
    return
  }
  func.func @transform_0(%arg0: i32) -> (i32, i32, i32, i32) {
    %c0_i32 = arith.constant 0 : i32
    %c0_i32_0 = arith.constant 0 : i32
    %c0_i32_1 = arith.constant 0 : i32
    %c0_i32_2 = arith.constant 0 : i32
    return %arg0, %c0_i32, %c0_i32_0, %c0_i32_1 : i32, i32, i32, i32
  }
  func.func @transform_1(%arg0: i32) -> (i32, i32, i32) {
    %c0_i32 = arith.constant 0 : i32
    %c0_i32_0 = arith.constant 0 : i32
    %c0_i32_1 = arith.constant 0 : i32
    return %arg0, %c0_i32, %c0_i32_0 : i32, i32, i32
  }
}

module attributes {stable_mosaic.version = 11 : i64} {
  func.func @_fc_fused_kernel(%arg0: i32, %arg1: memref<2x4096xbf16, #tpu.memory_space<vmem>>, %arg2: memref<4096x512xbf16, #tpu.memory_space<vmem>>, %arg3: memref<1x512xf32, #tpu.memory_space<vmem>>, %arg4: memref<512x128xbf16, #tpu.memory_space<vmem>>, %arg5: memref<1x128xf32, #tpu.memory_space<vmem>>, %arg6: memref<2x128xf32, #tpu.memory_space<vmem>>) attributes {dimension_semantics = [#tpu.dimension_semantics<arbitrary>], iteration_bounds = array<i64: 1>, scalar_prefetch = 0 : i64, scratch_operands = 0 : i64, tpu.core_type = #tpu.core_type<tc>, window_params = [{pipeline_mode = #tpu.pipeline_mode<synchronous>, transform_indices = @transform_0, window_bounds = array<i64: 2, 4096>}, {pipeline_mode = #tpu.pipeline_mode<synchronous>, transform_indices = @transform_1, window_bounds = array<i64: 4096, 512>}, {pipeline_mode = #tpu.pipeline_mode<synchronous>, transform_indices = @transform_2, window_bounds = array<i64: 1, 512>}, {pipeline_mode = #tpu.pipeline_mode<synchronous>, transform_indices = @transform_3, window_bounds = array<i64: 512, 128>}, {pipeline_mode = #tpu.pipeline_mode<synchronous>, transform_indices = @transform_4, window_bounds = array<i64: 1, 128>}, {pipeline_mode = #tpu.pipeline_mode<synchronous>, transform_indices = @transform_5, window_bounds = array<i64: 2, 128>}]} {
    %c0 = arith.constant 0 : index
    %c0_0 = arith.constant 0 : index
    %0 = vector.load %arg1[%c0, %c0_0] : memref<2x4096xbf16, #tpu.memory_space<vmem>>, vector<2x4096xbf16>
    %c0_1 = arith.constant 0 : index
    %c0_2 = arith.constant 0 : index
    %1 = vector.load %arg2[%c0_1, %c0_2] : memref<4096x512xbf16, #tpu.memory_space<vmem>>, vector<4096x512xbf16>
    %cst = arith.constant dense<0.000000e+00> : vector<2x512xf32>
    %2 = tpu.matmul %0, %1, %cst {dimension_numbers = #tpu.dot_dimension_numbers<[1], [0], [0], [1], [0, 0, 1, 1], [], []>} : vector<2x4096xbf16>, vector<4096x512xbf16>, vector<2x512xf32> -> vector<2x512xf32>
    %c0_3 = arith.constant 0 : index
    %c0_4 = arith.constant 0 : index
    %3 = vector.load %arg3[%c0_3, %c0_4] : memref<1x512xf32, #tpu.memory_space<vmem>>, vector<1x512xf32>
    %4 = vector.broadcast %3 : vector<1x512xf32> to vector<2x512xf32>
    %5 = arith.addf %2, %4 : vector<2x512xf32>
    %cst_5 = arith.constant 0.000000e+00 : f32
    %6 = vector.broadcast %cst_5 : f32 to vector<2x512xf32>
    %7 = arith.cmpf ogt, %5, %6 : vector<2x512xf32>
    %cst_6 = arith.constant 0.00999999977 : f32
    %8 = vector.broadcast %cst_6 : f32 to vector<2x512xf32>
    %9 = arith.mulf %8, %5 : vector<2x512xf32>
    %10 = arith.select %7, %5, %9 : vector<2x512xi1>, vector<2x512xf32>
    %11 = arith.truncf %10 : vector<2x512xf32> to vector<2x512xbf16>
    %c0_7 = arith.constant 0 : index
    %c0_8 = arith.constant 0 : index
    %12 = vector.load %arg4[%c0_7, %c0_8] : memref<512x128xbf16, #tpu.memory_space<vmem>>, vector<512x128xbf16>
    %cst_9 = arith.constant dense<0.000000e+00> : vector<2x128xf32>
    %13 = tpu.matmul %11, %12, %cst_9 {dimension_numbers = #tpu.dot_dimension_numbers<[1], [0], [0], [1], [0, 0, 1, 1], [], []>} : vector<2x512xbf16>, vector<512x128xbf16>, vector<2x128xf32> -> vector<2x128xf32>
    %c0_10 = arith.constant 0 : index
    %c0_11 = arith.constant 0 : index
    %14 = vector.load %arg5[%c0_10, %c0_11] : memref<1x128xf32, #tpu.memory_space<vmem>>, vector<1x128xf32>
    %15 = vector.broadcast %14 : vector<1x128xf32> to vector<2x128xf32>
    %16 = arith.addf %13, %15 : vector<2x128xf32>
    %c0_12 = arith.constant 0 : index
    %c0_13 = arith.constant 0 : index
    %17 = vector.load %arg6[%c0_12, %c0_13] : memref<2x128xf32, #tpu.memory_space<vmem>>, vector<2x128xf32>
    tpu.vector_store %arg6[%c0_12, %c0_13], %16 {strides = array<i32>} : memref<2x128xf32, #tpu.memory_space<vmem>>, vector<2x128xf32>,
    return
  }
  func.func @transform_0(%arg0: i32) -> (i32, i32) {
    %c0_i32 = arith.constant 0 : i32
    %c0_i32_0 = arith.constant 0 : i32
    %c0_i32_1 = arith.constant 0 : i32
    return %c0_i32, %c0_i32_0 : i32, i32
  }
  func.func @transform_1(%arg0: i32) -> (i32, i32) {
    %c0_i32 = arith.constant 0 : i32
    %c0_i32_0 = arith.constant 0 : i32
    %c0_i32_1 = arith.constant 0 : i32
    return %c0_i32, %c0_i32_0 : i32, i32
  }
  func.func @transform_2(%arg0: i32) -> (i32, i32) {
    %c0_i32 = arith.constant 0 : i32
    %c0_i32_0 = arith.constant 0 : i32
    %c0_i32_1 = arith.constant 0 : i32
    return %c0_i32, %c0_i32_0 : i32, i32
  }
  func.func @transform_3(%arg0: i32) -> (i32, i32) {
    %c0_i32 = arith.constant 0 : i32
    %c0_i32_0 = arith.constant 0 : i32
    %c0_i32_1 = arith.constant 0 : i32
    return %c0_i32, %c0_i32_0 : i32, i32
  }
  func.func @transform_4(%arg0: i32) -> (i32, i32) {
    %c0_i32 = arith.constant 0 : i32
    %c0_i32_0 = arith.constant 0 : i32
    %c0_i32_1 = arith.constant 0 : i32
    return %c0_i32, %c0_i32_0 : i32, i32
  }
  func.func @transform_5(%arg0: i32) -> (i32, i32) {
    %c0_i32 = arith.constant 0 : i32
    %c0_i32_0 = arith.constant 0 : i32
    %c0_i32_1 = arith.constant 0 : i32
    return %c0_i32, %c0_i32_0 : i32, i32
  }
}

</mosaic_0001>

<llo_original>
// kernel: cifar10net_forward.7
$region0: #{cifar10net_forward.7}
  #allocation0 [shape = 'u32[]', space=smem, size = 0x4, offset = 0x4, fixed_abs, tag = 'smem constant byte address 0x4 - core index']
  #allocation1 [shape = 'u32[144,128]{1,0:T(1,128)}', space=vmem, size = 0x12000, scoped, tag = 'internal scratch']
  #allocation2 [shape = 'f32[1]{0:T(128)S(6)}', space=smem, size = 0x200, scoped, tag = 'scoped memory for cifar10net_forward.7']
  %s0 = inlined_call_operand.vmem [shape: bf16[2048,32], index: 0, kind: input, shape index: {}]
  %s1 = inlined_call_operand.hbm [shape: bf16[32,64], index: 1, kind: input, shape index: {}]
  %s2 = inlined_call_operand.hbm [shape: f32[1,64], index: 2, kind: input, shape index: {}]
  %s3 = inlined_call_operand.<no memory space> [shape: f32[1], index: 3, kind: input, shape index: {}]
  %s4 = inlined_call_operand.vmem [shape: bf16[2048,64], index: 4, kind: output, shape index: {}]
  %s5 = sld [smem:[#allocation0]]
  $region57: #{cifar10net_forward.7} parent=0
    _
  %s7 = ssub.s32 1, %s5
  %s8 = scalar_select 0, %s7, %s5
  %9 = sst [smem:[#allocation2]] %s3
  $region1: #{cifar10net_forward.7} parent=0
    #allocation3 [shape = 'u8[8192]{0}', space=vmem, size = 0x2000, scoped, tag = 'input window, operand 1, single buffered']
    #allocation4 [shape = 's32[2]{0}', space=sflag, size = 0x8, scoped, tag = 'scoped memory for cifar10net_forward.7']
    #allocation5 [shape = 'u8[512]{0}', space=vmem, size = 0x400, scoped, tag = 'input window, operand 2, single buffered']
    #allocation6 [shape = 's32[1]{0}', space=sflag, size = 0x4, scoped, tag = 'scoped memory for cifar10net_forward.7']
    %10 = vsyncpa [#allocation4], 0
    %11 = vsyncpa [#allocation6], 0
    loop: start=0, step=1, limit=6
    $region2: #{cifar10net_forward.7} parent=1 // loop_pre_header
      _
    $region3: #{cifar10net_forward.7} parent=1 // loop_header
      %s13 = sphi 0, %s17
      %p14 = scmp.ge.s32.totalorder %s13, 6
      %s23 = sphi 0, %s25
      %s26 = sphi 0, %s23
      %s27 = sphi 0, %s26
      %s43 = sphi 0, %s27
      %s47 = sphi 0, %s47
      %s49 = sphi 0, %s47
      %s50 = sphi 0, %s49
      %s64 = sphi 0, %s50
      %s68 = sphi 0, %s68
      %s70 = sphi 0, %s68
      %s71 = sphi 0, %s70
      %s85 = sphi 0, %s71
      %s89 = sphi 0, %s89
      %s91 = sphi 0, %s89
      %s92 = sphi 0, %s91
      %s106 = sphi 0, %s92
      %s112 = sphi 0, %s114
      %s115 = sphi 0, %s112
      %s116 = sphi 0, %s115
      %s132 = sphi 0, %s116
    $region4: #{cifar10net_forward.7} parent=1 // loop_header_branch
      %16 = sbr.rel (%p14) target = $region8
    $region5: #{cifar10net_forward.7} parent=1 // loop_body
      %s18 = ssub.s32 %s13, 1
      %s19 = ssub.s32 %s13, 2
      %s20 = sadd.s32 %s13, 1
      %s21 = ssub.s32 %s13, %s20
      %p22 = scmp.eq.s32.totalorder %s21, 0
      %s24 = sadd.s32 %s23, 1
      %s25 = scalar_select %p22, %s23, %s24
      %p28 = pneg %p22
      %p29 = scmp.eq.s32.totalorder %s13, 3
      %p30 = por %p28, %p29
      %p31 = scmp.ne.s32.totalorder %s23, %s26
      %p32 = scmp.eq.s32.totalorder %s13, 0
      %p33 = por %p31, %p32
      %p34 = scmp.ne.s32.totalorder %s23, %s26
      %p35 = scmp.eq.s32.totalorder %s18, 3
      %p36 = por %p34, %p35
      %p37 = scmp.ne.s32.totalorder %s26, %s27
      %p38 = scmp.eq.s32.totalorder %s18, 0
      %p39 = por %p37, %p38
      %p40 = scmp.ne.s32.totalorder %s26, %s27
      %p41 = scmp.eq.s32.totalorder %s19, 3
      %p42 = por %p40, %p41
      %p44 = scmp.ne.s32.totalorder %s27, %s43
      %p45 = scmp.eq.s32.totalorder %s19, 0
      %p46 = por %p44, %p45
      %s48 = sadd.s32 %s47, 1
      %p51 = scmp.eq.s32.totalorder %s13, 3
      %p52 = scmp.ne.s32.totalorder %s47, %s49
      %p53 = scmp.eq.s32.totalorder %s13, 0
      %p54 = por %p52, %p53
      %p55 = scmp.ne.s32.totalorder %s47, %s49
      %p56 = scmp.eq.s32.totalorder %s18, 3
      %p57 = por %p55, %p56
      %p58 = scmp.ne.s32.totalorder %s49, %s50
      %p59 = scmp.eq.s32.totalorder %s18, 0
      %p60 = por %p58, %p59
      %p61 = scmp.ne.s32.totalorder %s49, %s50
      %p62 = scmp.eq.s32.totalorder %s19, 3
      %p63 = por %p61, %p62
      %p65 = scmp.ne.s32.totalorder %s50, %s64
      %p66 = scmp.eq.s32.totalorder %s19, 0
      %p67 = por %p65, %p66
      %s69 = sadd.s32 %s68, 1
      %p72 = scmp.eq.s32.totalorder %s13, 3
      %p73 = scmp.ne.s32.totalorder %s68, %s70
      %p74 = scmp.eq.s32.totalorder %s13, 0
      %p75 = por %p73, %p74
      %p76 = scmp.ne.s32.totalorder %s68, %s70
      %p77 = scmp.eq.s32.totalorder %s18, 3
      %p78 = por %p76, %p77
      %p79 = scmp.ne.s32.totalorder %s70, %s71
      %p80 = scmp.eq.s32.totalorder %s18, 0
      %p81 = por %p79, %p80
      %p82 = scmp.ne.s32.totalorder %s70, %s71
      %p83 = scmp.eq.s32.totalorder %s19, 3
      %p84 = por %p82, %p83
      %p86 = scmp.ne.s32.totalorder %s71, %s85
      %p87 = scmp.eq.s32.totalorder %s19, 0
      %p88 = por %p86, %p87
      %s90 = sadd.s32 %s89, 1
      %p93 = scmp.eq.s32.totalorder %s13, 3
      %p94 = scmp.ne.s32.totalorder %s89, %s91
      %p95 = scmp.eq.s32.totalorder %s13, 0
      %p96 = por %p94, %p95
      %p97 = scmp.ne.s32.totalorder %s89, %s91
      %p98 = scmp.eq.s32.totalorder %s18, 3
      %p99 = por %p97, %p98
      %p100 = scmp.ne.s32.totalorder %s91, %s92
      %p101 = scmp.eq.s32.totalorder %s18, 0
      %p102 = por %p100, %p101
      %p103 = scmp.ne.s32.totalorder %s91, %s92
      %p104 = scmp.eq.s32.totalorder %s19, 3
      %p105 = por %p103, %p104
      %p107 = scmp.ne.s32.totalorder %s92, %s106
      %p108 = scmp.eq.s32.totalorder %s19, 0
      %p109 = por %p107, %p108
      %s110 = ssub.s32 %s13, %s20
      %p111 = scmp.eq.s32.totalorder %s110, 0
      %s113 = sadd.s32 %s112, 1
      %s114 = scalar_select %p111, %s112, %s113
      %p117 = pneg %p111
      %p118 = scmp.eq.s32.totalorder %s13, 3
      %p119 = por %p117, %p118
      %p120 = scmp.ne.s32.totalorder %s112, %s115
      %p121 = scmp.eq.s32.totalorder %s13, 0
      %p122 = por %p120, %p121
      %p123 = scmp.ne.s32.totalorder %s112, %s115
      %p124 = scmp.eq.s32.totalorder %s18, 3
      %p125 = por %p123, %p124
      %p126 = scmp.ne.s32.totalorder %s115, %s116
      %p127 = scmp.eq.s32.totalorder %s18, 0
      %p128 = por %p126, %p127
      %p129 = scmp.ne.s32.totalorder %s115, %s116
      %p130 = scmp.eq.s32.totalorder %s19, 3
      %p131 = por %p129, %p130
      %p133 = scmp.ne.s32.totalorder %s116, %s132
      %p134 = scmp.eq.s32.totalorder %s19, 0
      %p135 = por %p133, %p134
      %p136 = scmp.le.s32.totalorder 1, %s13
      %p137 = scmp.lt.s32.totalorder %s13, 5
      %p138 = pnand %p136, %p137
      %p139 = pneg %p138
      // Predicated region
      $region9: #{cifar10net_forward.7} parent=5 // pred_check
        _
      $region10: #{cifar10net_forward.7} parent=5 // pred_check_branch
        %141 = sbr.rel (%p138) target = $region12
      $region11: #{cifar10net_forward.7} parent=5 // pred_region
        %s142 = ssub.s32 %s13, 1
        // Predicated region
        $region13: #{cifar10net_forward.7} parent=11 // pred_check
          %p143 = pneg %p60
        $region14: #{cifar10net_forward.7} parent=11 // pred_check_branch
          %145 = sbr.rel (%p143) target = $region16
        $region15: #{cifar10net_forward.7} parent=11 // pred_region
          %s147 = ssub.s32 256, 256
          %148 = vsyncadd [#allocation4], %s147
          %s149 = sshll.u32 [#allocation3], 4
          %s150 = int_to_ptr.vmem [resolvable:$true] %s149
          %155 = dma.hbm_to_vmem [thread:$0]  %s1, 256, %s150, [#allocation4], 64, 64, 4
        $region16: #{cifar10net_forward.7} parent=11 // pred_fallthru
          _
        // Predicated region
        $region17: #{cifar10net_forward.7} parent=11 // pred_check
          %p156 = pneg %p81
        $region18: #{cifar10net_forward.7} parent=11 // pred_check_branch
          %158 = sbr.rel (%p156) target = $region20
        $region19: #{cifar10net_forward.7} parent=11 // pred_region
          %s160 = ssub.s32 16, 16
          %161 = vsyncadd [#allocation6], %s160
          %s163 = sshll.u32 [#allocation5], 4
          %s164 = int_to_ptr.vmem [resolvable:$true] %s163
          %166 = dma.hbm_to_vmem [thread:$0]  %s2, 16, %s164, [#allocation6]
        $region20: #{cifar10net_forward.7} parent=11 // pred_fallthru
          _
        // Predicated region
        $region21: #{cifar10net_forward.7} parent=11 // pred_check
          %p167 = pneg %p102
        $region22: #{cifar10net_forward.7} parent=11 // pred_check_branch
          %169 = sbr.rel (%p167) target = $region24
        $region23: #{cifar10net_forward.7} parent=11 // pred_region
          _
        $region24: #{cifar10net_forward.7} parent=11 // pred_fallthru
          _
      $region12: #{cifar10net_forward.7} parent=5 // pred_fallthru
        _
      %p170 = scmp.lt.s32.totalorder %s13, 4
      // Predicated region
      $region25: #{cifar10net_forward.7} parent=5 // pred_check
        %p171 = pneg %p170
      $region26: #{cifar10net_forward.7} parent=5 // pred_check_branch
        %173 = sbr.rel (%p171) target = $region28
      $region27: #{cifar10net_forward.7} parent=5 // pred_region
        // Predicated region
        $region29: #{cifar10net_forward.7} parent=27 // pred_check
          %p174 = pneg %p33
        $region30: #{cifar10net_forward.7} parent=27 // pred_check_branch
          %176 = sbr.rel (%p174) target = $region32
        $region31: #{cifar10net_forward.7} parent=27 // pred_region
          %s177 = smul.u32 64, %s13
          %p178 = scmp.lt.s32.totalorder %s177, 255
          %s179 = scalar_select %p178, %s177, 255
          %s180 = smul.addr %s179, 4
          %s181 = scalar_lea.vmem %s0, %s180
          %s182 = smul.u32 64, %s13
        $region32: #{cifar10net_forward.7} parent=27 // pred_fallthru
          _
      $region28: #{cifar10net_forward.7} parent=5 // pred_fallthru
        _
      %p183 = scmp.le.s32.totalorder 1, %s13
      %p184 = scmp.lt.s32.totalorder %s13, 5
      %p185 = pnand %p183, %p184
      %p186 = pneg %p185
      // Predicated region
      $region33: #{cifar10net_forward.7} parent=5 // pred_check
        _
      $region34: #{cifar10net_forward.7} parent=5 // pred_check_branch
        %188 = sbr.rel (%p185) target = $region36
      $region35: #{cifar10net_forward.7} parent=5 // pred_region
        %s189 = ssub.s32 %s13, 1
        // Predicated region
        $region37: #{cifar10net_forward.7} parent=35 // pred_check
          %p190 = pneg %p60
        $region38: #{cifar10net_forward.7} parent=35 // pred_check_branch
          %192 = sbr.rel (%p190) target = $region40
        $region39: #{cifar10net_forward.7} parent=35 // pred_region
          %193 = dma.done [#allocation4], 256
        $region40: #{cifar10net_forward.7} parent=35 // pred_fallthru
          _
        // Predicated region
        $region41: #{cifar10net_forward.7} parent=35 // pred_check
          %p194 = pneg %p81
        $region42: #{cifar10net_forward.7} parent=35 // pred_check_branch
          %196 = sbr.rel (%p194) target = $region44
        $region43: #{cifar10net_forward.7} parent=35 // pred_region
          %197 = dma.done [#allocation6], 16
        $region44: #{cifar10net_forward.7} parent=35 // pred_fallthru
          _
        %s198 = smul.u32 64, %s18
        %p199 = scmp.lt.s32.totalorder %s198, 255
        %s200 = scalar_select %p199, %s198, 255
        %s201 = smul.addr %s200, 4
        %s202 = scalar_lea.vmem %s0, %s201
        %p203 = pneg %p39
        %p204 = pneg %p36
        %p205 = pneg %p60
        %p206 = pneg %p57
        %p207 = pneg %p81
        %p208 = pneg %p78
        %p209 = pneg %p102
        %p210 = pneg %p99
        %p211 = pneg %p128
        %p212 = pneg %p125
        %s213 = smul.u32 64, %s18
        %p214 = scmp.lt.s32.totalorder %s213, 255
        %s215 = scalar_select %p214, %s213, 255
        %s216 = smul.addr %s215, 4
        %s217 = scalar_lea.vmem %s4, %s216
        %s218 = smul.u32 64, %s18
        %p219 = scmp.lt.s32.totalorder %s218, 255
        %s220 = scalar_select %p219, %s218, 255
        %s221 = smul.addr %s220, 4
        %s222 = scalar_lea.vmem %s0, %s221
        %s223 = smul.u32 64, %s18
        %s224 = smul.u32 64, %s18
        %p225 = scmp.lt.s32.totalorder %s224, 255
        %s226 = scalar_select %p225, %s224, 255
        %s227 = smul.addr %s226, 4
        %s228 = scalar_lea.vmem %s4, %s227
        %s229 = smul.u32 64, %s18
        %v231 = vld [vmem:[%s222] sm:$0xf]
        %v232 = vld [vmem:[%s222 + $0x4] sm:$0xf]
        %v233 = vld [vmem:[%s222 + $0x8] sm:$0xf]
        %v234 = vld [vmem:[%s222 + $0xc] sm:$0xf]
        %v235 = vld [vmem:[%s222 + $0x10] sm:$0xf]
        %v236 = vld [vmem:[%s222 + $0x14] sm:$0xf]
        %v237 = vld [vmem:[%s222 + $0x18] sm:$0xf]
        %v238 = vld [vmem:[%s222 + $0x1c] sm:$0xf]
        %v239 = vld [vmem:[%s222 + $0x20] sm:$0xf]
        %v240 = vld [vmem:[%s222 + $0x24] sm:$0xf]
        %v241 = vld [vmem:[%s222 + $0x28] sm:$0xf]
        %v242 = vld [vmem:[%s222 + $0x2c] sm:$0xf]
        %v243 = vld [vmem:[%s222 + $0x30] sm:$0xf]
        %v244 = vld [vmem:[%s222 + $0x34] sm:$0xf]
        %v245 = vld [vmem:[%s222 + $0x38] sm:$0xf]
        %v246 = vld [vmem:[%s222 + $0x3c] sm:$0xf]
        %v247 = vld [vmem:[%s222 + $0x40] sm:$0xf]
        %v248 = vld [vmem:[%s222 + $0x44] sm:$0xf]
        %v249 = vld [vmem:[%s222 + $0x48] sm:$0xf]
        %v250 = vld [vmem:[%s222 + $0x4c] sm:$0xf]
        %v251 = vld [vmem:[%s222 + $0x50] sm:$0xf]
        %v252 = vld [vmem:[%s222 + $0x54] sm:$0xf]
        %v253 = vld [vmem:[%s222 + $0x58] sm:$0xf]
        %v254 = vld [vmem:[%s222 + $0x5c] sm:$0xf]
        %v255 = vld [vmem:[%s222 + $0x60] sm:$0xf]
        %v256 = vld [vmem:[%s222 + $0x64] sm:$0xf]
        %v257 = vld [vmem:[%s222 + $0x68] sm:$0xf]
        %v258 = vld [vmem:[%s222 + $0x6c] sm:$0xf]
        %v259 = vld [vmem:[%s222 + $0x70] sm:$0xf]
        %v260 = vld [vmem:[%s222 + $0x74] sm:$0xf]
        %v261 = vld [vmem:[%s222 + $0x78] sm:$0xf]
        %v262 = vld [vmem:[%s222 + $0x7c] sm:$0xf]
        %v263 = vld [vmem:[%s222 + $0x80] sm:$0xf]
        %v264 = vld [vmem:[%s222 + $0x84] sm:$0xf]
        %v265 = vld [vmem:[%s222 + $0x88] sm:$0xf]
        %v266 = vld [vmem:[%s222 + $0x8c] sm:$0xf]
        %v267 = vld [vmem:[%s222 + $0x90] sm:$0xf]
        %v268 = vld [vmem:[%s222 + $0x94] sm:$0xf]
        %v269 = vld [vmem:[%s222 + $0x98] sm:$0xf]
        %v270 = vld [vmem:[%s222 + $0x9c] sm:$0xf]
        %v271 = vld [vmem:[%s222 + $0xa0] sm:$0xf]
        %v272 = vld [vmem:[%s222 + $0xa4] sm:$0xf]
        %v273 = vld [vmem:[%s222 + $0xa8] sm:$0xf]
        %v274 = vld [vmem:[%s222 + $0xac] sm:$0xf]
        %v275 = vld [vmem:[%s222 + $0xb0] sm:$0xf]
        %v276 = vld [vmem:[%s222 + $0xb4] sm:$0xf]
        %v277 = vld [vmem:[%s222 + $0xb8] sm:$0xf]
        %v278 = vld [vmem:[%s222 + $0xbc] sm:$0xf]
        %v279 = vld [vmem:[%s222 + $0xc0] sm:$0xf]
        %v280 = vld [vmem:[%s222 + $0xc4] sm:$0xf]
        %v281 = vld [vmem:[%s222 + $0xc8] sm:$0xf]
        %v282 = vld [vmem:[%s222 + $0xcc] sm:$0xf]
        %v283 = vld [vmem:[%s222 + $0xd0] sm:$0xf]
        %v284 = vld [vmem:[%s222 + $0xd4] sm:$0xf]
        %v285 = vld [vmem:[%s222 + $0xd8] sm:$0xf]
        %v286 = vld [vmem:[%s222 + $0xdc] sm:$0xf]
        %v287 = vld [vmem:[%s222 + $0xe0] sm:$0xf]
        %v288 = vld [vmem:[%s222 + $0xe4] sm:$0xf]
        %v289 = vld [vmem:[%s222 + $0xe8] sm:$0xf]
        %v290 = vld [vmem:[%s222 + $0xec] sm:$0xf]
        %v291 = vld [vmem:[%s222 + $0xf0] sm:$0xf]
        %v292 = vld [vmem:[%s222 + $0xf4] sm:$0xf]
        %v293 = vld [vmem:[%s222 + $0xf8] sm:$0xf]
        %v294 = vld [vmem:[%s222 + $0xfc] sm:$0xf]
        %v295 = vld [vmem:[#allocation3] sm:$0xf]
        %v296 = vld [vmem:[#allocation3 + $0x4] sm:$0xf]
        %v297 = vld [vmem:[#allocation3 + $0x8] sm:$0xf]
        %v298 = vld [vmem:[#allocation3 + $0xc] sm:$0xf]
        %v299 = vld [vmem:[#allocation5] sm:$0x1]
        %v301 = vlaneseq
        %v302 = vshrl.u32 %v301, 7
        %v303 = vsub.s32 0, %v302
        %v304 = vrot.slane %v299, %v303
        %v370 = vunpack.c.l.b16 %v231
        %v371 = vunpack.c.l.b16 %v232
        %v372 = vunpack.c.l.b16 %v233
        %v373 = vunpack.c.l.b16 %v234
        %v374 = vunpack.c.l.b16 %v235
        %v375 = vunpack.c.l.b16 %v236
        %v376 = vunpack.c.l.b16 %v237
        %v377 = vunpack.c.l.b16 %v238
        %v378 = vunpack.c.l.b16 %v239
        %v379 = vunpack.c.l.b16 %v240
        %v380 = vunpack.c.l.b16 %v241
        %v381 = vunpack.c.l.b16 %v242
        %v382 = vunpack.c.l.b16 %v243
        %v383 = vunpack.c.l.b16 %v244
        %v384 = vunpack.c.l.b16 %v245
        %v385 = vunpack.c.l.b16 %v246
        %v386 = vunpack.c.l.b16 %v247
        %v387 = vunpack.c.l.b16 %v248
        %v388 = vunpack.c.l.b16 %v249
        %v389 = vunpack.c.l.b16 %v250
        %v390 = vunpack.c.l.b16 %v251
        %v391 = vunpack.c.l.b16 %v252
        %v392 = vunpack.c.l.b16 %v253
        %v393 = vunpack.c.l.b16 %v254
        %v394 = vunpack.c.l.b16 %v255
        %v395 = vunpack.c.l.b16 %v256
        %v396 = vunpack.c.l.b16 %v257
        %v397 = vunpack.c.l.b16 %v258
        %v398 = vunpack.c.l.b16 %v259
        %v399 = vunpack.c.l.b16 %v260
        %v400 = vunpack.c.l.b16 %v261
        %v401 = vunpack.c.l.b16 %v262
        %v402 = vunpack.c.l.b16 %v263
        %v403 = vunpack.c.l.b16 %v264
        %v404 = vunpack.c.l.b16 %v265
        %v405 = vunpack.c.l.b16 %v266
        %v406 = vunpack.c.l.b16 %v267
        %v407 = vunpack.c.l.b16 %v268
        %v408 = vunpack.c.l.b16 %v269
        %v409 = vunpack.c.l.b16 %v270
        %v410 = vunpack.c.l.b16 %v271
        %v411 = vunpack.c.l.b16 %v272
        %v412 = vunpack.c.l.b16 %v273
        %v413 = vunpack.c.l.b16 %v274
        %v414 = vunpack.c.l.b16 %v275
        %v415 = vunpack.c.l.b16 %v276
        %v416 = vunpack.c.l.b16 %v277
        %v417 = vunpack.c.l.b16 %v278
        %v418 = vunpack.c.l.b16 %v279
        %v419 = vunpack.c.l.b16 %v280
        %v420 = vunpack.c.l.b16 %v281
        %v421 = vunpack.c.l.b16 %v282
        %v422 = vunpack.c.l.b16 %v283
        %v423 = vunpack.c.l.b16 %v284
        %v424 = vunpack.c.l.b16 %v285
        %v425 = vunpack.c.l.b16 %v286
        %v426 = vunpack.c.l.b16 %v287
        %v427 = vunpack.c.l.b16 %v288
        %v428 = vunpack.c.l.b16 %v289
        %v429 = vunpack.c.l.b16 %v290
        %v430 = vunpack.c.l.b16 %v291
        %v431 = vunpack.c.l.b16 %v292
        %v432 = vunpack.c.l.b16 %v293
        %v433 = vunpack.c.l.b16 %v294
        %v434 = vpack.c.b16 %v371, %v370
        %v435 = vpack.c.b16 %v373, %v372
        %v436 = vpack.c.b16 %v375, %v374
        %v437 = vpack.c.b16 %v377, %v376
        %v438 = vpack.c.b16 %v379, %v378
        %v439 = vpack.c.b16 %v381, %v380
        %v440 = vpack.c.b16 %v383, %v382
        %v441 = vpack.c.b16 %v385, %v384
        %v442 = vpack.c.b16 %v387, %v386
        %v443 = vpack.c.b16 %v389, %v388
        %v444 = vpack.c.b16 %v391, %v390
        %v445 = vpack.c.b16 %v393, %v392
        %v446 = vpack.c.b16 %v395, %v394
        %v447 = vpack.c.b16 %v397, %v396
        %v448 = vpack.c.b16 %v399, %v398
        %v449 = vpack.c.b16 %v401, %v400
        %v450 = vpack.c.b16 %v403, %v402
        %v451 = vpack.c.b16 %v405, %v404
        %v452 = vpack.c.b16 %v407, %v406
        %v453 = vpack.c.b16 %v409, %v408
        %v454 = vpack.c.b16 %v411, %v410
        %v455 = vpack.c.b16 %v413, %v412
        %v456 = vpack.c.b16 %v415, %v414
        %v457 = vpack.c.b16 %v417, %v416
        %v458 = vpack.c.b16 %v419, %v418
        %v459 = vpack.c.b16 %v421, %v420
        %v460 = vpack.c.b16 %v423, %v422
        %v461 = vpack.c.b16 %v425, %v424
        %v462 = vpack.c.b16 %v427, %v426
        %v463 = vpack.c.b16 %v429, %v428
        %v464 = vpack.c.b16 %v431, %v430
        %v465 = vpack.c.b16 %v433, %v432
        %v470 = vunpack.c.l.b16 %v295
        %v471 = vunpack.c.l.b16 %v296
        %v472 = vunpack.c.l.b16 %v297
        %v473 = vunpack.c.l.b16 %v298
        %v474 = vpack.c.b16 %v471, %v470
        %v475 = vpack.c.b16 %v473, %v472
        %vm478 = vcmask 261120
        %v480 = vsel %vm478, %v434, 0
        %v483 = vsel %vm478, %v435, 0
        %v486 = vsel %vm478, %v436, 0
        %v489 = vsel %vm478, %v437, 0
        %v492 = vsel %vm478, %v438, 0
        %v495 = vsel %vm478, %v439, 0
        %v498 = vsel %vm478, %v440, 0
        %v501 = vsel %vm478, %v441, 0
        %v504 = vsel %vm478, %v442, 0
        %v507 = vsel %vm478, %v443, 0
        %v510 = vsel %vm478, %v444, 0
        %v513 = vsel %vm478, %v445, 0
        %v516 = vsel %vm478, %v446, 0
        %v519 = vsel %vm478, %v447, 0
        %v522 = vsel %vm478, %v448, 0
        %v525 = vsel %vm478, %v449, 0
        %v528 = vsel %vm478, %v450, 0
        %v531 = vsel %vm478, %v451, 0
        %v534 = vsel %vm478, %v452, 0
        %v537 = vsel %vm478, %v453, 0
        %v540 = vsel %vm478, %v454, 0
        %v543 = vsel %vm478, %v455, 0
        %v546 = vsel %vm478, %v456, 0
        %v549 = vsel %vm478, %v457, 0
        %v552 = vsel %vm478, %v458, 0
        %v555 = vsel %vm478, %v459, 0
        %v558 = vsel %vm478, %v460, 0
        %v561 = vsel %vm478, %v461, 0
        %v564 = vsel %vm478, %v462, 0
        %v567 = vsel %vm478, %v463, 0
        %v570 = vsel %vm478, %v464, 0
        %v573 = vsel %vm478, %v465, 0
        %575 = vmatprep.subr.bf16.mxu0 0
        %576 = vmatpush1.bf16.msra.mxu0 %v474
        %577 = vmatprep.subr.bf16.mxu0 0
        %578 = vmatpush1.bf16.msra.mxu0 %v475
        %579 = vmatprep.subr.bf16.mxu0 0
        %580 = vmatpush1.bf16.msra.mxu0 0
        %581 = vmatprep.subr.bf16.mxu0 0
        %582 = vmatpush1.bf16.msra.mxu0 0
        %583 = vmatprep.subr.bf16.mxu0 0
        %584 = vmatpush1.bf16.msra.mxu0 0
        %585 = vmatprep.subr.bf16.mxu0 0
        %586 = vmatpush1.bf16.msra.mxu0 0
        %587 = vmatprep.subr.bf16.mxu0 0
        %588 = vmatpush1.bf16.msra.mxu0 0
        %589 = vmatprep.subr.bf16.mxu0 0
        %590 = vmatpush1.bf16.msra.mxu0 0
        %591 = vmatprep.subr.bf16.mxu0 0
        %592 = vmatpush1.bf16.msra.mxu0 0
        %593 = vmatprep.subr.bf16.mxu0 0
        %594 = vmatpush1.bf16.msra.mxu0 0
        %595 = vmatprep.subr.bf16.mxu0 0
        %596 = vmatpush1.bf16.msra.mxu0 0
        %597 = vmatprep.subr.bf16.mxu0 0
        %598 = vmatpush1.bf16.msra.mxu0 0
        %599 = vmatprep.subr.bf16.mxu0 0
        %600 = vmatpush1.bf16.msra.mxu0 0
        %601 = vmatprep.subr.bf16.mxu0 0
        %602 = vmatpush1.bf16.msra.mxu0 0
        %603 = vmatprep.subr.bf16.mxu0 0
        %604 = vmatpush1.bf16.msra.mxu0 0
        %605 = vmatprep.subr.bf16.mxu0 0
        %606 = vmatpush1.bf16.msra.mxu0 0
        %607 = vmatprep.mubr.bf16.mxu0 0
        %608 = vmatmul.mubr.bf16.gmra.mrb[0].mxu0 %v480
        %v609 = vpop.f32.mrb[0].mxu0
        %v610 = vadd.f32 %v304, %v609
        %v611 = vpop.f32.mrb[0].mxu0
        %v612 = vpop.f32.mrb[0].mxu0
        %v613 = vadd.f32 %v304, %v612
        %v614 = vpop.f32.mrb[0].mxu0
        %615 = vmatprep.mubr.bf16.mxu0 0
        %616 = vmatmul.mubr.bf16.gmra.mrb[0].mxu0 %v483
        %v617 = vpop.f32.mrb[0].mxu0
        %v618 = vadd.f32 %v304, %v617
        %v619 = vpop.f32.mrb[0].mxu0
        %v620 = vpop.f32.mrb[0].mxu0
        %v621 = vadd.f32 %v304, %v620
        %v622 = vpop.f32.mrb[0].mxu0
        %623 = vmatprep.mubr.bf16.mxu0 0
        %624 = vmatmul.mubr.bf16.gmra.mrb[0].mxu0 %v486
        %v625 = vpop.f32.mrb[0].mxu0
        %v626 = vadd.f32 %v304, %v625
        %v627 = vpop.f32.mrb[0].mxu0
        %v628 = vpop.f32.mrb[0].mxu0
        %v629 = vadd.f32 %v304, %v628
        %v630 = vpop.f32.mrb[0].mxu0
        %631 = vmatprep.mubr.bf16.mxu0 0
        %632 = vmatmul.mubr.bf16.gmra.mrb[0].mxu0 %v489
        %v633 = vpop.f32.mrb[0].mxu0
        %v634 = vadd.f32 %v304, %v633
        %v635 = vpop.f32.mrb[0].mxu0
        %v636 = vpop.f32.mrb[0].mxu0
        %v637 = vadd.f32 %v304, %v636
        %v638 = vpop.f32.mrb[0].mxu0
        %639 = vmatprep.mubr.bf16.mxu0 0
        %640 = vmatmul.mubr.bf16.gmra.mrb[0].mxu0 %v492
        %v641 = vpop.f32.mrb[0].mxu0
        %v642 = vadd.f32 %v304, %v641
        %v643 = vpop.f32.mrb[0].mxu0
        %v644 = vpop.f32.mrb[0].mxu0
        %v645 = vadd.f32 %v304, %v644
        %v646 = vpop.f32.mrb[0].mxu0
        %647 = vmatprep.mubr.bf16.mxu0 0
        %648 = vmatmul.mubr.bf16.gmra.mrb[0].mxu0 %v495
        %v649 = vpop.f32.mrb[0].mxu0
        %v650 = vadd.f32 %v304, %v649
        %v651 = vpop.f32.mrb[0].mxu0
        %v652 = vpop.f32.mrb[0].mxu0
        %v653 = vadd.f32 %v304, %v652
        %v654 = vpop.f32.mrb[0].mxu0
        %655 = vmatprep.mubr.bf16.mxu0 0
        %656 = vmatmul.mubr.bf16.gmra.mrb[0].mxu0 %v498
        %v657 = vpop.f32.mrb[0].mxu0
        %v658 = vadd.f32 %v304, %v657
        %v659 = vpop.f32.mrb[0].mxu0
        %v660 = vpop.f32.mrb[0].mxu0
        %v661 = vadd.f32 %v304, %v660
        %v662 = vpop.f32.mrb[0].mxu0
        %663 = vmatprep.mubr.bf16.mxu0 0
        %664 = vmatmul.mubr.bf16.gmra.mrb[0].mxu0 %v501
        %v665 = vpop.f32.mrb[0].mxu0
        %v666 = vadd.f32 %v304, %v665
        %v667 = vpop.f32.mrb[0].mxu0
        %v668 = vpop.f32.mrb[0].mxu0
        %v669 = vadd.f32 %v304, %v668
        %v670 = vpop.f32.mrb[0].mxu0
        %671 = vmatprep.mubr.bf16.mxu0 0
        %672 = vmatmul.mubr.bf16.gmra.mrb[0].mxu0 %v504
        %v673 = vpop.f32.mrb[0].mxu0
        %v674 = vadd.f32 %v304, %v673
        %v675 = vpop.f32.mrb[0].mxu0
        %v676 = vpop.f32.mrb[0].mxu0
        %v677 = vadd.f32 %v304, %v676
        %v678 = vpop.f32.mrb[0].mxu0
        %679 = vmatprep.mubr.bf16.mxu0 0
        %680 = vmatmul.mubr.bf16.gmra.mrb[0].mxu0 %v507
        %v681 = vpop.f32.mrb[0].mxu0
        %v682 = vadd.f32 %v304, %v681
        %v683 = vpop.f32.mrb[0].mxu0
        %v684 = vpop.f32.mrb[0].mxu0
        %v685 = vadd.f32 %v304, %v684
        %v686 = vpop.f32.mrb[0].mxu0
        %687 = vmatprep.mubr.bf16.mxu0 0
        %688 = vmatmul.mubr.bf16.gmra.mrb[0].mxu0 %v510
        %v689 = vpop.f32.mrb[0].mxu0
        %v690 = vadd.f32 %v304, %v689
        %v691 = vpop.f32.mrb[0].mxu0
        %v692 = vpop.f32.mrb[0].mxu0
        %v693 = vadd.f32 %v304, %v692
        %v694 = vpop.f32.mrb[0].mxu0
        %695 = vmatprep.mubr.bf16.mxu0 0
        %696 = vmatmul.mubr.bf16.gmra.mrb[0].mxu0 %v513
        %v697 = vpop.f32.mrb[0].mxu0
        %v698 = vadd.f32 %v304, %v697
        %v699 = vpop.f32.mrb[0].mxu0
        %v700 = vpop.f32.mrb[0].mxu0
        %v701 = vadd.f32 %v304, %v700
        %v702 = vpop.f32.mrb[0].mxu0
        %703 = vmatprep.mubr.bf16.mxu0 0
        %704 = vmatmul.mubr.bf16.gmra.mrb[0].mxu0 %v516
        %v705 = vpop.f32.mrb[0].mxu0
        %v706 = vadd.f32 %v304, %v705
        %v707 = vpop.f32.mrb[0].mxu0
        %v708 = vpop.f32.mrb[0].mxu0
        %v709 = vadd.f32 %v304, %v708
        %v710 = vpop.f32.mrb[0].mxu0
        %711 = vmatprep.mubr.bf16.mxu0 0
        %712 = vmatmul.mubr.bf16.gmra.mrb[0].mxu0 %v519
        %v713 = vpop.f32.mrb[0].mxu0
        %v714 = vadd.f32 %v304, %v713
        %v715 = vpop.f32.mrb[0].mxu0
        %v716 = vpop.f32.mrb[0].mxu0
        %v717 = vadd.f32 %v304, %v716
        %v718 = vpop.f32.mrb[0].mxu0
        %719 = vmatprep.mubr.bf16.mxu0 0
        %720 = vmatmul.mubr.bf16.gmra.mrb[0].mxu0 %v522
        %v721 = vpop.f32.mrb[0].mxu0
        %v722 = vadd.f32 %v304, %v721
        %v723 = vpop.f32.mrb[0].mxu0
        %v724 = vpop.f32.mrb[0].mxu0
        %v725 = vadd.f32 %v304, %v724
        %v726 = vpop.f32.mrb[0].mxu0
        %727 = vmatprep.mubr.bf16.mxu0 0
        %728 = vmatmul.mubr.bf16.gmra.mrb[0].mxu0 %v525
        %v729 = vpop.f32.mrb[0].mxu0
        %v730 = vadd.f32 %v304, %v729
        %v731 = vpop.f32.mrb[0].mxu0
        %v732 = vpop.f32.mrb[0].mxu0
        %v733 = vadd.f32 %v304, %v732
        %v734 = vpop.f32.mrb[0].mxu0
        %735 = vmatprep.mubr.bf16.mxu0 0
        %736 = vmatmul.mubr.bf16.gmra.mrb[0].mxu0 %v528
        %v737 = vpop.f32.mrb[0].mxu0
        %v738 = vadd.f32 %v304, %v737
        %v739 = vpop.f32.mrb[0].mxu0
        %v740 = vpop.f32.mrb[0].mxu0
        %v741 = vadd.f32 %v304, %v740
        %v742 = vpop.f32.mrb[0].mxu0
        %743 = vmatprep.mubr.bf16.mxu0 0
        %744 = vmatmul.mubr.bf16.gmra.mrb[0].mxu0 %v531
        %v745 = vpop.f32.mrb[0].mxu0
        %v746 = vadd.f32 %v304, %v745
        %v747 = vpop.f32.mrb[0].mxu0
        %v748 = vpop.f32.mrb[0].mxu0
        %v749 = vadd.f32 %v304, %v748
        %v750 = vpop.f32.mrb[0].mxu0
        %751 = vmatprep.mubr.bf16.mxu0 0
        %752 = vmatmul.mubr.bf16.gmra.mrb[0].mxu0 %v534
        %v753 = vpop.f32.mrb[0].mxu0
        %v754 = vadd.f32 %v304, %v753
        %v755 = vpop.f32.mrb[0].mxu0
        %v756 = vpop.f32.mrb[0].mxu0
        %v757 = vadd.f32 %v304, %v756
        %v758 = vpop.f32.mrb[0].mxu0
        %759 = vmatprep.mubr.bf16.mxu0 0
        %760 = vmatmul.mubr.bf16.gmra.mrb[0].mxu0 %v537
        %v761 = vpop.f32.mrb[0].mxu0
        %v762 = vadd.f32 %v304, %v761
        %v763 = vpop.f32.mrb[0].mxu0
        %v764 = vpop.f32.mrb[0].mxu0
        %v765 = vadd.f32 %v304, %v764
        %v766 = vpop.f32.mrb[0].mxu0
        %767 = vmatprep.mubr.bf16.mxu0 0
        %768 = vmatmul.mubr.bf16.gmra.mrb[0].mxu0 %v540
        %v769 = vpop.f32.mrb[0].mxu0
        %v770 = vadd.f32 %v304, %v769
        %v771 = vpop.f32.mrb[0].mxu0
        %v772 = vpop.f32.mrb[0].mxu0
        %v773 = vadd.f32 %v304, %v772
        %v774 = vpop.f32.mrb[0].mxu0
        %775 = vmatprep.mubr.bf16.mxu0 0
        %776 = vmatmul.mubr.bf16.gmra.mrb[0].mxu0 %v543
        %v777 = vpop.f32.mrb[0].mxu0
        %v778 = vadd.f32 %v304, %v777
        %v779 = vpop.f32.mrb[0].mxu0
        %v780 = vpop.f32.mrb[0].mxu0
        %v781 = vadd.f32 %v304, %v780
        %v782 = vpop.f32.mrb[0].mxu0
        %783 = vmatprep.mubr.bf16.mxu0 0
        %784 = vmatmul.mubr.bf16.gmra.mrb[0].mxu0 %v546
        %v785 = vpop.f32.mrb[0].mxu0
        %v786 = vadd.f32 %v304, %v785
        %v787 = vpop.f32.mrb[0].mxu0
        %v788 = vpop.f32.mrb[0].mxu0
        %v789 = vadd.f32 %v304, %v788
        %v790 = vpop.f32.mrb[0].mxu0
        %791 = vmatprep.mubr.bf16.mxu0 0
        %792 = vmatmul.mubr.bf16.gmra.mrb[0].mxu0 %v549
        %v793 = vpop.f32.mrb[0].mxu0
        %v794 = vadd.f32 %v304, %v793
        %v795 = vpop.f32.mrb[0].mxu0
        %v796 = vpop.f32.mrb[0].mxu0
        %v797 = vadd.f32 %v304, %v796
        %v798 = vpop.f32.mrb[0].mxu0
        %799 = vmatprep.mubr.bf16.mxu0 0
        %800 = vmatmul.mubr.bf16.gmra.mrb[0].mxu0 %v552
        %v801 = vpop.f32.mrb[0].mxu0
        %v802 = vadd.f32 %v304, %v801
        %v803 = vpop.f32.mrb[0].mxu0
        %v804 = vpop.f32.mrb[0].mxu0
        %v805 = vadd.f32 %v304, %v804
        %v806 = vpop.f32.mrb[0].mxu0
        %807 = vmatprep.mubr.bf16.mxu0 0
        %808 = vmatmul.mubr.bf16.gmra.mrb[0].mxu0 %v555
        %v809 = vpop.f32.mrb[0].mxu0
        %v810 = vadd.f32 %v304, %v809
        %v811 = vpop.f32.mrb[0].mxu0
        %v812 = vpop.f32.mrb[0].mxu0
        %v813 = vadd.f32 %v304, %v812
        %v814 = vpop.f32.mrb[0].mxu0
        %815 = vmatprep.mubr.bf16.mxu0 0
        %816 = vmatmul.mubr.bf16.gmra.mrb[0].mxu0 %v558
        %v817 = vpop.f32.mrb[0].mxu0
        %v818 = vadd.f32 %v304, %v817
        %v819 = vpop.f32.mrb[0].mxu0
        %v820 = vpop.f32.mrb[0].mxu0
        %v821 = vadd.f32 %v304, %v820
        %v822 = vpop.f32.mrb[0].mxu0
        %823 = vmatprep.mubr.bf16.mxu0 0
        %824 = vmatmul.mubr.bf16.gmra.mrb[0].mxu0 %v561
        %v825 = vpop.f32.mrb[0].mxu0
        %v826 = vadd.f32 %v304, %v825
        %v827 = vpop.f32.mrb[0].mxu0
        %v828 = vpop.f32.mrb[0].mxu0
        %v829 = vadd.f32 %v304, %v828
        %v830 = vpop.f32.mrb[0].mxu0
        %831 = vmatprep.mubr.bf16.mxu0 0
        %832 = vmatmul.mubr.bf16.gmra.mrb[0].mxu0 %v564
        %v833 = vpop.f32.mrb[0].mxu0
        %v834 = vadd.f32 %v304, %v833
        %v835 = vpop.f32.mrb[0].mxu0
        %v836 = vpop.f32.mrb[0].mxu0
        %v837 = vadd.f32 %v304, %v836
        %v838 = vpop.f32.mrb[0].mxu0
        %839 = vmatprep.mubr.bf16.mxu0 0
        %840 = vmatmul.mubr.bf16.gmra.mrb[0].mxu0 %v567
        %v841 = vpop.f32.mrb[0].mxu0
        %v842 = vadd.f32 %v304, %v841
        %v843 = vpop.f32.mrb[0].mxu0
        %v844 = vpop.f32.mrb[0].mxu0
        %v845 = vadd.f32 %v304, %v844
        %v846 = vpop.f32.mrb[0].mxu0
        %847 = vmatprep.mubr.bf16.mxu0 0
        %848 = vmatmul.mubr.bf16.gmra.mrb[0].mxu0 %v570
        %v849 = vpop.f32.mrb[0].mxu0
        %v850 = vadd.f32 %v304, %v849
        %v851 = vpop.f32.mrb[0].mxu0
        %v852 = vpop.f32.mrb[0].mxu0
        %v853 = vadd.f32 %v304, %v852
        %v854 = vpop.f32.mrb[0].mxu0
        %855 = vmatprep.mubr.bf16.mxu0 0
        %856 = vmatmul.mubr.bf16.gmra.mrb[0].mxu0 %v573
        %v857 = vpop.f32.mrb[0].mxu0
        %v858 = vadd.f32 %v304, %v857
        %v859 = vpop.f32.mrb[0].mxu0
        %v860 = vpop.f32.mrb[0].mxu0
        %v861 = vadd.f32 %v304, %v860
        %v862 = vpop.f32.mrb[0].mxu0
        %863 = vdwg.mxu0
        %s864 = sld [smem:[#allocation2]]
        %vm865 = vcmp.gt.f32.partialorder %v610, 0.0
        %vm866 = vcmp.gt.f32.partialorder %v613, 0.0
        %vm867 = vcmp.gt.f32.partialorder %v618, 0.0
        %vm868 = vcmp.gt.f32.partialorder %v621, 0.0
        %vm869 = vcmp.gt.f32.partialorder %v626, 0.0
        %vm870 = vcmp.gt.f32.partialorder %v629, 0.0
        %vm871 = vcmp.gt.f32.partialorder %v634, 0.0
        %vm872 = vcmp.gt.f32.partialorder %v637, 0.0
        %vm873 = vcmp.gt.f32.partialorder %v642, 0.0
        %vm874 = vcmp.gt.f32.partialorder %v645, 0.0
        %vm875 = vcmp.gt.f32.partialorder %v650, 0.0
        %vm876 = vcmp.gt.f32.partialorder %v653, 0.0
        %vm877 = vcmp.gt.f32.partialorder %v658, 0.0
        %vm878 = vcmp.gt.f32.partialorder %v661, 0.0
        %vm879 = vcmp.gt.f32.partialorder %v666, 0.0
        %vm880 = vcmp.gt.f32.partialorder %v669, 0.0
        %vm881 = vcmp.gt.f32.partialorder %v674, 0.0
        %vm882 = vcmp.gt.f32.partialorder %v677, 0.0
        %vm883 = vcmp.gt.f32.partialorder %v682, 0.0
        %vm884 = vcmp.gt.f32.partialorder %v685, 0.0
        %vm885 = vcmp.gt.f32.partialorder %v690, 0.0
        %vm886 = vcmp.gt.f32.partialorder %v693, 0.0
        %vm887 = vcmp.gt.f32.partialorder %v698, 0.0
        %vm888 = vcmp.gt.f32.partialorder %v701, 0.0
        %vm889 = vcmp.gt.f32.partialorder %v706, 0.0
        %vm890 = vcmp.gt.f32.partialorder %v709, 0.0
        %vm891 = vcmp.gt.f32.partialorder %v714, 0.0
        %vm892 = vcmp.gt.f32.partialorder %v717, 0.0
        %vm893 = vcmp.gt.f32.partialorder %v722, 0.0
        %vm894 = vcmp.gt.f32.partialorder %v725, 0.0
        %vm895 = vcmp.gt.f32.partialorder %v730, 0.0
        %vm896 = vcmp.gt.f32.partialorder %v733, 0.0
        %vm897 = vcmp.gt.f32.partialorder %v738, 0.0
        %vm898 = vcmp.gt.f32.partialorder %v741, 0.0
        %vm899 = vcmp.gt.f32.partialorder %v746, 0.0
        %vm900 = vcmp.gt.f32.partialorder %v749, 0.0
        %vm901 = vcmp.gt.f32.partialorder %v754, 0.0
        %vm902 = vcmp.gt.f32.partialorder %v757, 0.0
        %vm903 = vcmp.gt.f32.partialorder %v762, 0.0
        %vm904 = vcmp.gt.f32.partialorder %v765, 0.0
        %vm905 = vcmp.gt.f32.partialorder %v770, 0.0
        %vm906 = vcmp.gt.f32.partialorder %v773, 0.0
        %vm907 = vcmp.gt.f32.partialorder %v778, 0.0
        %vm908 = vcmp.gt.f32.partialorder %v781, 0.0
        %vm909 = vcmp.gt.f32.partialorder %v786, 0.0
        %vm910 = vcmp.gt.f32.partialorder %v789, 0.0
        %vm911 = vcmp.gt.f32.partialorder %v794, 0.0
        %vm912 = vcmp.gt.f32.partialorder %v797, 0.0
        %vm913 = vcmp.gt.f32.partialorder %v802, 0.0
        %vm914 = vcmp.gt.f32.partialorder %v805, 0.0
        %vm915 = vcmp.gt.f32.partialorder %v810, 0.0
        %vm916 = vcmp.gt.f32.partialorder %v813, 0.0
        %vm917 = vcmp.gt.f32.partialorder %v818, 0.0
        %vm918 = vcmp.gt.f32.partialorder %v821, 0.0
        %vm919 = vcmp.gt.f32.partialorder %v826, 0.0
        %vm920 = vcmp.gt.f32.partialorder %v829, 0.0
        %vm921 = vcmp.gt.f32.partialorder %v834, 0.0
        %vm922 = vcmp.gt.f32.partialorder %v837, 0.0
        %vm923 = vcmp.gt.f32.partialorder %v842, 0.0
        %vm924 = vcmp.gt.f32.partialorder %v845, 0.0
        %vm925 = vcmp.gt.f32.partialorder %v850, 0.0
        %vm926 = vcmp.gt.f32.partialorder %v853, 0.0
        %vm927 = vcmp.gt.f32.partialorder %v858, 0.0
        %vm928 = vcmp.gt.f32.partialorder %v861, 0.0
        %v929 = vstv %s864
        %v930 = vmul.f32 %v929, %v610
        %v931 = vmul.f32 %v929, %v613
        %v932 = vmul.f32 %v929, %v618
        %v933 = vmul.f32 %v929, %v621
        %v934 = vmul.f32 %v929, %v626
        %v935 = vmul.f32 %v929, %v629
        %v936 = vmul.f32 %v929, %v634
        %v937 = vmul.f32 %v929, %v637
        %v938 = vmul.f32 %v929, %v642
        %v939 = vmul.f32 %v929, %v645
        %v940 = vmul.f32 %v929, %v650
        %v941 = vmul.f32 %v929, %v653
        %v942 = vmul.f32 %v929, %v658
        %v943 = vmul.f32 %v929, %v661
        %v944 = vmul.f32 %v929, %v666
        %v945 = vmul.f32 %v929, %v669
        %v946 = vmul.f32 %v929, %v674
        %v947 = vmul.f32 %v929, %v677
        %v948 = vmul.f32 %v929, %v682
        %v949 = vmul.f32 %v929, %v685
        %v950 = vmul.f32 %v929, %v690
        %v951 = vmul.f32 %v929, %v693
        %v952 = vmul.f32 %v929, %v698
        %v953 = vmul.f32 %v929, %v701
        %v954 = vmul.f32 %v929, %v706
        %v955 = vmul.f32 %v929, %v709
        %v956 = vmul.f32 %v929, %v714
        %v957 = vmul.f32 %v929, %v717
        %v958 = vmul.f32 %v929, %v722
        %v959 = vmul.f32 %v929, %v725
        %v960 = vmul.f32 %v929, %v730
        %v961 = vmul.f32 %v929, %v733
        %v962 = vmul.f32 %v929, %v738
        %v963 = vmul.f32 %v929, %v741
        %v964 = vmul.f32 %v929, %v746
        %v965 = vmul.f32 %v929, %v749
        %v966 = vmul.f32 %v929, %v754
        %v967 = vmul.f32 %v929, %v757
        %v968 = vmul.f32 %v929, %v762
        %v969 = vmul.f32 %v929, %v765
        %v970 = vmul.f32 %v929, %v770
        %v971 = vmul.f32 %v929, %v773
        %v972 = vmul.f32 %v929, %v778
        %v973 = vmul.f32 %v929, %v781
        %v974 = vmul.f32 %v929, %v786
        %v975 = vmul.f32 %v929, %v789
        %v976 = vmul.f32 %v929, %v794
        %v977 = vmul.f32 %v929, %v797
        %v978 = vmul.f32 %v929, %v802
        %v979 = vmul.f32 %v929, %v805
        %v980 = vmul.f32 %v929, %v810
        %v981 = vmul.f32 %v929, %v813
        %v982 = vmul.f32 %v929, %v818
        %v983 = vmul.f32 %v929, %v821
        %v984 = vmul.f32 %v929, %v826
        %v985 = vmul.f32 %v929, %v829
        %v986 = vmul.f32 %v929, %v834
        %v987 = vmul.f32 %v929, %v837
        %v988 = vmul.f32 %v929, %v842
        %v989 = vmul.f32 %v929, %v845
        %v990 = vmul.f32 %v929, %v850
        %v991 = vmul.f32 %v929, %v853
        %v992 = vmul.f32 %v929, %v858
        %v993 = vmul.f32 %v929, %v861
        %v994 = vsel %vm865, %v610, %v930
        %v995 = vsel %vm866, %v613, %v931
        %v996 = vsel %vm867, %v618, %v932
        %v997 = vsel %vm868, %v621, %v933
        %v998 = vsel %vm869, %v626, %v934
        %v999 = vsel %vm870, %v629, %v935
        %v1000 = vsel %vm871, %v634, %v936
        %v1001 = vsel %vm872, %v637, %v937
        %v1002 = vsel %vm873, %v642, %v938
        %v1003 = vsel %vm874, %v645, %v939
        %v1004 = vsel %vm875, %v650, %v940
        %v1005 = vsel %vm876, %v653, %v941
        %v1006 = vsel %vm877, %v658, %v942
        %v1007 = vsel %vm878, %v661, %v943
        %v1008 = vsel %vm879, %v666, %v944
        %v1009 = vsel %vm880, %v669, %v945
        %v1010 = vsel %vm881, %v674, %v946
        %v1011 = vsel %vm882, %v677, %v947
        %v1012 = vsel %vm883, %v682, %v948
        %v1013 = vsel %vm884, %v685, %v949
        %v1014 = vsel %vm885, %v690, %v950
        %v1015 = vsel %vm886, %v693, %v951
        %v1016 = vsel %vm887, %v698, %v952
        %v1017 = vsel %vm888, %v701, %v953
        %v1018 = vsel %vm889, %v706, %v954
        %v1019 = vsel %vm890, %v709, %v955
        %v1020 = vsel %vm891, %v714, %v956
        %v1021 = vsel %vm892, %v717, %v957
        %v1022 = vsel %vm893, %v722, %v958
        %v1023 = vsel %vm894, %v725, %v959
        %v1024 = vsel %vm895, %v730, %v960
        %v1025 = vsel %vm896, %v733, %v961
        %v1026 = vsel %vm897, %v738, %v962
        %v1027 = vsel %vm898, %v741, %v963
        %v1028 = vsel %vm899, %v746, %v964
        %v1029 = vsel %vm900, %v749, %v965
        %v1030 = vsel %vm901, %v754, %v966
        %v1031 = vsel %vm902, %v757, %v967
        %v1032 = vsel %vm903, %v762, %v968
        %v1033 = vsel %vm904, %v765, %v969
        %v1034 = vsel %vm905, %v770, %v970
        %v1035 = vsel %vm906, %v773, %v971
        %v1036 = vsel %vm907, %v778, %v972
        %v1037 = vsel %vm908, %v781, %v973
        %v1038 = vsel %vm909, %v786, %v974
        %v1039 = vsel %vm910, %v789, %v975
        %v1040 = vsel %vm911, %v794, %v976
        %v1041 = vsel %vm912, %v797, %v977
        %v1042 = vsel %vm913, %v802, %v978
        %v1043 = vsel %vm914, %v805, %v979
        %v1044 = vsel %vm915, %v810, %v980
        %v1045 = vsel %vm916, %v813, %v981
        %v1046 = vsel %vm917, %v818, %v982
        %v1047 = vsel %vm918, %v821, %v983
        %v1048 = vsel %vm919, %v826, %v984
        %v1049 = vsel %vm920, %v829, %v985
        %v1050 = vsel %vm921, %v834, %v986
        %v1051 = vsel %vm922, %v837, %v987
        %v1052 = vsel %vm923, %v842, %v988
        %v1053 = vsel %vm924, %v845, %v989
        %v1054 = vsel %vm925, %v850, %v990
        %v1055 = vsel %vm926, %v853, %v991
        %v1056 = vsel %vm927, %v858, %v992
        %v1057 = vsel %vm928, %v861, %v993
        %v1058 = vpack.c.bf16 %v995, %v994
        %v1059 = vpack.c.bf16 %v997, %v996
        %v1060 = vpack.c.bf16 %v999, %v998
        %v1061 = vpack.c.bf16 %v1001, %v1000
        %v1062 = vpack.c.bf16 %v1003, %v1002
        %v1063 = vpack.c.bf16 %v1005, %v1004
        %v1064 = vpack.c.bf16 %v1007, %v1006
        %v1065 = vpack.c.bf16 %v1009, %v1008
        %v1066 = vpack.c.bf16 %v1011, %v1010
        %v1067 = vpack.c.bf16 %v1013, %v1012
        %v1068 = vpack.c.bf16 %v1015, %v1014
        %v1069 = vpack.c.bf16 %v1017, %v1016
        %v1070 = vpack.c.bf16 %v1019, %v1018
        %v1071 = vpack.c.bf16 %v1021, %v1020
        %v1072 = vpack.c.bf16 %v1023, %v1022
        %v1073 = vpack.c.bf16 %v1025, %v1024
        %v1074 = vpack.c.bf16 %v1027, %v1026
        %v1075 = vpack.c.bf16 %v1029, %v1028
        %v1076 = vpack.c.bf16 %v1031, %v1030
        %v1077 = vpack.c.bf16 %v1033, %v1032
        %v1078 = vpack.c.bf16 %v1035, %v1034
        %v1079 = vpack.c.bf16 %v1037, %v1036
        %v1080 = vpack.c.bf16 %v1039, %v1038
        %v1081 = vpack.c.bf16 %v1041, %v1040
        %v1082 = vpack.c.bf16 %v1043, %v1042
        %v1083 = vpack.c.bf16 %v1045, %v1044
        %v1084 = vpack.c.bf16 %v1047, %v1046
        %v1085 = vpack.c.bf16 %v1049, %v1048
        %v1086 = vpack.c.bf16 %v1051, %v1050
        %v1087 = vpack.c.bf16 %v1053, %v1052
        %v1088 = vpack.c.bf16 %v1055, %v1054
        %v1089 = vpack.c.bf16 %v1057, %v1056
        %v1122 = vunpack.c.l.b16 %v1058
        %v1123 = vunpack.c.h.b16 %v1058
        %v1124 = vunpack.c.l.b16 %v1059
        %v1125 = vunpack.c.h.b16 %v1059
        %v1126 = vunpack.c.l.b16 %v1060
        %v1127 = vunpack.c.h.b16 %v1060
        %v1128 = vunpack.c.l.b16 %v1061
        %v1129 = vunpack.c.h.b16 %v1061
        %v1130 = vunpack.c.l.b16 %v1062
        %v1131 = vunpack.c.h.b16 %v1062
        %v1132 = vunpack.c.l.b16 %v1063
        %v1133 = vunpack.c.h.b16 %v1063
        %v1134 = vunpack.c.l.b16 %v1064
        %v1135 = vunpack.c.h.b16 %v1064
        %v1136 = vunpack.c.l.b16 %v1065
        %v1137 = vunpack.c.h.b16 %v1065
        %v1138 = vunpack.c.l.b16 %v1066
        %v1139 = vunpack.c.h.b16 %v1066
        %v1140 = vunpack.c.l.b16 %v1067
        %v1141 = vunpack.c.h.b16 %v1067
        %v1142 = vunpack.c.l.b16 %v1068
        %v1143 = vunpack.c.h.b16 %v1068
        %v1144 = vunpack.c.l.b16 %v1069
        %v1145 = vunpack.c.h.b16 %v1069
        %v1146 = vunpack.c.l.b16 %v1070
        %v1147 = vunpack.c.h.b16 %v1070
        %v1148 = vunpack.c.l.b16 %v1071
        %v1149 = vunpack.c.h.b16 %v1071
        %v1150 = vunpack.c.l.b16 %v1072
        %v1151 = vunpack.c.h.b16 %v1072
        %v1152 = vunpack.c.l.b16 %v1073
        %v1153 = vunpack.c.h.b16 %v1073
        %v1154 = vunpack.c.l.b16 %v1074
        %v1155 = vunpack.c.h.b16 %v1074
        %v1156 = vunpack.c.l.b16 %v1075
        %v1157 = vunpack.c.h.b16 %v1075
        %v1158 = vunpack.c.l.b16 %v1076
        %v1159 = vunpack.c.h.b16 %v1076
        %v1160 = vunpack.c.l.b16 %v1077
        %v1161 = vunpack.c.h.b16 %v1077
        %v1162 = vunpack.c.l.b16 %v1078
        %v1163 = vunpack.c.h.b16 %v1078
        %v1164 = vunpack.c.l.b16 %v1079
        %v1165 = vunpack.c.h.b16 %v1079
        %v1166 = vunpack.c.l.b16 %v1080
        %v1167 = vunpack.c.h.b16 %v1080
        %v1168 = vunpack.c.l.b16 %v1081
        %v1169 = vunpack.c.h.b16 %v1081
        %v1170 = vunpack.c.l.b16 %v1082
        %v1171 = vunpack.c.h.b16 %v1082
        %v1172 = vunpack.c.l.b16 %v1083
        %v1173 = vunpack.c.h.b16 %v1083
        %v1174 = vunpack.c.l.b16 %v1084
        %v1175 = vunpack.c.h.b16 %v1084
        %v1176 = vunpack.c.l.b16 %v1085
        %v1177 = vunpack.c.h.b16 %v1085
        %v1178 = vunpack.c.l.b16 %v1086
        %v1179 = vunpack.c.h.b16 %v1086
        %v1180 = vunpack.c.l.b16 %v1087
        %v1181 = vunpack.c.h.b16 %v1087
        %v1182 = vunpack.c.l.b16 %v1088
        %v1183 = vunpack.c.h.b16 %v1088
        %v1184 = vunpack.c.l.b16 %v1089
        %v1185 = vunpack.c.h.b16 %v1089
        %v1186 = vpack.c.b16 %v1122, %v1122
        %v1187 = vpack.c.b16 %v1123, %v1123
        %v1188 = vpack.c.b16 %v1124, %v1124
        %v1189 = vpack.c.b16 %v1125, %v1125
        %v1190 = vpack.c.b16 %v1126, %v1126
        %v1191 = vpack.c.b16 %v1127, %v1127
        %v1192 = vpack.c.b16 %v1128, %v1128
        %v1193 = vpack.c.b16 %v1129, %v1129
        %v1194 = vpack.c.b16 %v1130, %v1130
        %v1195 = vpack.c.b16 %v1131, %v1131
        %v1196 = vpack.c.b16 %v1132, %v1132
        %v1197 = vpack.c.b16 %v1133, %v1133
        %v1198 = vpack.c.b16 %v1134, %v1134
        %v1199 = vpack.c.b16 %v1135, %v1135
        %v1200 = vpack.c.b16 %v1136, %v1136
        %v1201 = vpack.c.b16 %v1137, %v1137
        %v1202 = vpack.c.b16 %v1138, %v1138
        %v1203 = vpack.c.b16 %v1139, %v1139
        %v1204 = vpack.c.b16 %v1140, %v1140
        %v1205 = vpack.c.b16 %v1141, %v1141
        %v1206 = vpack.c.b16 %v1142, %v1142
        %v1207 = vpack.c.b16 %v1143, %v1143
        %v1208 = vpack.c.b16 %v1144, %v1144
        %v1209 = vpack.c.b16 %v1145, %v1145
        %v1210 = vpack.c.b16 %v1146, %v1146
        %v1211 = vpack.c.b16 %v1147, %v1147
        %v1212 = vpack.c.b16 %v1148, %v1148
        %v1213 = vpack.c.b16 %v1149, %v1149
        %v1214 = vpack.c.b16 %v1150, %v1150
        %v1215 = vpack.c.b16 %v1151, %v1151
        %v1216 = vpack.c.b16 %v1152, %v1152
        %v1217 = vpack.c.b16 %v1153, %v1153
        %v1218 = vpack.c.b16 %v1154, %v1154
        %v1219 = vpack.c.b16 %v1155, %v1155
        %v1220 = vpack.c.b16 %v1156, %v1156
        %v1221 = vpack.c.b16 %v1157, %v1157
        %v1222 = vpack.c.b16 %v1158, %v1158
        %v1223 = vpack.c.b16 %v1159, %v1159
        %v1224 = vpack.c.b16 %v1160, %v1160
        %v1225 = vpack.c.b16 %v1161, %v1161
        %v1226 = vpack.c.b16 %v1162, %v1162
        %v1227 = vpack.c.b16 %v1163, %v1163
        %v1228 = vpack.c.b16 %v1164, %v1164
        %v1229 = vpack.c.b16 %v1165, %v1165
        %v1230 = vpack.c.b16 %v1166, %v1166
        %v1231 = vpack.c.b16 %v1167, %v1167
        %v1232 = vpack.c.b16 %v1168, %v1168
        %v1233 = vpack.c.b16 %v1169, %v1169
        %v1234 = vpack.c.b16 %v1170, %v1170
        %v1235 = vpack.c.b16 %v1171, %v1171
        %v1236 = vpack.c.b16 %v1172, %v1172
        %v1237 = vpack.c.b16 %v1173, %v1173
        %v1238 = vpack.c.b16 %v1174, %v1174
        %v1239 = vpack.c.b16 %v1175, %v1175
        %v1240 = vpack.c.b16 %v1176, %v1176
        %v1241 = vpack.c.b16 %v1177, %v1177
        %v1242 = vpack.c.b16 %v1178, %v1178
        %v1243 = vpack.c.b16 %v1179, %v1179
        %v1244 = vpack.c.b16 %v1180, %v1180
        %v1245 = vpack.c.b16 %v1181, %v1181
        %v1246 = vpack.c.b16 %v1182, %v1182
        %v1247 = vpack.c.b16 %v1183, %v1183
        %v1248 = vpack.c.b16 %v1184, %v1184
        %v1249 = vpack.c.b16 %v1185, %v1185
        %vm1314 = vcmask 519168
        %1315 = vst.msk [vmem:[%s228] sm:$0xf] %vm1314, %v1186
        %1316 = vst.msk [vmem:[%s228 + $0x4] sm:$0xf] %vm1314, %v1187
        %1317 = vst.msk [vmem:[%s228 + $0x8] sm:$0xf] %vm1314, %v1188
        %1318 = vst.msk [vmem:[%s228 + $0xc] sm:$0xf] %vm1314, %v1189
        %1319 = vst.msk [vmem:[%s228 + $0x10] sm:$0xf] %vm1314, %v1190
        %1320 = vst.msk [vmem:[%s228 + $0x14] sm:$0xf] %vm1314, %v1191
        %1321 = vst.msk [vmem:[%s228 + $0x18] sm:$0xf] %vm1314, %v1192
        %1322 = vst.msk [vmem:[%s228 + $0x1c] sm:$0xf] %vm1314, %v1193
        %1323 = vst.msk [vmem:[%s228 + $0x20] sm:$0xf] %vm1314, %v1194
        %1324 = vst.msk [vmem:[%s228 + $0x24] sm:$0xf] %vm1314, %v1195
        %1325 = vst.msk [vmem:[%s228 + $0x28] sm:$0xf] %vm1314, %v1196
        %1326 = vst.msk [vmem:[%s228 + $0x2c] sm:$0xf] %vm1314, %v1197
        %1327 = vst.msk [vmem:[%s228 + $0x30] sm:$0xf] %vm1314, %v1198
        %1328 = vst.msk [vmem:[%s228 + $0x34] sm:$0xf] %vm1314, %v1199
        %1329 = vst.msk [vmem:[%s228 + $0x38] sm:$0xf] %vm1314, %v1200
        %1330 = vst.msk [vmem:[%s228 + $0x3c] sm:$0xf] %vm1314, %v1201
        %1331 = vst.msk [vmem:[%s228 + $0x40] sm:$0xf] %vm1314, %v1202
        %1332 = vst.msk [vmem:[%s228 + $0x44] sm:$0xf] %vm1314, %v1203
        %1333 = vst.msk [vmem:[%s228 + $0x48] sm:$0xf] %vm1314, %v1204
        %1334 = vst.msk [vmem:[%s228 + $0x4c] sm:$0xf] %vm1314, %v1205
        %1335 = vst.msk [vmem:[%s228 + $0x50] sm:$0xf] %vm1314, %v1206
        %1336 = vst.msk [vmem:[%s228 + $0x54] sm:$0xf] %vm1314, %v1207
        %1337 = vst.msk [vmem:[%s228 + $0x58] sm:$0xf] %vm1314, %v1208
        %1338 = vst.msk [vmem:[%s228 + $0x5c] sm:$0xf] %vm1314, %v1209
        %1339 = vst.msk [vmem:[%s228 + $0x60] sm:$0xf] %vm1314, %v1210
        %1340 = vst.msk [vmem:[%s228 + $0x64] sm:$0xf] %vm1314, %v1211
        %1341 = vst.msk [vmem:[%s228 + $0x68] sm:$0xf] %vm1314, %v1212
        %1342 = vst.msk [vmem:[%s228 + $0x6c] sm:$0xf] %vm1314, %v1213
        %1343 = vst.msk [vmem:[%s228 + $0x70] sm:$0xf] %vm1314, %v1214
        %1344 = vst.msk [vmem:[%s228 + $0x74] sm:$0xf] %vm1314, %v1215
        %1345 = vst.msk [vmem:[%s228 + $0x78] sm:$0xf] %vm1314, %v1216
        %1346 = vst.msk [vmem:[%s228 + $0x7c] sm:$0xf] %vm1314, %v1217
        %1347 = vst.msk [vmem:[%s228 + $0x80] sm:$0xf] %vm1314, %v1218
        %1348 = vst.msk [vmem:[%s228 + $0x84] sm:$0xf] %vm1314, %v1219
        %1349 = vst.msk [vmem:[%s228 + $0x88] sm:$0xf] %vm1314, %v1220
        %1350 = vst.msk [vmem:[%s228 + $0x8c] sm:$0xf] %vm1314, %v1221
        %1351 = vst.msk [vmem:[%s228 + $0x90] sm:$0xf] %vm1314, %v1222
        %1352 = vst.msk [vmem:[%s228 + $0x94] sm:$0xf] %vm1314, %v1223
        %1353 = vst.msk [vmem:[%s228 + $0x98] sm:$0xf] %vm1314, %v1224
        %1354 = vst.msk [vmem:[%s228 + $0x9c] sm:$0xf] %vm1314, %v1225
        %1355 = vst.msk [vmem:[%s228 + $0xa0] sm:$0xf] %vm1314, %v1226
        %1356 = vst.msk [vmem:[%s228 + $0xa4] sm:$0xf] %vm1314, %v1227
        %1357 = vst.msk [vmem:[%s228 + $0xa8] sm:$0xf] %vm1314, %v1228
        %1358 = vst.msk [vmem:[%s228 + $0xac] sm:$0xf] %vm1314, %v1229
        %1359 = vst.msk [vmem:[%s228 + $0xb0] sm:$0xf] %vm1314, %v1230
        %1360 = vst.msk [vmem:[%s228 + $0xb4] sm:$0xf] %vm1314, %v1231
        %1361 = vst.msk [vmem:[%s228 + $0xb8] sm:$0xf] %vm1314, %v1232
        %1362 = vst.msk [vmem:[%s228 + $0xbc] sm:$0xf] %vm1314, %v1233
        %1363 = vst.msk [vmem:[%s228 + $0xc0] sm:$0xf] %vm1314, %v1234
        %1364 = vst.msk [vmem:[%s228 + $0xc4] sm:$0xf] %vm1314, %v1235
        %1365 = vst.msk [vmem:[%s228 + $0xc8] sm:$0xf] %vm1314, %v1236
        %1366 = vst.msk [vmem:[%s228 + $0xcc] sm:$0xf] %vm1314, %v1237
        %1367 = vst.msk [vmem:[%s228 + $0xd0] sm:$0xf] %vm1314, %v1238
        %1368 = vst.msk [vmem:[%s228 + $0xd4] sm:$0xf] %vm1314, %v1239
        %1369 = vst.msk [vmem:[%s228 + $0xd8] sm:$0xf] %vm1314, %v1240
        %1370 = vst.msk [vmem:[%s228 + $0xdc] sm:$0xf] %vm1314, %v1241
        %1371 = vst.msk [vmem:[%s228 + $0xe0] sm:$0xf] %vm1314, %v1242
        %1372 = vst.msk [vmem:[%s228 + $0xe4] sm:$0xf] %vm1314, %v1243
        %1373 = vst.msk [vmem:[%s228 + $0xe8] sm:$0xf] %vm1314, %v1244
        %1374 = vst.msk [vmem:[%s228 + $0xec] sm:$0xf] %vm1314, %v1245
        %1375 = vst.msk [vmem:[%s228 + $0xf0] sm:$0xf] %vm1314, %v1246
        %1376 = vst.msk [vmem:[%s228 + $0xf4] sm:$0xf] %vm1314, %v1247
        %1377 = vst.msk [vmem:[%s228 + $0xf8] sm:$0xf] %vm1314, %v1248
        %1378 = vst.msk [vmem:[%s228 + $0xfc] sm:$0xf] %vm1314, %v1249
        %s1379 = smul.u32 64, %s18
        %p1380 = scmp.lt.s32.totalorder %s1379, 255
        %s1381 = scalar_select %p1380, %s1379, 255
        %s1382 = smul.addr %s1381, 4
        %s1383 = scalar_lea.vmem %s4, %s1382
        // Predicated region
        $region45: #{cifar10net_forward.7} parent=35 // pred_check
          %p1384 = pneg %p125
        $region46: #{cifar10net_forward.7} parent=35 // pred_check_branch
          %1386 = sbr.rel (%p1384) target = $region48
        $region47: #{cifar10net_forward.7} parent=35 // pred_region
          %s1387 = smul.u32 64, %s18
        $region48: #{cifar10net_forward.7} parent=35 // pred_fallthru
          _
      $region36: #{cifar10net_forward.7} parent=5 // pred_fallthru
        _
      %p1388 = scmp.le.s32.totalorder 2, %s13
      // Predicated region
      $region49: #{cifar10net_forward.7} parent=5 // pred_check
        %p1389 = pneg %p1388
      $region50: #{cifar10net_forward.7} parent=5 // pred_check_branch
        %1391 = sbr.rel (%p1389) target = $region52
      $region51: #{cifar10net_forward.7} parent=5 // pred_region
        %s1392 = ssub.s32 %s13, 2
        // Predicated region
        $region53: #{cifar10net_forward.7} parent=51 // pred_check
          %p1393 = pneg %p131
        $region54: #{cifar10net_forward.7} parent=51 // pred_check_branch
          %1395 = sbr.rel (%p1393) target = $region56
        $region55: #{cifar10net_forward.7} parent=51 // pred_region
          %s1396 = smul.u32 64, %s19
          %p1397 = scmp.lt.s32.totalorder %s1396, 255
          %s1398 = scalar_select %p1397, %s1396, 255
          %s1399 = smul.addr %s1398, 4
          %s1400 = scalar_lea.vmem %s4, %s1399
        $region56: #{cifar10net_forward.7} parent=51 // pred_fallthru
          _
      $region52: #{cifar10net_forward.7} parent=5 // pred_fallthru
        _
    $region6: #{cifar10net_forward.7} parent=1 // loop_footer
      %s17 = sadd.s32 1, %s13
    $region7: #{cifar10net_forward.7} parent=1 // loop_footer_branch
      %12 = sbr.rel target = $region3
    $region8: #{cifar10net_forward.7} parent=1 // loop_exit
      _
    %1401 = vsyncpa [#allocation4], 1
    %s1402 = scalar_lea.sflag [#allocation4], 1
    %1403 = vsyncpa %s1402, 1
    %1404 = vsyncpa [#allocation6], 1

// kernel: cifar10net_forward.8
$region0: #{cifar10net_forward.8}
  #allocation0 [shape = 'u32[]', space=smem, size = 0x4, offset = 0x4, fixed_abs, tag = 'smem constant byte address 0x4 - core index']
  #allocation1 [shape = 'u32[144,128]{1,0:T(1,128)}', space=vmem, size = 0x12000, scoped, tag = 'internal scratch']
  %s0 = inlined_call_operand.vmem [shape: bf16[32,2,16,128], index: 0, kind: input, shape index: {}]
  %s1 = inlined_call_operand.vmem [shape: bf16[32,16,64], index: 1, kind: output, shape index: {}]
  %s2 = sld [smem:[#allocation0]]
  $region37: #{cifar10net_forward.8} parent=0
    _
  %s4 = ssub.s32 1, %s2
  %s5 = scalar_select 0, %s4, %s2
  loop: start=0, step=1, limit=4
  $region2: #{cifar10net_forward.8} parent=0 // loop_pre_header
    _
  $region3: #{cifar10net_forward.8} parent=0 // loop_header
    %s7 = sphi 0, %s11
    %p8 = scmp.ge.s32.totalorder %s7, 4
    %s17 = sphi 0, %s19
    %s20 = sphi 0, %s17
    %s21 = sphi 0, %s20
    %s37 = sphi 0, %s21
    %s43 = sphi 0, %s45
    %s46 = sphi 0, %s43
    %s47 = sphi 0, %s46
    %s63 = sphi 0, %s47
  $region4: #{cifar10net_forward.8} parent=0 // loop_header_branch
    %10 = sbr.rel (%p8) target = $region8
  $region5: #{cifar10net_forward.8} parent=0 // loop_body
    %s12 = ssub.s32 %s7, 1
    %s13 = ssub.s32 %s7, 2
    %s14 = sadd.s32 %s7, 1
    %s15 = ssub.s32 %s7, %s14
    %p16 = scmp.eq.s32.totalorder %s15, 0
    %s18 = sadd.s32 %s17, 1
    %s19 = scalar_select %p16, %s17, %s18
    %p22 = pneg %p16
    %p23 = scmp.eq.s32.totalorder %s7, 1
    %p24 = por %p22, %p23
    %p25 = scmp.ne.s32.totalorder %s17, %s20
    %p26 = scmp.eq.s32.totalorder %s7, 0
    %p27 = por %p25, %p26
    %p28 = scmp.ne.s32.totalorder %s17, %s20
    %p29 = scmp.eq.s32.totalorder %s12, 1
    %p30 = por %p28, %p29
    %p31 = scmp.ne.s32.totalorder %s20, %s21
    %p32 = scmp.eq.s32.totalorder %s12, 0
    %p33 = por %p31, %p32
    %p34 = scmp.ne.s32.totalorder %s20, %s21
    %p35 = scmp.eq.s32.totalorder %s13, 1
    %p36 = por %p34, %p35
    %p38 = scmp.ne.s32.totalorder %s21, %s37
    %p39 = scmp.eq.s32.totalorder %s13, 0
    %p40 = por %p38, %p39
    %s41 = ssub.s32 %s7, %s14
    %p42 = scmp.eq.s32.totalorder %s41, 0
    %s44 = sadd.s32 %s43, 1
    %s45 = scalar_select %p42, %s43, %s44
    %p48 = pneg %p42
    %p49 = scmp.eq.s32.totalorder %s7, 1
    %p50 = por %p48, %p49
    %p51 = scmp.ne.s32.totalorder %s43, %s46
    %p52 = scmp.eq.s32.totalorder %s7, 0
    %p53 = por %p51, %p52
    %p54 = scmp.ne.s32.totalorder %s43, %s46
    %p55 = scmp.eq.s32.totalorder %s12, 1
    %p56 = por %p54, %p55
    %p57 = scmp.ne.s32.totalorder %s46, %s47
    %p58 = scmp.eq.s32.totalorder %s12, 0
    %p59 = por %p57, %p58
    %p60 = scmp.ne.s32.totalorder %s46, %s47
    %p61 = scmp.eq.s32.totalorder %s13, 1
    %p62 = por %p60, %p61
    %p64 = scmp.ne.s32.totalorder %s47, %s63
    %p65 = scmp.eq.s32.totalorder %s13, 0
    %p66 = por %p64, %p65
    %p67 = scmp.le.s32.totalorder 1, %s7
    %p68 = scmp.lt.s32.totalorder %s7, 3
    %p69 = pnand %p67, %p68
    %p70 = pneg %p69
    // Predicated region
    $region9: #{cifar10net_forward.8} parent=5 // pred_check
      _
    $region10: #{cifar10net_forward.8} parent=5 // pred_check_branch
      %72 = sbr.rel (%p69) target = $region12
    $region11: #{cifar10net_forward.8} parent=5 // pred_region
      %s73 = ssub.s32 %s7, 1
    $region12: #{cifar10net_forward.8} parent=5 // pred_fallthru
      _
    %p74 = scmp.lt.s32.totalorder %s7, 2
    // Predicated region
    $region13: #{cifar10net_forward.8} parent=5 // pred_check
      %p75 = pneg %p74
    $region14: #{cifar10net_forward.8} parent=5 // pred_check_branch
      %77 = sbr.rel (%p75) target = $region16
    $region15: #{cifar10net_forward.8} parent=5 // pred_region
      // Predicated region
      $region17: #{cifar10net_forward.8} parent=15 // pred_check
        %p78 = pneg %p27
      $region18: #{cifar10net_forward.8} parent=15 // pred_check_branch
        %80 = sbr.rel (%p78) target = $region20
      $region19: #{cifar10net_forward.8} parent=15 // pred_region
        %s81 = smul.u32 16, %s7
        %p82 = scmp.lt.s32.totalorder %s81, 31
        %s83 = scalar_select %p82, %s81, 31
        %s84 = smul.addr %s83, 4
        %s85 = smul.addr %s84, 4
        %s86 = scalar_lea.vmem %s0, %s85
        %s87 = smul.u32 16, %s7
      $region20: #{cifar10net_forward.8} parent=15 // pred_fallthru
        _
    $region16: #{cifar10net_forward.8} parent=5 // pred_fallthru
      _
    %p88 = scmp.le.s32.totalorder 1, %s7
    %p89 = scmp.lt.s32.totalorder %s7, 3
    %p90 = pnand %p88, %p89
    %p91 = pneg %p90
    // Predicated region
    $region21: #{cifar10net_forward.8} parent=5 // pred_check
      _
    $region22: #{cifar10net_forward.8} parent=5 // pred_check_branch
      %93 = sbr.rel (%p90) target = $region24
    $region23: #{cifar10net_forward.8} parent=5 // pred_region
      %s94 = ssub.s32 %s7, 1
      %s95 = smul.u32 16, %s12
      %p96 = scmp.lt.s32.totalorder %s95, 31
      %s97 = scalar_select %p96, %s95, 31
      %s98 = smul.addr %s97, 4
      %s99 = smul.addr %s98, 4
      %s100 = scalar_lea.vmem %s0, %s99
      %p101 = pneg %p33
      %p102 = pneg %p30
      %p103 = pneg %p59
      %p104 = pneg %p56
      %s105 = smul.u32 16, %s12
      %p106 = scmp.lt.s32.totalorder %s105, 31
      %s107 = scalar_select %p106, %s105, 31
      %s108 = smul.addr %s107, 2
      %s109 = smul.addr %s108, 4
      %s110 = scalar_lea.vmem %s1, %s109
      %s111 = smul.u32 16, %s12
      %p112 = scmp.lt.s32.totalorder %s111, 31
      %s113 = scalar_select %p112, %s111, 31
      %s114 = smul.addr %s113, 4
      %s115 = smul.addr %s114, 4
      %s116 = scalar_lea.vmem %s0, %s115
      %s117 = smul.u32 16, %s12
      %s118 = smul.u32 16, %s12
      %p119 = scmp.lt.s32.totalorder %s118, 31
      %s120 = scalar_select %p119, %s118, 31
      %s121 = smul.addr %s120, 2
      %s122 = smul.addr %s121, 4
      %s123 = scalar_lea.vmem %s1, %s122
      %s124 = smul.u32 16, %s12
      %v125 = vld [vmem:[%s116] sm:$0xf]
      %v126 = vld [vmem:[%s116 + $0x4] sm:$0xf]
      %v127 = vld [vmem:[%s116 + $0x10] sm:$0xf]
      %v128 = vld [vmem:[%s116 + $0x14] sm:$0xf]
      %v129 = vld [vmem:[%s116 + $0x20] sm:$0xf]
      %v130 = vld [vmem:[%s116 + $0x24] sm:$0xf]
      %v131 = vld [vmem:[%s116 + $0x30] sm:$0xf]
      %v132 = vld [vmem:[%s116 + $0x34] sm:$0xf]
      %v133 = vld [vmem:[%s116 + $0x40] sm:$0xf]
      %v134 = vld [vmem:[%s116 + $0x44] sm:$0xf]
      %v135 = vld [vmem:[%s116 + $0x50] sm:$0xf]
      %v136 = vld [vmem:[%s116 + $0x54] sm:$0xf]
      %v137 = vld [vmem:[%s116 + $0x60] sm:$0xf]
      %v138 = vld [vmem:[%s116 + $0x64] sm:$0xf]
      %v139 = vld [vmem:[%s116 + $0x70] sm:$0xf]
      %v140 = vld [vmem:[%s116 + $0x74] sm:$0xf]
      %v141 = vld [vmem:[%s116 + $0x80] sm:$0xf]
      %v142 = vld [vmem:[%s116 + $0x84] sm:$0xf]
      %v143 = vld [vmem:[%s116 + $0x90] sm:$0xf]
      %v144 = vld [vmem:[%s116 + $0x94] sm:$0xf]
      %v145 = vld [vmem:[%s116 + $0xa0] sm:$0xf]
      %v146 = vld [vmem:[%s116 + $0xa4] sm:$0xf]
      %v147 = vld [vmem:[%s116 + $0xb0] sm:$0xf]
      %v148 = vld [vmem:[%s116 + $0xb4] sm:$0xf]
      %v149 = vld [vmem:[%s116 + $0xc0] sm:$0xf]
      %v150 = vld [vmem:[%s116 + $0xc4] sm:$0xf]
      %v151 = vld [vmem:[%s116 + $0xd0] sm:$0xf]
      %v152 = vld [vmem:[%s116 + $0xd4] sm:$0xf]
      %v153 = vld [vmem:[%s116 + $0xe0] sm:$0xf]
      %v154 = vld [vmem:[%s116 + $0xe4] sm:$0xf]
      %v155 = vld [vmem:[%s116 + $0xf0] sm:$0xf]
      %v156 = vld [vmem:[%s116 + $0xf4] sm:$0xf]
      %s157 = scalar_lea.vmem %s116, 8
      %v158 = vld [vmem:[%s157] sm:$0xf]
      %v159 = vld [vmem:[%s157 + $0x4] sm:$0xf]
      %v160 = vld [vmem:[%s157 + $0x10] sm:$0xf]
      %v161 = vld [vmem:[%s157 + $0x14] sm:$0xf]
      %v162 = vld [vmem:[%s157 + $0x20] sm:$0xf]
      %v163 = vld [vmem:[%s157 + $0x24] sm:$0xf]
      %v164 = vld [vmem:[%s157 + $0x30] sm:$0xf]
      %v165 = vld [vmem:[%s157 + $0x34] sm:$0xf]
      %v166 = vld [vmem:[%s157 + $0x40] sm:$0xf]
      %v167 = vld [vmem:[%s157 + $0x44] sm:$0xf]
      %v168 = vld [vmem:[%s157 + $0x50] sm:$0xf]
      %v169 = vld [vmem:[%s157 + $0x54] sm:$0xf]
      %v170 = vld [vmem:[%s157 + $0x60] sm:$0xf]
      %v171 = vld [vmem:[%s157 + $0x64] sm:$0xf]
      %v172 = vld [vmem:[%s157 + $0x70] sm:$0xf]
      %v173 = vld [vmem:[%s157 + $0x74] sm:$0xf]
      %v174 = vld [vmem:[%s157 + $0x80] sm:$0xf]
      %v175 = vld [vmem:[%s157 + $0x84] sm:$0xf]
      %v176 = vld [vmem:[%s157 + $0x90] sm:$0xf]
      %v177 = vld [vmem:[%s157 + $0x94] sm:$0xf]
      %v178 = vld [vmem:[%s157 + $0xa0] sm:$0xf]
      %v179 = vld [vmem:[%s157 + $0xa4] sm:$0xf]
      %v180 = vld [vmem:[%s157 + $0xb0] sm:$0xf]
      %v181 = vld [vmem:[%s157 + $0xb4] sm:$0xf]
      %v182 = vld [vmem:[%s157 + $0xc0] sm:$0xf]
      %v183 = vld [vmem:[%s157 + $0xc4] sm:$0xf]
      %v184 = vld [vmem:[%s157 + $0xd0] sm:$0xf]
      %v185 = vld [vmem:[%s157 + $0xd4] sm:$0xf]
      %v186 = vld [vmem:[%s157 + $0xe0] sm:$0xf]
      %v187 = vld [vmem:[%s157 + $0xe4] sm:$0xf]
      %v188 = vld [vmem:[%s157 + $0xf0] sm:$0xf]
      %v189 = vld [vmem:[%s157 + $0xf4] sm:$0xf]
      %v190 = vmax.bf16 %v125, %v158
      %v191 = vmax.bf16 %v126, %v159
      %v192 = vmax.bf16 %v127, %v160
      %v193 = vmax.bf16 %v128, %v161
      %v194 = vmax.bf16 %v129, %v162
      %v195 = vmax.bf16 %v130, %v163
      %v196 = vmax.bf16 %v131, %v164
      %v197 = vmax.bf16 %v132, %v165
      %v198 = vmax.bf16 %v133, %v166
      %v199 = vmax.bf16 %v134, %v167
      %v200 = vmax.bf16 %v135, %v168
      %v201 = vmax.bf16 %v136, %v169
      %v202 = vmax.bf16 %v137, %v170
      %v203 = vmax.bf16 %v138, %v171
      %v204 = vmax.bf16 %v139, %v172
      %v205 = vmax.bf16 %v140, %v173
      %v206 = vmax.bf16 %v141, %v174
      %v207 = vmax.bf16 %v142, %v175
      %v208 = vmax.bf16 %v143, %v176
      %v209 = vmax.bf16 %v144, %v177
      %v210 = vmax.bf16 %v145, %v178
      %v211 = vmax.bf16 %v146, %v179
      %v212 = vmax.bf16 %v147, %v180
      %v213 = vmax.bf16 %v148, %v181
      %v214 = vmax.bf16 %v149, %v182
      %v215 = vmax.bf16 %v150, %v183
      %v216 = vmax.bf16 %v151, %v184
      %v217 = vmax.bf16 %v152, %v185
      %v218 = vmax.bf16 %v153, %v186
      %v219 = vmax.bf16 %v154, %v187
      %v220 = vmax.bf16 %v155, %v188
      %v221 = vmax.bf16 %v156, %v189
      %254 = vrot.lane.b32.xlu0 %v190, 64
      %v255 = vpop.permute.xlu0 %254
      %256 = vrot.lane.b32.xlu0 %v191, 64
      %v257 = vpop.permute.xlu0 %256
      %258 = vrot.lane.b32.xlu0 %v192, 64
      %v259 = vpop.permute.xlu0 %258
      %260 = vrot.lane.b32.xlu0 %v193, 64
      %v261 = vpop.permute.xlu0 %260
      %262 = vrot.lane.b32.xlu0 %v194, 64
      %v263 = vpop.permute.xlu0 %262
      %264 = vrot.lane.b32.xlu0 %v195, 64
      %v265 = vpop.permute.xlu0 %264
      %266 = vrot.lane.b32.xlu0 %v196, 64
      %v267 = vpop.permute.xlu0 %266
      %268 = vrot.lane.b32.xlu0 %v197, 64
      %v269 = vpop.permute.xlu0 %268
      %270 = vrot.lane.b32.xlu0 %v198, 64
      %v271 = vpop.permute.xlu0 %270
      %272 = vrot.lane.b32.xlu0 %v199, 64
      %v273 = vpop.permute.xlu0 %272
      %274 = vrot.lane.b32.xlu0 %v200, 64
      %v275 = vpop.permute.xlu0 %274
      %276 = vrot.lane.b32.xlu0 %v201, 64
      %v277 = vpop.permute.xlu0 %276
      %278 = vrot.lane.b32.xlu0 %v202, 64
      %v279 = vpop.permute.xlu0 %278
      %280 = vrot.lane.b32.xlu0 %v203, 64
      %v281 = vpop.permute.xlu0 %280
      %282 = vrot.lane.b32.xlu0 %v204, 64
      %v283 = vpop.permute.xlu0 %282
      %284 = vrot.lane.b32.xlu0 %v205, 64
      %v285 = vpop.permute.xlu0 %284
      %286 = vrot.lane.b32.xlu0 %v206, 64
      %v287 = vpop.permute.xlu0 %286
      %288 = vrot.lane.b32.xlu0 %v207, 64
      %v289 = vpop.permute.xlu0 %288
      %290 = vrot.lane.b32.xlu0 %v208, 64
      %v291 = vpop.permute.xlu0 %290
      %292 = vrot.lane.b32.xlu0 %v209, 64
      %v293 = vpop.permute.xlu0 %292
      %294 = vrot.lane.b32.xlu0 %v210, 64
      %v295 = vpop.permute.xlu0 %294
      %296 = vrot.lane.b32.xlu0 %v211, 64
      %v297 = vpop.permute.xlu0 %296
      %298 = vrot.lane.b32.xlu0 %v212, 64
      %v299 = vpop.permute.xlu0 %298
      %300 = vrot.lane.b32.xlu0 %v213, 64
      %v301 = vpop.permute.xlu0 %300
      %302 = vrot.lane.b32.xlu0 %v214, 64
      %v303 = vpop.permute.xlu0 %302
      %304 = vrot.lane.b32.xlu0 %v215, 64
      %v305 = vpop.permute.xlu0 %304
      %306 = vrot.lane.b32.xlu0 %v216, 64
      %v307 = vpop.permute.xlu0 %306
      %308 = vrot.lane.b32.xlu0 %v217, 64
      %v309 = vpop.permute.xlu0 %308
      %310 = vrot.lane.b32.xlu0 %v218, 64
      %v311 = vpop.permute.xlu0 %310
      %312 = vrot.lane.b32.xlu0 %v219, 64
      %v313 = vpop.permute.xlu0 %312
      %314 = vrot.lane.b32.xlu0 %v220, 64
      %v315 = vpop.permute.xlu0 %314
      %316 = vrot.lane.b32.xlu0 %v221, 64
      %v317 = vpop.permute.xlu0 %316
      %v350 = vmax.bf16 %v190, %v255
      %v351 = vmax.bf16 %v191, %v257
      %v352 = vmax.bf16 %v192, %v259
      %v353 = vmax.bf16 %v193, %v261
      %v354 = vmax.bf16 %v194, %v263
      %v355 = vmax.bf16 %v195, %v265
      %v356 = vmax.bf16 %v196, %v267
      %v357 = vmax.bf16 %v197, %v269
      %v358 = vmax.bf16 %v198, %v271
      %v359 = vmax.bf16 %v199, %v273
      %v360 = vmax.bf16 %v200, %v275
      %v361 = vmax.bf16 %v201, %v277
      %v362 = vmax.bf16 %v202, %v279
      %v363 = vmax.bf16 %v203, %v281
      %v364 = vmax.bf16 %v204, %v283
      %v365 = vmax.bf16 %v205, %v285
      %v366 = vmax.bf16 %v206, %v287
      %v367 = vmax.bf16 %v207, %v289
      %v368 = vmax.bf16 %v208, %v291
      %v369 = vmax.bf16 %v209, %v293
      %v370 = vmax.bf16 %v210, %v295
      %v371 = vmax.bf16 %v211, %v297
      %v372 = vmax.bf16 %v212, %v299
      %v373 = vmax.bf16 %v213, %v301
      %v374 = vmax.bf16 %v214, %v303
      %v375 = vmax.bf16 %v215, %v305
      %v376 = vmax.bf16 %v216, %v307
      %v377 = vmax.bf16 %v217, %v309
      %v378 = vmax.bf16 %v218, %v311
      %v379 = vmax.bf16 %v219, %v313
      %v380 = vmax.bf16 %v220, %v315
      %v381 = vmax.bf16 %v221, %v317
      %vm382 = vcmask 519168
      %383 = vst.msk [vmem:[%s123] sm:$0xf] %vm382, %v350
      %384 = vst.msk [vmem:[%s123 + $0x4] sm:$0xf] %vm382, %v351
      %385 = vst.msk [vmem:[%s123 + $0x8] sm:$0xf] %vm382, %v352
      %386 = vst.msk [vmem:[%s123 + $0xc] sm:$0xf] %vm382, %v353
      %387 = vst.msk [vmem:[%s123 + $0x10] sm:$0xf] %vm382, %v354
      %388 = vst.msk [vmem:[%s123 + $0x14] sm:$0xf] %vm382, %v355
      %389 = vst.msk [vmem:[%s123 + $0x18] sm:$0xf] %vm382, %v356
      %390 = vst.msk [vmem:[%s123 + $0x1c] sm:$0xf] %vm382, %v357
      %391 = vst.msk [vmem:[%s123 + $0x20] sm:$0xf] %vm382, %v358
      %392 = vst.msk [vmem:[%s123 + $0x24] sm:$0xf] %vm382, %v359
      %393 = vst.msk [vmem:[%s123 + $0x28] sm:$0xf] %vm382, %v360
      %394 = vst.msk [vmem:[%s123 + $0x2c] sm:$0xf] %vm382, %v361
      %395 = vst.msk [vmem:[%s123 + $0x30] sm:$0xf] %vm382, %v362
      %396 = vst.msk [vmem:[%s123 + $0x34] sm:$0xf] %vm382, %v363
      %397 = vst.msk [vmem:[%s123 + $0x38] sm:$0xf] %vm382, %v364
      %398 = vst.msk [vmem:[%s123 + $0x3c] sm:$0xf] %vm382, %v365
      %399 = vst.msk [vmem:[%s123 + $0x40] sm:$0xf] %vm382, %v366
      %400 = vst.msk [vmem:[%s123 + $0x44] sm:$0xf] %vm382, %v367
      %401 = vst.msk [vmem:[%s123 + $0x48] sm:$0xf] %vm382, %v368
      %402 = vst.msk [vmem:[%s123 + $0x4c] sm:$0xf] %vm382, %v369
      %403 = vst.msk [vmem:[%s123 + $0x50] sm:$0xf] %vm382, %v370
      %404 = vst.msk [vmem:[%s123 + $0x54] sm:$0xf] %vm382, %v371
      %405 = vst.msk [vmem:[%s123 + $0x58] sm:$0xf] %vm382, %v372
      %406 = vst.msk [vmem:[%s123 + $0x5c] sm:$0xf] %vm382, %v373
      %407 = vst.msk [vmem:[%s123 + $0x60] sm:$0xf] %vm382, %v374
      %408 = vst.msk [vmem:[%s123 + $0x64] sm:$0xf] %vm382, %v375
      %409 = vst.msk [vmem:[%s123 + $0x68] sm:$0xf] %vm382, %v376
      %410 = vst.msk [vmem:[%s123 + $0x6c] sm:$0xf] %vm382, %v377
      %411 = vst.msk [vmem:[%s123 + $0x70] sm:$0xf] %vm382, %v378
      %412 = vst.msk [vmem:[%s123 + $0x74] sm:$0xf] %vm382, %v379
      %413 = vst.msk [vmem:[%s123 + $0x78] sm:$0xf] %vm382, %v380
      %414 = vst.msk [vmem:[%s123 + $0x7c] sm:$0xf] %vm382, %v381
      %s415 = smul.u32 16, %s12
      %p416 = scmp.lt.s32.totalorder %s415, 31
      %s417 = scalar_select %p416, %s415, 31
      %s418 = smul.addr %s417, 2
      %s419 = smul.addr %s418, 4
      %s420 = scalar_lea.vmem %s1, %s419
      // Predicated region
      $region25: #{cifar10net_forward.8} parent=23 // pred_check
        %p421 = pneg %p56
      $region26: #{cifar10net_forward.8} parent=23 // pred_check_branch
        %423 = sbr.rel (%p421) target = $region28
      $region27: #{cifar10net_forward.8} parent=23 // pred_region
        %s424 = smul.u32 16, %s12
      $region28: #{cifar10net_forward.8} parent=23 // pred_fallthru
        _
    $region24: #{cifar10net_forward.8} parent=5 // pred_fallthru
      _
    %p425 = scmp.le.s32.totalorder 2, %s7
    // Predicated region
    $region29: #{cifar10net_forward.8} parent=5 // pred_check
      %p426 = pneg %p425
    $region30: #{cifar10net_forward.8} parent=5 // pred_check_branch
      %428 = sbr.rel (%p426) target = $region32
    $region31: #{cifar10net_forward.8} parent=5 // pred_region
      %s429 = ssub.s32 %s7, 2
      // Predicated region
      $region33: #{cifar10net_forward.8} parent=31 // pred_check
        %p430 = pneg %p62
      $region34: #{cifar10net_forward.8} parent=31 // pred_check_branch
        %432 = sbr.rel (%p430) target = $region36
      $region35: #{cifar10net_forward.8} parent=31 // pred_region
        %s433 = smul.u32 16, %s13
        %p434 = scmp.lt.s32.totalorder %s433, 31
        %s435 = scalar_select %p434, %s433, 31
        %s436 = smul.addr %s435, 2
        %s437 = smul.addr %s436, 4
        %s438 = scalar_lea.vmem %s1, %s437
      $region36: #{cifar10net_forward.8} parent=31 // pred_fallthru
        _
    $region32: #{cifar10net_forward.8} parent=5 // pred_fallthru
      _
  $region6: #{cifar10net_forward.8} parent=0 // loop_footer
    %s11 = sadd.s32 1, %s7
  $region7: #{cifar10net_forward.8} parent=0 // loop_footer_branch
    %6 = sbr.rel target = $region3
  $region8: #{cifar10net_forward.8} parent=0 // loop_exit
    _

// kernel: cifar10net_forward.9
$region0: #{cifar10net_forward.9}
  #allocation0 [shape = 'u32[]', space=smem, size = 0x4, offset = 0x4, fixed_abs, tag = 'smem constant byte address 0x4 - core index']
  #allocation1 [shape = 'u32[144,128]{1,0:T(1,128)}', space=vmem, size = 0x12000, scoped, tag = 'internal scratch']
  #allocation2 [shape = 'f32[1]{0:T(128)S(6)}', space=smem, size = 0x200, scoped, tag = 'scoped memory for cifar10net_forward.9']
  %s0 = inlined_call_operand.vmem [shape: bf16[512,576], index: 0, kind: input, shape index: {}]
  %s1 = inlined_call_operand.vmem [shape: bf16[576,128], index: 1, kind: input, shape index: {}]
  %s2 = inlined_call_operand.vmem [shape: f32[1,128], index: 2, kind: input, shape index: {}]
  %s3 = inlined_call_operand.<no memory space> [shape: f32[1], index: 3, kind: input, shape index: {}]
  %s4 = inlined_call_operand.vmem [shape: bf16[512,128], index: 4, kind: output, shape index: {}]
  %s5 = sld [smem:[#allocation0]]
  $region49: #{cifar10net_forward.9} parent=0
    _
  %s7 = ssub.s32 1, %s5
  %s8 = scalar_select 0, %s7, %s5
  %9 = sst [smem:[#allocation2]] %s3
  loop: start=0, step=1, limit=4
  $region2: #{cifar10net_forward.9} parent=0 // loop_pre_header
    _
  $region3: #{cifar10net_forward.9} parent=0 // loop_header
    %s11 = sphi 0, %s15
    %p12 = scmp.ge.s32.totalorder %s11, 4
    %s21 = sphi 0, %s23
    %s24 = sphi 0, %s21
    %s25 = sphi 0, %s24
    %s41 = sphi 0, %s25
    %s45 = sphi 0, %s45
    %s47 = sphi 0, %s45
    %s48 = sphi 0, %s47
    %s62 = sphi 0, %s48
    %s66 = sphi 0, %s66
    %s68 = sphi 0, %s66
    %s69 = sphi 0, %s68
    %s83 = sphi 0, %s69
    %s87 = sphi 0, %s87
    %s89 = sphi 0, %s87
    %s90 = sphi 0, %s89
    %s104 = sphi 0, %s90
    %s110 = sphi 0, %s112
    %s113 = sphi 0, %s110
    %s114 = sphi 0, %s113
    %s130 = sphi 0, %s114
  $region4: #{cifar10net_forward.9} parent=0 // loop_header_branch
    %14 = sbr.rel (%p12) target = $region8
  $region5: #{cifar10net_forward.9} parent=0 // loop_body
    %s16 = ssub.s32 %s11, 1
    %s17 = ssub.s32 %s11, 2
    %s18 = sadd.s32 %s11, 1
    %s19 = ssub.s32 %s11, %s18
    %p20 = scmp.eq.s32.totalorder %s19, 0
    %s22 = sadd.s32 %s21, 1
    %s23 = scalar_select %p20, %s21, %s22
    %p26 = pneg %p20
    %p27 = scmp.eq.s32.totalorder %s11, 1
    %p28 = por %p26, %p27
    %p29 = scmp.ne.s32.totalorder %s21, %s24
    %p30 = scmp.eq.s32.totalorder %s11, 0
    %p31 = por %p29, %p30
    %p32 = scmp.ne.s32.totalorder %s21, %s24
    %p33 = scmp.eq.s32.totalorder %s16, 1
    %p34 = por %p32, %p33
    %p35 = scmp.ne.s32.totalorder %s24, %s25
    %p36 = scmp.eq.s32.totalorder %s16, 0
    %p37 = por %p35, %p36
    %p38 = scmp.ne.s32.totalorder %s24, %s25
    %p39 = scmp.eq.s32.totalorder %s17, 1
    %p40 = por %p38, %p39
    %p42 = scmp.ne.s32.totalorder %s25, %s41
    %p43 = scmp.eq.s32.totalorder %s17, 0
    %p44 = por %p42, %p43
    %s46 = sadd.s32 %s45, 1
    %p49 = scmp.eq.s32.totalorder %s11, 1
    %p50 = scmp.ne.s32.totalorder %s45, %s47
    %p51 = scmp.eq.s32.totalorder %s11, 0
    %p52 = por %p50, %p51
    %p53 = scmp.ne.s32.totalorder %s45, %s47
    %p54 = scmp.eq.s32.totalorder %s16, 1
    %p55 = por %p53, %p54
    %p56 = scmp.ne.s32.totalorder %s47, %s48
    %p57 = scmp.eq.s32.totalorder %s16, 0
    %p58 = por %p56, %p57
    %p59 = scmp.ne.s32.totalorder %s47, %s48
    %p60 = scmp.eq.s32.totalorder %s17, 1
    %p61 = por %p59, %p60
    %p63 = scmp.ne.s32.totalorder %s48, %s62
    %p64 = scmp.eq.s32.totalorder %s17, 0
    %p65 = por %p63, %p64
    %s67 = sadd.s32 %s66, 1
    %p70 = scmp.eq.s32.totalorder %s11, 1
    %p71 = scmp.ne.s32.totalorder %s66, %s68
    %p72 = scmp.eq.s32.totalorder %s11, 0
    %p73 = por %p71, %p72
    %p74 = scmp.ne.s32.totalorder %s66, %s68
    %p75 = scmp.eq.s32.totalorder %s16, 1
    %p76 = por %p74, %p75
    %p77 = scmp.ne.s32.totalorder %s68, %s69
    %p78 = scmp.eq.s32.totalorder %s16, 0
    %p79 = por %p77, %p78
    %p80 = scmp.ne.s32.totalorder %s68, %s69
    %p81 = scmp.eq.s32.totalorder %s17, 1
    %p82 = por %p80, %p81
    %p84 = scmp.ne.s32.totalorder %s69, %s83
    %p85 = scmp.eq.s32.totalorder %s17, 0
    %p86 = por %p84, %p85
    %s88 = sadd.s32 %s87, 1
    %p91 = scmp.eq.s32.totalorder %s11, 1
    %p92 = scmp.ne.s32.totalorder %s87, %s89
    %p93 = scmp.eq.s32.totalorder %s11, 0
    %p94 = por %p92, %p93
    %p95 = scmp.ne.s32.totalorder %s87, %s89
    %p96 = scmp.eq.s32.totalorder %s16, 1
    %p97 = por %p95, %p96
    %p98 = scmp.ne.s32.totalorder %s89, %s90
    %p99 = scmp.eq.s32.totalorder %s16, 0
    %p100 = por %p98, %p99
    %p101 = scmp.ne.s32.totalorder %s89, %s90
    %p102 = scmp.eq.s32.totalorder %s17, 1
    %p103 = por %p101, %p102
    %p105 = scmp.ne.s32.totalorder %s90, %s104
    %p106 = scmp.eq.s32.totalorder %s17, 0
    %p107 = por %p105, %p106
    %s108 = ssub.s32 %s11, %s18
    %p109 = scmp.eq.s32.totalorder %s108, 0
    %s111 = sadd.s32 %s110, 1
    %s112 = scalar_select %p109, %s110, %s111
    %p115 = pneg %p109
    %p116 = scmp.eq.s32.totalorder %s11, 1
    %p117 = por %p115, %p116
    %p118 = scmp.ne.s32.totalorder %s110, %s113
    %p119 = scmp.eq.s32.totalorder %s11, 0
    %p120 = por %p118, %p119
    %p121 = scmp.ne.s32.totalorder %s110, %s113
    %p122 = scmp.eq.s32.totalorder %s16, 1
    %p123 = por %p121, %p122
    %p124 = scmp.ne.s32.totalorder %s113, %s114
    %p125 = scmp.eq.s32.totalorder %s16, 0
    %p126 = por %p124, %p125
    %p127 = scmp.ne.s32.totalorder %s113, %s114
    %p128 = scmp.eq.s32.totalorder %s17, 1
    %p129 = por %p127, %p128
    %p131 = scmp.ne.s32.totalorder %s114, %s130
    %p132 = scmp.eq.s32.totalorder %s17, 0
    %p133 = por %p131, %p132
    %p134 = scmp.le.s32.totalorder 1, %s11
    %p135 = scmp.lt.s32.totalorder %s11, 3
    %p136 = pnand %p134, %p135
    %p137 = pneg %p136
    // Predicated region
    $region9: #{cifar10net_forward.9} parent=5 // pred_check
      _
    $region10: #{cifar10net_forward.9} parent=5 // pred_check_branch
      %139 = sbr.rel (%p136) target = $region12
    $region11: #{cifar10net_forward.9} parent=5 // pred_region
      %s140 = ssub.s32 %s11, 1
      // Predicated region
      $region13: #{cifar10net_forward.9} parent=11 // pred_check
        %p141 = pneg %p58
      $region14: #{cifar10net_forward.9} parent=11 // pred_check_branch
        %143 = sbr.rel (%p141) target = $region16
      $region15: #{cifar10net_forward.9} parent=11 // pred_region
        _
      $region16: #{cifar10net_forward.9} parent=11 // pred_fallthru
        _
      // Predicated region
      $region17: #{cifar10net_forward.9} parent=11 // pred_check
        %p144 = pneg %p79
      $region18: #{cifar10net_forward.9} parent=11 // pred_check_branch
        %146 = sbr.rel (%p144) target = $region20
      $region19: #{cifar10net_forward.9} parent=11 // pred_region
        _
      $region20: #{cifar10net_forward.9} parent=11 // pred_fallthru
        _
      // Predicated region
      $region21: #{cifar10net_forward.9} parent=11 // pred_check
        %p147 = pneg %p100
      $region22: #{cifar10net_forward.9} parent=11 // pred_check_branch
        %149 = sbr.rel (%p147) target = $region24
      $region23: #{cifar10net_forward.9} parent=11 // pred_region
        _
      $region24: #{cifar10net_forward.9} parent=11 // pred_fallthru
        _
    $region12: #{cifar10net_forward.9} parent=5 // pred_fallthru
      _
    %p150 = scmp.lt.s32.totalorder %s11, 2
    // Predicated region
    $region25: #{cifar10net_forward.9} parent=5 // pred_check
      %p151 = pneg %p150
    $region26: #{cifar10net_forward.9} parent=5 // pred_check_branch
      %153 = sbr.rel (%p151) target = $region28
    $region27: #{cifar10net_forward.9} parent=5 // pred_region
      // Predicated region
      $region29: #{cifar10net_forward.9} parent=27 // pred_check
        %p154 = pneg %p31
      $region30: #{cifar10net_forward.9} parent=27 // pred_check_branch
        %156 = sbr.rel (%p154) target = $region32
      $region31: #{cifar10net_forward.9} parent=27 // pred_region
        %s157 = smul.u32 32, %s11
        %p158 = scmp.lt.s32.totalorder %s157, 63
        %s159 = scalar_select %p158, %s157, 63
        %s160 = smul.addr %s159, 5
        %s161 = smul.addr %s160, 4
        %s162 = scalar_lea.vmem %s0, %s161
        %s163 = smul.u32 32, %s11
      $region32: #{cifar10net_forward.9} parent=27 // pred_fallthru
        _
    $region28: #{cifar10net_forward.9} parent=5 // pred_fallthru
      _
    %p164 = scmp.le.s32.totalorder 1, %s11
    %p165 = scmp.lt.s32.totalorder %s11, 3
    %p166 = pnand %p164, %p165
    %p167 = pneg %p166
    // Predicated region
    $region33: #{cifar10net_forward.9} parent=5 // pred_check
      _
    $region34: #{cifar10net_forward.9} parent=5 // pred_check_branch
      %169 = sbr.rel (%p166) target = $region36
    $region35: #{cifar10net_forward.9} parent=5 // pred_region
      %s170 = ssub.s32 %s11, 1
      %s171 = smul.u32 32, %s16
      %p172 = scmp.lt.s32.totalorder %s171, 63
      %s173 = scalar_select %p172, %s171, 63
      %s174 = smul.addr %s173, 5
      %s175 = smul.addr %s174, 4
      %s176 = scalar_lea.vmem %s0, %s175
      %p177 = pneg %p37
      %p178 = pneg %p34
      %p179 = pneg %p58
      %p180 = pneg %p55
      %p181 = pneg %p79
      %p182 = pneg %p76
      %p183 = pneg %p100
      %p184 = pneg %p97
      %p185 = pneg %p126
      %p186 = pneg %p123
      %s187 = smul.u32 32, %s16
      %p188 = scmp.lt.s32.totalorder %s187, 63
      %s189 = scalar_select %p188, %s187, 63
      %s190 = smul.addr %s189, 4
      %s191 = scalar_lea.vmem %s4, %s190
      %s192 = smul.u32 32, %s16
      %p193 = scmp.lt.s32.totalorder %s192, 63
      %s194 = scalar_select %p193, %s192, 63
      %s195 = smul.addr %s194, 5
      %s196 = smul.addr %s195, 4
      %s197 = scalar_lea.vmem %s0, %s196
      %s198 = smul.u32 32, %s16
      %s199 = smul.u32 32, %s16
      %p200 = scmp.lt.s32.totalorder %s199, 63
      %s201 = scalar_select %p200, %s199, 63
      %s202 = smul.addr %s201, 4
      %s203 = scalar_lea.vmem %s4, %s202
      %s204 = smul.u32 32, %s16
      %v206 = vld [vmem:[%s197] sm:$0xff]
      %v207 = vld [vmem:[%s197 + $0x8] sm:$0xff]
      %v208 = vld [vmem:[%s197 + $0x10] sm:$0xf]
      %v209 = vld [vmem:[%s197 + $0x14] sm:$0xff]
      %v210 = vld [vmem:[%s197 + $0x1c] sm:$0xff]
      %v211 = vld [vmem:[%s197 + $0x24] sm:$0xf]
      %v212 = vld [vmem:[%s197 + $0x28] sm:$0xff]
      %v213 = vld [vmem:[%s197 + $0x30] sm:$0xff]
      %v214 = vld [vmem:[%s197 + $0x38] sm:$0xf]
      %v215 = vld [vmem:[%s197 + $0x3c] sm:$0xff]
      %v216 = vld [vmem:[%s197 + $0x44] sm:$0xff]
      %v217 = vld [vmem:[%s197 + $0x4c] sm:$0xf]
      %v218 = vld [vmem:[%s197 + $0x50] sm:$0xff]
      %v219 = vld [vmem:[%s197 + $0x58] sm:$0xff]
      %v220 = vld [vmem:[%s197 + $0x60] sm:$0xf]
      %v221 = vld [vmem:[%s197 + $0x64] sm:$0xff]
      %v222 = vld [vmem:[%s197 + $0x6c] sm:$0xff]
      %v223 = vld [vmem:[%s197 + $0x74] sm:$0xf]
      %v224 = vld [vmem:[%s197 + $0x78] sm:$0xff]
      %v225 = vld [vmem:[%s197 + $0x80] sm:$0xff]
      %v226 = vld [vmem:[%s197 + $0x88] sm:$0xf]
      %v227 = vld [vmem:[%s197 + $0x8c] sm:$0xff]
      %v228 = vld [vmem:[%s197 + $0x94] sm:$0xff]
      %v229 = vld [vmem:[%s197 + $0x9c] sm:$0xf]
      %v230 = vld [vmem:[%s197 + $0xa0] sm:$0xff]
      %v231 = vld [vmem:[%s197 + $0xa8] sm:$0xff]
      %v232 = vld [vmem:[%s197 + $0xb0] sm:$0xf]
      %v233 = vld [vmem:[%s197 + $0xb4] sm:$0xff]
      %v234 = vld [vmem:[%s197 + $0xbc] sm:$0xff]
      %v235 = vld [vmem:[%s197 + $0xc4] sm:$0xf]
      %v236 = vld [vmem:[%s197 + $0xc8] sm:$0xff]
      %v237 = vld [vmem:[%s197 + $0xd0] sm:$0xff]
      %v238 = vld [vmem:[%s197 + $0xd8] sm:$0xf]
      %v239 = vld [vmem:[%s197 + $0xdc] sm:$0xff]
      %v240 = vld [vmem:[%s197 + $0xe4] sm:$0xff]
      %v241 = vld [vmem:[%s197 + $0xec] sm:$0xf]
      %v242 = vld [vmem:[%s197 + $0xf0] sm:$0xff]
      %v243 = vld [vmem:[%s197 + $0xf8] sm:$0xff]
      %v244 = vld [vmem:[%s197 + $0x100] sm:$0xf]
      %v245 = vld [vmem:[%s197 + $0x104] sm:$0xff]
      %v246 = vld [vmem:[%s197 + $0x10c] sm:$0xff]
      %v247 = vld [vmem:[%s197 + $0x114] sm:$0xf]
      %v248 = vld [vmem:[%s197 + $0x118] sm:$0xff]
      %v249 = vld [vmem:[%s197 + $0x120] sm:$0xff]
      %v250 = vld [vmem:[%s197 + $0x128] sm:$0xf]
      %v251 = vld [vmem:[%s197 + $0x12c] sm:$0xff]
      %v252 = vld [vmem:[%s197 + $0x134] sm:$0xff]
      %v253 = vld [vmem:[%s197 + $0x13c] sm:$0xf]
      %v254 = vld [vmem:[%s197 + $0x140] sm:$0xff]
      %v255 = vld [vmem:[%s197 + $0x148] sm:$0xff]
      %v256 = vld [vmem:[%s197 + $0x150] sm:$0xf]
      %v257 = vld [vmem:[%s197 + $0x154] sm:$0xff]
      %v258 = vld [vmem:[%s197 + $0x15c] sm:$0xff]
      %v259 = vld [vmem:[%s197 + $0x164] sm:$0xf]
      %v260 = vld [vmem:[%s197 + $0x168] sm:$0xff]
      %v261 = vld [vmem:[%s197 + $0x170] sm:$0xff]
      %v262 = vld [vmem:[%s197 + $0x178] sm:$0xf]
      %v263 = vld [vmem:[%s197 + $0x17c] sm:$0xff]
      %v264 = vld [vmem:[%s197 + $0x184] sm:$0xff]
      %v265 = vld [vmem:[%s197 + $0x18c] sm:$0xf]
      %v266 = vld [vmem:[%s197 + $0x190] sm:$0xff]
      %v267 = vld [vmem:[%s197 + $0x198] sm:$0xff]
      %v268 = vld [vmem:[%s197 + $0x1a0] sm:$0xf]
      %v269 = vld [vmem:[%s197 + $0x1a4] sm:$0xff]
      %v270 = vld [vmem:[%s197 + $0x1ac] sm:$0xff]
      %v271 = vld [vmem:[%s197 + $0x1b4] sm:$0xf]
      %v272 = vld [vmem:[%s197 + $0x1b8] sm:$0xff]
      %v273 = vld [vmem:[%s197 + $0x1c0] sm:$0xff]
      %v274 = vld [vmem:[%s197 + $0x1c8] sm:$0xf]
      %v275 = vld [vmem:[%s197 + $0x1cc] sm:$0xff]
      %v276 = vld [vmem:[%s197 + $0x1d4] sm:$0xff]
      %v277 = vld [vmem:[%s197 + $0x1dc] sm:$0xf]
      %v278 = vld [vmem:[%s197 + $0x1e0] sm:$0xff]
      %v279 = vld [vmem:[%s197 + $0x1e8] sm:$0xff]
      %v280 = vld [vmem:[%s197 + $0x1f0] sm:$0xf]
      %v281 = vld [vmem:[%s197 + $0x1f4] sm:$0xff]
      %v282 = vld [vmem:[%s197 + $0x1fc] sm:$0xff]
      %v283 = vld [vmem:[%s197 + $0x204] sm:$0xf]
      %v284 = vld [vmem:[%s197 + $0x208] sm:$0xff]
      %v285 = vld [vmem:[%s197 + $0x210] sm:$0xff]
      %v286 = vld [vmem:[%s197 + $0x218] sm:$0xf]
      %v287 = vld [vmem:[%s197 + $0x21c] sm:$0xff]
      %v288 = vld [vmem:[%s197 + $0x224] sm:$0xff]
      %v289 = vld [vmem:[%s197 + $0x22c] sm:$0xf]
      %v290 = vld [vmem:[%s197 + $0x230] sm:$0xff]
      %v291 = vld [vmem:[%s197 + $0x238] sm:$0xff]
      %v292 = vld [vmem:[%s197 + $0x240] sm:$0xf]
      %v293 = vld [vmem:[%s197 + $0x244] sm:$0xff]
      %v294 = vld [vmem:[%s197 + $0x24c] sm:$0xff]
      %v295 = vld [vmem:[%s197 + $0x254] sm:$0xf]
      %v296 = vld [vmem:[%s197 + $0x258] sm:$0xff]
      %v297 = vld [vmem:[%s197 + $0x260] sm:$0xff]
      %v298 = vld [vmem:[%s197 + $0x268] sm:$0xf]
      %v299 = vld [vmem:[%s197 + $0x26c] sm:$0xff]
      %v300 = vld [vmem:[%s197 + $0x274] sm:$0xff]
      %v301 = vld [vmem:[%s197 + $0x27c] sm:$0xf]
      %v302 = vld [vmem:[%s1] sm:$0xf]
      %v303 = vld [vmem:[%s1 + $0x4] sm:$0xf]
      %v304 = vld [vmem:[%s1 + $0x8] sm:$0xf]
      %v305 = vld [vmem:[%s1 + $0xc] sm:$0xf]
      %v306 = vld [vmem:[%s1 + $0x10] sm:$0xf]
      %v307 = vld [vmem:[%s1 + $0x14] sm:$0xf]
      %v308 = vld [vmem:[%s1 + $0x18] sm:$0xf]
      %v309 = vld [vmem:[%s1 + $0x1c] sm:$0xf]
      %v310 = vld [vmem:[%s1 + $0x20] sm:$0xf]
      %v311 = vld [vmem:[%s1 + $0x24] sm:$0xf]
      %v312 = vld [vmem:[%s1 + $0x28] sm:$0xf]
      %v313 = vld [vmem:[%s1 + $0x2c] sm:$0xf]
      %v314 = vld [vmem:[%s1 + $0x30] sm:$0xf]
      %v315 = vld [vmem:[%s1 + $0x34] sm:$0xf]
      %v316 = vld [vmem:[%s1 + $0x38] sm:$0xf]
      %v317 = vld [vmem:[%s1 + $0x3c] sm:$0xf]
      %v318 = vld [vmem:[%s1 + $0x40] sm:$0xf]
      %v319 = vld [vmem:[%s1 + $0x44] sm:$0xf]
      %v320 = vld [vmem:[%s1 + $0x48] sm:$0xf]
      %v321 = vld [vmem:[%s1 + $0x4c] sm:$0xf]
      %v322 = vld [vmem:[%s1 + $0x50] sm:$0xf]
      %v323 = vld [vmem:[%s1 + $0x54] sm:$0xf]
      %v324 = vld [vmem:[%s1 + $0x58] sm:$0xf]
      %v325 = vld [vmem:[%s1 + $0x5c] sm:$0xf]
      %v326 = vld [vmem:[%s1 + $0x60] sm:$0xf]
      %v327 = vld [vmem:[%s1 + $0x64] sm:$0xf]
      %v328 = vld [vmem:[%s1 + $0x68] sm:$0xf]
      %v329 = vld [vmem:[%s1 + $0x6c] sm:$0xf]
      %v330 = vld [vmem:[%s1 + $0x70] sm:$0xf]
      %v331 = vld [vmem:[%s1 + $0x74] sm:$0xf]
      %v332 = vld [vmem:[%s1 + $0x78] sm:$0xf]
      %v333 = vld [vmem:[%s1 + $0x7c] sm:$0xf]
      %v334 = vld [vmem:[%s1 + $0x80] sm:$0xf]
      %v335 = vld [vmem:[%s1 + $0x84] sm:$0xf]
      %v336 = vld [vmem:[%s1 + $0x88] sm:$0xf]
      %v337 = vld [vmem:[%s1 + $0x8c] sm:$0xf]
      %v338 = vld [vmem:[%s1 + $0x90] sm:$0xf]
      %v339 = vld [vmem:[%s1 + $0x94] sm:$0xf]
      %v340 = vld [vmem:[%s1 + $0x98] sm:$0xf]
      %v341 = vld [vmem:[%s1 + $0x9c] sm:$0xf]
      %v342 = vld [vmem:[%s1 + $0xa0] sm:$0xf]
      %v343 = vld [vmem:[%s1 + $0xa4] sm:$0xf]
      %v344 = vld [vmem:[%s1 + $0xa8] sm:$0xf]
      %v345 = vld [vmem:[%s1 + $0xac] sm:$0xf]
      %v346 = vld [vmem:[%s1 + $0xb0] sm:$0xf]
      %v347 = vld [vmem:[%s1 + $0xb4] sm:$0xf]
      %v348 = vld [vmem:[%s1 + $0xb8] sm:$0xf]
      %v349 = vld [vmem:[%s1 + $0xbc] sm:$0xf]
      %v350 = vld [vmem:[%s1 + $0xc0] sm:$0xf]
      %v351 = vld [vmem:[%s1 + $0xc4] sm:$0xf]
      %v352 = vld [vmem:[%s1 + $0xc8] sm:$0xf]
      %v353 = vld [vmem:[%s1 + $0xcc] sm:$0xf]
      %v354 = vld [vmem:[%s1 + $0xd0] sm:$0xf]
      %v355 = vld [vmem:[%s1 + $0xd4] sm:$0xf]
      %v356 = vld [vmem:[%s1 + $0xd8] sm:$0xf]
      %v357 = vld [vmem:[%s1 + $0xdc] sm:$0xf]
      %v358 = vld [vmem:[%s1 + $0xe0] sm:$0xf]
      %v359 = vld [vmem:[%s1 + $0xe4] sm:$0xf]
      %v360 = vld [vmem:[%s1 + $0xe8] sm:$0xf]
      %v361 = vld [vmem:[%s1 + $0xec] sm:$0xf]
      %v362 = vld [vmem:[%s1 + $0xf0] sm:$0xf]
      %v363 = vld [vmem:[%s1 + $0xf4] sm:$0xf]
      %v364 = vld [vmem:[%s1 + $0xf8] sm:$0xf]
      %v365 = vld [vmem:[%s1 + $0xfc] sm:$0xf]
      %v366 = vld [vmem:[%s1 + $0x100] sm:$0xf]
      %v367 = vld [vmem:[%s1 + $0x104] sm:$0xf]
      %v368 = vld [vmem:[%s1 + $0x108] sm:$0xf]
      %v369 = vld [vmem:[%s1 + $0x10c] sm:$0xf]
      %v370 = vld [vmem:[%s1 + $0x110] sm:$0xf]
      %v371 = vld [vmem:[%s1 + $0x114] sm:$0xf]
      %v372 = vld [vmem:[%s1 + $0x118] sm:$0xf]
      %v373 = vld [vmem:[%s1 + $0x11c] sm:$0xf]
      %v374 = vld [vmem:[%s2] sm:$0x1]
      %v376 = vlaneseq
      %v377 = vshrl.u32 %v376, 7
      %v378 = vsub.s32 0, %v377
      %v379 = vrot.slane %v374, %v378
      %v477 = vunpack.c.l.b16 %v206
      %v478 = vunpack.c.h.b16 %v206
      %v479 = vunpack.c.l.b16 %v207
      %v480 = vunpack.c.h.b16 %v207
      %v481 = vunpack.c.l.b16 %v208
      %v482 = vunpack.c.l.b16 %v209
      %v483 = vunpack.c.h.b16 %v209
      %v484 = vunpack.c.l.b16 %v210
      %v485 = vunpack.c.h.b16 %v210
      %v486 = vunpack.c.l.b16 %v211
      %v487 = vunpack.c.l.b16 %v212
      %v488 = vunpack.c.h.b16 %v212
      %v489 = vunpack.c.l.b16 %v213
      %v490 = vunpack.c.h.b16 %v213
      %v491 = vunpack.c.l.b16 %v214
      %v492 = vunpack.c.l.b16 %v215
      %v493 = vunpack.c.h.b16 %v215
      %v494 = vunpack.c.l.b16 %v216
      %v495 = vunpack.c.h.b16 %v216
      %v496 = vunpack.c.l.b16 %v217
      %v497 = vunpack.c.l.b16 %v218
      %v498 = vunpack.c.h.b16 %v218
      %v499 = vunpack.c.l.b16 %v219
      %v500 = vunpack.c.h.b16 %v219
      %v501 = vunpack.c.l.b16 %v220
      %v502 = vunpack.c.l.b16 %v221
      %v503 = vunpack.c.h.b16 %v221
      %v504 = vunpack.c.l.b16 %v222
      %v505 = vunpack.c.h.b16 %v222
      %v506 = vunpack.c.l.b16 %v223
      %v507 = vunpack.c.l.b16 %v224
      %v508 = vunpack.c.h.b16 %v224
      %v509 = vunpack.c.l.b16 %v225
      %v510 = vunpack.c.h.b16 %v225
      %v511 = vunpack.c.l.b16 %v226
      %v512 = vunpack.c.l.b16 %v227
      %v513 = vunpack.c.h.b16 %v227
      %v514 = vunpack.c.l.b16 %v228
      %v515 = vunpack.c.h.b16 %v228
      %v516 = vunpack.c.l.b16 %v229
      %v517 = vunpack.c.l.b16 %v230
      %v518 = vunpack.c.h.b16 %v230
      %v519 = vunpack.c.l.b16 %v231
      %v520 = vunpack.c.h.b16 %v231
      %v521 = vunpack.c.l.b16 %v232
      %v522 = vunpack.c.l.b16 %v233
      %v523 = vunpack.c.h.b16 %v233
      %v524 = vunpack.c.l.b16 %v234
      %v525 = vunpack.c.h.b16 %v234
      %v526 = vunpack.c.l.b16 %v235
      %v527 = vunpack.c.l.b16 %v236
      %v528 = vunpack.c.h.b16 %v236
      %v529 = vunpack.c.l.b16 %v237
      %v530 = vunpack.c.h.b16 %v237
      %v531 = vunpack.c.l.b16 %v238
      %v532 = vunpack.c.l.b16 %v239
      %v533 = vunpack.c.h.b16 %v239
      %v534 = vunpack.c.l.b16 %v240
      %v535 = vunpack.c.h.b16 %v240
      %v536 = vunpack.c.l.b16 %v241
      %v537 = vunpack.c.l.b16 %v242
      %v538 = vunpack.c.h.b16 %v242
      %v539 = vunpack.c.l.b16 %v243
      %v540 = vunpack.c.h.b16 %v243
      %v541 = vunpack.c.l.b16 %v244
      %v542 = vunpack.c.l.b16 %v245
      %v543 = vunpack.c.h.b16 %v245
      %v544 = vunpack.c.l.b16 %v246
      %v545 = vunpack.c.h.b16 %v246
      %v546 = vunpack.c.l.b16 %v247
      %v547 = vunpack.c.l.b16 %v248
      %v548 = vunpack.c.h.b16 %v248
      %v549 = vunpack.c.l.b16 %v249
      %v550 = vunpack.c.h.b16 %v249
      %v551 = vunpack.c.l.b16 %v250
      %v552 = vunpack.c.l.b16 %v251
      %v553 = vunpack.c.h.b16 %v251
      %v554 = vunpack.c.l.b16 %v252
      %v555 = vunpack.c.h.b16 %v252
      %v556 = vunpack.c.l.b16 %v253
      %v557 = vunpack.c.l.b16 %v254
      %v558 = vunpack.c.h.b16 %v254
      %v559 = vunpack.c.l.b16 %v255
      %v560 = vunpack.c.h.b16 %v255
      %v561 = vunpack.c.l.b16 %v256
      %v562 = vunpack.c.l.b16 %v257
      %v563 = vunpack.c.h.b16 %v257
      %v564 = vunpack.c.l.b16 %v258
      %v565 = vunpack.c.h.b16 %v258
      %v566 = vunpack.c.l.b16 %v259
      %v567 = vunpack.c.l.b16 %v260
      %v568 = vunpack.c.h.b16 %v260
      %v569 = vunpack.c.l.b16 %v261
      %v570 = vunpack.c.h.b16 %v261
      %v571 = vunpack.c.l.b16 %v262
      %v572 = vunpack.c.l.b16 %v263
      %v573 = vunpack.c.h.b16 %v263
      %v574 = vunpack.c.l.b16 %v264
      %v575 = vunpack.c.h.b16 %v264
      %v576 = vunpack.c.l.b16 %v265
      %v577 = vunpack.c.l.b16 %v266
      %v578 = vunpack.c.h.b16 %v266
      %v579 = vunpack.c.l.b16 %v267
      %v580 = vunpack.c.h.b16 %v267
      %v581 = vunpack.c.l.b16 %v268
      %v582 = vunpack.c.l.b16 %v269
      %v583 = vunpack.c.h.b16 %v269
      %v584 = vunpack.c.l.b16 %v270
      %v585 = vunpack.c.h.b16 %v270
      %v586 = vunpack.c.l.b16 %v271
      %v587 = vunpack.c.l.b16 %v272
      %v588 = vunpack.c.h.b16 %v272
      %v589 = vunpack.c.l.b16 %v273
      %v590 = vunpack.c.h.b16 %v273
      %v591 = vunpack.c.l.b16 %v274
      %v592 = vunpack.c.l.b16 %v275
      %v593 = vunpack.c.h.b16 %v275
      %v594 = vunpack.c.l.b16 %v276
      %v595 = vunpack.c.h.b16 %v276
      %v596 = vunpack.c.l.b16 %v277
      %v597 = vunpack.c.l.b16 %v278
      %v598 = vunpack.c.h.b16 %v278
      %v599 = vunpack.c.l.b16 %v279
      %v600 = vunpack.c.h.b16 %v279
      %v601 = vunpack.c.l.b16 %v280
      %v602 = vunpack.c.l.b16 %v281
      %v603 = vunpack.c.h.b16 %v281
      %v604 = vunpack.c.l.b16 %v282
      %v605 = vunpack.c.h.b16 %v282
      %v606 = vunpack.c.l.b16 %v283
      %v607 = vunpack.c.l.b16 %v284
      %v608 = vunpack.c.h.b16 %v284
      %v609 = vunpack.c.l.b16 %v285
      %v610 = vunpack.c.h.b16 %v285
      %v611 = vunpack.c.l.b16 %v286
      %v612 = vunpack.c.l.b16 %v287
      %v613 = vunpack.c.h.b16 %v287
      %v614 = vunpack.c.l.b16 %v288
      %v615 = vunpack.c.h.b16 %v288
      %v616 = vunpack.c.l.b16 %v289
      %v617 = vunpack.c.l.b16 %v290
      %v618 = vunpack.c.h.b16 %v290
      %v619 = vunpack.c.l.b16 %v291
      %v620 = vunpack.c.h.b16 %v291
      %v621 = vunpack.c.l.b16 %v292
      %v622 = vunpack.c.l.b16 %v293
      %v623 = vunpack.c.h.b16 %v293
      %v624 = vunpack.c.l.b16 %v294
      %v625 = vunpack.c.h.b16 %v294
      %v626 = vunpack.c.l.b16 %v295
      %v627 = vunpack.c.l.b16 %v296
      %v628 = vunpack.c.h.b16 %v296
      %v629 = vunpack.c.l.b16 %v297
      %v630 = vunpack.c.h.b16 %v297
      %v631 = vunpack.c.l.b16 %v298
      %v632 = vunpack.c.l.b16 %v299
      %v633 = vunpack.c.h.b16 %v299
      %v634 = vunpack.c.l.b16 %v300
      %v635 = vunpack.c.h.b16 %v300
      %v636 = vunpack.c.l.b16 %v301
      %v637 = vpack.c.b16 %v482, %v477
      %v638 = vpack.c.b16 %v483, %v478
      %v639 = vpack.c.b16 %v484, %v479
      %v640 = vpack.c.b16 %v485, %v480
      %v641 = vpack.c.b16 %v486, %v481
      %v642 = vpack.c.b16 %v492, %v487
      %v643 = vpack.c.b16 %v493, %v488
      %v644 = vpack.c.b16 %v494, %v489
      %v645 = vpack.c.b16 %v495, %v490
      %v646 = vpack.c.b16 %v496, %v491
      %v647 = vpack.c.b16 %v502, %v497
      %v648 = vpack.c.b16 %v503, %v498
      %v649 = vpack.c.b16 %v504, %v499
      %v650 = vpack.c.b16 %v505, %v500
      %v651 = vpack.c.b16 %v506, %v501
      %v652 = vpack.c.b16 %v512, %v507
      %v653 = vpack.c.b16 %v513, %v508
      %v654 = vpack.c.b16 %v514, %v509
      %v655 = vpack.c.b16 %v515, %v510
      %v656 = vpack.c.b16 %v516, %v511
      %v657 = vpack.c.b16 %v522, %v517
      %v658 = vpack.c.b16 %v523, %v518
      %v659 = vpack.c.b16 %v524, %v519
      %v660 = vpack.c.b16 %v525, %v520
      %v661 = vpack.c.b16 %v526, %v521
      %v662 = vpack.c.b16 %v532, %v527
      %v663 = vpack.c.b16 %v533, %v528
      %v664 = vpack.c.b16 %v534, %v529
      %v665 = vpack.c.b16 %v535, %v530
      %v666 = vpack.c.b16 %v536, %v531
      %v667 = vpack.c.b16 %v542, %v537
      %v668 = vpack.c.b16 %v543, %v538
      %v669 = vpack.c.b16 %v544, %v539
      %v670 = vpack.c.b16 %v545, %v540
      %v671 = vpack.c.b16 %v546, %v541
      %v672 = vpack.c.b16 %v552, %v547
      %v673 = vpack.c.b16 %v553, %v548
      %v674 = vpack.c.b16 %v554, %v549
      %v675 = vpack.c.b16 %v555, %v550
      %v676 = vpack.c.b16 %v556, %v551
      %v677 = vpack.c.b16 %v562, %v557
      %v678 = vpack.c.b16 %v563, %v558
      %v679 = vpack.c.b16 %v564, %v559
      %v680 = vpack.c.b16 %v565, %v560
      %v681 = vpack.c.b16 %v566, %v561
      %v682 = vpack.c.b16 %v572, %v567
      %v683 = vpack.c.b16 %v573, %v568
      %v684 = vpack.c.b16 %v574, %v569
      %v685 = vpack.c.b16 %v575, %v570
      %v686 = vpack.c.b16 %v576, %v571
      %v687 = vpack.c.b16 %v582, %v577
      %v688 = vpack.c.b16 %v583, %v578
      %v689 = vpack.c.b16 %v584, %v579
      %v690 = vpack.c.b16 %v585, %v580
      %v691 = vpack.c.b16 %v586, %v581
      %v692 = vpack.c.b16 %v592, %v587
      %v693 = vpack.c.b16 %v593, %v588
      %v694 = vpack.c.b16 %v594, %v589
      %v695 = vpack.c.b16 %v595, %v590
      %v696 = vpack.c.b16 %v596, %v591
      %v697 = vpack.c.b16 %v602, %v597
      %v698 = vpack.c.b16 %v603, %v598
      %v699 = vpack.c.b16 %v604, %v599
      %v700 = vpack.c.b16 %v605, %v600
      %v701 = vpack.c.b16 %v606, %v601
      %v702 = vpack.c.b16 %v612, %v607
      %v703 = vpack.c.b16 %v613, %v608
      %v704 = vpack.c.b16 %v614, %v609
      %v705 = vpack.c.b16 %v615, %v610
      %v706 = vpack.c.b16 %v616, %v611
      %v707 = vpack.c.b16 %v622, %v617
      %v708 = vpack.c.b16 %v623, %v618
      %v709 = vpack.c.b16 %v624, %v619
      %v710 = vpack.c.b16 %v625, %v620
      %v711 = vpack.c.b16 %v626, %v621
      %v712 = vpack.c.b16 %v632, %v627
      %v713 = vpack.c.b16 %v633, %v628
      %v714 = vpack.c.b16 %v634, %v629
      %v715 = vpack.c.b16 %v635, %v630
      %v716 = vpack.c.b16 %v636, %v631
      %v853 = vunpack.c.l.b16 %v302
      %v854 = vunpack.c.l.b16 %v303
      %v855 = vunpack.c.l.b16 %v304
      %v856 = vunpack.c.l.b16 %v305
      %v857 = vunpack.c.l.b16 %v306
      %v858 = vunpack.c.l.b16 %v307
      %v859 = vunpack.c.l.b16 %v308
      %v860 = vunpack.c.l.b16 %v309
      %v861 = vunpack.c.l.b16 %v310
      %v862 = vunpack.c.l.b16 %v311
      %v863 = vunpack.c.l.b16 %v312
      %v864 = vunpack.c.l.b16 %v313
      %v865 = vunpack.c.l.b16 %v314
      %v866 = vunpack.c.l.b16 %v315
      %v867 = vunpack.c.l.b16 %v316
      %v868 = vunpack.c.l.b16 %v317
      %v869 = vunpack.c.l.b16 %v318
      %v870 = vunpack.c.l.b16 %v319
      %v871 = vunpack.c.l.b16 %v320
      %v872 = vunpack.c.l.b16 %v321
      %v873 = vunpack.c.l.b16 %v322
      %v874 = vunpack.c.l.b16 %v323
      %v875 = vunpack.c.l.b16 %v324
      %v876 = vunpack.c.l.b16 %v325
      %v877 = vunpack.c.l.b16 %v326
      %v878 = vunpack.c.l.b16 %v327
      %v879 = vunpack.c.l.b16 %v328
      %v880 = vunpack.c.l.b16 %v329
      %v881 = vunpack.c.l.b16 %v330
      %v882 = vunpack.c.l.b16 %v331
      %v883 = vunpack.c.l.b16 %v332
      %v884 = vunpack.c.l.b16 %v333
      %v885 = vunpack.c.l.b16 %v334
      %v886 = vunpack.c.l.b16 %v335
      %v887 = vunpack.c.l.b16 %v336
      %v888 = vunpack.c.l.b16 %v337
      %v889 = vunpack.c.l.b16 %v338
      %v890 = vunpack.c.l.b16 %v339
      %v891 = vunpack.c.l.b16 %v340
      %v892 = vunpack.c.l.b16 %v341
      %v893 = vunpack.c.l.b16 %v342
      %v894 = vunpack.c.l.b16 %v343
      %v895 = vunpack.c.l.b16 %v344
      %v896 = vunpack.c.l.b16 %v345
      %v897 = vunpack.c.l.b16 %v346
      %v898 = vunpack.c.l.b16 %v347
      %v899 = vunpack.c.l.b16 %v348
      %v900 = vunpack.c.l.b16 %v349
      %v901 = vunpack.c.l.b16 %v350
      %v902 = vunpack.c.l.b16 %v351
      %v903 = vunpack.c.l.b16 %v352
      %v904 = vunpack.c.l.b16 %v353
      %v905 = vunpack.c.l.b16 %v354
      %v906 = vunpack.c.l.b16 %v355
      %v907 = vunpack.c.l.b16 %v356
      %v908 = vunpack.c.l.b16 %v357
      %v909 = vunpack.c.l.b16 %v358
      %v910 = vunpack.c.l.b16 %v359
      %v911 = vunpack.c.l.b16 %v360
      %v912 = vunpack.c.l.b16 %v361
      %v913 = vunpack.c.l.b16 %v362
      %v914 = vunpack.c.l.b16 %v363
      %v915 = vunpack.c.l.b16 %v364
      %v916 = vunpack.c.l.b16 %v365
      %v917 = vunpack.c.l.b16 %v366
      %v918 = vunpack.c.l.b16 %v367
      %v919 = vunpack.c.l.b16 %v368
      %v920 = vunpack.c.l.b16 %v369
      %v921 = vunpack.c.l.b16 %v370
      %v922 = vunpack.c.l.b16 %v371
      %v923 = vunpack.c.l.b16 %v372
      %v924 = vunpack.c.l.b16 %v373
      %v925 = vpack.c.b16 %v854, %v853
      %v926 = vpack.c.b16 %v856, %v855
      %v927 = vpack.c.b16 %v858, %v857
      %v928 = vpack.c.b16 %v860, %v859
      %v929 = vpack.c.b16 %v862, %v861
      %v930 = vpack.c.b16 %v864, %v863
      %v931 = vpack.c.b16 %v866, %v865
      %v932 = vpack.c.b16 %v868, %v867
      %v933 = vpack.c.b16 %v870, %v869
      %v934 = vpack.c.b16 %v872, %v871
      %v935 = vpack.c.b16 %v874, %v873
      %v936 = vpack.c.b16 %v876, %v875
      %v937 = vpack.c.b16 %v878, %v877
      %v938 = vpack.c.b16 %v880, %v879
      %v939 = vpack.c.b16 %v882, %v881
      %v940 = vpack.c.b16 %v884, %v883
      %v941 = vpack.c.b16 %v886, %v885
      %v942 = vpack.c.b16 %v888, %v887
      %v943 = vpack.c.b16 %v890, %v889
      %v944 = vpack.c.b16 %v892, %v891
      %v945 = vpack.c.b16 %v894, %v893
      %v946 = vpack.c.b16 %v896, %v895
      %v947 = vpack.c.b16 %v898, %v897
      %v948 = vpack.c.b16 %v900, %v899
      %v949 = vpack.c.b16 %v902, %v901
      %v950 = vpack.c.b16 %v904, %v903
      %v951 = vpack.c.b16 %v906, %v905
      %v952 = vpack.c.b16 %v908, %v907
      %v953 = vpack.c.b16 %v910, %v909
      %v954 = vpack.c.b16 %v912, %v911
      %v955 = vpack.c.b16 %v914, %v913
      %v956 = vpack.c.b16 %v916, %v915
      %v957 = vpack.c.b16 %v918, %v917
      %v958 = vpack.c.b16 %v920, %v919
      %v959 = vpack.c.b16 %v922, %v921
      %v960 = vpack.c.b16 %v924, %v923
      %vm997 = vcmask 523264
      %v999 = vsel %vm997, %v641, 0
      %v1002 = vsel %vm997, %v646, 0
      %v1005 = vsel %vm997, %v651, 0
      %v1008 = vsel %vm997, %v656, 0
      %v1011 = vsel %vm997, %v661, 0
      %v1014 = vsel %vm997, %v666, 0
      %v1017 = vsel %vm997, %v671, 0
      %v1020 = vsel %vm997, %v676, 0
      %v1023 = vsel %vm997, %v681, 0
      %v1026 = vsel %vm997, %v686, 0
      %v1029 = vsel %vm997, %v691, 0
      %v1032 = vsel %vm997, %v696, 0
      %v1035 = vsel %vm997, %v701, 0
      %v1038 = vsel %vm997, %v706, 0
      %v1041 = vsel %vm997, %v711, 0
      %v1044 = vsel %vm997, %v716, 0
      %1046 = vmatprep.subr.bf16.mxu0 0
      %1047 = vmatpush1.bf16.msra.mxu0 %v925
      %1048 = vmatprep.subr.bf16.mxu0 0
      %1049 = vmatpush1.bf16.msra.mxu0 %v926
      %1050 = vmatprep.subr.bf16.mxu0 0
      %1051 = vmatpush1.bf16.msra.mxu0 %v927
      %1052 = vmatprep.subr.bf16.mxu0 0
      %1053 = vmatpush1.bf16.msra.mxu0 %v928
      %1054 = vmatprep.subr.bf16.mxu0 0
      %1055 = vmatpush1.bf16.msra.mxu0 %v929
      %1056 = vmatprep.subr.bf16.mxu0 0
      %1057 = vmatpush1.bf16.msra.mxu0 %v930
      %1058 = vmatprep.subr.bf16.mxu0 0
      %1059 = vmatpush1.bf16.msra.mxu0 %v931
      %1060 = vmatprep.subr.bf16.mxu0 0
      %1061 = vmatpush1.bf16.msra.mxu0 %v932
      %1062 = vmatprep.subr.bf16.mxu0 0
      %1063 = vmatpush1.bf16.msra.mxu0 %v933
      %1064 = vmatprep.subr.bf16.mxu0 0
      %1065 = vmatpush1.bf16.msra.mxu0 %v934
      %1066 = vmatprep.subr.bf16.mxu0 0
      %1067 = vmatpush1.bf16.msra.mxu0 %v935
      %1068 = vmatprep.subr.bf16.mxu0 0
      %1069 = vmatpush1.bf16.msra.mxu0 %v936
      %1070 = vmatprep.subr.bf16.mxu0 0
      %1071 = vmatpush1.bf16.msra.mxu0 %v937
      %1072 = vmatprep.subr.bf16.mxu0 0
      %1073 = vmatpush1.bf16.msra.mxu0 %v938
      %1074 = vmatprep.subr.bf16.mxu0 0
      %1075 = vmatpush1.bf16.msra.mxu0 %v939
      %1076 = vmatprep.subr.bf16.mxu0 0
      %1077 = vmatpush1.bf16.msra.mxu0 %v940
      %1078 = vmatprep.mubr.bf16.mxu0 %v638
      %1079 = vmatmul.mubr.bf16.gmra.mrb[0].mxu0 %v637
      %v1080 = vpop.f32.mrb[0].mxu0
      %v1081 = vadd.f32 %v379, %v1080
      %v1082 = vpop.f32.mrb[0].mxu0
      %v1083 = vpop.f32.mrb[0].mxu0
      %v1084 = vadd.f32 %v379, %v1083
      %v1085 = vpop.f32.mrb[0].mxu0
      %1086 = vmatprep.mubr.bf16.mxu0 %v643
      %1087 = vmatmul.mubr.bf16.gmra.mrb[0].mxu0 %v642
      %v1088 = vpop.f32.mrb[0].mxu0
      %v1089 = vadd.f32 %v379, %v1088
      %v1090 = vpop.f32.mrb[0].mxu0
      %v1091 = vpop.f32.mrb[0].mxu0
      %v1092 = vadd.f32 %v379, %v1091
      %v1093 = vpop.f32.mrb[0].mxu0
      %1094 = vmatprep.mubr.bf16.mxu0 %v648
      %1095 = vmatmul.mubr.bf16.gmra.mrb[0].mxu0 %v647
      %v1096 = vpop.f32.mrb[0].mxu0
      %v1097 = vadd.f32 %v379, %v1096
      %v1098 = vpop.f32.mrb[0].mxu0
      %v1099 = vpop.f32.mrb[0].mxu0
      %v1100 = vadd.f32 %v379, %v1099
      %v1101 = vpop.f32.mrb[0].mxu0
      %1102 = vmatprep.mubr.bf16.mxu0 %v653
      %1103 = vmatmul.mubr.bf16.gmra.mrb[0].mxu0 %v652
      %v1104 = vpop.f32.mrb[0].mxu0
      %v1105 = vadd.f32 %v379, %v1104
      %v1106 = vpop.f32.mrb[0].mxu0
      %v1107 = vpop.f32.mrb[0].mxu0
      %v1108 = vadd.f32 %v379, %v1107
      %v1109 = vpop.f32.mrb[0].mxu0
      %1110 = vmatprep.mubr.bf16.mxu0 %v658
      %1111 = vmatmul.mubr.bf16.gmra.mrb[0].mxu0 %v657
      %v1112 = vpop.f32.mrb[0].mxu0
      %v1113 = vadd.f32 %v379, %v1112
      %v1114 = vpop.f32.mrb[0].mxu0
      %v1115 = vpop.f32.mrb[0].mxu0
      %v1116 = vadd.f32 %v379, %v1115
      %v1117 = vpop.f32.mrb[0].mxu0
      %1118 = vmatprep.mubr.bf16.mxu0 %v663
      %1119 = vmatmul.mubr.bf16.gmra.mrb[0].mxu0 %v662
      %v1120 = vpop.f32.mrb[0].mxu0
      %v1121 = vadd.f32 %v379, %v1120
      %v1122 = vpop.f32.mrb[0].mxu0
      %v1123 = vpop.f32.mrb[0].mxu0
      %v1124 = vadd.f32 %v379, %v1123
      %v1125 = vpop.f32.mrb[0].mxu0
      %1126 = vmatprep.mubr.bf16.mxu0 %v668
      %1127 = vmatmul.mubr.bf16.gmra.mrb[0].mxu0 %v667
      %v1128 = vpop.f32.mrb[0].mxu0
      %v1129 = vadd.f32 %v379, %v1128
      %v1130 = vpop.f32.mrb[0].mxu0
      %v1131 = vpop.f32.mrb[0].mxu0
      %v1132 = vadd.f32 %v379, %v1131
      %v1133 = vpop.f32.mrb[0].mxu0
      %1134 = vmatprep.mubr.bf16.mxu0 %v673
      %1135 = vmatmul.mubr.bf16.gmra.mrb[0].mxu0 %v672
      %v1136 = vpop.f32.mrb[0].mxu0
      %v1137 = vadd.f32 %v379, %v1136
      %v1138 = vpop.f32.mrb[0].mxu0
      %v1139 = vpop.f32.mrb[0].mxu0
      %v1140 = vadd.f32 %v379, %v1139
      %v1141 = vpop.f32.mrb[0].mxu0
      %1142 = vmatprep.mubr.bf16.mxu0 %v678
      %1143 = vmatmul.mubr.bf16.gmra.mrb[0].mxu0 %v677
      %v1144 = vpop.f32.mrb[0].mxu0
      %v1145 = vadd.f32 %v379, %v1144
      %v1146 = vpop.f32.mrb[0].mxu0
      %v1147 = vpop.f32.mrb[0].mxu0
      %v1148 = vadd.f32 %v379, %v1147
      %v1149 = vpop.f32.mrb[0].mxu0
      %1150 = vmatprep.mubr.bf16.mxu0 %v683
      %1151 = vmatmul.mubr.bf16.gmra.mrb[0].mxu0 %v682
      %v1152 = vpop.f32.mrb[0].mxu0
      %v1153 = vadd.f32 %v379, %v1152
      %v1154 = vpop.f32.mrb[0].mxu0
      %v1155 = vpop.f32.mrb[0].mxu0
      %v1156 = vadd.f32 %v379, %v1155
      %v1157 = vpop.f32.mrb[0].mxu0
      %1158 = vmatprep.mubr.bf16.mxu0 %v688
      %1159 = vmatmul.mubr.bf16.gmra.mrb[0].mxu0 %v687
      %v1160 = vpop.f32.mrb[0].mxu0
      %v1161 = vadd.f32 %v379, %v1160
      %v1162 = vpop.f32.mrb[0].mxu0
      %v1163 = vpop.f32.mrb[0].mxu0
      %v1164 = vadd.f32 %v379, %v1163
      %v1165 = vpop.f32.mrb[0].mxu0
      %1166 = vmatprep.mubr.bf16.mxu0 %v693
      %1167 = vmatmul.mubr.bf16.gmra.mrb[0].mxu0 %v692
      %v1168 = vpop.f32.mrb[0].mxu0
      %v1169 = vadd.f32 %v379, %v1168
      %v1170 = vpop.f32.mrb[0].mxu0
      %v1171 = vpop.f32.mrb[0].mxu0
      %v1172 = vadd.f32 %v379, %v1171
      %v1173 = vpop.f32.mrb[0].mxu0
      %1174 = vmatprep.mubr.bf16.mxu0 %v698
      %1175 = vmatmul.mubr.bf16.gmra.mrb[0].mxu0 %v697
      %v1176 = vpop.f32.mrb[0].mxu0
      %v1177 = vadd.f32 %v379, %v1176
      %v1178 = vpop.f32.mrb[0].mxu0
      %v1179 = vpop.f32.mrb[0].mxu0
      %v1180 = vadd.f32 %v379, %v1179
      %v1181 = vpop.f32.mrb[0].mxu0
      %1182 = vmatprep.mubr.bf16.mxu0 %v703
      %1183 = vmatmul.mubr.bf16.gmra.mrb[0].mxu0 %v702
      %v1184 = vpop.f32.mrb[0].mxu0
      %v1185 = vadd.f32 %v379, %v1184
      %v1186 = vpop.f32.mrb[0].mxu0
      %v1187 = vpop.f32.mrb[0].mxu0
      %v1188 = vadd.f32 %v379, %v1187
      %v1189 = vpop.f32.mrb[0].mxu0
      %1190 = vmatprep.mubr.bf16.mxu0 %v708
      %1191 = vmatmul.mubr.bf16.gmra.mrb[0].mxu0 %v707
      %v1192 = vpop.f32.mrb[0].mxu0
      %v1193 = vadd.f32 %v379, %v1192
      %v1194 = vpop.f32.mrb[0].mxu0
      %v1195 = vpop.f32.mrb[0].mxu0
      %v1196 = vadd.f32 %v379, %v1195
      %v1197 = vpop.f32.mrb[0].mxu0
      %1198 = vmatprep.mubr.bf16.mxu0 %v713
      %1199 = vmatmul.mubr.bf16.gmra.mrb[0].mxu0 %v712
      %v1200 = vpop.f32.mrb[0].mxu0
      %v1201 = vadd.f32 %v379, %v1200
      %v1202 = vpop.f32.mrb[0].mxu0
      %v1203 = vpop.f32.mrb[0].mxu0
      %v1204 = vadd.f32 %v379, %v1203
      %v1205 = vpop.f32.mrb[0].mxu0
      %1206 = vdwg.mxu0
      %1207 = vmatprep.subr.bf16.mxu0 0
      %1208 = vmatpush1.bf16.msra.mxu0 %v941
      %1209 = vmatprep.subr.bf16.mxu0 0
      %1210 = vmatpush1.bf16.msra.mxu0 %v942
      %1211 = vmatprep.subr.bf16.mxu0 0
      %1212 = vmatpush1.bf16.msra.mxu0 %v943
      %1213 = vmatprep.subr.bf16.mxu0 0
      %1214 = vmatpush1.bf16.msra.mxu0 %v944
      %1215 = vmatprep.subr.bf16.mxu0 0
      %1216 = vmatpush1.bf16.msra.mxu0 %v945
      %1217 = vmatprep.subr.bf16.mxu0 0
      %1218 = vmatpush1.bf16.msra.mxu0 %v946
      %1219 = vmatprep.subr.bf16.mxu0 0
      %1220 = vmatpush1.bf16.msra.mxu0 %v947
      %1221 = vmatprep.subr.bf16.mxu0 0
      %1222 = vmatpush1.bf16.msra.mxu0 %v948
      %1223 = vmatprep.subr.bf16.mxu0 0
      %1224 = vmatpush1.bf16.msra.mxu0 %v949
      %1225 = vmatprep.subr.bf16.mxu0 0
      %1226 = vmatpush1.bf16.msra.mxu0 %v950
      %1227 = vmatprep.subr.bf16.mxu0 0
      %1228 = vmatpush1.bf16.msra.mxu0 %v951
      %1229 = vmatprep.subr.bf16.mxu0 0
      %1230 = vmatpush1.bf16.msra.mxu0 %v952
      %1231 = vmatprep.subr.bf16.mxu0 0
      %1232 = vmatpush1.bf16.msra.mxu0 %v953
      %1233 = vmatprep.subr.bf16.mxu0 0
      %1234 = vmatpush1.bf16.msra.mxu0 %v954
      %1235 = vmatprep.subr.bf16.mxu0 0
      %1236 = vmatpush1.bf16.msra.mxu0 %v955
      %1237 = vmatprep.subr.bf16.mxu0 0
      %1238 = vmatpush1.bf16.msra.mxu0 %v956
      %1239 = vmatprep.mubr.bf16.mxu0 %v640
      %1240 = vmatmul.mubr.bf16.gmra.mrb[0].mxu0 %v639
      %v1241 = vpop.f32.mrb[0].mxu0
      %v1242 = vadd.f32 %v1081, %v1241
      %v1243 = vpop.f32.mrb[0].mxu0
      %v1244 = vpop.f32.mrb[0].mxu0
      %v1245 = vadd.f32 %v1084, %v1244
      %v1246 = vpop.f32.mrb[0].mxu0
      %1247 = vmatprep.mubr.bf16.mxu0 %v645
      %1248 = vmatmul.mubr.bf16.gmra.mrb[0].mxu0 %v644
      %v1249 = vpop.f32.mrb[0].mxu0
      %v1250 = vadd.f32 %v1089, %v1249
      %v1251 = vpop.f32.mrb[0].mxu0
      %v1252 = vpop.f32.mrb[0].mxu0
      %v1253 = vadd.f32 %v1092, %v1252
      %v1254 = vpop.f32.mrb[0].mxu0
      %1255 = vmatprep.mubr.bf16.mxu0 %v650
      %1256 = vmatmul.mubr.bf16.gmra.mrb[0].mxu0 %v649
      %v1257 = vpop.f32.mrb[0].mxu0
      %v1258 = vadd.f32 %v1097, %v1257
      %v1259 = vpop.f32.mrb[0].mxu0
      %v1260 = vpop.f32.mrb[0].mxu0
      %v1261 = vadd.f32 %v1100, %v1260
      %v1262 = vpop.f32.mrb[0].mxu0
      %1263 = vmatprep.mubr.bf16.mxu0 %v655
      %1264 = vmatmul.mubr.bf16.gmra.mrb[0].mxu0 %v654
      %v1265 = vpop.f32.mrb[0].mxu0
      %v1266 = vadd.f32 %v1105, %v1265
      %v1267 = vpop.f32.mrb[0].mxu0
      %v1268 = vpop.f32.mrb[0].mxu0
      %v1269 = vadd.f32 %v1108, %v1268
      %v1270 = vpop.f32.mrb[0].mxu0
      %1271 = vmatprep.mubr.bf16.mxu0 %v660
      %1272 = vmatmul.mubr.bf16.gmra.mrb[0].mxu0 %v659
      %v1273 = vpop.f32.mrb[0].mxu0
      %v1274 = vadd.f32 %v1113, %v1273
      %v1275 = vpop.f32.mrb[0].mxu0
      %v1276 = vpop.f32.mrb[0].mxu0
      %v1277 = vadd.f32 %v1116, %v1276
      %v1278 = vpop.f32.mrb[0].mxu0
      %1279 = vmatprep.mubr.bf16.mxu0 %v665
      %1280 = vmatmul.mubr.bf16.gmra.mrb[0].mxu0 %v664
      %v1281 = vpop.f32.mrb[0].mxu0
      %v1282 = vadd.f32 %v1121, %v1281
      %v1283 = vpop.f32.mrb[0].mxu0
      %v1284 = vpop.f32.mrb[0].mxu0
      %v1285 = vadd.f32 %v1124, %v1284
      %v1286 = vpop.f32.mrb[0].mxu0
      %1287 = vmatprep.mubr.bf16.mxu0 %v670
      %1288 = vmatmul.mubr.bf16.gmra.mrb[0].mxu0 %v669
      %v1289 = vpop.f32.mrb[0].mxu0
      %v1290 = vadd.f32 %v1129, %v1289
      %v1291 = vpop.f32.mrb[0].mxu0
      %v1292 = vpop.f32.mrb[0].mxu0
      %v1293 = vadd.f32 %v1132, %v1292
      %v1294 = vpop.f32.mrb[0].mxu0
      %1295 = vmatprep.mubr.bf16.mxu0 %v675
      %1296 = vmatmul.mubr.bf16.gmra.mrb[0].mxu0 %v674
      %v1297 = vpop.f32.mrb[0].mxu0
      %v1298 = vadd.f32 %v1137, %v1297
      %v1299 = vpop.f32.mrb[0].mxu0
      %v1300 = vpop.f32.mrb[0].mxu0
      %v1301 = vadd.f32 %v1140, %v1300
      %v1302 = vpop.f32.mrb[0].mxu0
      %1303 = vmatprep.mubr.bf16.mxu0 %v680
      %1304 = vmatmul.mubr.bf16.gmra.mrb[0].mxu0 %v679
      %v1305 = vpop.f32.mrb[0].mxu0
      %v1306 = vadd.f32 %v1145, %v1305
      %v1307 = vpop.f32.mrb[0].mxu0
      %v1308 = vpop.f32.mrb[0].mxu0
      %v1309 = vadd.f32 %v1148, %v1308
      %v1310 = vpop.f32.mrb[0].mxu0
      %1311 = vmatprep.mubr.bf16.mxu0 %v685
      %1312 = vmatmul.mubr.bf16.gmra.mrb[0].mxu0 %v684
      %v1313 = vpop.f32.mrb[0].mxu0
      %v1314 = vadd.f32 %v1153, %v1313
      %v1315 = vpop.f32.mrb[0].mxu0
      %v1316 = vpop.f32.mrb[0].mxu0
      %v1317 = vadd.f32 %v1156, %v1316
      %v1318 = vpop.f32.mrb[0].mxu0
      %1319 = vmatprep.mubr.bf16.mxu0 %v690
      %1320 = vmatmul.mubr.bf16.gmra.mrb[0].mxu0 %v689
      %v1321 = vpop.f32.mrb[0].mxu0
      %v1322 = vadd.f32 %v1161, %v1321
      %v1323 = vpop.f32.mrb[0].mxu0
      %v1324 = vpop.f32.mrb[0].mxu0
      %v1325 = vadd.f32 %v1164, %v1324
      %v1326 = vpop.f32.mrb[0].mxu0
      %1327 = vmatprep.mubr.bf16.mxu0 %v695
      %1328 = vmatmul.mubr.bf16.gmra.mrb[0].mxu0 %v694
      %v1329 = vpop.f32.mrb[0].mxu0
      %v1330 = vadd.f32 %v1169, %v1329
      %v1331 = vpop.f32.mrb[0].mxu0
      %v1332 = vpop.f32.mrb[0].mxu0
      %v1333 = vadd.f32 %v1172, %v1332
      %v1334 = vpop.f32.mrb[0].mxu0
      %1335 = vmatprep.mubr.bf16.mxu0 %v700
      %1336 = vmatmul.mubr.bf16.gmra.mrb[0].mxu0 %v699
      %v1337 = vpop.f32.mrb[0].mxu0
      %v1338 = vadd.f32 %v1177, %v1337
      %v1339 = vpop.f32.mrb[0].mxu0
      %v1340 = vpop.f32.mrb[0].mxu0
      %v1341 = vadd.f32 %v1180, %v1340
      %v1342 = vpop.f32.mrb[0].mxu0
      %1343 = vmatprep.mubr.bf16.mxu0 %v705
      %1344 = vmatmul.mubr.bf16.gmra.mrb[0].mxu0 %v704
      %v1345 = vpop.f32.mrb[0].mxu0
      %v1346 = vadd.f32 %v1185, %v1345
      %v1347 = vpop.f32.mrb[0].mxu0
      %v1348 = vpop.f32.mrb[0].mxu0
      %v1349 = vadd.f32 %v1188, %v1348
      %v1350 = vpop.f32.mrb[0].mxu0
      %1351 = vmatprep.mubr.bf16.mxu0 %v710
      %1352 = vmatmul.mubr.bf16.gmra.mrb[0].mxu0 %v709
      %v1353 = vpop.f32.mrb[0].mxu0
      %v1354 = vadd.f32 %v1193, %v1353
      %v1355 = vpop.f32.mrb[0].mxu0
      %v1356 = vpop.f32.mrb[0].mxu0
      %v1357 = vadd.f32 %v1196, %v1356
      %v1358 = vpop.f32.mrb[0].mxu0
      %1359 = vmatprep.mubr.bf16.mxu0 %v715
      %1360 = vmatmul.mubr.bf16.gmra.mrb[0].mxu0 %v714
      %v1361 = vpop.f32.mrb[0].mxu0
      %v1362 = vadd.f32 %v1201, %v1361
      %v1363 = vpop.f32.mrb[0].mxu0
      %v1364 = vpop.f32.mrb[0].mxu0
      %v1365 = vadd.f32 %v1204, %v1364
      %v1366 = vpop.f32.mrb[0].mxu0
      %1367 = vdwg.mxu0
      %1368 = vmatprep.subr.bf16.mxu0 0
      %1369 = vmatpush1.bf16.msra.mxu0 %v957
      %1370 = vmatprep.subr.bf16.mxu0 0
      %1371 = vmatpush1.bf16.msra.mxu0 %v958
      %1372 = vmatprep.subr.bf16.mxu0 0
      %1373 = vmatpush1.bf16.msra.mxu0 %v959
      %1374 = vmatprep.subr.bf16.mxu0 0
      %1375 = vmatpush1.bf16.msra.mxu0 %v960
      %1376 = vmatprep.subr.bf16.mxu0 0
      %1377 = vmatpush1.bf16.msra.mxu0 0
      %1378 = vmatprep.subr.bf16.mxu0 0
      %1379 = vmatpush1.bf16.msra.mxu0 0
      %1380 = vmatprep.subr.bf16.mxu0 0
      %1381 = vmatpush1.bf16.msra.mxu0 0
      %1382 = vmatprep.subr.bf16.mxu0 0
      %1383 = vmatpush1.bf16.msra.mxu0 0
      %1384 = vmatprep.subr.bf16.mxu0 0
      %1385 = vmatpush1.bf16.msra.mxu0 0
      %1386 = vmatprep.subr.bf16.mxu0 0
      %1387 = vmatpush1.bf16.msra.mxu0 0
      %1388 = vmatprep.subr.bf16.mxu0 0
      %1389 = vmatpush1.bf16.msra.mxu0 0
      %1390 = vmatprep.subr.bf16.mxu0 0
      %1391 = vmatpush1.bf16.msra.mxu0 0
      %1392 = vmatprep.subr.bf16.mxu0 0
      %1393 = vmatpush1.bf16.msra.mxu0 0
      %1394 = vmatprep.subr.bf16.mxu0 0
      %1395 = vmatpush1.bf16.msra.mxu0 0
      %1396 = vmatprep.subr.bf16.mxu0 0
      %1397 = vmatpush1.bf16.msra.mxu0 0
      %1398 = vmatprep.subr.bf16.mxu0 0
      %1399 = vmatpush1.bf16.msra.mxu0 0
      %1400 = vmatprep.mubr.bf16.mxu0 0
      %1401 = vmatmul.mubr.bf16.gmra.mrb[0].mxu0 %v999
      %v1402 = vpop.f32.mrb[0].mxu0
      %v1403 = vadd.f32 %v1242, %v1402
      %v1404 = vpop.f32.mrb[0].mxu0
      %v1405 = vpop.f32.mrb[0].mxu0
      %v1406 = vadd.f32 %v1245, %v1405
      %v1407 = vpop.f32.mrb[0].mxu0
      %1408 = vmatprep.mubr.bf16.mxu0 0
      %1409 = vmatmul.mubr.bf16.gmra.mrb[0].mxu0 %v1002
      %v1410 = vpop.f32.mrb[0].mxu0
      %v1411 = vadd.f32 %v1250, %v1410
      %v1412 = vpop.f32.mrb[0].mxu0
      %v1413 = vpop.f32.mrb[0].mxu0
      %v1414 = vadd.f32 %v1253, %v1413
      %v1415 = vpop.f32.mrb[0].mxu0
      %1416 = vmatprep.mubr.bf16.mxu0 0
      %1417 = vmatmul.mubr.bf16.gmra.mrb[0].mxu0 %v1005
      %v1418 = vpop.f32.mrb[0].mxu0
      %v1419 = vadd.f32 %v1258, %v1418
      %v1420 = vpop.f32.mrb[0].mxu0
      %v1421 = vpop.f32.mrb[0].mxu0
      %v1422 = vadd.f32 %v1261, %v1421
      %v1423 = vpop.f32.mrb[0].mxu0
      %1424 = vmatprep.mubr.bf16.mxu0 0
      %1425 = vmatmul.mubr.bf16.gmra.mrb[0].mxu0 %v1008
      %v1426 = vpop.f32.mrb[0].mxu0
      %v1427 = vadd.f32 %v1266, %v1426
      %v1428 = vpop.f32.mrb[0].mxu0
      %v1429 = vpop.f32.mrb[0].mxu0
      %v1430 = vadd.f32 %v1269, %v1429
      %v1431 = vpop.f32.mrb[0].mxu0
      %1432 = vmatprep.mubr.bf16.mxu0 0
      %1433 = vmatmul.mubr.bf16.gmra.mrb[0].mxu0 %v1011
      %v1434 = vpop.f32.mrb[0].mxu0
      %v1435 = vadd.f32 %v1274, %v1434
      %v1436 = vpop.f32.mrb[0].mxu0
      %v1437 = vpop.f32.mrb[0].mxu0
      %v1438 = vadd.f32 %v1277, %v1437
      %v1439 = vpop.f32.mrb[0].mxu0
      %1440 = vmatprep.mubr.bf16.mxu0 0
      %1441 = vmatmul.mubr.bf16.gmra.mrb[0].mxu0 %v1014
      %v1442 = vpop.f32.mrb[0].mxu0
      %v1443 = vadd.f32 %v1282, %v1442
      %v1444 = vpop.f32.mrb[0].mxu0
      %v1445 = vpop.f32.mrb[0].mxu0
      %v1446 = vadd.f32 %v1285, %v1445
      %v1447 = vpop.f32.mrb[0].mxu0
      %1448 = vmatprep.mubr.bf16.mxu0 0
      %1449 = vmatmul.mubr.bf16.gmra.mrb[0].mxu0 %v1017
      %v1450 = vpop.f32.mrb[0].mxu0
      %v1451 = vadd.f32 %v1290, %v1450
      %v1452 = vpop.f32.mrb[0].mxu0
      %v1453 = vpop.f32.mrb[0].mxu0
      %v1454 = vadd.f32 %v1293, %v1453
      %v1455 = vpop.f32.mrb[0].mxu0
      %1456 = vmatprep.mubr.bf16.mxu0 0
      %1457 = vmatmul.mubr.bf16.gmra.mrb[0].mxu0 %v1020
      %v1458 = vpop.f32.mrb[0].mxu0
      %v1459 = vadd.f32 %v1298, %v1458
      %v1460 = vpop.f32.mrb[0].mxu0
      %v1461 = vpop.f32.mrb[0].mxu0
      %v1462 = vadd.f32 %v1301, %v1461
      %v1463 = vpop.f32.mrb[0].mxu0
      %1464 = vmatprep.mubr.bf16.mxu0 0
      %1465 = vmatmul.mubr.bf16.gmra.mrb[0].mxu0 %v1023
      %v1466 = vpop.f32.mrb[0].mxu0
      %v1467 = vadd.f32 %v1306, %v1466
      %v1468 = vpop.f32.mrb[0].mxu0
      %v1469 = vpop.f32.mrb[0].mxu0
      %v1470 = vadd.f32 %v1309, %v1469
      %v1471 = vpop.f32.mrb[0].mxu0
      %1472 = vmatprep.mubr.bf16.mxu0 0
      %1473 = vmatmul.mubr.bf16.gmra.mrb[0].mxu0 %v1026
      %v1474 = vpop.f32.mrb[0].mxu0
      %v1475 = vadd.f32 %v1314, %v1474
      %v1476 = vpop.f32.mrb[0].mxu0
      %v1477 = vpop.f32.mrb[0].mxu0
      %v1478 = vadd.f32 %v1317, %v1477
      %v1479 = vpop.f32.mrb[0].mxu0
      %1480 = vmatprep.mubr.bf16.mxu0 0
      %1481 = vmatmul.mubr.bf16.gmra.mrb[0].mxu0 %v1029
      %v1482 = vpop.f32.mrb[0].mxu0
      %v1483 = vadd.f32 %v1322, %v1482
      %v1484 = vpop.f32.mrb[0].mxu0
      %v1485 = vpop.f32.mrb[0].mxu0
      %v1486 = vadd.f32 %v1325, %v1485
      %v1487 = vpop.f32.mrb[0].mxu0
      %1488 = vmatprep.mubr.bf16.mxu0 0
      %1489 = vmatmul.mubr.bf16.gmra.mrb[0].mxu0 %v1032
      %v1490 = vpop.f32.mrb[0].mxu0
      %v1491 = vadd.f32 %v1330, %v1490
      %v1492 = vpop.f32.mrb[0].mxu0
      %v1493 = vpop.f32.mrb[0].mxu0
      %v1494 = vadd.f32 %v1333, %v1493
      %v1495 = vpop.f32.mrb[0].mxu0
      %1496 = vmatprep.mubr.bf16.mxu0 0
      %1497 = vmatmul.mubr.bf16.gmra.mrb[0].mxu0 %v1035
      %v1498 = vpop.f32.mrb[0].mxu0
      %v1499 = vadd.f32 %v1338, %v1498
      %v1500 = vpop.f32.mrb[0].mxu0
      %v1501 = vpop.f32.mrb[0].mxu0
      %v1502 = vadd.f32 %v1341, %v1501
      %v1503 = vpop.f32.mrb[0].mxu0
      %1504 = vmatprep.mubr.bf16.mxu0 0
      %1505 = vmatmul.mubr.bf16.gmra.mrb[0].mxu0 %v1038
      %v1506 = vpop.f32.mrb[0].mxu0
      %v1507 = vadd.f32 %v1346, %v1506
      %v1508 = vpop.f32.mrb[0].mxu0
      %v1509 = vpop.f32.mrb[0].mxu0
      %v1510 = vadd.f32 %v1349, %v1509
      %v1511 = vpop.f32.mrb[0].mxu0
      %1512 = vmatprep.mubr.bf16.mxu0 0
      %1513 = vmatmul.mubr.bf16.gmra.mrb[0].mxu0 %v1041
      %v1514 = vpop.f32.mrb[0].mxu0
      %v1515 = vadd.f32 %v1354, %v1514
      %v1516 = vpop.f32.mrb[0].mxu0
      %v1517 = vpop.f32.mrb[0].mxu0
      %v1518 = vadd.f32 %v1357, %v1517
      %v1519 = vpop.f32.mrb[0].mxu0
      %1520 = vmatprep.mubr.bf16.mxu0 0
      %1521 = vmatmul.mubr.bf16.gmra.mrb[0].mxu0 %v1044
      %v1522 = vpop.f32.mrb[0].mxu0
      %v1523 = vadd.f32 %v1362, %v1522
      %v1524 = vpop.f32.mrb[0].mxu0
      %v1525 = vpop.f32.mrb[0].mxu0
      %v1526 = vadd.f32 %v1365, %v1525
      %v1527 = vpop.f32.mrb[0].mxu0
      %1528 = vdwg.mxu0
      %s1529 = sld [smem:[#allocation2]]
      %vm1530 = vcmp.gt.f32.partialorder %v1403, 0.0
      %vm1531 = vcmp.gt.f32.partialorder %v1406, 0.0
      %vm1532 = vcmp.gt.f32.partialorder %v1411, 0.0
      %vm1533 = vcmp.gt.f32.partialorder %v1414, 0.0
      %vm1534 = vcmp.gt.f32.partialorder %v1419, 0.0
      %vm1535 = vcmp.gt.f32.partialorder %v1422, 0.0
      %vm1536 = vcmp.gt.f32.partialorder %v1427, 0.0
      %vm1537 = vcmp.gt.f32.partialorder %v1430, 0.0
      %vm1538 = vcmp.gt.f32.partialorder %v1435, 0.0
      %vm1539 = vcmp.gt.f32.partialorder %v1438, 0.0
      %vm1540 = vcmp.gt.f32.partialorder %v1443, 0.0
      %vm1541 = vcmp.gt.f32.partialorder %v1446, 0.0
      %vm1542 = vcmp.gt.f32.partialorder %v1451, 0.0
      %vm1543 = vcmp.gt.f32.partialorder %v1454, 0.0
      %vm1544 = vcmp.gt.f32.partialorder %v1459, 0.0
      %vm1545 = vcmp.gt.f32.partialorder %v1462, 0.0
      %vm1546 = vcmp.gt.f32.partialorder %v1467, 0.0
      %vm1547 = vcmp.gt.f32.partialorder %v1470, 0.0
      %vm1548 = vcmp.gt.f32.partialorder %v1475, 0.0
      %vm1549 = vcmp.gt.f32.partialorder %v1478, 0.0
      %vm1550 = vcmp.gt.f32.partialorder %v1483, 0.0
      %vm1551 = vcmp.gt.f32.partialorder %v1486, 0.0
      %vm1552 = vcmp.gt.f32.partialorder %v1491, 0.0
      %vm1553 = vcmp.gt.f32.partialorder %v1494, 0.0
      %vm1554 = vcmp.gt.f32.partialorder %v1499, 0.0
      %vm1555 = vcmp.gt.f32.partialorder %v1502, 0.0
      %vm1556 = vcmp.gt.f32.partialorder %v1507, 0.0
      %vm1557 = vcmp.gt.f32.partialorder %v1510, 0.0
      %vm1558 = vcmp.gt.f32.partialorder %v1515, 0.0
      %vm1559 = vcmp.gt.f32.partialorder %v1518, 0.0
      %vm1560 = vcmp.gt.f32.partialorder %v1523, 0.0
      %vm1561 = vcmp.gt.f32.partialorder %v1526, 0.0
      %v1562 = vstv %s1529
      %v1563 = vmul.f32 %v1562, %v1403
      %v1564 = vmul.f32 %v1562, %v1406
      %v1565 = vmul.f32 %v1562, %v1411
      %v1566 = vmul.f32 %v1562, %v1414
      %v1567 = vmul.f32 %v1562, %v1419
      %v1568 = vmul.f32 %v1562, %v1422
      %v1569 = vmul.f32 %v1562, %v1427
      %v1570 = vmul.f32 %v1562, %v1430
      %v1571 = vmul.f32 %v1562, %v1435
      %v1572 = vmul.f32 %v1562, %v1438
      %v1573 = vmul.f32 %v1562, %v1443
      %v1574 = vmul.f32 %v1562, %v1446
      %v1575 = vmul.f32 %v1562, %v1451
      %v1576 = vmul.f32 %v1562, %v1454
      %v1577 = vmul.f32 %v1562, %v1459
      %v1578 = vmul.f32 %v1562, %v1462
      %v1579 = vmul.f32 %v1562, %v1467
      %v1580 = vmul.f32 %v1562, %v1470
      %v1581 = vmul.f32 %v1562, %v1475
      %v1582 = vmul.f32 %v1562, %v1478
      %v1583 = vmul.f32 %v1562, %v1483
      %v1584 = vmul.f32 %v1562, %v1486
      %v1585 = vmul.f32 %v1562, %v1491
      %v1586 = vmul.f32 %v1562, %v1494
      %v1587 = vmul.f32 %v1562, %v1499
      %v1588 = vmul.f32 %v1562, %v1502
      %v1589 = vmul.f32 %v1562, %v1507
      %v1590 = vmul.f32 %v1562, %v1510
      %v1591 = vmul.f32 %v1562, %v1515
      %v1592 = vmul.f32 %v1562, %v1518
      %v1593 = vmul.f32 %v1562, %v1523
      %v1594 = vmul.f32 %v1562, %v1526
      %v1595 = vsel %vm1530, %v1403, %v1563
      %v1596 = vsel %vm1531, %v1406, %v1564
      %v1597 = vsel %vm1532, %v1411, %v1565
      %v1598 = vsel %vm1533, %v1414, %v1566
      %v1599 = vsel %vm1534, %v1419, %v1567
      %v1600 = vsel %vm1535, %v1422, %v1568
      %v1601 = vsel %vm1536, %v1427, %v1569
      %v1602 = vsel %vm1537, %v1430, %v1570
      %v1603 = vsel %vm1538, %v1435, %v1571
      %v1604 = vsel %vm1539, %v1438, %v1572
      %v1605 = vsel %vm1540, %v1443, %v1573
      %v1606 = vsel %vm1541, %v1446, %v1574
      %v1607 = vsel %vm1542, %v1451, %v1575
      %v1608 = vsel %vm1543, %v1454, %v1576
      %v1609 = vsel %vm1544, %v1459, %v1577
      %v1610 = vsel %vm1545, %v1462, %v1578
      %v1611 = vsel %vm1546, %v1467, %v1579
      %v1612 = vsel %vm1547, %v1470, %v1580
      %v1613 = vsel %vm1548, %v1475, %v1581
      %v1614 = vsel %vm1549, %v1478, %v1582
      %v1615 = vsel %vm1550, %v1483, %v1583
      %v1616 = vsel %vm1551, %v1486, %v1584
      %v1617 = vsel %vm1552, %v1491, %v1585
      %v1618 = vsel %vm1553, %v1494, %v1586
      %v1619 = vsel %vm1554, %v1499, %v1587
      %v1620 = vsel %vm1555, %v1502, %v1588
      %v1621 = vsel %vm1556, %v1507, %v1589
      %v1622 = vsel %vm1557, %v1510, %v1590
      %v1623 = vsel %vm1558, %v1515, %v1591
      %v1624 = vsel %vm1559, %v1518, %v1592
      %v1625 = vsel %vm1560, %v1523, %v1593
      %v1626 = vsel %vm1561, %v1526, %v1594
      %v1627 = vpack.c.bf16 %v1596, %v1595
      %v1628 = vpack.c.bf16 %v1598, %v1597
      %v1629 = vpack.c.bf16 %v1600, %v1599
      %v1630 = vpack.c.bf16 %v1602, %v1601
      %v1631 = vpack.c.bf16 %v1604, %v1603
      %v1632 = vpack.c.bf16 %v1606, %v1605
      %v1633 = vpack.c.bf16 %v1608, %v1607
      %v1634 = vpack.c.bf16 %v1610, %v1609
      %v1635 = vpack.c.bf16 %v1612, %v1611
      %v1636 = vpack.c.bf16 %v1614, %v1613
      %v1637 = vpack.c.bf16 %v1616, %v1615
      %v1638 = vpack.c.bf16 %v1618, %v1617
      %v1639 = vpack.c.bf16 %v1620, %v1619
      %v1640 = vpack.c.bf16 %v1622, %v1621
      %v1641 = vpack.c.bf16 %v1624, %v1623
      %v1642 = vpack.c.bf16 %v1626, %v1625
      %v1659 = vunpack.c.l.b16 %v1627
      %v1660 = vunpack.c.h.b16 %v1627
      %v1661 = vunpack.c.l.b16 %v1628
      %v1662 = vunpack.c.h.b16 %v1628
      %v1663 = vunpack.c.l.b16 %v1629
      %v1664 = vunpack.c.h.b16 %v1629
      %v1665 = vunpack.c.l.b16 %v1630
      %v1666 = vunpack.c.h.b16 %v1630
      %v1667 = vunpack.c.l.b16 %v1631
      %v1668 = vunpack.c.h.b16 %v1631
      %v1669 = vunpack.c.l.b16 %v1632
      %v1670 = vunpack.c.h.b16 %v1632
      %v1671 = vunpack.c.l.b16 %v1633
      %v1672 = vunpack.c.h.b16 %v1633
      %v1673 = vunpack.c.l.b16 %v1634
      %v1674 = vunpack.c.h.b16 %v1634
      %v1675 = vunpack.c.l.b16 %v1635
      %v1676 = vunpack.c.h.b16 %v1635
      %v1677 = vunpack.c.l.b16 %v1636
      %v1678 = vunpack.c.h.b16 %v1636
      %v1679 = vunpack.c.l.b16 %v1637
      %v1680 = vunpack.c.h.b16 %v1637
      %v1681 = vunpack.c.l.b16 %v1638
      %v1682 = vunpack.c.h.b16 %v1638
      %v1683 = vunpack.c.l.b16 %v1639
      %v1684 = vunpack.c.h.b16 %v1639
      %v1685 = vunpack.c.l.b16 %v1640
      %v1686 = vunpack.c.h.b16 %v1640
      %v1687 = vunpack.c.l.b16 %v1641
      %v1688 = vunpack.c.h.b16 %v1641
      %v1689 = vunpack.c.l.b16 %v1642
      %v1690 = vunpack.c.h.b16 %v1642
      %v1691 = vpack.c.b16 %v1659, %v1659
      %v1692 = vpack.c.b16 %v1660, %v1660
      %v1693 = vpack.c.b16 %v1661, %v1661
      %v1694 = vpack.c.b16 %v1662, %v1662
      %v1695 = vpack.c.b16 %v1663, %v1663
      %v1696 = vpack.c.b16 %v1664, %v1664
      %v1697 = vpack.c.b16 %v1665, %v1665
      %v1698 = vpack.c.b16 %v1666, %v1666
      %v1699 = vpack.c.b16 %v1667, %v1667
      %v1700 = vpack.c.b16 %v1668, %v1668
      %v1701 = vpack.c.b16 %v1669, %v1669
      %v1702 = vpack.c.b16 %v1670, %v1670
      %v1703 = vpack.c.b16 %v1671, %v1671
      %v1704 = vpack.c.b16 %v1672, %v1672
      %v1705 = vpack.c.b16 %v1673, %v1673
      %v1706 = vpack.c.b16 %v1674, %v1674
      %v1707 = vpack.c.b16 %v1675, %v1675
      %v1708 = vpack.c.b16 %v1676, %v1676
      %v1709 = vpack.c.b16 %v1677, %v1677
      %v1710 = vpack.c.b16 %v1678, %v1678
      %v1711 = vpack.c.b16 %v1679, %v1679
      %v1712 = vpack.c.b16 %v1680, %v1680
      %v1713 = vpack.c.b16 %v1681, %v1681
      %v1714 = vpack.c.b16 %v1682, %v1682
      %v1715 = vpack.c.b16 %v1683, %v1683
      %v1716 = vpack.c.b16 %v1684, %v1684
      %v1717 = vpack.c.b16 %v1685, %v1685
      %v1718 = vpack.c.b16 %v1686, %v1686
      %v1719 = vpack.c.b16 %v1687, %v1687
      %v1720 = vpack.c.b16 %v1688, %v1688
      %v1721 = vpack.c.b16 %v1689, %v1689
      %v1722 = vpack.c.b16 %v1690, %v1690
      %1755 = vst [vmem:[%s203] sm:$0xf] %v1691
      %1756 = vst [vmem:[%s203 + $0x4] sm:$0xf] %v1692
      %1757 = vst [vmem:[%s203 + $0x8] sm:$0xf] %v1693
      %1758 = vst [vmem:[%s203 + $0xc] sm:$0xf] %v1694
      %1759 = vst [vmem:[%s203 + $0x10] sm:$0xf] %v1695
      %1760 = vst [vmem:[%s203 + $0x14] sm:$0xf] %v1696
      %1761 = vst [vmem:[%s203 + $0x18] sm:$0xf] %v1697
      %1762 = vst [vmem:[%s203 + $0x1c] sm:$0xf] %v1698
      %1763 = vst [vmem:[%s203 + $0x20] sm:$0xf] %v1699
      %1764 = vst [vmem:[%s203 + $0x24] sm:$0xf] %v1700
      %1765 = vst [vmem:[%s203 + $0x28] sm:$0xf] %v1701
      %1766 = vst [vmem:[%s203 + $0x2c] sm:$0xf] %v1702
      %1767 = vst [vmem:[%s203 + $0x30] sm:$0xf] %v1703
      %1768 = vst [vmem:[%s203 + $0x34] sm:$0xf] %v1704
      %1769 = vst [vmem:[%s203 + $0x38] sm:$0xf] %v1705
      %1770 = vst [vmem:[%s203 + $0x3c] sm:$0xf] %v1706
      %1771 = vst [vmem:[%s203 + $0x40] sm:$0xf] %v1707
      %1772 = vst [vmem:[%s203 + $0x44] sm:$0xf] %v1708
      %1773 = vst [vmem:[%s203 + $0x48] sm:$0xf] %v1709
      %1774 = vst [vmem:[%s203 + $0x4c] sm:$0xf] %v1710
      %1775 = vst [vmem:[%s203 + $0x50] sm:$0xf] %v1711
      %1776 = vst [vmem:[%s203 + $0x54] sm:$0xf] %v1712
      %1777 = vst [vmem:[%s203 + $0x58] sm:$0xf] %v1713
      %1778 = vst [vmem:[%s203 + $0x5c] sm:$0xf] %v1714
      %1779 = vst [vmem:[%s203 + $0x60] sm:$0xf] %v1715
      %1780 = vst [vmem:[%s203 + $0x64] sm:$0xf] %v1716
      %1781 = vst [vmem:[%s203 + $0x68] sm:$0xf] %v1717
      %1782 = vst [vmem:[%s203 + $0x6c] sm:$0xf] %v1718
      %1783 = vst [vmem:[%s203 + $0x70] sm:$0xf] %v1719
      %1784 = vst [vmem:[%s203 + $0x74] sm:$0xf] %v1720
      %1785 = vst [vmem:[%s203 + $0x78] sm:$0xf] %v1721
      %1786 = vst [vmem:[%s203 + $0x7c] sm:$0xf] %v1722
      %s1787 = smul.u32 32, %s16
      %p1788 = scmp.lt.s32.totalorder %s1787, 63
      %s1789 = scalar_select %p1788, %s1787, 63
      %s1790 = smul.addr %s1789, 4
      %s1791 = scalar_lea.vmem %s4, %s1790
      // Predicated region
      $region37: #{cifar10net_forward.9} parent=35 // pred_check
        %p1792 = pneg %p123
      $region38: #{cifar10net_forward.9} parent=35 // pred_check_branch
        %1794 = sbr.rel (%p1792) target = $region40
      $region39: #{cifar10net_forward.9} parent=35 // pred_region
        %s1795 = smul.u32 32, %s16
      $region40: #{cifar10net_forward.9} parent=35 // pred_fallthru
        _
    $region36: #{cifar10net_forward.9} parent=5 // pred_fallthru
      _
    %p1796 = scmp.le.s32.totalorder 2, %s11
    // Predicated region
    $region41: #{cifar10net_forward.9} parent=5 // pred_check
      %p1797 = pneg %p1796
    $region42: #{cifar10net_forward.9} parent=5 // pred_check_branch
      %1799 = sbr.rel (%p1797) target = $region44
    $region43: #{cifar10net_forward.9} parent=5 // pred_region
      %s1800 = ssub.s32 %s11, 2
      // Predicated region
      $region45: #{cifar10net_forward.9} parent=43 // pred_check
        %p1801 = pneg %p129
      $region46: #{cifar10net_forward.9} parent=43 // pred_check_branch
        %1803 = sbr.rel (%p1801) target = $region48
      $region47: #{cifar10net_forward.9} parent=43 // pred_region
        %s1804 = smul.u32 32, %s17
        %p1805 = scmp.lt.s32.totalorder %s1804, 63
        %s1806 = scalar_select %p1805, %s1804, 63
        %s1807 = smul.addr %s1806, 4
        %s1808 = scalar_lea.vmem %s4, %s1807
      $region48: #{cifar10net_forward.9} parent=43 // pred_fallthru
        _
    $region44: #{cifar10net_forward.9} parent=5 // pred_fallthru
      _
  $region6: #{cifar10net_forward.9} parent=0 // loop_footer
    %s15 = sadd.s32 1, %s11
  $region7: #{cifar10net_forward.9} parent=0 // loop_footer_branch
    %10 = sbr.rel target = $region3
  $region8: #{cifar10net_forward.9} parent=0 // loop_exit
    _

// kernel: cifar10net_forward.10
$region0: #{cifar10net_forward.10}
  #allocation0 [shape = 'u32[]', space=smem, size = 0x4, offset = 0x4, fixed_abs, tag = 'smem constant byte address 0x4 - core index']
  #allocation1 [shape = 'u32[144,128]{1,0:T(1,128)}', space=vmem, size = 0x12000, scoped, tag = 'internal scratch']
  %s0 = inlined_call_operand.vmem [shape: bf16[16,2,8,256], index: 0, kind: input, shape index: {}]
  %s1 = inlined_call_operand.vmem [shape: bf16[16,8,128], index: 1, kind: output, shape index: {}]
  %s2 = sld [smem:[#allocation0]]
  $region37: #{cifar10net_forward.10} parent=0
    _
  %s4 = ssub.s32 1, %s2
  %s5 = scalar_select 0, %s4, %s2
  loop: start=0, step=1, limit=4
  $region2: #{cifar10net_forward.10} parent=0 // loop_pre_header
    _
  $region3: #{cifar10net_forward.10} parent=0 // loop_header
    %s7 = sphi 0, %s11
    %p8 = scmp.ge.s32.totalorder %s7, 4
    %s17 = sphi 0, %s19
    %s20 = sphi 0, %s17
    %s21 = sphi 0, %s20
    %s37 = sphi 0, %s21
    %s43 = sphi 0, %s45
    %s46 = sphi 0, %s43
    %s47 = sphi 0, %s46
    %s63 = sphi 0, %s47
  $region4: #{cifar10net_forward.10} parent=0 // loop_header_branch
    %10 = sbr.rel (%p8) target = $region8
  $region5: #{cifar10net_forward.10} parent=0 // loop_body
    %s12 = ssub.s32 %s7, 1
    %s13 = ssub.s32 %s7, 2
    %s14 = sadd.s32 %s7, 1
    %s15 = ssub.s32 %s7, %s14
    %p16 = scmp.eq.s32.totalorder %s15, 0
    %s18 = sadd.s32 %s17, 1
    %s19 = scalar_select %p16, %s17, %s18
    %p22 = pneg %p16
    %p23 = scmp.eq.s32.totalorder %s7, 1
    %p24 = por %p22, %p23
    %p25 = scmp.ne.s32.totalorder %s17, %s20
    %p26 = scmp.eq.s32.totalorder %s7, 0
    %p27 = por %p25, %p26
    %p28 = scmp.ne.s32.totalorder %s17, %s20
    %p29 = scmp.eq.s32.totalorder %s12, 1
    %p30 = por %p28, %p29
    %p31 = scmp.ne.s32.totalorder %s20, %s21
    %p32 = scmp.eq.s32.totalorder %s12, 0
    %p33 = por %p31, %p32
    %p34 = scmp.ne.s32.totalorder %s20, %s21
    %p35 = scmp.eq.s32.totalorder %s13, 1
    %p36 = por %p34, %p35
    %p38 = scmp.ne.s32.totalorder %s21, %s37
    %p39 = scmp.eq.s32.totalorder %s13, 0
    %p40 = por %p38, %p39
    %s41 = ssub.s32 %s7, %s14
    %p42 = scmp.eq.s32.totalorder %s41, 0
    %s44 = sadd.s32 %s43, 1
    %s45 = scalar_select %p42, %s43, %s44
    %p48 = pneg %p42
    %p49 = scmp.eq.s32.totalorder %s7, 1
    %p50 = por %p48, %p49
    %p51 = scmp.ne.s32.totalorder %s43, %s46
    %p52 = scmp.eq.s32.totalorder %s7, 0
    %p53 = por %p51, %p52
    %p54 = scmp.ne.s32.totalorder %s43, %s46
    %p55 = scmp.eq.s32.totalorder %s12, 1
    %p56 = por %p54, %p55
    %p57 = scmp.ne.s32.totalorder %s46, %s47
    %p58 = scmp.eq.s32.totalorder %s12, 0
    %p59 = por %p57, %p58
    %p60 = scmp.ne.s32.totalorder %s46, %s47
    %p61 = scmp.eq.s32.totalorder %s13, 1
    %p62 = por %p60, %p61
    %p64 = scmp.ne.s32.totalorder %s47, %s63
    %p65 = scmp.eq.s32.totalorder %s13, 0
    %p66 = por %p64, %p65
    %p67 = scmp.le.s32.totalorder 1, %s7
    %p68 = scmp.lt.s32.totalorder %s7, 3
    %p69 = pnand %p67, %p68
    %p70 = pneg %p69
    // Predicated region
    $region9: #{cifar10net_forward.10} parent=5 // pred_check
      _
    $region10: #{cifar10net_forward.10} parent=5 // pred_check_branch
      %72 = sbr.rel (%p69) target = $region12
    $region11: #{cifar10net_forward.10} parent=5 // pred_region
      %s73 = ssub.s32 %s7, 1
    $region12: #{cifar10net_forward.10} parent=5 // pred_fallthru
      _
    %p74 = scmp.lt.s32.totalorder %s7, 2
    // Predicated region
    $region13: #{cifar10net_forward.10} parent=5 // pred_check
      %p75 = pneg %p74
    $region14: #{cifar10net_forward.10} parent=5 // pred_check_branch
      %77 = sbr.rel (%p75) target = $region16
    $region15: #{cifar10net_forward.10} parent=5 // pred_region
      // Predicated region
      $region17: #{cifar10net_forward.10} parent=15 // pred_check
        %p78 = pneg %p27
      $region18: #{cifar10net_forward.10} parent=15 // pred_check_branch
        %80 = sbr.rel (%p78) target = $region20
      $region19: #{cifar10net_forward.10} parent=15 // pred_region
        %s81 = smul.u32 8, %s7
        %p82 = scmp.lt.s32.totalorder %s81, 15
        %s83 = scalar_select %p82, %s81, 15
        %s84 = smul.addr %s83, 4
        %s85 = smul.addr %s84, 4
        %s86 = scalar_lea.vmem %s0, %s85
        %s87 = smul.u32 8, %s7
      $region20: #{cifar10net_forward.10} parent=15 // pred_fallthru
        _
    $region16: #{cifar10net_forward.10} parent=5 // pred_fallthru
      _
    %p88 = scmp.le.s32.totalorder 1, %s7
    %p89 = scmp.lt.s32.totalorder %s7, 3
    %p90 = pnand %p88, %p89
    %p91 = pneg %p90
    // Predicated region
    $region21: #{cifar10net_forward.10} parent=5 // pred_check
      _
    $region22: #{cifar10net_forward.10} parent=5 // pred_check_branch
      %93 = sbr.rel (%p90) target = $region24
    $region23: #{cifar10net_forward.10} parent=5 // pred_region
      %s94 = ssub.s32 %s7, 1
      %s95 = smul.u32 8, %s12
      %p96 = scmp.lt.s32.totalorder %s95, 15
      %s97 = scalar_select %p96, %s95, 15
      %s98 = smul.addr %s97, 4
      %s99 = smul.addr %s98, 4
      %s100 = scalar_lea.vmem %s0, %s99
      %p101 = pneg %p33
      %p102 = pneg %p30
      %p103 = pneg %p59
      %p104 = pneg %p56
      %s105 = smul.u32 8, %s12
      %p106 = scmp.lt.s32.totalorder %s105, 15
      %s107 = scalar_select %p106, %s105, 15
      %s108 = smul.addr %s107, 4
      %s109 = scalar_lea.vmem %s1, %s108
      %s110 = smul.u32 8, %s12
      %p111 = scmp.lt.s32.totalorder %s110, 15
      %s112 = scalar_select %p111, %s110, 15
      %s113 = smul.addr %s112, 4
      %s114 = smul.addr %s113, 4
      %s115 = scalar_lea.vmem %s0, %s114
      %s116 = smul.u32 8, %s12
      %s117 = smul.u32 8, %s12
      %p118 = scmp.lt.s32.totalorder %s117, 15
      %s119 = scalar_select %p118, %s117, 15
      %s120 = smul.addr %s119, 4
      %s121 = scalar_lea.vmem %s1, %s120
      %s122 = smul.u32 8, %s12
      %v123 = vld [vmem:[%s115] sm:$0xff]
      %v124 = vld [vmem:[%s115 + $0x10] sm:$0xff]
      %v125 = vld [vmem:[%s115 + $0x20] sm:$0xff]
      %v126 = vld [vmem:[%s115 + $0x30] sm:$0xff]
      %v127 = vld [vmem:[%s115 + $0x40] sm:$0xff]
      %v128 = vld [vmem:[%s115 + $0x50] sm:$0xff]
      %v129 = vld [vmem:[%s115 + $0x60] sm:$0xff]
      %v130 = vld [vmem:[%s115 + $0x70] sm:$0xff]
      %s131 = scalar_lea.vmem %s115, 8
      %v132 = vld [vmem:[%s131] sm:$0xff]
      %v133 = vld [vmem:[%s131 + $0x10] sm:$0xff]
      %v134 = vld [vmem:[%s131 + $0x20] sm:$0xff]
      %v135 = vld [vmem:[%s131 + $0x30] sm:$0xff]
      %v136 = vld [vmem:[%s131 + $0x40] sm:$0xff]
      %v137 = vld [vmem:[%s131 + $0x50] sm:$0xff]
      %v138 = vld [vmem:[%s131 + $0x60] sm:$0xff]
      %v139 = vld [vmem:[%s131 + $0x70] sm:$0xff]
      %v140 = vmax.bf16 %v123, %v132
      %v141 = vmax.bf16 %v124, %v133
      %v142 = vmax.bf16 %v125, %v134
      %v143 = vmax.bf16 %v126, %v135
      %v144 = vmax.bf16 %v127, %v136
      %v145 = vmax.bf16 %v128, %v137
      %v146 = vmax.bf16 %v129, %v138
      %v147 = vmax.bf16 %v130, %v139
      %v156 = vrot.slane %v140, 4
      %v157 = vrot.slane %v141, 4
      %v158 = vrot.slane %v142, 4
      %v159 = vrot.slane %v143, 4
      %v160 = vrot.slane %v144, 4
      %v161 = vrot.slane %v145, 4
      %v162 = vrot.slane %v146, 4
      %v163 = vrot.slane %v147, 4
      %v172 = vmax.bf16 %v140, %v156
      %v173 = vmax.bf16 %v141, %v157
      %v174 = vmax.bf16 %v142, %v158
      %v175 = vmax.bf16 %v143, %v159
      %v176 = vmax.bf16 %v144, %v160
      %v177 = vmax.bf16 %v145, %v161
      %v178 = vmax.bf16 %v146, %v162
      %v179 = vmax.bf16 %v147, %v163
      %180 = vst [vmem:[%s121] sm:$0xf] %v172
      %181 = vst [vmem:[%s121 + $0x4] sm:$0xf] %v173
      %182 = vst [vmem:[%s121 + $0x8] sm:$0xf] %v174
      %183 = vst [vmem:[%s121 + $0xc] sm:$0xf] %v175
      %184 = vst [vmem:[%s121 + $0x10] sm:$0xf] %v176
      %185 = vst [vmem:[%s121 + $0x14] sm:$0xf] %v177
      %186 = vst [vmem:[%s121 + $0x18] sm:$0xf] %v178
      %187 = vst [vmem:[%s121 + $0x1c] sm:$0xf] %v179
      %s188 = smul.u32 8, %s12
      %p189 = scmp.lt.s32.totalorder %s188, 15
      %s190 = scalar_select %p189, %s188, 15
      %s191 = smul.addr %s190, 4
      %s192 = scalar_lea.vmem %s1, %s191
      // Predicated region
      $region25: #{cifar10net_forward.10} parent=23 // pred_check
        %p193 = pneg %p56
      $region26: #{cifar10net_forward.10} parent=23 // pred_check_branch
        %195 = sbr.rel (%p193) target = $region28
      $region27: #{cifar10net_forward.10} parent=23 // pred_region
        %s196 = smul.u32 8, %s12
      $region28: #{cifar10net_forward.10} parent=23 // pred_fallthru
        _
    $region24: #{cifar10net_forward.10} parent=5 // pred_fallthru
      _
    %p197 = scmp.le.s32.totalorder 2, %s7
    // Predicated region
    $region29: #{cifar10net_forward.10} parent=5 // pred_check
      %p198 = pneg %p197
    $region30: #{cifar10net_forward.10} parent=5 // pred_check_branch
      %200 = sbr.rel (%p198) target = $region32
    $region31: #{cifar10net_forward.10} parent=5 // pred_region
      %s201 = ssub.s32 %s7, 2
      // Predicated region
      $region33: #{cifar10net_forward.10} parent=31 // pred_check
        %p202 = pneg %p62
      $region34: #{cifar10net_forward.10} parent=31 // pred_check_branch
        %204 = sbr.rel (%p202) target = $region36
      $region35: #{cifar10net_forward.10} parent=31 // pred_region
        %s205 = smul.u32 8, %s13
        %p206 = scmp.lt.s32.totalorder %s205, 15
        %s207 = scalar_select %p206, %s205, 15
        %s208 = smul.addr %s207, 4
        %s209 = scalar_lea.vmem %s1, %s208
      $region36: #{cifar10net_forward.10} parent=31 // pred_fallthru
        _
    $region32: #{cifar10net_forward.10} parent=5 // pred_fallthru
      _
  $region6: #{cifar10net_forward.10} parent=0 // loop_footer
    %s11 = sadd.s32 1, %s7
  $region7: #{cifar10net_forward.10} parent=0 // loop_footer_branch
    %6 = sbr.rel target = $region3
  $region8: #{cifar10net_forward.10} parent=0 // loop_exit
    _

// kernel: cifar10net_forward.12
$region0: #{cifar10net_forward.12}
  #allocation0 [shape = 'u32[]', space=smem, size = 0x4, offset = 0x4, fixed_abs, tag = 'smem constant byte address 0x4 - core index']
  #allocation1 [shape = 'u32[144,128]{1,0:T(1,128)}', space=vmem, size = 0x12000, scoped, tag = 'internal scratch']
  %s0 = inlined_call_operand.vmem [shape: bf16[8,2,4,512], index: 0, kind: input, shape index: {}]
  %s1 = inlined_call_operand.vmem [shape: bf16[8,4,256], index: 1, kind: output, shape index: {}]
  %s2 = sld [smem:[#allocation0]]
  $region37: #{cifar10net_forward.12} parent=0
    _
  %s4 = ssub.s32 1, %s2
  %s5 = scalar_select 0, %s4, %s2
  loop: start=0, step=1, limit=4
  $region2: #{cifar10net_forward.12} parent=0 // loop_pre_header
    _
  $region3: #{cifar10net_forward.12} parent=0 // loop_header
    %s7 = sphi 0, %s11
    %p8 = scmp.ge.s32.totalorder %s7, 4
    %s17 = sphi 0, %s19
    %s20 = sphi 0, %s17
    %s21 = sphi 0, %s20
    %s37 = sphi 0, %s21
    %s43 = sphi 0, %s45
    %s46 = sphi 0, %s43
    %s47 = sphi 0, %s46
    %s63 = sphi 0, %s47
  $region4: #{cifar10net_forward.12} parent=0 // loop_header_branch
    %10 = sbr.rel (%p8) target = $region8
  $region5: #{cifar10net_forward.12} parent=0 // loop_body
    %s12 = ssub.s32 %s7, 1
    %s13 = ssub.s32 %s7, 2
    %s14 = sadd.s32 %s7, 1
    %s15 = ssub.s32 %s7, %s14
    %p16 = scmp.eq.s32.totalorder %s15, 0
    %s18 = sadd.s32 %s17, 1
    %s19 = scalar_select %p16, %s17, %s18
    %p22 = pneg %p16
    %p23 = scmp.eq.s32.totalorder %s7, 1
    %p24 = por %p22, %p23
    %p25 = scmp.ne.s32.totalorder %s17, %s20
    %p26 = scmp.eq.s32.totalorder %s7, 0
    %p27 = por %p25, %p26
    %p28 = scmp.ne.s32.totalorder %s17, %s20
    %p29 = scmp.eq.s32.totalorder %s12, 1
    %p30 = por %p28, %p29
    %p31 = scmp.ne.s32.totalorder %s20, %s21
    %p32 = scmp.eq.s32.totalorder %s12, 0
    %p33 = por %p31, %p32
    %p34 = scmp.ne.s32.totalorder %s20, %s21
    %p35 = scmp.eq.s32.totalorder %s13, 1
    %p36 = por %p34, %p35
    %p38 = scmp.ne.s32.totalorder %s21, %s37
    %p39 = scmp.eq.s32.totalorder %s13, 0
    %p40 = por %p38, %p39
    %s41 = ssub.s32 %s7, %s14
    %p42 = scmp.eq.s32.totalorder %s41, 0
    %s44 = sadd.s32 %s43, 1
    %s45 = scalar_select %p42, %s43, %s44
    %p48 = pneg %p42
    %p49 = scmp.eq.s32.totalorder %s7, 1
    %p50 = por %p48, %p49
    %p51 = scmp.ne.s32.totalorder %s43, %s46
    %p52 = scmp.eq.s32.totalorder %s7, 0
    %p53 = por %p51, %p52
    %p54 = scmp.ne.s32.totalorder %s43, %s46
    %p55 = scmp.eq.s32.totalorder %s12, 1
    %p56 = por %p54, %p55
    %p57 = scmp.ne.s32.totalorder %s46, %s47
    %p58 = scmp.eq.s32.totalorder %s12, 0
    %p59 = por %p57, %p58
    %p60 = scmp.ne.s32.totalorder %s46, %s47
    %p61 = scmp.eq.s32.totalorder %s13, 1
    %p62 = por %p60, %p61
    %p64 = scmp.ne.s32.totalorder %s47, %s63
    %p65 = scmp.eq.s32.totalorder %s13, 0
    %p66 = por %p64, %p65
    %p67 = scmp.le.s32.totalorder 1, %s7
    %p68 = scmp.lt.s32.totalorder %s7, 3
    %p69 = pnand %p67, %p68
    %p70 = pneg %p69
    // Predicated region
    $region9: #{cifar10net_forward.12} parent=5 // pred_check
      _
    $region10: #{cifar10net_forward.12} parent=5 // pred_check_branch
      %72 = sbr.rel (%p69) target = $region12
    $region11: #{cifar10net_forward.12} parent=5 // pred_region
      %s73 = ssub.s32 %s7, 1
    $region12: #{cifar10net_forward.12} parent=5 // pred_fallthru
      _
    %p74 = scmp.lt.s32.totalorder %s7, 2
    // Predicated region
    $region13: #{cifar10net_forward.12} parent=5 // pred_check
      %p75 = pneg %p74
    $region14: #{cifar10net_forward.12} parent=5 // pred_check_branch
      %77 = sbr.rel (%p75) target = $region16
    $region15: #{cifar10net_forward.12} parent=5 // pred_region
      // Predicated region
      $region17: #{cifar10net_forward.12} parent=15 // pred_check
        %p78 = pneg %p27
      $region18: #{cifar10net_forward.12} parent=15 // pred_check_branch
        %80 = sbr.rel (%p78) target = $region20
      $region19: #{cifar10net_forward.12} parent=15 // pred_region
        %s81 = smul.u32 4, %s7
        %p82 = scmp.lt.s32.totalorder %s81, 7
        %s83 = scalar_select %p82, %s81, 7
        %s84 = smul.addr %s83, 8
        %s85 = smul.addr %s84, 2
        %s86 = scalar_lea.vmem %s0, %s85
        %s87 = smul.u32 4, %s7
      $region20: #{cifar10net_forward.12} parent=15 // pred_fallthru
        _
    $region16: #{cifar10net_forward.12} parent=5 // pred_fallthru
      _
    %p88 = scmp.le.s32.totalorder 1, %s7
    %p89 = scmp.lt.s32.totalorder %s7, 3
    %p90 = pnand %p88, %p89
    %p91 = pneg %p90
    // Predicated region
    $region21: #{cifar10net_forward.12} parent=5 // pred_check
      _
    $region22: #{cifar10net_forward.12} parent=5 // pred_check_branch
      %93 = sbr.rel (%p90) target = $region24
    $region23: #{cifar10net_forward.12} parent=5 // pred_region
      %s94 = ssub.s32 %s7, 1
      %s95 = smul.u32 4, %s12
      %p96 = scmp.lt.s32.totalorder %s95, 7
      %s97 = scalar_select %p96, %s95, 7
      %s98 = smul.addr %s97, 8
      %s99 = smul.addr %s98, 2
      %s100 = scalar_lea.vmem %s0, %s99
      %p101 = pneg %p33
      %p102 = pneg %p30
      %p103 = pneg %p59
      %p104 = pneg %p56
      %s105 = smul.u32 4, %s12
      %p106 = scmp.lt.s32.totalorder %s105, 7
      %s107 = scalar_select %p106, %s105, 7
      %s108 = smul.addr %s107, 2
      %s109 = smul.addr %s108, 2
      %s110 = scalar_lea.vmem %s1, %s109
      %s111 = smul.u32 4, %s12
      %p112 = scmp.lt.s32.totalorder %s111, 7
      %s113 = scalar_select %p112, %s111, 7
      %s114 = smul.addr %s113, 8
      %s115 = smul.addr %s114, 2
      %s116 = scalar_lea.vmem %s0, %s115
      %s117 = smul.u32 4, %s12
      %s118 = smul.u32 4, %s12
      %p119 = scmp.lt.s32.totalorder %s118, 7
      %s120 = scalar_select %p119, %s118, 7
      %s121 = smul.addr %s120, 2
      %s122 = smul.addr %s121, 2
      %s123 = scalar_lea.vmem %s1, %s122
      %s124 = smul.u32 4, %s12
      %v125 = vld [vmem:[%s116] sm:$0xff]
      %v126 = vld [vmem:[%s116 + $0x10] sm:$0xff]
      %v127 = vld [vmem:[%s116 + $0x20] sm:$0xff]
      %v128 = vld [vmem:[%s116 + $0x30] sm:$0xff]
      %s129 = scalar_lea.vmem %s116, 8
      %v130 = vld [vmem:[%s129] sm:$0xff]
      %v131 = vld [vmem:[%s129 + $0x10] sm:$0xff]
      %v132 = vld [vmem:[%s129 + $0x20] sm:$0xff]
      %v133 = vld [vmem:[%s129 + $0x30] sm:$0xff]
      %v134 = vmax.bf16 %v125, %v130
      %v135 = vmax.bf16 %v126, %v131
      %v136 = vmax.bf16 %v127, %v132
      %v137 = vmax.bf16 %v128, %v133
      %v142 = vrot.slane %v134, 4
      %v143 = vrot.slane %v135, 4
      %v144 = vrot.slane %v136, 4
      %v145 = vrot.slane %v137, 4
      %v150 = vmax.bf16 %v134, %v142
      %v151 = vmax.bf16 %v135, %v143
      %v152 = vmax.bf16 %v136, %v144
      %v153 = vmax.bf16 %v137, %v145
      %154 = vst [vmem:[%s123] sm:$0xf] %v150
      %155 = vst [vmem:[%s123 + $0x4] sm:$0xf] %v151
      %156 = vst [vmem:[%s123 + $0x8] sm:$0xf] %v152
      %157 = vst [vmem:[%s123 + $0xc] sm:$0xf] %v153
      %s158 = smul.u32 4, %s12
      %p159 = scmp.lt.s32.totalorder %s158, 7
      %s160 = scalar_select %p159, %s158, 7
      %s161 = smul.addr %s160, 2
      %s162 = smul.addr %s161, 2
      %s163 = scalar_lea.vmem %s1, %s162
      // Predicated region
      $region25: #{cifar10net_forward.12} parent=23 // pred_check
        %p164 = pneg %p56
      $region26: #{cifar10net_forward.12} parent=23 // pred_check_branch
        %166 = sbr.rel (%p164) target = $region28
      $region27: #{cifar10net_forward.12} parent=23 // pred_region
        %s167 = smul.u32 4, %s12
      $region28: #{cifar10net_forward.12} parent=23 // pred_fallthru
        _
    $region24: #{cifar10net_forward.12} parent=5 // pred_fallthru
      _
    %p168 = scmp.le.s32.totalorder 2, %s7
    // Predicated region
    $region29: #{cifar10net_forward.12} parent=5 // pred_check
      %p169 = pneg %p168
    $region30: #{cifar10net_forward.12} parent=5 // pred_check_branch
      %171 = sbr.rel (%p169) target = $region32
    $region31: #{cifar10net_forward.12} parent=5 // pred_region
      %s172 = ssub.s32 %s7, 2
      // Predicated region
      $region33: #{cifar10net_forward.12} parent=31 // pred_check
        %p173 = pneg %p62
      $region34: #{cifar10net_forward.12} parent=31 // pred_check_branch
        %175 = sbr.rel (%p173) target = $region36
      $region35: #{cifar10net_forward.12} parent=31 // pred_region
        %s176 = smul.u32 4, %s13
        %p177 = scmp.lt.s32.totalorder %s176, 7
        %s178 = scalar_select %p177, %s176, 7
        %s179 = smul.addr %s178, 2
        %s180 = smul.addr %s179, 2
        %s181 = scalar_lea.vmem %s1, %s180
      $region36: #{cifar10net_forward.12} parent=31 // pred_fallthru
        _
    $region32: #{cifar10net_forward.12} parent=5 // pred_fallthru
      _
  $region6: #{cifar10net_forward.12} parent=0 // loop_footer
    %s11 = sadd.s32 1, %s7
  $region7: #{cifar10net_forward.12} parent=0 // loop_footer_branch
    %6 = sbr.rel target = $region3
  $region8: #{cifar10net_forward.12} parent=0 // loop_exit
    _

// kernel: cifar10net_forward.11
$region0: #{cifar10net_forward.11}
  #allocation0 [shape = 'u32[]', space=smem, size = 0x4, offset = 0x4, fixed_abs, tag = 'smem constant byte address 0x4 - core index']
  #allocation1 [shape = 'u32[144,128]{1,0:T(1,128)}', space=vmem, size = 0x12000, scoped, tag = 'internal scratch']
  #allocation2 [shape = 'f32[1]{0:T(128)S(6)}', space=smem, size = 0x200, scoped, tag = 'scoped memory for cifar10net_forward.11']
  %s0 = inlined_call_operand.vmem [shape: bf16[128,1152], index: 0, kind: input, shape index: {}]
  %s1 = inlined_call_operand.vmem [shape: bf16[1152,256], index: 1, kind: input, shape index: {}]
  %s2 = inlined_call_operand.vmem [shape: f32[1,256], index: 2, kind: input, shape index: {}]
  %s3 = inlined_call_operand.<no memory space> [shape: f32[1], index: 3, kind: input, shape index: {}]
  %s4 = inlined_call_operand.vmem [shape: bf16[128,256], index: 4, kind: output, shape index: {}]
  %s5 = sld [smem:[#allocation0]]
  $region49: #{cifar10net_forward.11} parent=0
    _
  %s7 = ssub.s32 1, %s5
  %s8 = scalar_select 0, %s7, %s5
  %9 = sst [smem:[#allocation2]] %s3
  loop: start=0, step=1, limit=4
  $region2: #{cifar10net_forward.11} parent=0 // loop_pre_header
    _
  $region3: #{cifar10net_forward.11} parent=0 // loop_header
    %s11 = sphi 0, %s15
    %p12 = scmp.ge.s32.totalorder %s11, 4
    %s21 = sphi 0, %s23
    %s24 = sphi 0, %s21
    %s25 = sphi 0, %s24
    %s41 = sphi 0, %s25
    %s45 = sphi 0, %s45
    %s47 = sphi 0, %s45
    %s48 = sphi 0, %s47
    %s62 = sphi 0, %s48
    %s66 = sphi 0, %s66
    %s68 = sphi 0, %s66
    %s69 = sphi 0, %s68
    %s83 = sphi 0, %s69
    %s87 = sphi 0, %s87
    %s89 = sphi 0, %s87
    %s90 = sphi 0, %s89
    %s104 = sphi 0, %s90
    %s110 = sphi 0, %s112
    %s113 = sphi 0, %s110
    %s114 = sphi 0, %s113
    %s130 = sphi 0, %s114
  $region4: #{cifar10net_forward.11} parent=0 // loop_header_branch
    %14 = sbr.rel (%p12) target = $region8
  $region5: #{cifar10net_forward.11} parent=0 // loop_body
    %s16 = ssub.s32 %s11, 1
    %s17 = ssub.s32 %s11, 2
    %s18 = sadd.s32 %s11, 1
    %s19 = ssub.s32 %s11, %s18
    %p20 = scmp.eq.s32.totalorder %s19, 0
    %s22 = sadd.s32 %s21, 1
    %s23 = scalar_select %p20, %s21, %s22
    %p26 = pneg %p20
    %p27 = scmp.eq.s32.totalorder %s11, 1
    %p28 = por %p26, %p27
    %p29 = scmp.ne.s32.totalorder %s21, %s24
    %p30 = scmp.eq.s32.totalorder %s11, 0
    %p31 = por %p29, %p30
    %p32 = scmp.ne.s32.totalorder %s21, %s24
    %p33 = scmp.eq.s32.totalorder %s16, 1
    %p34 = por %p32, %p33
    %p35 = scmp.ne.s32.totalorder %s24, %s25
    %p36 = scmp.eq.s32.totalorder %s16, 0
    %p37 = por %p35, %p36
    %p38 = scmp.ne.s32.totalorder %s24, %s25
    %p39 = scmp.eq.s32.totalorder %s17, 1
    %p40 = por %p38, %p39
    %p42 = scmp.ne.s32.totalorder %s25, %s41
    %p43 = scmp.eq.s32.totalorder %s17, 0
    %p44 = por %p42, %p43
    %s46 = sadd.s32 %s45, 1
    %p49 = scmp.eq.s32.totalorder %s11, 1
    %p50 = scmp.ne.s32.totalorder %s45, %s47
    %p51 = scmp.eq.s32.totalorder %s11, 0
    %p52 = por %p50, %p51
    %p53 = scmp.ne.s32.totalorder %s45, %s47
    %p54 = scmp.eq.s32.totalorder %s16, 1
    %p55 = por %p53, %p54
    %p56 = scmp.ne.s32.totalorder %s47, %s48
    %p57 = scmp.eq.s32.totalorder %s16, 0
    %p58 = por %p56, %p57
    %p59 = scmp.ne.s32.totalorder %s47, %s48
    %p60 = scmp.eq.s32.totalorder %s17, 1
    %p61 = por %p59, %p60
    %p63 = scmp.ne.s32.totalorder %s48, %s62
    %p64 = scmp.eq.s32.totalorder %s17, 0
    %p65 = por %p63, %p64
    %s67 = sadd.s32 %s66, 1
    %p70 = scmp.eq.s32.totalorder %s11, 1
    %p71 = scmp.ne.s32.totalorder %s66, %s68
    %p72 = scmp.eq.s32.totalorder %s11, 0
    %p73 = por %p71, %p72
    %p74 = scmp.ne.s32.totalorder %s66, %s68
    %p75 = scmp.eq.s32.totalorder %s16, 1
    %p76 = por %p74, %p75
    %p77 = scmp.ne.s32.totalorder %s68, %s69
    %p78 = scmp.eq.s32.totalorder %s16, 0
    %p79 = por %p77, %p78
    %p80 = scmp.ne.s32.totalorder %s68, %s69
    %p81 = scmp.eq.s32.totalorder %s17, 1
    %p82 = por %p80, %p81
    %p84 = scmp.ne.s32.totalorder %s69, %s83
    %p85 = scmp.eq.s32.totalorder %s17, 0
    %p86 = por %p84, %p85
    %s88 = sadd.s32 %s87, 1
    %p91 = scmp.eq.s32.totalorder %s11, 1
    %p92 = scmp.ne.s32.totalorder %s87, %s89
    %p93 = scmp.eq.s32.totalorder %s11, 0
    %p94 = por %p92, %p93
    %p95 = scmp.ne.s32.totalorder %s87, %s89
    %p96 = scmp.eq.s32.totalorder %s16, 1
    %p97 = por %p95, %p96
    %p98 = scmp.ne.s32.totalorder %s89, %s90
    %p99 = scmp.eq.s32.totalorder %s16, 0
    %p100 = por %p98, %p99
    %p101 = scmp.ne.s32.totalorder %s89, %s90
    %p102 = scmp.eq.s32.totalorder %s17, 1
    %p103 = por %p101, %p102
    %p105 = scmp.ne.s32.totalorder %s90, %s104
    %p106 = scmp.eq.s32.totalorder %s17, 0
    %p107 = por %p105, %p106
    %s108 = ssub.s32 %s11, %s18
    %p109 = scmp.eq.s32.totalorder %s108, 0
    %s111 = sadd.s32 %s110, 1
    %s112 = scalar_select %p109, %s110, %s111
    %p115 = pneg %p109
    %p116 = scmp.eq.s32.totalorder %s11, 1
    %p117 = por %p115, %p116
    %p118 = scmp.ne.s32.totalorder %s110, %s113
    %p119 = scmp.eq.s32.totalorder %s11, 0
    %p120 = por %p118, %p119
    %p121 = scmp.ne.s32.totalorder %s110, %s113
    %p122 = scmp.eq.s32.totalorder %s16, 1
    %p123 = por %p121, %p122
    %p124 = scmp.ne.s32.totalorder %s113, %s114
    %p125 = scmp.eq.s32.totalorder %s16, 0
    %p126 = por %p124, %p125
    %p127 = scmp.ne.s32.totalorder %s113, %s114
    %p128 = scmp.eq.s32.totalorder %s17, 1
    %p129 = por %p127, %p128
    %p131 = scmp.ne.s32.totalorder %s114, %s130
    %p132 = scmp.eq.s32.totalorder %s17, 0
    %p133 = por %p131, %p132
    %p134 = scmp.le.s32.totalorder 1, %s11
    %p135 = scmp.lt.s32.totalorder %s11, 3
    %p136 = pnand %p134, %p135
    %p137 = pneg %p136
    // Predicated region
    $region9: #{cifar10net_forward.11} parent=5 // pred_check
      _
    $region10: #{cifar10net_forward.11} parent=5 // pred_check_branch
      %139 = sbr.rel (%p136) target = $region12
    $region11: #{cifar10net_forward.11} parent=5 // pred_region
      %s140 = ssub.s32 %s11, 1
      // Predicated region
      $region13: #{cifar10net_forward.11} parent=11 // pred_check
        %p141 = pneg %p58
      $region14: #{cifar10net_forward.11} parent=11 // pred_check_branch
        %143 = sbr.rel (%p141) target = $region16
      $region15: #{cifar10net_forward.11} parent=11 // pred_region
        _
      $region16: #{cifar10net_forward.11} parent=11 // pred_fallthru
        _
      // Predicated region
      $region17: #{cifar10net_forward.11} parent=11 // pred_check
        %p144 = pneg %p79
      $region18: #{cifar10net_forward.11} parent=11 // pred_check_branch
        %146 = sbr.rel (%p144) target = $region20
      $region19: #{cifar10net_forward.11} parent=11 // pred_region
        _
      $region20: #{cifar10net_forward.11} parent=11 // pred_fallthru
        _
      // Predicated region
      $region21: #{cifar10net_forward.11} parent=11 // pred_check
        %p147 = pneg %p100
      $region22: #{cifar10net_forward.11} parent=11 // pred_check_branch
        %149 = sbr.rel (%p147) target = $region24
      $region23: #{cifar10net_forward.11} parent=11 // pred_region
        _
      $region24: #{cifar10net_forward.11} parent=11 // pred_fallthru
        _
    $region12: #{cifar10net_forward.11} parent=5 // pred_fallthru
      _
    %p150 = scmp.lt.s32.totalorder %s11, 2
    // Predicated region
    $region25: #{cifar10net_forward.11} parent=5 // pred_check
      %p151 = pneg %p150
    $region26: #{cifar10net_forward.11} parent=5 // pred_check_branch
      %153 = sbr.rel (%p151) target = $region28
    $region27: #{cifar10net_forward.11} parent=5 // pred_region
      // Predicated region
      $region29: #{cifar10net_forward.11} parent=27 // pred_check
        %p154 = pneg %p31
      $region30: #{cifar10net_forward.11} parent=27 // pred_check_branch
        %156 = sbr.rel (%p154) target = $region32
      $region31: #{cifar10net_forward.11} parent=27 // pred_region
        %s157 = smul.u32 8, %s11
        %p158 = scmp.lt.s32.totalorder %s157, 15
        %s159 = scalar_select %p158, %s157, 15
        %s160 = smul.addr %s159, 9
        %s161 = smul.addr %s160, 4
        %s162 = scalar_lea.vmem %s0, %s161
        %s163 = smul.u32 8, %s11
      $region32: #{cifar10net_forward.11} parent=27 // pred_fallthru
        _
    $region28: #{cifar10net_forward.11} parent=5 // pred_fallthru
      _
    %p164 = scmp.le.s32.totalorder 1, %s11
    %p165 = scmp.lt.s32.totalorder %s11, 3
    %p166 = pnand %p164, %p165
    %p167 = pneg %p166
    // Predicated region
    $region33: #{cifar10net_forward.11} parent=5 // pred_check
      _
    $region34: #{cifar10net_forward.11} parent=5 // pred_check_branch
      %169 = sbr.rel (%p166) target = $region36
    $region35: #{cifar10net_forward.11} parent=5 // pred_region
      %s170 = ssub.s32 %s11, 1
      %s171 = smul.u32 8, %s16
      %p172 = scmp.lt.s32.totalorder %s171, 15
      %s173 = scalar_select %p172, %s171, 15
      %s174 = smul.addr %s173, 9
      %s175 = smul.addr %s174, 4
      %s176 = scalar_lea.vmem %s0, %s175
      %p177 = pneg %p37
      %p178 = pneg %p34
      %p179 = pneg %p58
      %p180 = pneg %p55
      %p181 = pneg %p79
      %p182 = pneg %p76
      %p183 = pneg %p100
      %p184 = pneg %p97
      %p185 = pneg %p126
      %p186 = pneg %p123
      %s187 = smul.u32 8, %s16
      %p188 = scmp.lt.s32.totalorder %s187, 15
      %s189 = scalar_select %p188, %s187, 15
      %s190 = smul.addr %s189, 2
      %s191 = smul.addr %s190, 4
      %s192 = scalar_lea.vmem %s4, %s191
      %s193 = smul.u32 8, %s16
      %p194 = scmp.lt.s32.totalorder %s193, 15
      %s195 = scalar_select %p194, %s193, 15
      %s196 = smul.addr %s195, 9
      %s197 = smul.addr %s196, 4
      %s198 = scalar_lea.vmem %s0, %s197
      %s199 = smul.u32 8, %s16
      %s200 = smul.u32 8, %s16
      %p201 = scmp.lt.s32.totalorder %s200, 15
      %s202 = scalar_select %p201, %s200, 15
      %s203 = smul.addr %s202, 2
      %s204 = smul.addr %s203, 4
      %s205 = scalar_lea.vmem %s4, %s204
      %s206 = smul.u32 8, %s16
      %v208 = vld [vmem:[%s198] sm:$0xff]
      %v209 = vld [vmem:[%s198 + $0x8] sm:$0xff]
      %v210 = vld [vmem:[%s198 + $0x10] sm:$0xff]
      %v211 = vld [vmem:[%s198 + $0x18] sm:$0xff]
      %v212 = vld [vmem:[%s198 + $0x20] sm:$0xf]
      %v213 = vld [vmem:[%s198 + $0x24] sm:$0xff]
      %v214 = vld [vmem:[%s198 + $0x2c] sm:$0xff]
      %v215 = vld [vmem:[%s198 + $0x34] sm:$0xff]
      %v216 = vld [vmem:[%s198 + $0x3c] sm:$0xff]
      %v217 = vld [vmem:[%s198 + $0x44] sm:$0xf]
      %v218 = vld [vmem:[%s198 + $0x48] sm:$0xff]
      %v219 = vld [vmem:[%s198 + $0x50] sm:$0xff]
      %v220 = vld [vmem:[%s198 + $0x58] sm:$0xff]
      %v221 = vld [vmem:[%s198 + $0x60] sm:$0xff]
      %v222 = vld [vmem:[%s198 + $0x68] sm:$0xf]
      %v223 = vld [vmem:[%s198 + $0x6c] sm:$0xff]
      %v224 = vld [vmem:[%s198 + $0x74] sm:$0xff]
      %v225 = vld [vmem:[%s198 + $0x7c] sm:$0xff]
      %v226 = vld [vmem:[%s198 + $0x84] sm:$0xff]
      %v227 = vld [vmem:[%s198 + $0x8c] sm:$0xf]
      %v228 = vld [vmem:[%s198 + $0x90] sm:$0xff]
      %v229 = vld [vmem:[%s198 + $0x98] sm:$0xff]
      %v230 = vld [vmem:[%s198 + $0xa0] sm:$0xff]
      %v231 = vld [vmem:[%s198 + $0xa8] sm:$0xff]
      %v232 = vld [vmem:[%s198 + $0xb0] sm:$0xf]
      %v233 = vld [vmem:[%s198 + $0xb4] sm:$0xff]
      %v234 = vld [vmem:[%s198 + $0xbc] sm:$0xff]
      %v235 = vld [vmem:[%s198 + $0xc4] sm:$0xff]
      %v236 = vld [vmem:[%s198 + $0xcc] sm:$0xff]
      %v237 = vld [vmem:[%s198 + $0xd4] sm:$0xf]
      %v238 = vld [vmem:[%s198 + $0xd8] sm:$0xff]
      %v239 = vld [vmem:[%s198 + $0xe0] sm:$0xff]
      %v240 = vld [vmem:[%s198 + $0xe8] sm:$0xff]
      %v241 = vld [vmem:[%s198 + $0xf0] sm:$0xff]
      %v242 = vld [vmem:[%s198 + $0xf8] sm:$0xf]
      %v243 = vld [vmem:[%s198 + $0xfc] sm:$0xff]
      %v244 = vld [vmem:[%s198 + $0x104] sm:$0xff]
      %v245 = vld [vmem:[%s198 + $0x10c] sm:$0xff]
      %v246 = vld [vmem:[%s198 + $0x114] sm:$0xff]
      %v247 = vld [vmem:[%s198 + $0x11c] sm:$0xf]
      %v248 = vld [vmem:[%s1] sm:$0xff]
      %v249 = vld [vmem:[%s1 + $0x8] sm:$0xff]
      %v250 = vld [vmem:[%s1 + $0x10] sm:$0xff]
      %v251 = vld [vmem:[%s1 + $0x18] sm:$0xff]
      %v252 = vld [vmem:[%s1 + $0x20] sm:$0xff]
      %v253 = vld [vmem:[%s1 + $0x28] sm:$0xff]
      %v254 = vld [vmem:[%s1 + $0x30] sm:$0xff]
      %v255 = vld [vmem:[%s1 + $0x38] sm:$0xff]
      %v256 = vld [vmem:[%s1 + $0x40] sm:$0xff]
      %v257 = vld [vmem:[%s1 + $0x48] sm:$0xff]
      %v258 = vld [vmem:[%s1 + $0x50] sm:$0xff]
      %v259 = vld [vmem:[%s1 + $0x58] sm:$0xff]
      %v260 = vld [vmem:[%s1 + $0x60] sm:$0xff]
      %v261 = vld [vmem:[%s1 + $0x68] sm:$0xff]
      %v262 = vld [vmem:[%s1 + $0x70] sm:$0xff]
      %v263 = vld [vmem:[%s1 + $0x78] sm:$0xff]
      %v264 = vld [vmem:[%s1 + $0x80] sm:$0xff]
      %v265 = vld [vmem:[%s1 + $0x88] sm:$0xff]
      %v266 = vld [vmem:[%s1 + $0x90] sm:$0xff]
      %v267 = vld [vmem:[%s1 + $0x98] sm:$0xff]
      %v268 = vld [vmem:[%s1 + $0xa0] sm:$0xff]
      %v269 = vld [vmem:[%s1 + $0xa8] sm:$0xff]
      %v270 = vld [vmem:[%s1 + $0xb0] sm:$0xff]
      %v271 = vld [vmem:[%s1 + $0xb8] sm:$0xff]
      %v272 = vld [vmem:[%s1 + $0xc0] sm:$0xff]
      %v273 = vld [vmem:[%s1 + $0xc8] sm:$0xff]
      %v274 = vld [vmem:[%s1 + $0xd0] sm:$0xff]
      %v275 = vld [vmem:[%s1 + $0xd8] sm:$0xff]
      %v276 = vld [vmem:[%s1 + $0xe0] sm:$0xff]
      %v277 = vld [vmem:[%s1 + $0xe8] sm:$0xff]
      %v278 = vld [vmem:[%s1 + $0xf0] sm:$0xff]
      %v279 = vld [vmem:[%s1 + $0xf8] sm:$0xff]
      %v280 = vld [vmem:[%s1 + $0x100] sm:$0xff]
      %v281 = vld [vmem:[%s1 + $0x108] sm:$0xff]
      %v282 = vld [vmem:[%s1 + $0x110] sm:$0xff]
      %v283 = vld [vmem:[%s1 + $0x118] sm:$0xff]
      %v284 = vld [vmem:[%s1 + $0x120] sm:$0xff]
      %v285 = vld [vmem:[%s1 + $0x128] sm:$0xff]
      %v286 = vld [vmem:[%s1 + $0x130] sm:$0xff]
      %v287 = vld [vmem:[%s1 + $0x138] sm:$0xff]
      %v288 = vld [vmem:[%s1 + $0x140] sm:$0xff]
      %v289 = vld [vmem:[%s1 + $0x148] sm:$0xff]
      %v290 = vld [vmem:[%s1 + $0x150] sm:$0xff]
      %v291 = vld [vmem:[%s1 + $0x158] sm:$0xff]
      %v292 = vld [vmem:[%s1 + $0x160] sm:$0xff]
      %v293 = vld [vmem:[%s1 + $0x168] sm:$0xff]
      %v294 = vld [vmem:[%s1 + $0x170] sm:$0xff]
      %v295 = vld [vmem:[%s1 + $0x178] sm:$0xff]
      %v296 = vld [vmem:[%s1 + $0x180] sm:$0xff]
      %v297 = vld [vmem:[%s1 + $0x188] sm:$0xff]
      %v298 = vld [vmem:[%s1 + $0x190] sm:$0xff]
      %v299 = vld [vmem:[%s1 + $0x198] sm:$0xff]
      %v300 = vld [vmem:[%s1 + $0x1a0] sm:$0xff]
      %v301 = vld [vmem:[%s1 + $0x1a8] sm:$0xff]
      %v302 = vld [vmem:[%s1 + $0x1b0] sm:$0xff]
      %v303 = vld [vmem:[%s1 + $0x1b8] sm:$0xff]
      %v304 = vld [vmem:[%s1 + $0x1c0] sm:$0xff]
      %v305 = vld [vmem:[%s1 + $0x1c8] sm:$0xff]
      %v306 = vld [vmem:[%s1 + $0x1d0] sm:$0xff]
      %v307 = vld [vmem:[%s1 + $0x1d8] sm:$0xff]
      %v308 = vld [vmem:[%s1 + $0x1e0] sm:$0xff]
      %v309 = vld [vmem:[%s1 + $0x1e8] sm:$0xff]
      %v310 = vld [vmem:[%s1 + $0x1f0] sm:$0xff]
      %v311 = vld [vmem:[%s1 + $0x1f8] sm:$0xff]
      %v312 = vld [vmem:[%s1 + $0x200] sm:$0xff]
      %v313 = vld [vmem:[%s1 + $0x208] sm:$0xff]
      %v314 = vld [vmem:[%s1 + $0x210] sm:$0xff]
      %v315 = vld [vmem:[%s1 + $0x218] sm:$0xff]
      %v316 = vld [vmem:[%s1 + $0x220] sm:$0xff]
      %v317 = vld [vmem:[%s1 + $0x228] sm:$0xff]
      %v318 = vld [vmem:[%s1 + $0x230] sm:$0xff]
      %v319 = vld [vmem:[%s1 + $0x238] sm:$0xff]
      %v320 = vld [vmem:[%s1 + $0x240] sm:$0xff]
      %v321 = vld [vmem:[%s1 + $0x248] sm:$0xff]
      %v322 = vld [vmem:[%s1 + $0x250] sm:$0xff]
      %v323 = vld [vmem:[%s1 + $0x258] sm:$0xff]
      %v324 = vld [vmem:[%s1 + $0x260] sm:$0xff]
      %v325 = vld [vmem:[%s1 + $0x268] sm:$0xff]
      %v326 = vld [vmem:[%s1 + $0x270] sm:$0xff]
      %v327 = vld [vmem:[%s1 + $0x278] sm:$0xff]
      %v328 = vld [vmem:[%s1 + $0x280] sm:$0xff]
      %v329 = vld [vmem:[%s1 + $0x288] sm:$0xff]
      %v330 = vld [vmem:[%s1 + $0x290] sm:$0xff]
      %v331 = vld [vmem:[%s1 + $0x298] sm:$0xff]
      %v332 = vld [vmem:[%s1 + $0x2a0] sm:$0xff]
      %v333 = vld [vmem:[%s1 + $0x2a8] sm:$0xff]
      %v334 = vld [vmem:[%s1 + $0x2b0] sm:$0xff]
      %v335 = vld [vmem:[%s1 + $0x2b8] sm:$0xff]
      %v336 = vld [vmem:[%s1 + $0x2c0] sm:$0xff]
      %v337 = vld [vmem:[%s1 + $0x2c8] sm:$0xff]
      %v338 = vld [vmem:[%s1 + $0x2d0] sm:$0xff]
      %v339 = vld [vmem:[%s1 + $0x2d8] sm:$0xff]
      %v340 = vld [vmem:[%s1 + $0x2e0] sm:$0xff]
      %v341 = vld [vmem:[%s1 + $0x2e8] sm:$0xff]
      %v342 = vld [vmem:[%s1 + $0x2f0] sm:$0xff]
      %v343 = vld [vmem:[%s1 + $0x2f8] sm:$0xff]
      %v344 = vld [vmem:[%s1 + $0x300] sm:$0xff]
      %v345 = vld [vmem:[%s1 + $0x308] sm:$0xff]
      %v346 = vld [vmem:[%s1 + $0x310] sm:$0xff]
      %v347 = vld [vmem:[%s1 + $0x318] sm:$0xff]
      %v348 = vld [vmem:[%s1 + $0x320] sm:$0xff]
      %v349 = vld [vmem:[%s1 + $0x328] sm:$0xff]
      %v350 = vld [vmem:[%s1 + $0x330] sm:$0xff]
      %v351 = vld [vmem:[%s1 + $0x338] sm:$0xff]
      %v352 = vld [vmem:[%s1 + $0x340] sm:$0xff]
      %v353 = vld [vmem:[%s1 + $0x348] sm:$0xff]
      %v354 = vld [vmem:[%s1 + $0x350] sm:$0xff]
      %v355 = vld [vmem:[%s1 + $0x358] sm:$0xff]
      %v356 = vld [vmem:[%s1 + $0x360] sm:$0xff]
      %v357 = vld [vmem:[%s1 + $0x368] sm:$0xff]
      %v358 = vld [vmem:[%s1 + $0x370] sm:$0xff]
      %v359 = vld [vmem:[%s1 + $0x378] sm:$0xff]
      %v360 = vld [vmem:[%s1 + $0x380] sm:$0xff]
      %v361 = vld [vmem:[%s1 + $0x388] sm:$0xff]
      %v362 = vld [vmem:[%s1 + $0x390] sm:$0xff]
      %v363 = vld [vmem:[%s1 + $0x398] sm:$0xff]
      %v364 = vld [vmem:[%s1 + $0x3a0] sm:$0xff]
      %v365 = vld [vmem:[%s1 + $0x3a8] sm:$0xff]
      %v366 = vld [vmem:[%s1 + $0x3b0] sm:$0xff]
      %v367 = vld [vmem:[%s1 + $0x3b8] sm:$0xff]
      %v368 = vld [vmem:[%s1 + $0x3c0] sm:$0xff]
      %v369 = vld [vmem:[%s1 + $0x3c8] sm:$0xff]
      %v370 = vld [vmem:[%s1 + $0x3d0] sm:$0xff]
      %v371 = vld [vmem:[%s1 + $0x3d8] sm:$0xff]
      %v372 = vld [vmem:[%s1 + $0x3e0] sm:$0xff]
      %v373 = vld [vmem:[%s1 + $0x3e8] sm:$0xff]
      %v374 = vld [vmem:[%s1 + $0x3f0] sm:$0xff]
      %v375 = vld [vmem:[%s1 + $0x3f8] sm:$0xff]
      %v376 = vld [vmem:[%s1 + $0x400] sm:$0xff]
      %v377 = vld [vmem:[%s1 + $0x408] sm:$0xff]
      %v378 = vld [vmem:[%s1 + $0x410] sm:$0xff]
      %v379 = vld [vmem:[%s1 + $0x418] sm:$0xff]
      %v380 = vld [vmem:[%s1 + $0x420] sm:$0xff]
      %v381 = vld [vmem:[%s1 + $0x428] sm:$0xff]
      %v382 = vld [vmem:[%s1 + $0x430] sm:$0xff]
      %v383 = vld [vmem:[%s1 + $0x438] sm:$0xff]
      %v384 = vld [vmem:[%s1 + $0x440] sm:$0xff]
      %v385 = vld [vmem:[%s1 + $0x448] sm:$0xff]
      %v386 = vld [vmem:[%s1 + $0x450] sm:$0xff]
      %v387 = vld [vmem:[%s1 + $0x458] sm:$0xff]
      %v388 = vld [vmem:[%s1 + $0x460] sm:$0xff]
      %v389 = vld [vmem:[%s1 + $0x468] sm:$0xff]
      %v390 = vld [vmem:[%s1 + $0x470] sm:$0xff]
      %v391 = vld [vmem:[%s1 + $0x478] sm:$0xff]
      %v392 = vld [vmem:[%s2] sm:$0x3]
      %v394 = vlaneseq
      %v395 = vshrl.u32 %v394, 7
      %v396 = vsub.s32 0, %v395
      %v397 = vrot.slane %v392, %v396
      %v398 = vlaneseq
      %v399 = vshrl.u32 %v398, 7
      %v400 = vsub.s32 1, %v399
      %v401 = vrot.slane %v392, %v400
      %v444 = vunpack.c.l.b16 %v208
      %v445 = vunpack.c.h.b16 %v208
      %v446 = vunpack.c.l.b16 %v209
      %v447 = vunpack.c.h.b16 %v209
      %v448 = vunpack.c.l.b16 %v210
      %v449 = vunpack.c.h.b16 %v210
      %v450 = vunpack.c.l.b16 %v211
      %v451 = vunpack.c.h.b16 %v211
      %v452 = vunpack.c.l.b16 %v212
      %v453 = vunpack.c.l.b16 %v213
      %v454 = vunpack.c.h.b16 %v213
      %v455 = vunpack.c.l.b16 %v214
      %v456 = vunpack.c.h.b16 %v214
      %v457 = vunpack.c.l.b16 %v215
      %v458 = vunpack.c.h.b16 %v215
      %v459 = vunpack.c.l.b16 %v216
      %v460 = vunpack.c.h.b16 %v216
      %v461 = vunpack.c.l.b16 %v217
      %v462 = vunpack.c.l.b16 %v218
      %v463 = vunpack.c.h.b16 %v218
      %v464 = vunpack.c.l.b16 %v219
      %v465 = vunpack.c.h.b16 %v219
      %v466 = vunpack.c.l.b16 %v220
      %v467 = vunpack.c.h.b16 %v220
      %v468 = vunpack.c.l.b16 %v221
      %v469 = vunpack.c.h.b16 %v221
      %v470 = vunpack.c.l.b16 %v222
      %v471 = vunpack.c.l.b16 %v223
      %v472 = vunpack.c.h.b16 %v223
      %v473 = vunpack.c.l.b16 %v224
      %v474 = vunpack.c.h.b16 %v224
      %v475 = vunpack.c.l.b16 %v225
      %v476 = vunpack.c.h.b16 %v225
      %v477 = vunpack.c.l.b16 %v226
      %v478 = vunpack.c.h.b16 %v226
      %v479 = vunpack.c.l.b16 %v227
      %v480 = vunpack.c.l.b16 %v228
      %v481 = vunpack.c.h.b16 %v228
      %v482 = vunpack.c.l.b16 %v229
      %v483 = vunpack.c.h.b16 %v229
      %v484 = vunpack.c.l.b16 %v230
      %v485 = vunpack.c.h.b16 %v230
      %v486 = vunpack.c.l.b16 %v231
      %v487 = vunpack.c.h.b16 %v231
      %v488 = vunpack.c.l.b16 %v232
      %v489 = vunpack.c.l.b16 %v233
      %v490 = vunpack.c.h.b16 %v233
      %v491 = vunpack.c.l.b16 %v234
      %v492 = vunpack.c.h.b16 %v234
      %v493 = vunpack.c.l.b16 %v235
      %v494 = vunpack.c.h.b16 %v235
      %v495 = vunpack.c.l.b16 %v236
      %v496 = vunpack.c.h.b16 %v236
      %v497 = vunpack.c.l.b16 %v237
      %v498 = vunpack.c.l.b16 %v238
      %v499 = vunpack.c.h.b16 %v238
      %v500 = vunpack.c.l.b16 %v239
      %v501 = vunpack.c.h.b16 %v239
      %v502 = vunpack.c.l.b16 %v240
      %v503 = vunpack.c.h.b16 %v240
      %v504 = vunpack.c.l.b16 %v241
      %v505 = vunpack.c.h.b16 %v241
      %v506 = vunpack.c.l.b16 %v242
      %v507 = vunpack.c.l.b16 %v243
      %v508 = vunpack.c.h.b16 %v243
      %v509 = vunpack.c.l.b16 %v244
      %v510 = vunpack.c.h.b16 %v244
      %v511 = vunpack.c.l.b16 %v245
      %v512 = vunpack.c.h.b16 %v245
      %v513 = vunpack.c.l.b16 %v246
      %v514 = vunpack.c.h.b16 %v246
      %v515 = vunpack.c.l.b16 %v247
      %v516 = vpack.c.b16 %v453, %v444
      %v517 = vpack.c.b16 %v454, %v445
      %v518 = vpack.c.b16 %v455, %v446
      %v519 = vpack.c.b16 %v456, %v447
      %v520 = vpack.c.b16 %v457, %v448
      %v521 = vpack.c.b16 %v458, %v449
      %v522 = vpack.c.b16 %v459, %v450
      %v523 = vpack.c.b16 %v460, %v451
      %v524 = vpack.c.b16 %v461, %v452
      %v525 = vpack.c.b16 %v471, %v462
      %v526 = vpack.c.b16 %v472, %v463
      %v527 = vpack.c.b16 %v473, %v464
      %v528 = vpack.c.b16 %v474, %v465
      %v529 = vpack.c.b16 %v475, %v466
      %v530 = vpack.c.b16 %v476, %v467
      %v531 = vpack.c.b16 %v477, %v468
      %v532 = vpack.c.b16 %v478, %v469
      %v533 = vpack.c.b16 %v479, %v470
      %v534 = vpack.c.b16 %v489, %v480
      %v535 = vpack.c.b16 %v490, %v481
      %v536 = vpack.c.b16 %v491, %v482
      %v537 = vpack.c.b16 %v492, %v483
      %v538 = vpack.c.b16 %v493, %v484
      %v539 = vpack.c.b16 %v494, %v485
      %v540 = vpack.c.b16 %v495, %v486
      %v541 = vpack.c.b16 %v496, %v487
      %v542 = vpack.c.b16 %v497, %v488
      %v543 = vpack.c.b16 %v507, %v498
      %v544 = vpack.c.b16 %v508, %v499
      %v545 = vpack.c.b16 %v509, %v500
      %v546 = vpack.c.b16 %v510, %v501
      %v547 = vpack.c.b16 %v511, %v502
      %v548 = vpack.c.b16 %v512, %v503
      %v549 = vpack.c.b16 %v513, %v504
      %v550 = vpack.c.b16 %v514, %v505
      %v551 = vpack.c.b16 %v515, %v506
      %v732 = vunpack.c.l.b16 %v248
      %v733 = vunpack.c.h.b16 %v248
      %v734 = vunpack.c.l.b16 %v249
      %v735 = vunpack.c.h.b16 %v249
      %v736 = vunpack.c.l.b16 %v250
      %v737 = vunpack.c.h.b16 %v250
      %v738 = vunpack.c.l.b16 %v251
      %v739 = vunpack.c.h.b16 %v251
      %v740 = vunpack.c.l.b16 %v252
      %v741 = vunpack.c.h.b16 %v252
      %v742 = vunpack.c.l.b16 %v253
      %v743 = vunpack.c.h.b16 %v253
      %v744 = vunpack.c.l.b16 %v254
      %v745 = vunpack.c.h.b16 %v254
      %v746 = vunpack.c.l.b16 %v255
      %v747 = vunpack.c.h.b16 %v255
      %v748 = vunpack.c.l.b16 %v256
      %v749 = vunpack.c.h.b16 %v256
      %v750 = vunpack.c.l.b16 %v257
      %v751 = vunpack.c.h.b16 %v257
      %v752 = vunpack.c.l.b16 %v258
      %v753 = vunpack.c.h.b16 %v258
      %v754 = vunpack.c.l.b16 %v259
      %v755 = vunpack.c.h.b16 %v259
      %v756 = vunpack.c.l.b16 %v260
      %v757 = vunpack.c.h.b16 %v260
      %v758 = vunpack.c.l.b16 %v261
      %v759 = vunpack.c.h.b16 %v261
      %v760 = vunpack.c.l.b16 %v262
      %v761 = vunpack.c.h.b16 %v262
      %v762 = vunpack.c.l.b16 %v263
      %v763 = vunpack.c.h.b16 %v263
      %v764 = vunpack.c.l.b16 %v264
      %v765 = vunpack.c.h.b16 %v264
      %v766 = vunpack.c.l.b16 %v265
      %v767 = vunpack.c.h.b16 %v265
      %v768 = vunpack.c.l.b16 %v266
      %v769 = vunpack.c.h.b16 %v266
      %v770 = vunpack.c.l.b16 %v267
      %v771 = vunpack.c.h.b16 %v267
      %v772 = vunpack.c.l.b16 %v268
      %v773 = vunpack.c.h.b16 %v268
      %v774 = vunpack.c.l.b16 %v269
      %v775 = vunpack.c.h.b16 %v269
      %v776 = vunpack.c.l.b16 %v270
      %v777 = vunpack.c.h.b16 %v270
      %v778 = vunpack.c.l.b16 %v271
      %v779 = vunpack.c.h.b16 %v271
      %v780 = vunpack.c.l.b16 %v272
      %v781 = vunpack.c.h.b16 %v272
      %v782 = vunpack.c.l.b16 %v273
      %v783 = vunpack.c.h.b16 %v273
      %v784 = vunpack.c.l.b16 %v274
      %v785 = vunpack.c.h.b16 %v274
      %v786 = vunpack.c.l.b16 %v275
      %v787 = vunpack.c.h.b16 %v275
      %v788 = vunpack.c.l.b16 %v276
      %v789 = vunpack.c.h.b16 %v276
      %v790 = vunpack.c.l.b16 %v277
      %v791 = vunpack.c.h.b16 %v277
      %v792 = vunpack.c.l.b16 %v278
      %v793 = vunpack.c.h.b16 %v278
      %v794 = vunpack.c.l.b16 %v279
      %v795 = vunpack.c.h.b16 %v279
      %v796 = vunpack.c.l.b16 %v280
      %v797 = vunpack.c.h.b16 %v280
      %v798 = vunpack.c.l.b16 %v281
      %v799 = vunpack.c.h.b16 %v281
      %v800 = vunpack.c.l.b16 %v282
      %v801 = vunpack.c.h.b16 %v282
      %v802 = vunpack.c.l.b16 %v283
      %v803 = vunpack.c.h.b16 %v283
      %v804 = vunpack.c.l.b16 %v284
      %v805 = vunpack.c.h.b16 %v284
      %v806 = vunpack.c.l.b16 %v285
      %v807 = vunpack.c.h.b16 %v285
      %v808 = vunpack.c.l.b16 %v286
      %v809 = vunpack.c.h.b16 %v286
      %v810 = vunpack.c.l.b16 %v287
      %v811 = vunpack.c.h.b16 %v287
      %v812 = vunpack.c.l.b16 %v288
      %v813 = vunpack.c.h.b16 %v288
      %v814 = vunpack.c.l.b16 %v289
      %v815 = vunpack.c.h.b16 %v289
      %v816 = vunpack.c.l.b16 %v290
      %v817 = vunpack.c.h.b16 %v290
      %v818 = vunpack.c.l.b16 %v291
      %v819 = vunpack.c.h.b16 %v291
      %v820 = vunpack.c.l.b16 %v292
      %v821 = vunpack.c.h.b16 %v292
      %v822 = vunpack.c.l.b16 %v293
      %v823 = vunpack.c.h.b16 %v293
      %v824 = vunpack.c.l.b16 %v294
      %v825 = vunpack.c.h.b16 %v294
      %v826 = vunpack.c.l.b16 %v295
      %v827 = vunpack.c.h.b16 %v295
      %v828 = vunpack.c.l.b16 %v296
      %v829 = vunpack.c.h.b16 %v296
      %v830 = vunpack.c.l.b16 %v297
      %v831 = vunpack.c.h.b16 %v297
      %v832 = vunpack.c.l.b16 %v298
      %v833 = vunpack.c.h.b16 %v298
      %v834 = vunpack.c.l.b16 %v299
      %v835 = vunpack.c.h.b16 %v299
      %v836 = vunpack.c.l.b16 %v300
      %v837 = vunpack.c.h.b16 %v300
      %v838 = vunpack.c.l.b16 %v301
      %v839 = vunpack.c.h.b16 %v301
      %v840 = vunpack.c.l.b16 %v302
      %v841 = vunpack.c.h.b16 %v302
      %v842 = vunpack.c.l.b16 %v303
      %v843 = vunpack.c.h.b16 %v303
      %v844 = vunpack.c.l.b16 %v304
      %v845 = vunpack.c.h.b16 %v304
      %v846 = vunpack.c.l.b16 %v305
      %v847 = vunpack.c.h.b16 %v305
      %v848 = vunpack.c.l.b16 %v306
      %v849 = vunpack.c.h.b16 %v306
      %v850 = vunpack.c.l.b16 %v307
      %v851 = vunpack.c.h.b16 %v307
      %v852 = vunpack.c.l.b16 %v308
      %v853 = vunpack.c.h.b16 %v308
      %v854 = vunpack.c.l.b16 %v309
      %v855 = vunpack.c.h.b16 %v309
      %v856 = vunpack.c.l.b16 %v310
      %v857 = vunpack.c.h.b16 %v310
      %v858 = vunpack.c.l.b16 %v311
      %v859 = vunpack.c.h.b16 %v311
      %v860 = vunpack.c.l.b16 %v312
      %v861 = vunpack.c.h.b16 %v312
      %v862 = vunpack.c.l.b16 %v313
      %v863 = vunpack.c.h.b16 %v313
      %v864 = vunpack.c.l.b16 %v314
      %v865 = vunpack.c.h.b16 %v314
      %v866 = vunpack.c.l.b16 %v315
      %v867 = vunpack.c.h.b16 %v315
      %v868 = vunpack.c.l.b16 %v316
      %v869 = vunpack.c.h.b16 %v316
      %v870 = vunpack.c.l.b16 %v317
      %v871 = vunpack.c.h.b16 %v317
      %v872 = vunpack.c.l.b16 %v318
      %v873 = vunpack.c.h.b16 %v318
      %v874 = vunpack.c.l.b16 %v319
      %v875 = vunpack.c.h.b16 %v319
      %v876 = vunpack.c.l.b16 %v320
      %v877 = vunpack.c.h.b16 %v320
      %v878 = vunpack.c.l.b16 %v321
      %v879 = vunpack.c.h.b16 %v321
      %v880 = vunpack.c.l.b16 %v322
      %v881 = vunpack.c.h.b16 %v322
      %v882 = vunpack.c.l.b16 %v323
      %v883 = vunpack.c.h.b16 %v323
      %v884 = vunpack.c.l.b16 %v324
      %v885 = vunpack.c.h.b16 %v324
      %v886 = vunpack.c.l.b16 %v325
      %v887 = vunpack.c.h.b16 %v325
      %v888 = vunpack.c.l.b16 %v326
      %v889 = vunpack.c.h.b16 %v326
      %v890 = vunpack.c.l.b16 %v327
      %v891 = vunpack.c.h.b16 %v327
      %v892 = vunpack.c.l.b16 %v328
      %v893 = vunpack.c.h.b16 %v328
      %v894 = vunpack.c.l.b16 %v329
      %v895 = vunpack.c.h.b16 %v329
      %v896 = vunpack.c.l.b16 %v330
      %v897 = vunpack.c.h.b16 %v330
      %v898 = vunpack.c.l.b16 %v331
      %v899 = vunpack.c.h.b16 %v331
      %v900 = vunpack.c.l.b16 %v332
      %v901 = vunpack.c.h.b16 %v332
      %v902 = vunpack.c.l.b16 %v333
      %v903 = vunpack.c.h.b16 %v333
      %v904 = vunpack.c.l.b16 %v334
      %v905 = vunpack.c.h.b16 %v334
      %v906 = vunpack.c.l.b16 %v335
      %v907 = vunpack.c.h.b16 %v335
      %v908 = vunpack.c.l.b16 %v336
      %v909 = vunpack.c.h.b16 %v336
      %v910 = vunpack.c.l.b16 %v337
      %v911 = vunpack.c.h.b16 %v337
      %v912 = vunpack.c.l.b16 %v338
      %v913 = vunpack.c.h.b16 %v338
      %v914 = vunpack.c.l.b16 %v339
      %v915 = vunpack.c.h.b16 %v339
      %v916 = vunpack.c.l.b16 %v340
      %v917 = vunpack.c.h.b16 %v340
      %v918 = vunpack.c.l.b16 %v341
      %v919 = vunpack.c.h.b16 %v341
      %v920 = vunpack.c.l.b16 %v342
      %v921 = vunpack.c.h.b16 %v342
      %v922 = vunpack.c.l.b16 %v343
      %v923 = vunpack.c.h.b16 %v343
      %v924 = vunpack.c.l.b16 %v344
      %v925 = vunpack.c.h.b16 %v344
      %v926 = vunpack.c.l.b16 %v345
      %v927 = vunpack.c.h.b16 %v345
      %v928 = vunpack.c.l.b16 %v346
      %v929 = vunpack.c.h.b16 %v346
      %v930 = vunpack.c.l.b16 %v347
      %v931 = vunpack.c.h.b16 %v347
      %v932 = vunpack.c.l.b16 %v348
      %v933 = vunpack.c.h.b16 %v348
      %v934 = vunpack.c.l.b16 %v349
      %v935 = vunpack.c.h.b16 %v349
      %v936 = vunpack.c.l.b16 %v350
      %v937 = vunpack.c.h.b16 %v350
      %v938 = vunpack.c.l.b16 %v351
      %v939 = vunpack.c.h.b16 %v351
      %v940 = vunpack.c.l.b16 %v352
      %v941 = vunpack.c.h.b16 %v352
      %v942 = vunpack.c.l.b16 %v353
      %v943 = vunpack.c.h.b16 %v353
      %v944 = vunpack.c.l.b16 %v354
      %v945 = vunpack.c.h.b16 %v354
      %v946 = vunpack.c.l.b16 %v355
      %v947 = vunpack.c.h.b16 %v355
      %v948 = vunpack.c.l.b16 %v356
      %v949 = vunpack.c.h.b16 %v356
      %v950 = vunpack.c.l.b16 %v357
      %v951 = vunpack.c.h.b16 %v357
      %v952 = vunpack.c.l.b16 %v358
      %v953 = vunpack.c.h.b16 %v358
      %v954 = vunpack.c.l.b16 %v359
      %v955 = vunpack.c.h.b16 %v359
      %v956 = vunpack.c.l.b16 %v360
      %v957 = vunpack.c.h.b16 %v360
      %v958 = vunpack.c.l.b16 %v361
      %v959 = vunpack.c.h.b16 %v361
      %v960 = vunpack.c.l.b16 %v362
      %v961 = vunpack.c.h.b16 %v362
      %v962 = vunpack.c.l.b16 %v363
      %v963 = vunpack.c.h.b16 %v363
      %v964 = vunpack.c.l.b16 %v364
      %v965 = vunpack.c.h.b16 %v364
      %v966 = vunpack.c.l.b16 %v365
      %v967 = vunpack.c.h.b16 %v365
      %v968 = vunpack.c.l.b16 %v366
      %v969 = vunpack.c.h.b16 %v366
      %v970 = vunpack.c.l.b16 %v367
      %v971 = vunpack.c.h.b16 %v367
      %v972 = vunpack.c.l.b16 %v368
      %v973 = vunpack.c.h.b16 %v368
      %v974 = vunpack.c.l.b16 %v369
      %v975 = vunpack.c.h.b16 %v369
      %v976 = vunpack.c.l.b16 %v370
      %v977 = vunpack.c.h.b16 %v370
      %v978 = vunpack.c.l.b16 %v371
      %v979 = vunpack.c.h.b16 %v371
      %v980 = vunpack.c.l.b16 %v372
      %v981 = vunpack.c.h.b16 %v372
      %v982 = vunpack.c.l.b16 %v373
      %v983 = vunpack.c.h.b16 %v373
      %v984 = vunpack.c.l.b16 %v374
      %v985 = vunpack.c.h.b16 %v374
      %v986 = vunpack.c.l.b16 %v375
      %v987 = vunpack.c.h.b16 %v375
      %v988 = vunpack.c.l.b16 %v376
      %v989 = vunpack.c.h.b16 %v376
      %v990 = vunpack.c.l.b16 %v377
      %v991 = vunpack.c.h.b16 %v377
      %v992 = vunpack.c.l.b16 %v378
      %v993 = vunpack.c.h.b16 %v378
      %v994 = vunpack.c.l.b16 %v379
      %v995 = vunpack.c.h.b16 %v379
      %v996 = vunpack.c.l.b16 %v380
      %v997 = vunpack.c.h.b16 %v380
      %v998 = vunpack.c.l.b16 %v381
      %v999 = vunpack.c.h.b16 %v381
      %v1000 = vunpack.c.l.b16 %v382
      %v1001 = vunpack.c.h.b16 %v382
      %v1002 = vunpack.c.l.b16 %v383
      %v1003 = vunpack.c.h.b16 %v383
      %v1004 = vunpack.c.l.b16 %v384
      %v1005 = vunpack.c.h.b16 %v384
      %v1006 = vunpack.c.l.b16 %v385
      %v1007 = vunpack.c.h.b16 %v385
      %v1008 = vunpack.c.l.b16 %v386
      %v1009 = vunpack.c.h.b16 %v386
      %v1010 = vunpack.c.l.b16 %v387
      %v1011 = vunpack.c.h.b16 %v387
      %v1012 = vunpack.c.l.b16 %v388
      %v1013 = vunpack.c.h.b16 %v388
      %v1014 = vunpack.c.l.b16 %v389
      %v1015 = vunpack.c.h.b16 %v389
      %v1016 = vunpack.c.l.b16 %v390
      %v1017 = vunpack.c.h.b16 %v390
      %v1018 = vunpack.c.l.b16 %v391
      %v1019 = vunpack.c.h.b16 %v391
      %v1020 = vpack.c.b16 %v734, %v732
      %v1021 = vpack.c.b16 %v735, %v733
      %v1022 = vpack.c.b16 %v738, %v736
      %v1023 = vpack.c.b16 %v739, %v737
      %v1024 = vpack.c.b16 %v742, %v740
      %v1025 = vpack.c.b16 %v743, %v741
      %v1026 = vpack.c.b16 %v746, %v744
      %v1027 = vpack.c.b16 %v747, %v745
      %v1028 = vpack.c.b16 %v750, %v748
      %v1029 = vpack.c.b16 %v751, %v749
      %v1030 = vpack.c.b16 %v754, %v752
      %v1031 = vpack.c.b16 %v755, %v753
      %v1032 = vpack.c.b16 %v758, %v756
      %v1033 = vpack.c.b16 %v759, %v757
      %v1034 = vpack.c.b16 %v762, %v760
      %v1035 = vpack.c.b16 %v763, %v761
      %v1036 = vpack.c.b16 %v766, %v764
      %v1037 = vpack.c.b16 %v767, %v765
      %v1038 = vpack.c.b16 %v770, %v768
      %v1039 = vpack.c.b16 %v771, %v769
      %v1040 = vpack.c.b16 %v774, %v772
      %v1041 = vpack.c.b16 %v775, %v773
      %v1042 = vpack.c.b16 %v778, %v776
      %v1043 = vpack.c.b16 %v779, %v777
      %v1044 = vpack.c.b16 %v782, %v780
      %v1045 = vpack.c.b16 %v783, %v781
      %v1046 = vpack.c.b16 %v786, %v784
      %v1047 = vpack.c.b16 %v787, %v785
      %v1048 = vpack.c.b16 %v790, %v788
      %v1049 = vpack.c.b16 %v791, %v789
      %v1050 = vpack.c.b16 %v794, %v792
      %v1051 = vpack.c.b16 %v795, %v793
      %v1052 = vpack.c.b16 %v798, %v796
      %v1053 = vpack.c.b16 %v799, %v797
      %v1054 = vpack.c.b16 %v802, %v800
      %v1055 = vpack.c.b16 %v803, %v801
      %v1056 = vpack.c.b16 %v806, %v804
      %v1057 = vpack.c.b16 %v807, %v805
      %v1058 = vpack.c.b16 %v810, %v808
      %v1059 = vpack.c.b16 %v811, %v809
      %v1060 = vpack.c.b16 %v814, %v812
      %v1061 = vpack.c.b16 %v815, %v813
      %v1062 = vpack.c.b16 %v818, %v816
      %v1063 = vpack.c.b16 %v819, %v817
      %v1064 = vpack.c.b16 %v822, %v820
      %v1065 = vpack.c.b16 %v823, %v821
      %v1066 = vpack.c.b16 %v826, %v824
      %v1067 = vpack.c.b16 %v827, %v825
      %v1068 = vpack.c.b16 %v830, %v828
      %v1069 = vpack.c.b16 %v831, %v829
      %v1070 = vpack.c.b16 %v834, %v832
      %v1071 = vpack.c.b16 %v835, %v833
      %v1072 = vpack.c.b16 %v838, %v836
      %v1073 = vpack.c.b16 %v839, %v837
      %v1074 = vpack.c.b16 %v842, %v840
      %v1075 = vpack.c.b16 %v843, %v841
      %v1076 = vpack.c.b16 %v846, %v844
      %v1077 = vpack.c.b16 %v847, %v845
      %v1078 = vpack.c.b16 %v850, %v848
      %v1079 = vpack.c.b16 %v851, %v849
      %v1080 = vpack.c.b16 %v854, %v852
      %v1081 = vpack.c.b16 %v855, %v853
      %v1082 = vpack.c.b16 %v858, %v856
      %v1083 = vpack.c.b16 %v859, %v857
      %v1084 = vpack.c.b16 %v862, %v860
      %v1085 = vpack.c.b16 %v863, %v861
      %v1086 = vpack.c.b16 %v866, %v864
      %v1087 = vpack.c.b16 %v867, %v865
      %v1088 = vpack.c.b16 %v870, %v868
      %v1089 = vpack.c.b16 %v871, %v869
      %v1090 = vpack.c.b16 %v874, %v872
      %v1091 = vpack.c.b16 %v875, %v873
      %v1092 = vpack.c.b16 %v878, %v876
      %v1093 = vpack.c.b16 %v879, %v877
      %v1094 = vpack.c.b16 %v882, %v880
      %v1095 = vpack.c.b16 %v883, %v881
      %v1096 = vpack.c.b16 %v886, %v884
      %v1097 = vpack.c.b16 %v887, %v885
      %v1098 = vpack.c.b16 %v890, %v888
      %v1099 = vpack.c.b16 %v891, %v889
      %v1100 = vpack.c.b16 %v894, %v892
      %v1101 = vpack.c.b16 %v895, %v893
      %v1102 = vpack.c.b16 %v898, %v896
      %v1103 = vpack.c.b16 %v899, %v897
      %v1104 = vpack.c.b16 %v902, %v900
      %v1105 = vpack.c.b16 %v903, %v901
      %v1106 = vpack.c.b16 %v906, %v904
      %v1107 = vpack.c.b16 %v907, %v905
      %v1108 = vpack.c.b16 %v910, %v908
      %v1109 = vpack.c.b16 %v911, %v909
      %v1110 = vpack.c.b16 %v914, %v912
      %v1111 = vpack.c.b16 %v915, %v913
      %v1112 = vpack.c.b16 %v918, %v916
      %v1113 = vpack.c.b16 %v919, %v917
      %v1114 = vpack.c.b16 %v922, %v920
      %v1115 = vpack.c.b16 %v923, %v921
      %v1116 = vpack.c.b16 %v926, %v924
      %v1117 = vpack.c.b16 %v927, %v925
      %v1118 = vpack.c.b16 %v930, %v928
      %v1119 = vpack.c.b16 %v931, %v929
      %v1120 = vpack.c.b16 %v934, %v932
      %v1121 = vpack.c.b16 %v935, %v933
      %v1122 = vpack.c.b16 %v938, %v936
      %v1123 = vpack.c.b16 %v939, %v937
      %v1124 = vpack.c.b16 %v942, %v940
      %v1125 = vpack.c.b16 %v943, %v941
      %v1126 = vpack.c.b16 %v946, %v944
      %v1127 = vpack.c.b16 %v947, %v945
      %v1128 = vpack.c.b16 %v950, %v948
      %v1129 = vpack.c.b16 %v951, %v949
      %v1130 = vpack.c.b16 %v954, %v952
      %v1131 = vpack.c.b16 %v955, %v953
      %v1132 = vpack.c.b16 %v958, %v956
      %v1133 = vpack.c.b16 %v959, %v957
      %v1134 = vpack.c.b16 %v962, %v960
      %v1135 = vpack.c.b16 %v963, %v961
      %v1136 = vpack.c.b16 %v966, %v964
      %v1137 = vpack.c.b16 %v967, %v965
      %v1138 = vpack.c.b16 %v970, %v968
      %v1139 = vpack.c.b16 %v971, %v969
      %v1140 = vpack.c.b16 %v974, %v972
      %v1141 = vpack.c.b16 %v975, %v973
      %v1142 = vpack.c.b16 %v978, %v976
      %v1143 = vpack.c.b16 %v979, %v977
      %v1144 = vpack.c.b16 %v982, %v980
      %v1145 = vpack.c.b16 %v983, %v981
      %v1146 = vpack.c.b16 %v986, %v984
      %v1147 = vpack.c.b16 %v987, %v985
      %v1148 = vpack.c.b16 %v990, %v988
      %v1149 = vpack.c.b16 %v991, %v989
      %v1150 = vpack.c.b16 %v994, %v992
      %v1151 = vpack.c.b16 %v995, %v993
      %v1152 = vpack.c.b16 %v998, %v996
      %v1153 = vpack.c.b16 %v999, %v997
      %v1154 = vpack.c.b16 %v1002, %v1000
      %v1155 = vpack.c.b16 %v1003, %v1001
      %v1156 = vpack.c.b16 %v1006, %v1004
      %v1157 = vpack.c.b16 %v1007, %v1005
      %v1158 = vpack.c.b16 %v1010, %v1008
      %v1159 = vpack.c.b16 %v1011, %v1009
      %v1160 = vpack.c.b16 %v1014, %v1012
      %v1161 = vpack.c.b16 %v1015, %v1013
      %v1162 = vpack.c.b16 %v1018, %v1016
      %v1163 = vpack.c.b16 %v1019, %v1017
      %1308 = vmatprep.subr.bf16.mxu0 %v1021
      %1309 = vmatpush1.bf16.msra.mxu0 %v1020
      %1310 = vmatprep.subr.bf16.mxu0 %v1023
      %1311 = vmatpush1.bf16.msra.mxu0 %v1022
      %1312 = vmatprep.subr.bf16.mxu0 %v1025
      %1313 = vmatpush1.bf16.msra.mxu0 %v1024
      %1314 = vmatprep.subr.bf16.mxu0 %v1027
      %1315 = vmatpush1.bf16.msra.mxu0 %v1026
      %1316 = vmatprep.subr.bf16.mxu0 %v1029
      %1317 = vmatpush1.bf16.msra.mxu0 %v1028
      %1318 = vmatprep.subr.bf16.mxu0 %v1031
      %1319 = vmatpush1.bf16.msra.mxu0 %v1030
      %1320 = vmatprep.subr.bf16.mxu0 %v1033
      %1321 = vmatpush1.bf16.msra.mxu0 %v1032
      %1322 = vmatprep.subr.bf16.mxu0 %v1035
      %1323 = vmatpush1.bf16.msra.mxu0 %v1034
      %1324 = vmatprep.subr.bf16.mxu0 %v1037
      %1325 = vmatpush1.bf16.msra.mxu0 %v1036
      %1326 = vmatprep.subr.bf16.mxu0 %v1039
      %1327 = vmatpush1.bf16.msra.mxu0 %v1038
      %1328 = vmatprep.subr.bf16.mxu0 %v1041
      %1329 = vmatpush1.bf16.msra.mxu0 %v1040
      %1330 = vmatprep.subr.bf16.mxu0 %v1043
      %1331 = vmatpush1.bf16.msra.mxu0 %v1042
      %1332 = vmatprep.subr.bf16.mxu0 %v1045
      %1333 = vmatpush1.bf16.msra.mxu0 %v1044
      %1334 = vmatprep.subr.bf16.mxu0 %v1047
      %1335 = vmatpush1.bf16.msra.mxu0 %v1046
      %1336 = vmatprep.subr.bf16.mxu0 %v1049
      %1337 = vmatpush1.bf16.msra.mxu0 %v1048
      %1338 = vmatprep.subr.bf16.mxu0 %v1051
      %1339 = vmatpush1.bf16.msra.mxu0 %v1050
      %1340 = vmatprep.mubr.bf16.mxu0 %v517
      %1341 = vmatmul.mubr.bf16.gmra.mrb[0].mxu0 %v516
      %v1342 = vpop.f32.mrb[0].mxu0
      %v1343 = vadd.f32 %v397, %v1342
      %v1344 = vpop.f32.mrb[0].mxu0
      %v1345 = vadd.f32 %v401, %v1344
      %v1346 = vpop.f32.mrb[0].mxu0
      %v1347 = vadd.f32 %v397, %v1346
      %v1348 = vpop.f32.mrb[0].mxu0
      %v1349 = vadd.f32 %v401, %v1348
      %1350 = vmatprep.mubr.bf16.mxu0 %v526
      %1351 = vmatmul.mubr.bf16.gmra.mrb[0].mxu0 %v525
      %v1352 = vpop.f32.mrb[0].mxu0
      %v1353 = vadd.f32 %v397, %v1352
      %v1354 = vpop.f32.mrb[0].mxu0
      %v1355 = vadd.f32 %v401, %v1354
      %v1356 = vpop.f32.mrb[0].mxu0
      %v1357 = vadd.f32 %v397, %v1356
      %v1358 = vpop.f32.mrb[0].mxu0
      %v1359 = vadd.f32 %v401, %v1358
      %1360 = vmatprep.mubr.bf16.mxu0 %v535
      %1361 = vmatmul.mubr.bf16.gmra.mrb[0].mxu0 %v534
      %v1362 = vpop.f32.mrb[0].mxu0
      %v1363 = vadd.f32 %v397, %v1362
      %v1364 = vpop.f32.mrb[0].mxu0
      %v1365 = vadd.f32 %v401, %v1364
      %v1366 = vpop.f32.mrb[0].mxu0
      %v1367 = vadd.f32 %v397, %v1366
      %v1368 = vpop.f32.mrb[0].mxu0
      %v1369 = vadd.f32 %v401, %v1368
      %1370 = vmatprep.mubr.bf16.mxu0 %v544
      %1371 = vmatmul.mubr.bf16.gmra.mrb[0].mxu0 %v543
      %v1372 = vpop.f32.mrb[0].mxu0
      %v1373 = vadd.f32 %v397, %v1372
      %v1374 = vpop.f32.mrb[0].mxu0
      %v1375 = vadd.f32 %v401, %v1374
      %v1376 = vpop.f32.mrb[0].mxu0
      %v1377 = vadd.f32 %v397, %v1376
      %v1378 = vpop.f32.mrb[0].mxu0
      %v1379 = vadd.f32 %v401, %v1378
      %1380 = vdwg.mxu0
      %1381 = vmatprep.subr.bf16.mxu0 %v1053
      %1382 = vmatpush1.bf16.msra.mxu0 %v1052
      %1383 = vmatprep.subr.bf16.mxu0 %v1055
      %1384 = vmatpush1.bf16.msra.mxu0 %v1054
      %1385 = vmatprep.subr.bf16.mxu0 %v1057
      %1386 = vmatpush1.bf16.msra.mxu0 %v1056
      %1387 = vmatprep.subr.bf16.mxu0 %v1059
      %1388 = vmatpush1.bf16.msra.mxu0 %v1058
      %1389 = vmatprep.subr.bf16.mxu0 %v1061
      %1390 = vmatpush1.bf16.msra.mxu0 %v1060
      %1391 = vmatprep.subr.bf16.mxu0 %v1063
      %1392 = vmatpush1.bf16.msra.mxu0 %v1062
      %1393 = vmatprep.subr.bf16.mxu0 %v1065
      %1394 = vmatpush1.bf16.msra.mxu0 %v1064
      %1395 = vmatprep.subr.bf16.mxu0 %v1067
      %1396 = vmatpush1.bf16.msra.mxu0 %v1066
      %1397 = vmatprep.subr.bf16.mxu0 %v1069
      %1398 = vmatpush1.bf16.msra.mxu0 %v1068
      %1399 = vmatprep.subr.bf16.mxu0 %v1071
      %1400 = vmatpush1.bf16.msra.mxu0 %v1070
      %1401 = vmatprep.subr.bf16.mxu0 %v1073
      %1402 = vmatpush1.bf16.msra.mxu0 %v1072
      %1403 = vmatprep.subr.bf16.mxu0 %v1075
      %1404 = vmatpush1.bf16.msra.mxu0 %v1074
      %1405 = vmatprep.subr.bf16.mxu0 %v1077
      %1406 = vmatpush1.bf16.msra.mxu0 %v1076
      %1407 = vmatprep.subr.bf16.mxu0 %v1079
      %1408 = vmatpush1.bf16.msra.mxu0 %v1078
      %1409 = vmatprep.subr.bf16.mxu0 %v1081
      %1410 = vmatpush1.bf16.msra.mxu0 %v1080
      %1411 = vmatprep.subr.bf16.mxu0 %v1083
      %1412 = vmatpush1.bf16.msra.mxu0 %v1082
      %1413 = vmatprep.mubr.bf16.mxu0 %v519
      %1414 = vmatmul.mubr.bf16.gmra.mrb[0].mxu0 %v518
      %v1415 = vpop.f32.mrb[0].mxu0
      %v1416 = vadd.f32 %v1343, %v1415
      %v1417 = vpop.f32.mrb[0].mxu0
      %v1418 = vadd.f32 %v1345, %v1417
      %v1419 = vpop.f32.mrb[0].mxu0
      %v1420 = vadd.f32 %v1347, %v1419
      %v1421 = vpop.f32.mrb[0].mxu0
      %v1422 = vadd.f32 %v1349, %v1421
      %1423 = vmatprep.mubr.bf16.mxu0 %v528
      %1424 = vmatmul.mubr.bf16.gmra.mrb[0].mxu0 %v527
      %v1425 = vpop.f32.mrb[0].mxu0
      %v1426 = vadd.f32 %v1353, %v1425
      %v1427 = vpop.f32.mrb[0].mxu0
      %v1428 = vadd.f32 %v1355, %v1427
      %v1429 = vpop.f32.mrb[0].mxu0
      %v1430 = vadd.f32 %v1357, %v1429
      %v1431 = vpop.f32.mrb[0].mxu0
      %v1432 = vadd.f32 %v1359, %v1431
      %1433 = vmatprep.mubr.bf16.mxu0 %v537
      %1434 = vmatmul.mubr.bf16.gmra.mrb[0].mxu0 %v536
      %v1435 = vpop.f32.mrb[0].mxu0
      %v1436 = vadd.f32 %v1363, %v1435
      %v1437 = vpop.f32.mrb[0].mxu0
      %v1438 = vadd.f32 %v1365, %v1437
      %v1439 = vpop.f32.mrb[0].mxu0
      %v1440 = vadd.f32 %v1367, %v1439
      %v1441 = vpop.f32.mrb[0].mxu0
      %v1442 = vadd.f32 %v1369, %v1441
      %1443 = vmatprep.mubr.bf16.mxu0 %v546
      %1444 = vmatmul.mubr.bf16.gmra.mrb[0].mxu0 %v545
      %v1445 = vpop.f32.mrb[0].mxu0
      %v1446 = vadd.f32 %v1373, %v1445
      %v1447 = vpop.f32.mrb[0].mxu0
      %v1448 = vadd.f32 %v1375, %v1447
      %v1449 = vpop.f32.mrb[0].mxu0
      %v1450 = vadd.f32 %v1377, %v1449
      %v1451 = vpop.f32.mrb[0].mxu0
      %v1452 = vadd.f32 %v1379, %v1451
      %1453 = vdwg.mxu0
      %1454 = vmatprep.subr.bf16.mxu0 %v1085
      %1455 = vmatpush1.bf16.msra.mxu0 %v1084
      %1456 = vmatprep.subr.bf16.mxu0 %v1087
      %1457 = vmatpush1.bf16.msra.mxu0 %v1086
      %1458 = vmatprep.subr.bf16.mxu0 %v1089
      %1459 = vmatpush1.bf16.msra.mxu0 %v1088
      %1460 = vmatprep.subr.bf16.mxu0 %v1091
      %1461 = vmatpush1.bf16.msra.mxu0 %v1090
      %1462 = vmatprep.subr.bf16.mxu0 %v1093
      %1463 = vmatpush1.bf16.msra.mxu0 %v1092
      %1464 = vmatprep.subr.bf16.mxu0 %v1095
      %1465 = vmatpush1.bf16.msra.mxu0 %v1094
      %1466 = vmatprep.subr.bf16.mxu0 %v1097
      %1467 = vmatpush1.bf16.msra.mxu0 %v1096
      %1468 = vmatprep.subr.bf16.mxu0 %v1099
      %1469 = vmatpush1.bf16.msra.mxu0 %v1098
      %1470 = vmatprep.subr.bf16.mxu0 %v1101
      %1471 = vmatpush1.bf16.msra.mxu0 %v1100
      %1472 = vmatprep.subr.bf16.mxu0 %v1103
      %1473 = vmatpush1.bf16.msra.mxu0 %v1102
      %1474 = vmatprep.subr.bf16.mxu0 %v1105
      %1475 = vmatpush1.bf16.msra.mxu0 %v1104
      %1476 = vmatprep.subr.bf16.mxu0 %v1107
      %1477 = vmatpush1.bf16.msra.mxu0 %v1106
      %1478 = vmatprep.subr.bf16.mxu0 %v1109
      %1479 = vmatpush1.bf16.msra.mxu0 %v1108
      %1480 = vmatprep.subr.bf16.mxu0 %v1111
      %1481 = vmatpush1.bf16.msra.mxu0 %v1110
      %1482 = vmatprep.subr.bf16.mxu0 %v1113
      %1483 = vmatpush1.bf16.msra.mxu0 %v1112
      %1484 = vmatprep.subr.bf16.mxu0 %v1115
      %1485 = vmatpush1.bf16.msra.mxu0 %v1114
      %1486 = vmatprep.mubr.bf16.mxu0 %v521
      %1487 = vmatmul.mubr.bf16.gmra.mrb[0].mxu0 %v520
      %v1488 = vpop.f32.mrb[0].mxu0
      %v1489 = vadd.f32 %v1416, %v1488
      %v1490 = vpop.f32.mrb[0].mxu0
      %v1491 = vadd.f32 %v1418, %v1490
      %v1492 = vpop.f32.mrb[0].mxu0
      %v1493 = vadd.f32 %v1420, %v1492
      %v1494 = vpop.f32.mrb[0].mxu0
      %v1495 = vadd.f32 %v1422, %v1494
      %1496 = vmatprep.mubr.bf16.mxu0 %v530
      %1497 = vmatmul.mubr.bf16.gmra.mrb[0].mxu0 %v529
      %v1498 = vpop.f32.mrb[0].mxu0
      %v1499 = vadd.f32 %v1426, %v1498
      %v1500 = vpop.f32.mrb[0].mxu0
      %v1501 = vadd.f32 %v1428, %v1500
      %v1502 = vpop.f32.mrb[0].mxu0
      %v1503 = vadd.f32 %v1430, %v1502
      %v1504 = vpop.f32.mrb[0].mxu0
      %v1505 = vadd.f32 %v1432, %v1504
      %1506 = vmatprep.mubr.bf16.mxu0 %v539
      %1507 = vmatmul.mubr.bf16.gmra.mrb[0].mxu0 %v538
      %v1508 = vpop.f32.mrb[0].mxu0
      %v1509 = vadd.f32 %v1436, %v1508
      %v1510 = vpop.f32.mrb[0].mxu0
      %v1511 = vadd.f32 %v1438, %v1510
      %v1512 = vpop.f32.mrb[0].mxu0
      %v1513 = vadd.f32 %v1440, %v1512
      %v1514 = vpop.f32.mrb[0].mxu0
      %v1515 = vadd.f32 %v1442, %v1514
      %1516 = vmatprep.mubr.bf16.mxu0 %v548
      %1517 = vmatmul.mubr.bf16.gmra.mrb[0].mxu0 %v547
      %v1518 = vpop.f32.mrb[0].mxu0
      %v1519 = vadd.f32 %v1446, %v1518
      %v1520 = vpop.f32.mrb[0].mxu0
      %v1521 = vadd.f32 %v1448, %v1520
      %v1522 = vpop.f32.mrb[0].mxu0
      %v1523 = vadd.f32 %v1450, %v1522
      %v1524 = vpop.f32.mrb[0].mxu0
      %v1525 = vadd.f32 %v1452, %v1524
      %1526 = vdwg.mxu0
      %1527 = vmatprep.subr.bf16.mxu0 %v1117
      %1528 = vmatpush1.bf16.msra.mxu0 %v1116
      %1529 = vmatprep.subr.bf16.mxu0 %v1119
      %1530 = vmatpush1.bf16.msra.mxu0 %v1118
      %1531 = vmatprep.subr.bf16.mxu0 %v1121
      %1532 = vmatpush1.bf16.msra.mxu0 %v1120
      %1533 = vmatprep.subr.bf16.mxu0 %v1123
      %1534 = vmatpush1.bf16.msra.mxu0 %v1122
      %1535 = vmatprep.subr.bf16.mxu0 %v1125
      %1536 = vmatpush1.bf16.msra.mxu0 %v1124
      %1537 = vmatprep.subr.bf16.mxu0 %v1127
      %1538 = vmatpush1.bf16.msra.mxu0 %v1126
      %1539 = vmatprep.subr.bf16.mxu0 %v1129
      %1540 = vmatpush1.bf16.msra.mxu0 %v1128
      %1541 = vmatprep.subr.bf16.mxu0 %v1131
      %1542 = vmatpush1.bf16.msra.mxu0 %v1130
      %1543 = vmatprep.subr.bf16.mxu0 %v1133
      %1544 = vmatpush1.bf16.msra.mxu0 %v1132
      %1545 = vmatprep.subr.bf16.mxu0 %v1135
      %1546 = vmatpush1.bf16.msra.mxu0 %v1134
      %1547 = vmatprep.subr.bf16.mxu0 %v1137
      %1548 = vmatpush1.bf16.msra.mxu0 %v1136
      %1549 = vmatprep.subr.bf16.mxu0 %v1139
      %1550 = vmatpush1.bf16.msra.mxu0 %v1138
      %1551 = vmatprep.subr.bf16.mxu0 %v1141
      %1552 = vmatpush1.bf16.msra.mxu0 %v1140
      %1553 = vmatprep.subr.bf16.mxu0 %v1143
      %1554 = vmatpush1.bf16.msra.mxu0 %v1142
      %1555 = vmatprep.subr.bf16.mxu0 %v1145
      %1556 = vmatpush1.bf16.msra.mxu0 %v1144
      %1557 = vmatprep.subr.bf16.mxu0 %v1147
      %1558 = vmatpush1.bf16.msra.mxu0 %v1146
      %1559 = vmatprep.mubr.bf16.mxu0 %v523
      %1560 = vmatmul.mubr.bf16.gmra.mrb[0].mxu0 %v522
      %v1561 = vpop.f32.mrb[0].mxu0
      %v1562 = vadd.f32 %v1489, %v1561
      %v1563 = vpop.f32.mrb[0].mxu0
      %v1564 = vadd.f32 %v1491, %v1563
      %v1565 = vpop.f32.mrb[0].mxu0
      %v1566 = vadd.f32 %v1493, %v1565
      %v1567 = vpop.f32.mrb[0].mxu0
      %v1568 = vadd.f32 %v1495, %v1567
      %1569 = vmatprep.mubr.bf16.mxu0 %v532
      %1570 = vmatmul.mubr.bf16.gmra.mrb[0].mxu0 %v531
      %v1571 = vpop.f32.mrb[0].mxu0
      %v1572 = vadd.f32 %v1499, %v1571
      %v1573 = vpop.f32.mrb[0].mxu0
      %v1574 = vadd.f32 %v1501, %v1573
      %v1575 = vpop.f32.mrb[0].mxu0
      %v1576 = vadd.f32 %v1503, %v1575
      %v1577 = vpop.f32.mrb[0].mxu0
      %v1578 = vadd.f32 %v1505, %v1577
      %1579 = vmatprep.mubr.bf16.mxu0 %v541
      %1580 = vmatmul.mubr.bf16.gmra.mrb[0].mxu0 %v540
      %v1581 = vpop.f32.mrb[0].mxu0
      %v1582 = vadd.f32 %v1509, %v1581
      %v1583 = vpop.f32.mrb[0].mxu0
      %v1584 = vadd.f32 %v1511, %v1583
      %v1585 = vpop.f32.mrb[0].mxu0
      %v1586 = vadd.f32 %v1513, %v1585
      %v1587 = vpop.f32.mrb[0].mxu0
      %v1588 = vadd.f32 %v1515, %v1587
      %1589 = vmatprep.mubr.bf16.mxu0 %v550
      %1590 = vmatmul.mubr.bf16.gmra.mrb[0].mxu0 %v549
      %v1591 = vpop.f32.mrb[0].mxu0
      %v1592 = vadd.f32 %v1519, %v1591
      %v1593 = vpop.f32.mrb[0].mxu0
      %v1594 = vadd.f32 %v1521, %v1593
      %v1595 = vpop.f32.mrb[0].mxu0
      %v1596 = vadd.f32 %v1523, %v1595
      %v1597 = vpop.f32.mrb[0].mxu0
      %v1598 = vadd.f32 %v1525, %v1597
      %1599 = vdwg.mxu0
      %1600 = vmatprep.subr.bf16.mxu0 %v1149
      %1601 = vmatpush1.bf16.msra.mxu0 %v1148
      %1602 = vmatprep.subr.bf16.mxu0 %v1151
      %1603 = vmatpush1.bf16.msra.mxu0 %v1150
      %1604 = vmatprep.subr.bf16.mxu0 %v1153
      %1605 = vmatpush1.bf16.msra.mxu0 %v1152
      %1606 = vmatprep.subr.bf16.mxu0 %v1155
      %1607 = vmatpush1.bf16.msra.mxu0 %v1154
      %1608 = vmatprep.subr.bf16.mxu0 %v1157
      %1609 = vmatpush1.bf16.msra.mxu0 %v1156
      %1610 = vmatprep.subr.bf16.mxu0 %v1159
      %1611 = vmatpush1.bf16.msra.mxu0 %v1158
      %1612 = vmatprep.subr.bf16.mxu0 %v1161
      %1613 = vmatpush1.bf16.msra.mxu0 %v1160
      %1614 = vmatprep.subr.bf16.mxu0 %v1163
      %1615 = vmatpush1.bf16.msra.mxu0 %v1162
      %1616 = vmatprep.subr.bf16.mxu0 0
      %1617 = vmatpush1.bf16.msra.mxu0 0
      %1618 = vmatprep.subr.bf16.mxu0 0
      %1619 = vmatpush1.bf16.msra.mxu0 0
      %1620 = vmatprep.subr.bf16.mxu0 0
      %1621 = vmatpush1.bf16.msra.mxu0 0
      %1622 = vmatprep.subr.bf16.mxu0 0
      %1623 = vmatpush1.bf16.msra.mxu0 0
      %1624 = vmatprep.subr.bf16.mxu0 0
      %1625 = vmatpush1.bf16.msra.mxu0 0
      %1626 = vmatprep.subr.bf16.mxu0 0
      %1627 = vmatpush1.bf16.msra.mxu0 0
      %1628 = vmatprep.subr.bf16.mxu0 0
      %1629 = vmatpush1.bf16.msra.mxu0 0
      %1630 = vmatprep.subr.bf16.mxu0 0
      %1631 = vmatpush1.bf16.msra.mxu0 0
      %1632 = vmatprep.mubr.bf16.mxu0 0
      %1633 = vmatmul.mubr.bf16.gmra.mrb[0].mxu0 %v524
      %v1634 = vpop.f32.mrb[0].mxu0
      %v1635 = vadd.f32 %v1562, %v1634
      %v1636 = vpop.f32.mrb[0].mxu0
      %v1637 = vadd.f32 %v1564, %v1636
      %v1638 = vpop.f32.mrb[0].mxu0
      %v1639 = vadd.f32 %v1566, %v1638
      %v1640 = vpop.f32.mrb[0].mxu0
      %v1641 = vadd.f32 %v1568, %v1640
      %1642 = vmatprep.mubr.bf16.mxu0 0
      %1643 = vmatmul.mubr.bf16.gmra.mrb[0].mxu0 %v533
      %v1644 = vpop.f32.mrb[0].mxu0
      %v1645 = vadd.f32 %v1572, %v1644
      %v1646 = vpop.f32.mrb[0].mxu0
      %v1647 = vadd.f32 %v1574, %v1646
      %v1648 = vpop.f32.mrb[0].mxu0
      %v1649 = vadd.f32 %v1576, %v1648
      %v1650 = vpop.f32.mrb[0].mxu0
      %v1651 = vadd.f32 %v1578, %v1650
      %1652 = vmatprep.mubr.bf16.mxu0 0
      %1653 = vmatmul.mubr.bf16.gmra.mrb[0].mxu0 %v542
      %v1654 = vpop.f32.mrb[0].mxu0
      %v1655 = vadd.f32 %v1582, %v1654
      %v1656 = vpop.f32.mrb[0].mxu0
      %v1657 = vadd.f32 %v1584, %v1656
      %v1658 = vpop.f32.mrb[0].mxu0
      %v1659 = vadd.f32 %v1586, %v1658
      %v1660 = vpop.f32.mrb[0].mxu0
      %v1661 = vadd.f32 %v1588, %v1660
      %1662 = vmatprep.mubr.bf16.mxu0 0
      %1663 = vmatmul.mubr.bf16.gmra.mrb[0].mxu0 %v551
      %v1664 = vpop.f32.mrb[0].mxu0
      %v1665 = vadd.f32 %v1592, %v1664
      %v1666 = vpop.f32.mrb[0].mxu0
      %v1667 = vadd.f32 %v1594, %v1666
      %v1668 = vpop.f32.mrb[0].mxu0
      %v1669 = vadd.f32 %v1596, %v1668
      %v1670 = vpop.f32.mrb[0].mxu0
      %v1671 = vadd.f32 %v1598, %v1670
      %1672 = vdwg.mxu0
      %s1673 = sld [smem:[#allocation2]]
      %vm1674 = vcmp.gt.f32.partialorder %v1635, 0.0
      %vm1675 = vcmp.gt.f32.partialorder %v1637, 0.0
      %vm1676 = vcmp.gt.f32.partialorder %v1639, 0.0
      %vm1677 = vcmp.gt.f32.partialorder %v1641, 0.0
      %vm1678 = vcmp.gt.f32.partialorder %v1645, 0.0
      %vm1679 = vcmp.gt.f32.partialorder %v1647, 0.0
      %vm1680 = vcmp.gt.f32.partialorder %v1649, 0.0
      %vm1681 = vcmp.gt.f32.partialorder %v1651, 0.0
      %vm1682 = vcmp.gt.f32.partialorder %v1655, 0.0
      %vm1683 = vcmp.gt.f32.partialorder %v1657, 0.0
      %vm1684 = vcmp.gt.f32.partialorder %v1659, 0.0
      %vm1685 = vcmp.gt.f32.partialorder %v1661, 0.0
      %vm1686 = vcmp.gt.f32.partialorder %v1665, 0.0
      %vm1687 = vcmp.gt.f32.partialorder %v1667, 0.0
      %vm1688 = vcmp.gt.f32.partialorder %v1669, 0.0
      %vm1689 = vcmp.gt.f32.partialorder %v1671, 0.0
      %v1690 = vmin.f32 %v1635, 0.0
      %v1691 = vmin.f32 %v1637, 0.0
      %v1692 = vmin.f32 %v1639, 0.0
      %v1693 = vmin.f32 %v1641, 0.0
      %v1694 = vmin.f32 %v1645, 0.0
      %v1695 = vmin.f32 %v1647, 0.0
      %v1696 = vmin.f32 %v1649, 0.0
      %v1697 = vmin.f32 %v1651, 0.0
      %v1698 = vmin.f32 %v1655, 0.0
      %v1699 = vmin.f32 %v1657, 0.0
      %v1700 = vmin.f32 %v1659, 0.0
      %v1701 = vmin.f32 %v1661, 0.0
      %v1702 = vmin.f32 %v1665, 0.0
      %v1703 = vmin.f32 %v1667, 0.0
      %v1704 = vmin.f32 %v1669, 0.0
      %v1705 = vmin.f32 %v1671, 0.0
      %v1706 = vmul.f32 %v1690, 1.442695
      %v1707 = vpow.pop %v1706
      %v1708 = vmul.f32 %v1691, 1.442695
      %v1709 = vpow.pop %v1708
      %v1710 = vmul.f32 %v1692, 1.442695
      %v1711 = vpow.pop %v1710
      %v1712 = vmul.f32 %v1693, 1.442695
      %v1713 = vpow.pop %v1712
      %v1714 = vmul.f32 %v1694, 1.442695
      %v1715 = vpow.pop %v1714
      %v1716 = vmul.f32 %v1695, 1.442695
      %v1717 = vpow.pop %v1716
      %v1718 = vmul.f32 %v1696, 1.442695
      %v1719 = vpow.pop %v1718
      %v1720 = vmul.f32 %v1697, 1.442695
      %v1721 = vpow.pop %v1720
      %v1722 = vmul.f32 %v1698, 1.442695
      %v1723 = vpow.pop %v1722
      %v1724 = vmul.f32 %v1699, 1.442695
      %v1725 = vpow.pop %v1724
      %v1726 = vmul.f32 %v1700, 1.442695
      %v1727 = vpow.pop %v1726
      %v1728 = vmul.f32 %v1701, 1.442695
      %v1729 = vpow.pop %v1728
      %v1730 = vmul.f32 %v1702, 1.442695
      %v1731 = vpow.pop %v1730
      %v1732 = vmul.f32 %v1703, 1.442695
      %v1733 = vpow.pop %v1732
      %v1734 = vmul.f32 %v1704, 1.442695
      %v1735 = vpow.pop %v1734
      %v1736 = vmul.f32 %v1705, 1.442695
      %v1737 = vpow.pop %v1736
      %v1738 = vsub.f32 %v1707, 1.0
      %v1739 = vsub.f32 %v1709, 1.0
      %v1740 = vsub.f32 %v1711, 1.0
      %v1741 = vsub.f32 %v1713, 1.0
      %v1742 = vsub.f32 %v1715, 1.0
      %v1743 = vsub.f32 %v1717, 1.0
      %v1744 = vsub.f32 %v1719, 1.0
      %v1745 = vsub.f32 %v1721, 1.0
      %v1746 = vsub.f32 %v1723, 1.0
      %v1747 = vsub.f32 %v1725, 1.0
      %v1748 = vsub.f32 %v1727, 1.0
      %v1749 = vsub.f32 %v1729, 1.0
      %v1750 = vsub.f32 %v1731, 1.0
      %v1751 = vsub.f32 %v1733, 1.0
      %v1752 = vsub.f32 %v1735, 1.0
      %v1753 = vsub.f32 %v1737, 1.0
      %v1754 = vstv %s1673
      %v1755 = vmul.f32 %v1754, %v1738
      %v1756 = vmul.f32 %v1754, %v1739
      %v1757 = vmul.f32 %v1754, %v1740
      %v1758 = vmul.f32 %v1754, %v1741
      %v1759 = vmul.f32 %v1754, %v1742
      %v1760 = vmul.f32 %v1754, %v1743
      %v1761 = vmul.f32 %v1754, %v1744
      %v1762 = vmul.f32 %v1754, %v1745
      %v1763 = vmul.f32 %v1754, %v1746
      %v1764 = vmul.f32 %v1754, %v1747
      %v1765 = vmul.f32 %v1754, %v1748
      %v1766 = vmul.f32 %v1754, %v1749
      %v1767 = vmul.f32 %v1754, %v1750
      %v1768 = vmul.f32 %v1754, %v1751
      %v1769 = vmul.f32 %v1754, %v1752
      %v1770 = vmul.f32 %v1754, %v1753
      %v1771 = vsel %vm1674, %v1635, %v1755
      %v1772 = vsel %vm1675, %v1637, %v1756
      %v1773 = vsel %vm1676, %v1639, %v1757
      %v1774 = vsel %vm1677, %v1641, %v1758
      %v1775 = vsel %vm1678, %v1645, %v1759
      %v1776 = vsel %vm1679, %v1647, %v1760
      %v1777 = vsel %vm1680, %v1649, %v1761
      %v1778 = vsel %vm1681, %v1651, %v1762
      %v1779 = vsel %vm1682, %v1655, %v1763
      %v1780 = vsel %vm1683, %v1657, %v1764
      %v1781 = vsel %vm1684, %v1659, %v1765
      %v1782 = vsel %vm1685, %v1661, %v1766
      %v1783 = vsel %vm1686, %v1665, %v1767
      %v1784 = vsel %vm1687, %v1667, %v1768
      %v1785 = vsel %vm1688, %v1669, %v1769
      %v1786 = vsel %vm1689, %v1671, %v1770
      %v1787 = vpack.c.bf16 %v1773, %v1771
      %v1788 = vpack.c.bf16 %v1774, %v1772
      %v1789 = vpack.c.bf16 %v1777, %v1775
      %v1790 = vpack.c.bf16 %v1778, %v1776
      %v1791 = vpack.c.bf16 %v1781, %v1779
      %v1792 = vpack.c.bf16 %v1782, %v1780
      %v1793 = vpack.c.bf16 %v1785, %v1783
      %v1794 = vpack.c.bf16 %v1786, %v1784
      %v1803 = vunpack.c.l.b16 %v1787
      %v1804 = vunpack.c.l.b16 %v1788
      %v1805 = vunpack.c.h.b16 %v1787
      %v1806 = vunpack.c.h.b16 %v1788
      %v1807 = vunpack.c.l.b16 %v1789
      %v1808 = vunpack.c.l.b16 %v1790
      %v1809 = vunpack.c.h.b16 %v1789
      %v1810 = vunpack.c.h.b16 %v1790
      %v1811 = vunpack.c.l.b16 %v1791
      %v1812 = vunpack.c.l.b16 %v1792
      %v1813 = vunpack.c.h.b16 %v1791
      %v1814 = vunpack.c.h.b16 %v1792
      %v1815 = vunpack.c.l.b16 %v1793
      %v1816 = vunpack.c.l.b16 %v1794
      %v1817 = vunpack.c.h.b16 %v1793
      %v1818 = vunpack.c.h.b16 %v1794
      %v1819 = vpack.c.b16 %v1804, %v1803
      %v1820 = vpack.c.b16 %v1806, %v1805
      %v1821 = vpack.c.b16 %v1808, %v1807
      %v1822 = vpack.c.b16 %v1810, %v1809
      %v1823 = vpack.c.b16 %v1812, %v1811
      %v1824 = vpack.c.b16 %v1814, %v1813
      %v1825 = vpack.c.b16 %v1816, %v1815
      %v1826 = vpack.c.b16 %v1818, %v1817
      %1835 = vst [vmem:[%s205] sm:$0xff] %v1819
      %1836 = vst [vmem:[%s205 + $0x8] sm:$0xff] %v1820
      %1837 = vst [vmem:[%s205 + $0x10] sm:$0xff] %v1821
      %1838 = vst [vmem:[%s205 + $0x18] sm:$0xff] %v1822
      %1839 = vst [vmem:[%s205 + $0x20] sm:$0xff] %v1823
      %1840 = vst [vmem:[%s205 + $0x28] sm:$0xff] %v1824
      %1841 = vst [vmem:[%s205 + $0x30] sm:$0xff] %v1825
      %1842 = vst [vmem:[%s205 + $0x38] sm:$0xff] %v1826
      %s1843 = smul.u32 8, %s16
      %p1844 = scmp.lt.s32.totalorder %s1843, 15
      %s1845 = scalar_select %p1844, %s1843, 15
      %s1846 = smul.addr %s1845, 2
      %s1847 = smul.addr %s1846, 4
      %s1848 = scalar_lea.vmem %s4, %s1847
      // Predicated region
      $region37: #{cifar10net_forward.11} parent=35 // pred_check
        %p1849 = pneg %p123
      $region38: #{cifar10net_forward.11} parent=35 // pred_check_branch
        %1851 = sbr.rel (%p1849) target = $region40
      $region39: #{cifar10net_forward.11} parent=35 // pred_region
        %s1852 = smul.u32 8, %s16
      $region40: #{cifar10net_forward.11} parent=35 // pred_fallthru
        _
    $region36: #{cifar10net_forward.11} parent=5 // pred_fallthru
      _
    %p1853 = scmp.le.s32.totalorder 2, %s11
    // Predicated region
    $region41: #{cifar10net_forward.11} parent=5 // pred_check
      %p1854 = pneg %p1853
    $region42: #{cifar10net_forward.11} parent=5 // pred_check_branch
      %1856 = sbr.rel (%p1854) target = $region44
    $region43: #{cifar10net_forward.11} parent=5 // pred_region
      %s1857 = ssub.s32 %s11, 2
      // Predicated region
      $region45: #{cifar10net_forward.11} parent=43 // pred_check
        %p1858 = pneg %p129
      $region46: #{cifar10net_forward.11} parent=43 // pred_check_branch
        %1860 = sbr.rel (%p1858) target = $region48
      $region47: #{cifar10net_forward.11} parent=43 // pred_region
        %s1861 = smul.u32 8, %s17
        %p1862 = scmp.lt.s32.totalorder %s1861, 15
        %s1863 = scalar_select %p1862, %s1861, 15
        %s1864 = smul.addr %s1863, 2
        %s1865 = smul.addr %s1864, 4
        %s1866 = scalar_lea.vmem %s4, %s1865
      $region48: #{cifar10net_forward.11} parent=43 // pred_fallthru
        _
    $region44: #{cifar10net_forward.11} parent=5 // pred_fallthru
      _
  $region6: #{cifar10net_forward.11} parent=0 // loop_footer
    %s15 = sadd.s32 1, %s11
  $region7: #{cifar10net_forward.11} parent=0 // loop_footer_branch
    %10 = sbr.rel target = $region3
  $region8: #{cifar10net_forward.11} parent=0 // loop_exit
    _

// kernel: cifar10net_forward.13
$region0: #{cifar10net_forward.13}
  #allocation0 [shape = 'u32[]', space=smem, size = 0x4, offset = 0x4, fixed_abs, tag = 'smem constant byte address 0x4 - core index']
  #allocation1 [shape = 'u32[144,128]{1,0:T(1,128)}', space=vmem, size = 0x12000, scoped, tag = 'internal scratch']
  %s0 = inlined_call_operand.vmem [shape: bf16[2,4096], index: 0, kind: input, shape index: {}]
  %s1 = inlined_call_operand.vmem [shape: bf16[4096,512], index: 1, kind: input, shape index: {}]
  %s2 = inlined_call_operand.vmem [shape: f32[1,512], index: 2, kind: input, shape index: {}]
  %s3 = inlined_call_operand.vmem [shape: bf16[512,128], index: 3, kind: input, shape index: {}]
  %s4 = inlined_call_operand.vmem [shape: f32[1,128], index: 4, kind: input, shape index: {}]
  %s5 = inlined_call_operand.hbm [shape: f32[2,128], index: 5, kind: output, shape index: {}]
  %s6 = sld [smem:[#allocation0]]
  $region30: #{cifar10net_forward.13} parent=0
    _
  %s8 = ssub.s32 1, %s6
  %s9 = scalar_select 0, %s8, %s6
  $region1: #{cifar10net_forward.13} parent=0
    #allocation2 [shape = 'u8[1024]{0}', space=vmem, size = 0x400, scoped, tag = 'output window, operand 0, single buffered']
    #allocation3 [shape = 's32[1]{0}', space=sflag, size = 0x4, scoped, tag = 'scoped memory for cifar10net_forward.13']
    %10 = vsyncpa [#allocation3], 0
    // Predicated region
    $region2: #{cifar10net_forward.13} parent=1 // pred_check
      _
    $region3: #{cifar10net_forward.13} parent=1 // pred_check_branch
      %12 = sbr.rel (0) target = $region5
    $region4: #{cifar10net_forward.13} parent=1 // pred_region
      _
    $region5: #{cifar10net_forward.13} parent=1 // pred_fallthru
      _
    // Predicated region
    $region6: #{cifar10net_forward.13} parent=1 // pred_check
      _
    $region7: #{cifar10net_forward.13} parent=1 // pred_check_branch
      %14 = sbr.rel (0) target = $region9
    $region8: #{cifar10net_forward.13} parent=1 // pred_region
      _
    $region9: #{cifar10net_forward.13} parent=1 // pred_fallthru
      _
    // Predicated region
    $region10: #{cifar10net_forward.13} parent=1 // pred_check
      _
    $region11: #{cifar10net_forward.13} parent=1 // pred_check_branch
      %16 = sbr.rel (0) target = $region13
    $region12: #{cifar10net_forward.13} parent=1 // pred_region
      _
    $region13: #{cifar10net_forward.13} parent=1 // pred_fallthru
      _
    // Predicated region
    $region14: #{cifar10net_forward.13} parent=1 // pred_check
      _
    $region15: #{cifar10net_forward.13} parent=1 // pred_check_branch
      %18 = sbr.rel (0) target = $region17
    $region16: #{cifar10net_forward.13} parent=1 // pred_region
      _
    $region17: #{cifar10net_forward.13} parent=1 // pred_fallthru
      _
    // Predicated region
    $region18: #{cifar10net_forward.13} parent=1 // pred_check
      _
    $region19: #{cifar10net_forward.13} parent=1 // pred_check_branch
      %20 = sbr.rel (0) target = $region21
    $region20: #{cifar10net_forward.13} parent=1 // pred_region
      _
    $region21: #{cifar10net_forward.13} parent=1 // pred_fallthru
      _
    %v22 = vld [vmem:[%s0] sm:$0xff]
    %v23 = vld [vmem:[%s0 + $0x8] sm:$0xff]
    %v24 = vld [vmem:[%s0 + $0x10] sm:$0xff]
    %v25 = vld [vmem:[%s0 + $0x18] sm:$0xff]
    %v26 = vld [vmem:[%s1] sm:$0xff]
    %v27 = vld [vmem:[%s1 + $0x8] sm:$0xff]
    %v28 = vld [vmem:[%s1 + $0x10] sm:$0xff]
    %v29 = vld [vmem:[%s1 + $0x18] sm:$0xff]
    %v30 = vld [vmem:[%s1 + $0x20] sm:$0xff]
    %v31 = vld [vmem:[%s1 + $0x28] sm:$0xff]
    %v32 = vld [vmem:[%s1 + $0x30] sm:$0xff]
    %v33 = vld [vmem:[%s1 + $0x38] sm:$0xff]
    %v34 = vld [vmem:[%s1 + $0x40] sm:$0xff]
    %v35 = vld [vmem:[%s1 + $0x48] sm:$0xff]
    %v36 = vld [vmem:[%s1 + $0x50] sm:$0xff]
    %v37 = vld [vmem:[%s1 + $0x58] sm:$0xff]
    %v38 = vld [vmem:[%s1 + $0x60] sm:$0xff]
    %v39 = vld [vmem:[%s1 + $0x68] sm:$0xff]
    %v40 = vld [vmem:[%s1 + $0x70] sm:$0xff]
    %v41 = vld [vmem:[%s1 + $0x78] sm:$0xff]
    %v42 = vld [vmem:[%s1 + $0x80] sm:$0xff]
    %v43 = vld [vmem:[%s1 + $0x88] sm:$0xff]
    %v44 = vld [vmem:[%s1 + $0x90] sm:$0xff]
    %v45 = vld [vmem:[%s1 + $0x98] sm:$0xff]
    %v46 = vld [vmem:[%s1 + $0xa0] sm:$0xff]
    %v47 = vld [vmem:[%s1 + $0xa8] sm:$0xff]
    %v48 = vld [vmem:[%s1 + $0xb0] sm:$0xff]
    %v49 = vld [vmem:[%s1 + $0xb8] sm:$0xff]
    %v50 = vld [vmem:[%s1 + $0xc0] sm:$0xff]
    %v51 = vld [vmem:[%s1 + $0xc8] sm:$0xff]
    %v52 = vld [vmem:[%s1 + $0xd0] sm:$0xff]
    %v53 = vld [vmem:[%s1 + $0xd8] sm:$0xff]
    %v54 = vld [vmem:[%s1 + $0xe0] sm:$0xff]
    %v55 = vld [vmem:[%s1 + $0xe8] sm:$0xff]
    %v56 = vld [vmem:[%s1 + $0xf0] sm:$0xff]
    %v57 = vld [vmem:[%s1 + $0xf8] sm:$0xff]
    %v58 = vld [vmem:[%s1 + $0x100] sm:$0xff]
    %v59 = vld [vmem:[%s1 + $0x108] sm:$0xff]
    %v60 = vld [vmem:[%s1 + $0x110] sm:$0xff]
    %v61 = vld [vmem:[%s1 + $0x118] sm:$0xff]
    %v62 = vld [vmem:[%s1 + $0x120] sm:$0xff]
    %v63 = vld [vmem:[%s1 + $0x128] sm:$0xff]
    %v64 = vld [vmem:[%s1 + $0x130] sm:$0xff]
    %v65 = vld [vmem:[%s1 + $0x138] sm:$0xff]
    %v66 = vld [vmem:[%s1 + $0x140] sm:$0xff]
    %v67 = vld [vmem:[%s1 + $0x148] sm:$0xff]
    %v68 = vld [vmem:[%s1 + $0x150] sm:$0xff]
    %v69 = vld [vmem:[%s1 + $0x158] sm:$0xff]
    %v70 = vld [vmem:[%s1 + $0x160] sm:$0xff]
    %v71 = vld [vmem:[%s1 + $0x168] sm:$0xff]
    %v72 = vld [vmem:[%s1 + $0x170] sm:$0xff]
    %v73 = vld [vmem:[%s1 + $0x178] sm:$0xff]
    %v74 = vld [vmem:[%s1 + $0x180] sm:$0xff]
    %v75 = vld [vmem:[%s1 + $0x188] sm:$0xff]
    %v76 = vld [vmem:[%s1 + $0x190] sm:$0xff]
    %v77 = vld [vmem:[%s1 + $0x198] sm:$0xff]
    %v78 = vld [vmem:[%s1 + $0x1a0] sm:$0xff]
    %v79 = vld [vmem:[%s1 + $0x1a8] sm:$0xff]
    %v80 = vld [vmem:[%s1 + $0x1b0] sm:$0xff]
    %v81 = vld [vmem:[%s1 + $0x1b8] sm:$0xff]
    %v82 = vld [vmem:[%s1 + $0x1c0] sm:$0xff]
    %v83 = vld [vmem:[%s1 + $0x1c8] sm:$0xff]
    %v84 = vld [vmem:[%s1 + $0x1d0] sm:$0xff]
    %v85 = vld [vmem:[%s1 + $0x1d8] sm:$0xff]
    %v86 = vld [vmem:[%s1 + $0x1e0] sm:$0xff]
    %v87 = vld [vmem:[%s1 + $0x1e8] sm:$0xff]
    %v88 = vld [vmem:[%s1 + $0x1f0] sm:$0xff]
    %v89 = vld [vmem:[%s1 + $0x1f8] sm:$0xff]
    %v90 = vld [vmem:[%s1 + $0x200] sm:$0xff]
    %v91 = vld [vmem:[%s1 + $0x208] sm:$0xff]
    %v92 = vld [vmem:[%s1 + $0x210] sm:$0xff]
    %v93 = vld [vmem:[%s1 + $0x218] sm:$0xff]
    %v94 = vld [vmem:[%s1 + $0x220] sm:$0xff]
    %v95 = vld [vmem:[%s1 + $0x228] sm:$0xff]
    %v96 = vld [vmem:[%s1 + $0x230] sm:$0xff]
    %v97 = vld [vmem:[%s1 + $0x238] sm:$0xff]
    %v98 = vld [vmem:[%s1 + $0x240] sm:$0xff]
    %v99 = vld [vmem:[%s1 + $0x248] sm:$0xff]
    %v100 = vld [vmem:[%s1 + $0x250] sm:$0xff]
    %v101 = vld [vmem:[%s1 + $0x258] sm:$0xff]
    %v102 = vld [vmem:[%s1 + $0x260] sm:$0xff]
    %v103 = vld [vmem:[%s1 + $0x268] sm:$0xff]
    %v104 = vld [vmem:[%s1 + $0x270] sm:$0xff]
    %v105 = vld [vmem:[%s1 + $0x278] sm:$0xff]
    %v106 = vld [vmem:[%s1 + $0x280] sm:$0xff]
    %v107 = vld [vmem:[%s1 + $0x288] sm:$0xff]
    %v108 = vld [vmem:[%s1 + $0x290] sm:$0xff]
    %v109 = vld [vmem:[%s1 + $0x298] sm:$0xff]
    %v110 = vld [vmem:[%s1 + $0x2a0] sm:$0xff]
    %v111 = vld [vmem:[%s1 + $0x2a8] sm:$0xff]
    %v112 = vld [vmem:[%s1 + $0x2b0] sm:$0xff]
    %v113 = vld [vmem:[%s1 + $0x2b8] sm:$0xff]
    %v114 = vld [vmem:[%s1 + $0x2c0] sm:$0xff]
    %v115 = vld [vmem:[%s1 + $0x2c8] sm:$0xff]
    %v116 = vld [vmem:[%s1 + $0x2d0] sm:$0xff]
    %v117 = vld [vmem:[%s1 + $0x2d8] sm:$0xff]
    %v118 = vld [vmem:[%s1 + $0x2e0] sm:$0xff]
    %v119 = vld [vmem:[%s1 + $0x2e8] sm:$0xff]
    %v120 = vld [vmem:[%s1 + $0x2f0] sm:$0xff]
    %v121 = vld [vmem:[%s1 + $0x2f8] sm:$0xff]
    %v122 = vld [vmem:[%s1 + $0x300] sm:$0xff]
    %v123 = vld [vmem:[%s1 + $0x308] sm:$0xff]
    %v124 = vld [vmem:[%s1 + $0x310] sm:$0xff]
    %v125 = vld [vmem:[%s1 + $0x318] sm:$0xff]
    %v126 = vld [vmem:[%s1 + $0x320] sm:$0xff]
    %v127 = vld [vmem:[%s1 + $0x328] sm:$0xff]
    %v128 = vld [vmem:[%s1 + $0x330] sm:$0xff]
    %v129 = vld [vmem:[%s1 + $0x338] sm:$0xff]
    %v130 = vld [vmem:[%s1 + $0x340] sm:$0xff]
    %v131 = vld [vmem:[%s1 + $0x348] sm:$0xff]
    %v132 = vld [vmem:[%s1 + $0x350] sm:$0xff]
    %v133 = vld [vmem:[%s1 + $0x358] sm:$0xff]
    %v134 = vld [vmem:[%s1 + $0x360] sm:$0xff]
    %v135 = vld [vmem:[%s1 + $0x368] sm:$0xff]
    %v136 = vld [vmem:[%s1 + $0x370] sm:$0xff]
    %v137 = vld [vmem:[%s1 + $0x378] sm:$0xff]
    %v138 = vld [vmem:[%s1 + $0x380] sm:$0xff]
    %v139 = vld [vmem:[%s1 + $0x388] sm:$0xff]
    %v140 = vld [vmem:[%s1 + $0x390] sm:$0xff]
    %v141 = vld [vmem:[%s1 + $0x398] sm:$0xff]
    %v142 = vld [vmem:[%s1 + $0x3a0] sm:$0xff]
    %v143 = vld [vmem:[%s1 + $0x3a8] sm:$0xff]
    %v144 = vld [vmem:[%s1 + $0x3b0] sm:$0xff]
    %v145 = vld [vmem:[%s1 + $0x3b8] sm:$0xff]
    %v146 = vld [vmem:[%s1 + $0x3c0] sm:$0xff]
    %v147 = vld [vmem:[%s1 + $0x3c8] sm:$0xff]
    %v148 = vld [vmem:[%s1 + $0x3d0] sm:$0xff]
    %v149 = vld [vmem:[%s1 + $0x3d8] sm:$0xff]
    %v150 = vld [vmem:[%s1 + $0x3e0] sm:$0xff]
    %v151 = vld [vmem:[%s1 + $0x3e8] sm:$0xff]
    %v152 = vld [vmem:[%s1 + $0x3f0] sm:$0xff]
    %v153 = vld [vmem:[%s1 + $0x3f8] sm:$0xff]
    %v154 = vld [vmem:[%s1 + $0x400] sm:$0xff]
    %v155 = vld [vmem:[%s1 + $0x408] sm:$0xff]
    %v156 = vld [vmem:[%s1 + $0x410] sm:$0xff]
    %v157 = vld [vmem:[%s1 + $0x418] sm:$0xff]
    %v158 = vld [vmem:[%s1 + $0x420] sm:$0xff]
    %v159 = vld [vmem:[%s1 + $0x428] sm:$0xff]
    %v160 = vld [vmem:[%s1 + $0x430] sm:$0xff]
    %v161 = vld [vmem:[%s1 + $0x438] sm:$0xff]
    %v162 = vld [vmem:[%s1 + $0x440] sm:$0xff]
    %v163 = vld [vmem:[%s1 + $0x448] sm:$0xff]
    %v164 = vld [vmem:[%s1 + $0x450] sm:$0xff]
    %v165 = vld [vmem:[%s1 + $0x458] sm:$0xff]
    %v166 = vld [vmem:[%s1 + $0x460] sm:$0xff]
    %v167 = vld [vmem:[%s1 + $0x468] sm:$0xff]
    %v168 = vld [vmem:[%s1 + $0x470] sm:$0xff]
    %v169 = vld [vmem:[%s1 + $0x478] sm:$0xff]
    %v170 = vld [vmem:[%s1 + $0x480] sm:$0xff]
    %v171 = vld [vmem:[%s1 + $0x488] sm:$0xff]
    %v172 = vld [vmem:[%s1 + $0x490] sm:$0xff]
    %v173 = vld [vmem:[%s1 + $0x498] sm:$0xff]
    %v174 = vld [vmem:[%s1 + $0x4a0] sm:$0xff]
    %v175 = vld [vmem:[%s1 + $0x4a8] sm:$0xff]
    %v176 = vld [vmem:[%s1 + $0x4b0] sm:$0xff]
    %v177 = vld [vmem:[%s1 + $0x4b8] sm:$0xff]
    %v178 = vld [vmem:[%s1 + $0x4c0] sm:$0xff]
    %v179 = vld [vmem:[%s1 + $0x4c8] sm:$0xff]
    %v180 = vld [vmem:[%s1 + $0x4d0] sm:$0xff]
    %v181 = vld [vmem:[%s1 + $0x4d8] sm:$0xff]
    %v182 = vld [vmem:[%s1 + $0x4e0] sm:$0xff]
    %v183 = vld [vmem:[%s1 + $0x4e8] sm:$0xff]
    %v184 = vld [vmem:[%s1 + $0x4f0] sm:$0xff]
    %v185 = vld [vmem:[%s1 + $0x4f8] sm:$0xff]
    %v186 = vld [vmem:[%s1 + $0x500] sm:$0xff]
    %v187 = vld [vmem:[%s1 + $0x508] sm:$0xff]
    %v188 = vld [vmem:[%s1 + $0x510] sm:$0xff]
    %v189 = vld [vmem:[%s1 + $0x518] sm:$0xff]
    %v190 = vld [vmem:[%s1 + $0x520] sm:$0xff]
    %v191 = vld [vmem:[%s1 + $0x528] sm:$0xff]
    %v192 = vld [vmem:[%s1 + $0x530] sm:$0xff]
    %v193 = vld [vmem:[%s1 + $0x538] sm:$0xff]
    %v194 = vld [vmem:[%s1 + $0x540] sm:$0xff]
    %v195 = vld [vmem:[%s1 + $0x548] sm:$0xff]
    %v196 = vld [vmem:[%s1 + $0x550] sm:$0xff]
    %v197 = vld [vmem:[%s1 + $0x558] sm:$0xff]
    %v198 = vld [vmem:[%s1 + $0x560] sm:$0xff]
    %v199 = vld [vmem:[%s1 + $0x568] sm:$0xff]
    %v200 = vld [vmem:[%s1 + $0x570] sm:$0xff]
    %v201 = vld [vmem:[%s1 + $0x578] sm:$0xff]
    %v202 = vld [vmem:[%s1 + $0x580] sm:$0xff]
    %v203 = vld [vmem:[%s1 + $0x588] sm:$0xff]
    %v204 = vld [vmem:[%s1 + $0x590] sm:$0xff]
    %v205 = vld [vmem:[%s1 + $0x598] sm:$0xff]
    %v206 = vld [vmem:[%s1 + $0x5a0] sm:$0xff]
    %v207 = vld [vmem:[%s1 + $0x5a8] sm:$0xff]
    %v208 = vld [vmem:[%s1 + $0x5b0] sm:$0xff]
    %v209 = vld [vmem:[%s1 + $0x5b8] sm:$0xff]
    %v210 = vld [vmem:[%s1 + $0x5c0] sm:$0xff]
    %v211 = vld [vmem:[%s1 + $0x5c8] sm:$0xff]
    %v212 = vld [vmem:[%s1 + $0x5d0] sm:$0xff]
    %v213 = vld [vmem:[%s1 + $0x5d8] sm:$0xff]
    %v214 = vld [vmem:[%s1 + $0x5e0] sm:$0xff]
    %v215 = vld [vmem:[%s1 + $0x5e8] sm:$0xff]
    %v216 = vld [vmem:[%s1 + $0x5f0] sm:$0xff]
    %v217 = vld [vmem:[%s1 + $0x5f8] sm:$0xff]
    %v218 = vld [vmem:[%s1 + $0x600] sm:$0xff]
    %v219 = vld [vmem:[%s1 + $0x608] sm:$0xff]
    %v220 = vld [vmem:[%s1 + $0x610] sm:$0xff]
    %v221 = vld [vmem:[%s1 + $0x618] sm:$0xff]
    %v222 = vld [vmem:[%s1 + $0x620] sm:$0xff]
    %v223 = vld [vmem:[%s1 + $0x628] sm:$0xff]
    %v224 = vld [vmem:[%s1 + $0x630] sm:$0xff]
    %v225 = vld [vmem:[%s1 + $0x638] sm:$0xff]
    %v226 = vld [vmem:[%s1 + $0x640] sm:$0xff]
    %v227 = vld [vmem:[%s1 + $0x648] sm:$0xff]
    %v228 = vld [vmem:[%s1 + $0x650] sm:$0xff]
    %v229 = vld [vmem:[%s1 + $0x658] sm:$0xff]
    %v230 = vld [vmem:[%s1 + $0x660] sm:$0xff]
    %v231 = vld [vmem:[%s1 + $0x668] sm:$0xff]
    %v232 = vld [vmem:[%s1 + $0x670] sm:$0xff]
    %v233 = vld [vmem:[%s1 + $0x678] sm:$0xff]
    %v234 = vld [vmem:[%s1 + $0x680] sm:$0xff]
    %v235 = vld [vmem:[%s1 + $0x688] sm:$0xff]
    %v236 = vld [vmem:[%s1 + $0x690] sm:$0xff]
    %v237 = vld [vmem:[%s1 + $0x698] sm:$0xff]
    %v238 = vld [vmem:[%s1 + $0x6a0] sm:$0xff]
    %v239 = vld [vmem:[%s1 + $0x6a8] sm:$0xff]
    %v240 = vld [vmem:[%s1 + $0x6b0] sm:$0xff]
    %v241 = vld [vmem:[%s1 + $0x6b8] sm:$0xff]
    %v242 = vld [vmem:[%s1 + $0x6c0] sm:$0xff]
    %v243 = vld [vmem:[%s1 + $0x6c8] sm:$0xff]
    %v244 = vld [vmem:[%s1 + $0x6d0] sm:$0xff]
    %v245 = vld [vmem:[%s1 + $0x6d8] sm:$0xff]
    %v246 = vld [vmem:[%s1 + $0x6e0] sm:$0xff]
    %v247 = vld [vmem:[%s1 + $0x6e8] sm:$0xff]
    %v248 = vld [vmem:[%s1 + $0x6f0] sm:$0xff]
    %v249 = vld [vmem:[%s1 + $0x6f8] sm:$0xff]
    %v250 = vld [vmem:[%s1 + $0x700] sm:$0xff]
    %v251 = vld [vmem:[%s1 + $0x708] sm:$0xff]
    %v252 = vld [vmem:[%s1 + $0x710] sm:$0xff]
    %v253 = vld [vmem:[%s1 + $0x718] sm:$0xff]
    %v254 = vld [vmem:[%s1 + $0x720] sm:$0xff]
    %v255 = vld [vmem:[%s1 + $0x728] sm:$0xff]
    %v256 = vld [vmem:[%s1 + $0x730] sm:$0xff]
    %v257 = vld [vmem:[%s1 + $0x738] sm:$0xff]
    %v258 = vld [vmem:[%s1 + $0x740] sm:$0xff]
    %v259 = vld [vmem:[%s1 + $0x748] sm:$0xff]
    %v260 = vld [vmem:[%s1 + $0x750] sm:$0xff]
    %v261 = vld [vmem:[%s1 + $0x758] sm:$0xff]
    %v262 = vld [vmem:[%s1 + $0x760] sm:$0xff]
    %v263 = vld [vmem:[%s1 + $0x768] sm:$0xff]
    %v264 = vld [vmem:[%s1 + $0x770] sm:$0xff]
    %v265 = vld [vmem:[%s1 + $0x778] sm:$0xff]
    %v266 = vld [vmem:[%s1 + $0x780] sm:$0xff]
    %v267 = vld [vmem:[%s1 + $0x788] sm:$0xff]
    %v268 = vld [vmem:[%s1 + $0x790] sm:$0xff]
    %v269 = vld [vmem:[%s1 + $0x798] sm:$0xff]
    %v270 = vld [vmem:[%s1 + $0x7a0] sm:$0xff]
    %v271 = vld [vmem:[%s1 + $0x7a8] sm:$0xff]
    %v272 = vld [vmem:[%s1 + $0x7b0] sm:$0xff]
    %v273 = vld [vmem:[%s1 + $0x7b8] sm:$0xff]
    %v274 = vld [vmem:[%s1 + $0x7c0] sm:$0xff]
    %v275 = vld [vmem:[%s1 + $0x7c8] sm:$0xff]
    %v276 = vld [vmem:[%s1 + $0x7d0] sm:$0xff]
    %v277 = vld [vmem:[%s1 + $0x7d8] sm:$0xff]
    %v278 = vld [vmem:[%s1 + $0x7e0] sm:$0xff]
    %v279 = vld [vmem:[%s1 + $0x7e8] sm:$0xff]
    %v280 = vld [vmem:[%s1 + $0x7f0] sm:$0xff]
    %v281 = vld [vmem:[%s1 + $0x7f8] sm:$0xff]
    %v282 = vld [vmem:[%s1 + $0x800] sm:$0xff]
    %v283 = vld [vmem:[%s1 + $0x808] sm:$0xff]
    %v284 = vld [vmem:[%s1 + $0x810] sm:$0xff]
    %v285 = vld [vmem:[%s1 + $0x818] sm:$0xff]
    %v286 = vld [vmem:[%s1 + $0x820] sm:$0xff]
    %v287 = vld [vmem:[%s1 + $0x828] sm:$0xff]
    %v288 = vld [vmem:[%s1 + $0x830] sm:$0xff]
    %v289 = vld [vmem:[%s1 + $0x838] sm:$0xff]
    %v290 = vld [vmem:[%s1 + $0x840] sm:$0xff]
    %v291 = vld [vmem:[%s1 + $0x848] sm:$0xff]
    %v292 = vld [vmem:[%s1 + $0x850] sm:$0xff]
    %v293 = vld [vmem:[%s1 + $0x858] sm:$0xff]
    %v294 = vld [vmem:[%s1 + $0x860] sm:$0xff]
    %v295 = vld [vmem:[%s1 + $0x868] sm:$0xff]
    %v296 = vld [vmem:[%s1 + $0x870] sm:$0xff]
    %v297 = vld [vmem:[%s1 + $0x878] sm:$0xff]
    %v298 = vld [vmem:[%s1 + $0x880] sm:$0xff]
    %v299 = vld [vmem:[%s1 + $0x888] sm:$0xff]
    %v300 = vld [vmem:[%s1 + $0x890] sm:$0xff]
    %v301 = vld [vmem:[%s1 + $0x898] sm:$0xff]
    %v302 = vld [vmem:[%s1 + $0x8a0] sm:$0xff]
    %v303 = vld [vmem:[%s1 + $0x8a8] sm:$0xff]
    %v304 = vld [vmem:[%s1 + $0x8b0] sm:$0xff]
    %v305 = vld [vmem:[%s1 + $0x8b8] sm:$0xff]
    %v306 = vld [vmem:[%s1 + $0x8c0] sm:$0xff]
    %v307 = vld [vmem:[%s1 + $0x8c8] sm:$0xff]
    %v308 = vld [vmem:[%s1 + $0x8d0] sm:$0xff]
    %v309 = vld [vmem:[%s1 + $0x8d8] sm:$0xff]
    %v310 = vld [vmem:[%s1 + $0x8e0] sm:$0xff]
    %v311 = vld [vmem:[%s1 + $0x8e8] sm:$0xff]
    %v312 = vld [vmem:[%s1 + $0x8f0] sm:$0xff]
    %v313 = vld [vmem:[%s1 + $0x8f8] sm:$0xff]
    %v314 = vld [vmem:[%s1 + $0x900] sm:$0xff]
    %v315 = vld [vmem:[%s1 + $0x908] sm:$0xff]
    %v316 = vld [vmem:[%s1 + $0x910] sm:$0xff]
    %v317 = vld [vmem:[%s1 + $0x918] sm:$0xff]
    %v318 = vld [vmem:[%s1 + $0x920] sm:$0xff]
    %v319 = vld [vmem:[%s1 + $0x928] sm:$0xff]
    %v320 = vld [vmem:[%s1 + $0x930] sm:$0xff]
    %v321 = vld [vmem:[%s1 + $0x938] sm:$0xff]
    %v322 = vld [vmem:[%s1 + $0x940] sm:$0xff]
    %v323 = vld [vmem:[%s1 + $0x948] sm:$0xff]
    %v324 = vld [vmem:[%s1 + $0x950] sm:$0xff]
    %v325 = vld [vmem:[%s1 + $0x958] sm:$0xff]
    %v326 = vld [vmem:[%s1 + $0x960] sm:$0xff]
    %v327 = vld [vmem:[%s1 + $0x968] sm:$0xff]
    %v328 = vld [vmem:[%s1 + $0x970] sm:$0xff]
    %v329 = vld [vmem:[%s1 + $0x978] sm:$0xff]
    %v330 = vld [vmem:[%s1 + $0x980] sm:$0xff]
    %v331 = vld [vmem:[%s1 + $0x988] sm:$0xff]
    %v332 = vld [vmem:[%s1 + $0x990] sm:$0xff]
    %v333 = vld [vmem:[%s1 + $0x998] sm:$0xff]
    %v334 = vld [vmem:[%s1 + $0x9a0] sm:$0xff]
    %v335 = vld [vmem:[%s1 + $0x9a8] sm:$0xff]
    %v336 = vld [vmem:[%s1 + $0x9b0] sm:$0xff]
    %v337 = vld [vmem:[%s1 + $0x9b8] sm:$0xff]
    %v338 = vld [vmem:[%s1 + $0x9c0] sm:$0xff]
    %v339 = vld [vmem:[%s1 + $0x9c8] sm:$0xff]
    %v340 = vld [vmem:[%s1 + $0x9d0] sm:$0xff]
    %v341 = vld [vmem:[%s1 + $0x9d8] sm:$0xff]
    %v342 = vld [vmem:[%s1 + $0x9e0] sm:$0xff]
    %v343 = vld [vmem:[%s1 + $0x9e8] sm:$0xff]
    %v344 = vld [vmem:[%s1 + $0x9f0] sm:$0xff]
    %v345 = vld [vmem:[%s1 + $0x9f8] sm:$0xff]
    %v346 = vld [vmem:[%s1 + $0xa00] sm:$0xff]
    %v347 = vld [vmem:[%s1 + $0xa08] sm:$0xff]
    %v348 = vld [vmem:[%s1 + $0xa10] sm:$0xff]
    %v349 = vld [vmem:[%s1 + $0xa18] sm:$0xff]
    %v350 = vld [vmem:[%s1 + $0xa20] sm:$0xff]
    %v351 = vld [vmem:[%s1 + $0xa28] sm:$0xff]
    %v352 = vld [vmem:[%s1 + $0xa30] sm:$0xff]
    %v353 = vld [vmem:[%s1 + $0xa38] sm:$0xff]
    %v354 = vld [vmem:[%s1 + $0xa40] sm:$0xff]
    %v355 = vld [vmem:[%s1 + $0xa48] sm:$0xff]
    %v356 = vld [vmem:[%s1 + $0xa50] sm:$0xff]
    %v357 = vld [vmem:[%s1 + $0xa58] sm:$0xff]
    %v358 = vld [vmem:[%s1 + $0xa60] sm:$0xff]
    %v359 = vld [vmem:[%s1 + $0xa68] sm:$0xff]
    %v360 = vld [vmem:[%s1 + $0xa70] sm:$0xff]
    %v361 = vld [vmem:[%s1 + $0xa78] sm:$0xff]
    %v362 = vld [vmem:[%s1 + $0xa80] sm:$0xff]
    %v363 = vld [vmem:[%s1 + $0xa88] sm:$0xff]
    %v364 = vld [vmem:[%s1 + $0xa90] sm:$0xff]
    %v365 = vld [vmem:[%s1 + $0xa98] sm:$0xff]
    %v366 = vld [vmem:[%s1 + $0xaa0] sm:$0xff]
    %v367 = vld [vmem:[%s1 + $0xaa8] sm:$0xff]
    %v368 = vld [vmem:[%s1 + $0xab0] sm:$0xff]
    %v369 = vld [vmem:[%s1 + $0xab8] sm:$0xff]
    %v370 = vld [vmem:[%s1 + $0xac0] sm:$0xff]
    %v371 = vld [vmem:[%s1 + $0xac8] sm:$0xff]
    %v372 = vld [vmem:[%s1 + $0xad0] sm:$0xff]
    %v373 = vld [vmem:[%s1 + $0xad8] sm:$0xff]
    %v374 = vld [vmem:[%s1 + $0xae0] sm:$0xff]
    %v375 = vld [vmem:[%s1 + $0xae8] sm:$0xff]
    %v376 = vld [vmem:[%s1 + $0xaf0] sm:$0xff]
    %v377 = vld [vmem:[%s1 + $0xaf8] sm:$0xff]
    %v378 = vld [vmem:[%s1 + $0xb00] sm:$0xff]
    %v379 = vld [vmem:[%s1 + $0xb08] sm:$0xff]
    %v380 = vld [vmem:[%s1 + $0xb10] sm:$0xff]
    %v381 = vld [vmem:[%s1 + $0xb18] sm:$0xff]
    %v382 = vld [vmem:[%s1 + $0xb20] sm:$0xff]
    %v383 = vld [vmem:[%s1 + $0xb28] sm:$0xff]
    %v384 = vld [vmem:[%s1 + $0xb30] sm:$0xff]
    %v385 = vld [vmem:[%s1 + $0xb38] sm:$0xff]
    %v386 = vld [vmem:[%s1 + $0xb40] sm:$0xff]
    %v387 = vld [vmem:[%s1 + $0xb48] sm:$0xff]
    %v388 = vld [vmem:[%s1 + $0xb50] sm:$0xff]
    %v389 = vld [vmem:[%s1 + $0xb58] sm:$0xff]
    %v390 = vld [vmem:[%s1 + $0xb60] sm:$0xff]
    %v391 = vld [vmem:[%s1 + $0xb68] sm:$0xff]
    %v392 = vld [vmem:[%s1 + $0xb70] sm:$0xff]
    %v393 = vld [vmem:[%s1 + $0xb78] sm:$0xff]
    %v394 = vld [vmem:[%s1 + $0xb80] sm:$0xff]
    %v395 = vld [vmem:[%s1 + $0xb88] sm:$0xff]
    %v396 = vld [vmem:[%s1 + $0xb90] sm:$0xff]
    %v397 = vld [vmem:[%s1 + $0xb98] sm:$0xff]
    %v398 = vld [vmem:[%s1 + $0xba0] sm:$0xff]
    %v399 = vld [vmem:[%s1 + $0xba8] sm:$0xff]
    %v400 = vld [vmem:[%s1 + $0xbb0] sm:$0xff]
    %v401 = vld [vmem:[%s1 + $0xbb8] sm:$0xff]
    %v402 = vld [vmem:[%s1 + $0xbc0] sm:$0xff]
    %v403 = vld [vmem:[%s1 + $0xbc8] sm:$0xff]
    %v404 = vld [vmem:[%s1 + $0xbd0] sm:$0xff]
    %v405 = vld [vmem:[%s1 + $0xbd8] sm:$0xff]
    %v406 = vld [vmem:[%s1 + $0xbe0] sm:$0xff]
    %v407 = vld [vmem:[%s1 + $0xbe8] sm:$0xff]
    %v408 = vld [vmem:[%s1 + $0xbf0] sm:$0xff]
    %v409 = vld [vmem:[%s1 + $0xbf8] sm:$0xff]
    %v410 = vld [vmem:[%s1 + $0xc00] sm:$0xff]
    %v411 = vld [vmem:[%s1 + $0xc08] sm:$0xff]
    %v412 = vld [vmem:[%s1 + $0xc10] sm:$0xff]
    %v413 = vld [vmem:[%s1 + $0xc18] sm:$0xff]
    %v414 = vld [vmem:[%s1 + $0xc20] sm:$0xff]
    %v415 = vld [vmem:[%s1 + $0xc28] sm:$0xff]
    %v416 = vld [vmem:[%s1 + $0xc30] sm:$0xff]
    %v417 = vld [vmem:[%s1 + $0xc38] sm:$0xff]
    %v418 = vld [vmem:[%s1 + $0xc40] sm:$0xff]
    %v419 = vld [vmem:[%s1 + $0xc48] sm:$0xff]
    %v420 = vld [vmem:[%s1 + $0xc50] sm:$0xff]
    %v421 = vld [vmem:[%s1 + $0xc58] sm:$0xff]
    %v422 = vld [vmem:[%s1 + $0xc60] sm:$0xff]
    %v423 = vld [vmem:[%s1 + $0xc68] sm:$0xff]
    %v424 = vld [vmem:[%s1 + $0xc70] sm:$0xff]
    %v425 = vld [vmem:[%s1 + $0xc78] sm:$0xff]
    %v426 = vld [vmem:[%s1 + $0xc80] sm:$0xff]
    %v427 = vld [vmem:[%s1 + $0xc88] sm:$0xff]
    %v428 = vld [vmem:[%s1 + $0xc90] sm:$0xff]
    %v429 = vld [vmem:[%s1 + $0xc98] sm:$0xff]
    %v430 = vld [vmem:[%s1 + $0xca0] sm:$0xff]
    %v431 = vld [vmem:[%s1 + $0xca8] sm:$0xff]
    %v432 = vld [vmem:[%s1 + $0xcb0] sm:$0xff]
    %v433 = vld [vmem:[%s1 + $0xcb8] sm:$0xff]
    %v434 = vld [vmem:[%s1 + $0xcc0] sm:$0xff]
    %v435 = vld [vmem:[%s1 + $0xcc8] sm:$0xff]
    %v436 = vld [vmem:[%s1 + $0xcd0] sm:$0xff]
    %v437 = vld [vmem:[%s1 + $0xcd8] sm:$0xff]
    %v438 = vld [vmem:[%s1 + $0xce0] sm:$0xff]
    %v439 = vld [vmem:[%s1 + $0xce8] sm:$0xff]
    %v440 = vld [vmem:[%s1 + $0xcf0] sm:$0xff]
    %v441 = vld [vmem:[%s1 + $0xcf8] sm:$0xff]
    %v442 = vld [vmem:[%s1 + $0xd00] sm:$0xff]
    %v443 = vld [vmem:[%s1 + $0xd08] sm:$0xff]
    %v444 = vld [vmem:[%s1 + $0xd10] sm:$0xff]
    %v445 = vld [vmem:[%s1 + $0xd18] sm:$0xff]
    %v446 = vld [vmem:[%s1 + $0xd20] sm:$0xff]
    %v447 = vld [vmem:[%s1 + $0xd28] sm:$0xff]
    %v448 = vld [vmem:[%s1 + $0xd30] sm:$0xff]
    %v449 = vld [vmem:[%s1 + $0xd38] sm:$0xff]
    %v450 = vld [vmem:[%s1 + $0xd40] sm:$0xff]
    %v451 = vld [vmem:[%s1 + $0xd48] sm:$0xff]
    %v452 = vld [vmem:[%s1 + $0xd50] sm:$0xff]
    %v453 = vld [vmem:[%s1 + $0xd58] sm:$0xff]
    %v454 = vld [vmem:[%s1 + $0xd60] sm:$0xff]
    %v455 = vld [vmem:[%s1 + $0xd68] sm:$0xff]
    %v456 = vld [vmem:[%s1 + $0xd70] sm:$0xff]
    %v457 = vld [vmem:[%s1 + $0xd78] sm:$0xff]
    %v458 = vld [vmem:[%s1 + $0xd80] sm:$0xff]
    %v459 = vld [vmem:[%s1 + $0xd88] sm:$0xff]
    %v460 = vld [vmem:[%s1 + $0xd90] sm:$0xff]
    %v461 = vld [vmem:[%s1 + $0xd98] sm:$0xff]
    %v462 = vld [vmem:[%s1 + $0xda0] sm:$0xff]
    %v463 = vld [vmem:[%s1 + $0xda8] sm:$0xff]
    %v464 = vld [vmem:[%s1 + $0xdb0] sm:$0xff]
    %v465 = vld [vmem:[%s1 + $0xdb8] sm:$0xff]
    %v466 = vld [vmem:[%s1 + $0xdc0] sm:$0xff]
    %v467 = vld [vmem:[%s1 + $0xdc8] sm:$0xff]
    %v468 = vld [vmem:[%s1 + $0xdd0] sm:$0xff]
    %v469 = vld [vmem:[%s1 + $0xdd8] sm:$0xff]
    %v470 = vld [vmem:[%s1 + $0xde0] sm:$0xff]
    %v471 = vld [vmem:[%s1 + $0xde8] sm:$0xff]
    %v472 = vld [vmem:[%s1 + $0xdf0] sm:$0xff]
    %v473 = vld [vmem:[%s1 + $0xdf8] sm:$0xff]
    %v474 = vld [vmem:[%s1 + $0xe00] sm:$0xff]
    %v475 = vld [vmem:[%s1 + $0xe08] sm:$0xff]
    %v476 = vld [vmem:[%s1 + $0xe10] sm:$0xff]
    %v477 = vld [vmem:[%s1 + $0xe18] sm:$0xff]
    %v478 = vld [vmem:[%s1 + $0xe20] sm:$0xff]
    %v479 = vld [vmem:[%s1 + $0xe28] sm:$0xff]
    %v480 = vld [vmem:[%s1 + $0xe30] sm:$0xff]
    %v481 = vld [vmem:[%s1 + $0xe38] sm:$0xff]
    %v482 = vld [vmem:[%s1 + $0xe40] sm:$0xff]
    %v483 = vld [vmem:[%s1 + $0xe48] sm:$0xff]
    %v484 = vld [vmem:[%s1 + $0xe50] sm:$0xff]
    %v485 = vld [vmem:[%s1 + $0xe58] sm:$0xff]
    %v486 = vld [vmem:[%s1 + $0xe60] sm:$0xff]
    %v487 = vld [vmem:[%s1 + $0xe68] sm:$0xff]
    %v488 = vld [vmem:[%s1 + $0xe70] sm:$0xff]
    %v489 = vld [vmem:[%s1 + $0xe78] sm:$0xff]
    %v490 = vld [vmem:[%s1 + $0xe80] sm:$0xff]
    %v491 = vld [vmem:[%s1 + $0xe88] sm:$0xff]
    %v492 = vld [vmem:[%s1 + $0xe90] sm:$0xff]
    %v493 = vld [vmem:[%s1 + $0xe98] sm:$0xff]
    %v494 = vld [vmem:[%s1 + $0xea0] sm:$0xff]
    %v495 = vld [vmem:[%s1 + $0xea8] sm:$0xff]
    %v496 = vld [vmem:[%s1 + $0xeb0] sm:$0xff]
    %v497 = vld [vmem:[%s1 + $0xeb8] sm:$0xff]
    %v498 = vld [vmem:[%s1 + $0xec0] sm:$0xff]
    %v499 = vld [vmem:[%s1 + $0xec8] sm:$0xff]
    %v500 = vld [vmem:[%s1 + $0xed0] sm:$0xff]
    %v501 = vld [vmem:[%s1 + $0xed8] sm:$0xff]
    %v502 = vld [vmem:[%s1 + $0xee0] sm:$0xff]
    %v503 = vld [vmem:[%s1 + $0xee8] sm:$0xff]
    %v504 = vld [vmem:[%s1 + $0xef0] sm:$0xff]
    %v505 = vld [vmem:[%s1 + $0xef8] sm:$0xff]
    %v506 = vld [vmem:[%s1 + $0xf00] sm:$0xff]
    %v507 = vld [vmem:[%s1 + $0xf08] sm:$0xff]
    %v508 = vld [vmem:[%s1 + $0xf10] sm:$0xff]
    %v509 = vld [vmem:[%s1 + $0xf18] sm:$0xff]
    %v510 = vld [vmem:[%s1 + $0xf20] sm:$0xff]
    %v511 = vld [vmem:[%s1 + $0xf28] sm:$0xff]
    %v512 = vld [vmem:[%s1 + $0xf30] sm:$0xff]
    %v513 = vld [vmem:[%s1 + $0xf38] sm:$0xff]
    %v514 = vld [vmem:[%s1 + $0xf40] sm:$0xff]
    %v515 = vld [vmem:[%s1 + $0xf48] sm:$0xff]
    %v516 = vld [vmem:[%s1 + $0xf50] sm:$0xff]
    %v517 = vld [vmem:[%s1 + $0xf58] sm:$0xff]
    %v518 = vld [vmem:[%s1 + $0xf60] sm:$0xff]
    %v519 = vld [vmem:[%s1 + $0xf68] sm:$0xff]
    %v520 = vld [vmem:[%s1 + $0xf70] sm:$0xff]
    %v521 = vld [vmem:[%s1 + $0xf78] sm:$0xff]
    %v522 = vld [vmem:[%s1 + $0xf80] sm:$0xff]
    %v523 = vld [vmem:[%s1 + $0xf88] sm:$0xff]
    %v524 = vld [vmem:[%s1 + $0xf90] sm:$0xff]
    %v525 = vld [vmem:[%s1 + $0xf98] sm:$0xff]
    %v526 = vld [vmem:[%s1 + $0xfa0] sm:$0xff]
    %v527 = vld [vmem:[%s1 + $0xfa8] sm:$0xff]
    %v528 = vld [vmem:[%s1 + $0xfb0] sm:$0xff]
    %v529 = vld [vmem:[%s1 + $0xfb8] sm:$0xff]
    %v530 = vld [vmem:[%s1 + $0xfc0] sm:$0xff]
    %v531 = vld [vmem:[%s1 + $0xfc8] sm:$0xff]
    %v532 = vld [vmem:[%s1 + $0xfd0] sm:$0xff]
    %v533 = vld [vmem:[%s1 + $0xfd8] sm:$0xff]
    %v534 = vld [vmem:[%s1 + $0xfe0] sm:$0xff]
    %v535 = vld [vmem:[%s1 + $0xfe8] sm:$0xff]
    %v536 = vld [vmem:[%s1 + $0xff0] sm:$0xff]
    %v537 = vld [vmem:[%s1 + $0xff8] sm:$0xff]
    %v538 = vld [vmem:[%s1 + $0x1000] sm:$0xff]
    %v539 = vld [vmem:[%s1 + $0x1008] sm:$0xff]
    %v540 = vld [vmem:[%s1 + $0x1010] sm:$0xff]
    %v541 = vld [vmem:[%s1 + $0x1018] sm:$0xff]
    %v542 = vld [vmem:[%s1 + $0x1020] sm:$0xff]
    %v543 = vld [vmem:[%s1 + $0x1028] sm:$0xff]
    %v544 = vld [vmem:[%s1 + $0x1030] sm:$0xff]
    %v545 = vld [vmem:[%s1 + $0x1038] sm:$0xff]
    %v546 = vld [vmem:[%s1 + $0x1040] sm:$0xff]
    %v547 = vld [vmem:[%s1 + $0x1048] sm:$0xff]
    %v548 = vld [vmem:[%s1 + $0x1050] sm:$0xff]
    %v549 = vld [vmem:[%s1 + $0x1058] sm:$0xff]
    %v550 = vld [vmem:[%s1 + $0x1060] sm:$0xff]
    %v551 = vld [vmem:[%s1 + $0x1068] sm:$0xff]
    %v552 = vld [vmem:[%s1 + $0x1070] sm:$0xff]
    %v553 = vld [vmem:[%s1 + $0x1078] sm:$0xff]
    %v554 = vld [vmem:[%s1 + $0x1080] sm:$0xff]
    %v555 = vld [vmem:[%s1 + $0x1088] sm:$0xff]
    %v556 = vld [vmem:[%s1 + $0x1090] sm:$0xff]
    %v557 = vld [vmem:[%s1 + $0x1098] sm:$0xff]
    %v558 = vld [vmem:[%s1 + $0x10a0] sm:$0xff]
    %v559 = vld [vmem:[%s1 + $0x10a8] sm:$0xff]
    %v560 = vld [vmem:[%s1 + $0x10b0] sm:$0xff]
    %v561 = vld [vmem:[%s1 + $0x10b8] sm:$0xff]
    %v562 = vld [vmem:[%s1 + $0x10c0] sm:$0xff]
    %v563 = vld [vmem:[%s1 + $0x10c8] sm:$0xff]
    %v564 = vld [vmem:[%s1 + $0x10d0] sm:$0xff]
    %v565 = vld [vmem:[%s1 + $0x10d8] sm:$0xff]
    %v566 = vld [vmem:[%s1 + $0x10e0] sm:$0xff]
    %v567 = vld [vmem:[%s1 + $0x10e8] sm:$0xff]
    %v568 = vld [vmem:[%s1 + $0x10f0] sm:$0xff]
    %v569 = vld [vmem:[%s1 + $0x10f8] sm:$0xff]
    %v570 = vld [vmem:[%s1 + $0x1100] sm:$0xff]
    %v571 = vld [vmem:[%s1 + $0x1108] sm:$0xff]
    %v572 = vld [vmem:[%s1 + $0x1110] sm:$0xff]
    %v573 = vld [vmem:[%s1 + $0x1118] sm:$0xff]
    %v574 = vld [vmem:[%s1 + $0x1120] sm:$0xff]
    %v575 = vld [vmem:[%s1 + $0x1128] sm:$0xff]
    %v576 = vld [vmem:[%s1 + $0x1130] sm:$0xff]
    %v577 = vld [vmem:[%s1 + $0x1138] sm:$0xff]
    %v578 = vld [vmem:[%s1 + $0x1140] sm:$0xff]
    %v579 = vld [vmem:[%s1 + $0x1148] sm:$0xff]
    %v580 = vld [vmem:[%s1 + $0x1150] sm:$0xff]
    %v581 = vld [vmem:[%s1 + $0x1158] sm:$0xff]
    %v582 = vld [vmem:[%s1 + $0x1160] sm:$0xff]
    %v583 = vld [vmem:[%s1 + $0x1168] sm:$0xff]
    %v584 = vld [vmem:[%s1 + $0x1170] sm:$0xff]
    %v585 = vld [vmem:[%s1 + $0x1178] sm:$0xff]
    %v586 = vld [vmem:[%s1 + $0x1180] sm:$0xff]
    %v587 = vld [vmem:[%s1 + $0x1188] sm:$0xff]
    %v588 = vld [vmem:[%s1 + $0x1190] sm:$0xff]
    %v589 = vld [vmem:[%s1 + $0x1198] sm:$0xff]
    %v590 = vld [vmem:[%s1 + $0x11a0] sm:$0xff]
    %v591 = vld [vmem:[%s1 + $0x11a8] sm:$0xff]
    %v592 = vld [vmem:[%s1 + $0x11b0] sm:$0xff]
    %v593 = vld [vmem:[%s1 + $0x11b8] sm:$0xff]
    %v594 = vld [vmem:[%s1 + $0x11c0] sm:$0xff]
    %v595 = vld [vmem:[%s1 + $0x11c8] sm:$0xff]
    %v596 = vld [vmem:[%s1 + $0x11d0] sm:$0xff]
    %v597 = vld [vmem:[%s1 + $0x11d8] sm:$0xff]
    %v598 = vld [vmem:[%s1 + $0x11e0] sm:$0xff]
    %v599 = vld [vmem:[%s1 + $0x11e8] sm:$0xff]
    %v600 = vld [vmem:[%s1 + $0x11f0] sm:$0xff]
    %v601 = vld [vmem:[%s1 + $0x11f8] sm:$0xff]
    %v602 = vld [vmem:[%s1 + $0x1200] sm:$0xff]
    %v603 = vld [vmem:[%s1 + $0x1208] sm:$0xff]
    %v604 = vld [vmem:[%s1 + $0x1210] sm:$0xff]
    %v605 = vld [vmem:[%s1 + $0x1218] sm:$0xff]
    %v606 = vld [vmem:[%s1 + $0x1220] sm:$0xff]
    %v607 = vld [vmem:[%s1 + $0x1228] sm:$0xff]
    %v608 = vld [vmem:[%s1 + $0x1230] sm:$0xff]
    %v609 = vld [vmem:[%s1 + $0x1238] sm:$0xff]
    %v610 = vld [vmem:[%s1 + $0x1240] sm:$0xff]
    %v611 = vld [vmem:[%s1 + $0x1248] sm:$0xff]
    %v612 = vld [vmem:[%s1 + $0x1250] sm:$0xff]
    %v613 = vld [vmem:[%s1 + $0x1258] sm:$0xff]
    %v614 = vld [vmem:[%s1 + $0x1260] sm:$0xff]
    %v615 = vld [vmem:[%s1 + $0x1268] sm:$0xff]
    %v616 = vld [vmem:[%s1 + $0x1270] sm:$0xff]
    %v617 = vld [vmem:[%s1 + $0x1278] sm:$0xff]
    %v618 = vld [vmem:[%s1 + $0x1280] sm:$0xff]
    %v619 = vld [vmem:[%s1 + $0x1288] sm:$0xff]
    %v620 = vld [vmem:[%s1 + $0x1290] sm:$0xff]
    %v621 = vld [vmem:[%s1 + $0x1298] sm:$0xff]
    %v622 = vld [vmem:[%s1 + $0x12a0] sm:$0xff]
    %v623 = vld [vmem:[%s1 + $0x12a8] sm:$0xff]
    %v624 = vld [vmem:[%s1 + $0x12b0] sm:$0xff]
    %v625 = vld [vmem:[%s1 + $0x12b8] sm:$0xff]
    %v626 = vld [vmem:[%s1 + $0x12c0] sm:$0xff]
    %v627 = vld [vmem:[%s1 + $0x12c8] sm:$0xff]
    %v628 = vld [vmem:[%s1 + $0x12d0] sm:$0xff]
    %v629 = vld [vmem:[%s1 + $0x12d8] sm:$0xff]
    %v630 = vld [vmem:[%s1 + $0x12e0] sm:$0xff]
    %v631 = vld [vmem:[%s1 + $0x12e8] sm:$0xff]
    %v632 = vld [vmem:[%s1 + $0x12f0] sm:$0xff]
    %v633 = vld [vmem:[%s1 + $0x12f8] sm:$0xff]
    %v634 = vld [vmem:[%s1 + $0x1300] sm:$0xff]
    %v635 = vld [vmem:[%s1 + $0x1308] sm:$0xff]
    %v636 = vld [vmem:[%s1 + $0x1310] sm:$0xff]
    %v637 = vld [vmem:[%s1 + $0x1318] sm:$0xff]
    %v638 = vld [vmem:[%s1 + $0x1320] sm:$0xff]
    %v639 = vld [vmem:[%s1 + $0x1328] sm:$0xff]
    %v640 = vld [vmem:[%s1 + $0x1330] sm:$0xff]
    %v641 = vld [vmem:[%s1 + $0x1338] sm:$0xff]
    %v642 = vld [vmem:[%s1 + $0x1340] sm:$0xff]
    %v643 = vld [vmem:[%s1 + $0x1348] sm:$0xff]
    %v644 = vld [vmem:[%s1 + $0x1350] sm:$0xff]
    %v645 = vld [vmem:[%s1 + $0x1358] sm:$0xff]
    %v646 = vld [vmem:[%s1 + $0x1360] sm:$0xff]
    %v647 = vld [vmem:[%s1 + $0x1368] sm:$0xff]
    %v648 = vld [vmem:[%s1 + $0x1370] sm:$0xff]
    %v649 = vld [vmem:[%s1 + $0x1378] sm:$0xff]
    %v650 = vld [vmem:[%s1 + $0x1380] sm:$0xff]
    %v651 = vld [vmem:[%s1 + $0x1388] sm:$0xff]
    %v652 = vld [vmem:[%s1 + $0x1390] sm:$0xff]
    %v653 = vld [vmem:[%s1 + $0x1398] sm:$0xff]
    %v654 = vld [vmem:[%s1 + $0x13a0] sm:$0xff]
    %v655 = vld [vmem:[%s1 + $0x13a8] sm:$0xff]
    %v656 = vld [vmem:[%s1 + $0x13b0] sm:$0xff]
    %v657 = vld [vmem:[%s1 + $0x13b8] sm:$0xff]
    %v658 = vld [vmem:[%s1 + $0x13c0] sm:$0xff]
    %v659 = vld [vmem:[%s1 + $0x13c8] sm:$0xff]
    %v660 = vld [vmem:[%s1 + $0x13d0] sm:$0xff]
    %v661 = vld [vmem:[%s1 + $0x13d8] sm:$0xff]
    %v662 = vld [vmem:[%s1 + $0x13e0] sm:$0xff]
    %v663 = vld [vmem:[%s1 + $0x13e8] sm:$0xff]
    %v664 = vld [vmem:[%s1 + $0x13f0] sm:$0xff]
    %v665 = vld [vmem:[%s1 + $0x13f8] sm:$0xff]
    %v666 = vld [vmem:[%s1 + $0x1400] sm:$0xff]
    %v667 = vld [vmem:[%s1 + $0x1408] sm:$0xff]
    %v668 = vld [vmem:[%s1 + $0x1410] sm:$0xff]
    %v669 = vld [vmem:[%s1 + $0x1418] sm:$0xff]
    %v670 = vld [vmem:[%s1 + $0x1420] sm:$0xff]
    %v671 = vld [vmem:[%s1 + $0x1428] sm:$0xff]
    %v672 = vld [vmem:[%s1 + $0x1430] sm:$0xff]
    %v673 = vld [vmem:[%s1 + $0x1438] sm:$0xff]
    %v674 = vld [vmem:[%s1 + $0x1440] sm:$0xff]
    %v675 = vld [vmem:[%s1 + $0x1448] sm:$0xff]
    %v676 = vld [vmem:[%s1 + $0x1450] sm:$0xff]
    %v677 = vld [vmem:[%s1 + $0x1458] sm:$0xff]
    %v678 = vld [vmem:[%s1 + $0x1460] sm:$0xff]
    %v679 = vld [vmem:[%s1 + $0x1468] sm:$0xff]
    %v680 = vld [vmem:[%s1 + $0x1470] sm:$0xff]
    %v681 = vld [vmem:[%s1 + $0x1478] sm:$0xff]
    %v682 = vld [vmem:[%s1 + $0x1480] sm:$0xff]
    %v683 = vld [vmem:[%s1 + $0x1488] sm:$0xff]
    %v684 = vld [vmem:[%s1 + $0x1490] sm:$0xff]
    %v685 = vld [vmem:[%s1 + $0x1498] sm:$0xff]
    %v686 = vld [vmem:[%s1 + $0x14a0] sm:$0xff]
    %v687 = vld [vmem:[%s1 + $0x14a8] sm:$0xff]
    %v688 = vld [vmem:[%s1 + $0x14b0] sm:$0xff]
    %v689 = vld [vmem:[%s1 + $0x14b8] sm:$0xff]
    %v690 = vld [vmem:[%s1 + $0x14c0] sm:$0xff]
    %v691 = vld [vmem:[%s1 + $0x14c8] sm:$0xff]
    %v692 = vld [vmem:[%s1 + $0x14d0] sm:$0xff]
    %v693 = vld [vmem:[%s1 + $0x14d8] sm:$0xff]
    %v694 = vld [vmem:[%s1 + $0x14e0] sm:$0xff]
    %v695 = vld [vmem:[%s1 + $0x14e8] sm:$0xff]
    %v696 = vld [vmem:[%s1 + $0x14f0] sm:$0xff]
    %v697 = vld [vmem:[%s1 + $0x14f8] sm:$0xff]
    %v698 = vld [vmem:[%s1 + $0x1500] sm:$0xff]
    %v699 = vld [vmem:[%s1 + $0x1508] sm:$0xff]
    %v700 = vld [vmem:[%s1 + $0x1510] sm:$0xff]
    %v701 = vld [vmem:[%s1 + $0x1518] sm:$0xff]
    %v702 = vld [vmem:[%s1 + $0x1520] sm:$0xff]
    %v703 = vld [vmem:[%s1 + $0x1528] sm:$0xff]
    %v704 = vld [vmem:[%s1 + $0x1530] sm:$0xff]
    %v705 = vld [vmem:[%s1 + $0x1538] sm:$0xff]
    %v706 = vld [vmem:[%s1 + $0x1540] sm:$0xff]
    %v707 = vld [vmem:[%s1 + $0x1548] sm:$0xff]
    %v708 = vld [vmem:[%s1 + $0x1550] sm:$0xff]
    %v709 = vld [vmem:[%s1 + $0x1558] sm:$0xff]
    %v710 = vld [vmem:[%s1 + $0x1560] sm:$0xff]
    %v711 = vld [vmem:[%s1 + $0x1568] sm:$0xff]
    %v712 = vld [vmem:[%s1 + $0x1570] sm:$0xff]
    %v713 = vld [vmem:[%s1 + $0x1578] sm:$0xff]
    %v714 = vld [vmem:[%s1 + $0x1580] sm:$0xff]
    %v715 = vld [vmem:[%s1 + $0x1588] sm:$0xff]
    %v716 = vld [vmem:[%s1 + $0x1590] sm:$0xff]
    %v717 = vld [vmem:[%s1 + $0x1598] sm:$0xff]
    %v718 = vld [vmem:[%s1 + $0x15a0] sm:$0xff]
    %v719 = vld [vmem:[%s1 + $0x15a8] sm:$0xff]
    %v720 = vld [vmem:[%s1 + $0x15b0] sm:$0xff]
    %v721 = vld [vmem:[%s1 + $0x15b8] sm:$0xff]
    %v722 = vld [vmem:[%s1 + $0x15c0] sm:$0xff]
    %v723 = vld [vmem:[%s1 + $0x15c8] sm:$0xff]
    %v724 = vld [vmem:[%s1 + $0x15d0] sm:$0xff]
    %v725 = vld [vmem:[%s1 + $0x15d8] sm:$0xff]
    %v726 = vld [vmem:[%s1 + $0x15e0] sm:$0xff]
    %v727 = vld [vmem:[%s1 + $0x15e8] sm:$0xff]
    %v728 = vld [vmem:[%s1 + $0x15f0] sm:$0xff]
    %v729 = vld [vmem:[%s1 + $0x15f8] sm:$0xff]
    %v730 = vld [vmem:[%s1 + $0x1600] sm:$0xff]
    %v731 = vld [vmem:[%s1 + $0x1608] sm:$0xff]
    %v732 = vld [vmem:[%s1 + $0x1610] sm:$0xff]
    %v733 = vld [vmem:[%s1 + $0x1618] sm:$0xff]
    %v734 = vld [vmem:[%s1 + $0x1620] sm:$0xff]
    %v735 = vld [vmem:[%s1 + $0x1628] sm:$0xff]
    %v736 = vld [vmem:[%s1 + $0x1630] sm:$0xff]
    %v737 = vld [vmem:[%s1 + $0x1638] sm:$0xff]
    %v738 = vld [vmem:[%s1 + $0x1640] sm:$0xff]
    %v739 = vld [vmem:[%s1 + $0x1648] sm:$0xff]
    %v740 = vld [vmem:[%s1 + $0x1650] sm:$0xff]
    %v741 = vld [vmem:[%s1 + $0x1658] sm:$0xff]
    %v742 = vld [vmem:[%s1 + $0x1660] sm:$0xff]
    %v743 = vld [vmem:[%s1 + $0x1668] sm:$0xff]
    %v744 = vld [vmem:[%s1 + $0x1670] sm:$0xff]
    %v745 = vld [vmem:[%s1 + $0x1678] sm:$0xff]
    %v746 = vld [vmem:[%s1 + $0x1680] sm:$0xff]
    %v747 = vld [vmem:[%s1 + $0x1688] sm:$0xff]
    %v748 = vld [vmem:[%s1 + $0x1690] sm:$0xff]
    %v749 = vld [vmem:[%s1 + $0x1698] sm:$0xff]
    %v750 = vld [vmem:[%s1 + $0x16a0] sm:$0xff]
    %v751 = vld [vmem:[%s1 + $0x16a8] sm:$0xff]
    %v752 = vld [vmem:[%s1 + $0x16b0] sm:$0xff]
    %v753 = vld [vmem:[%s1 + $0x16b8] sm:$0xff]
    %v754 = vld [vmem:[%s1 + $0x16c0] sm:$0xff]
    %v755 = vld [vmem:[%s1 + $0x16c8] sm:$0xff]
    %v756 = vld [vmem:[%s1 + $0x16d0] sm:$0xff]
    %v757 = vld [vmem:[%s1 + $0x16d8] sm:$0xff]
    %v758 = vld [vmem:[%s1 + $0x16e0] sm:$0xff]
    %v759 = vld [vmem:[%s1 + $0x16e8] sm:$0xff]
    %v760 = vld [vmem:[%s1 + $0x16f0] sm:$0xff]
    %v761 = vld [vmem:[%s1 + $0x16f8] sm:$0xff]
    %v762 = vld [vmem:[%s1 + $0x1700] sm:$0xff]
    %v763 = vld [vmem:[%s1 + $0x1708] sm:$0xff]
    %v764 = vld [vmem:[%s1 + $0x1710] sm:$0xff]
    %v765 = vld [vmem:[%s1 + $0x1718] sm:$0xff]
    %v766 = vld [vmem:[%s1 + $0x1720] sm:$0xff]
    %v767 = vld [vmem:[%s1 + $0x1728] sm:$0xff]
    %v768 = vld [vmem:[%s1 + $0x1730] sm:$0xff]
    %v769 = vld [vmem:[%s1 + $0x1738] sm:$0xff]
    %v770 = vld [vmem:[%s1 + $0x1740] sm:$0xff]
    %v771 = vld [vmem:[%s1 + $0x1748] sm:$0xff]
    %v772 = vld [vmem:[%s1 + $0x1750] sm:$0xff]
    %v773 = vld [vmem:[%s1 + $0x1758] sm:$0xff]
    %v774 = vld [vmem:[%s1 + $0x1760] sm:$0xff]
    %v775 = vld [vmem:[%s1 + $0x1768] sm:$0xff]
    %v776 = vld [vmem:[%s1 + $0x1770] sm:$0xff]
    %v777 = vld [vmem:[%s1 + $0x1778] sm:$0xff]
    %v778 = vld [vmem:[%s1 + $0x1780] sm:$0xff]
    %v779 = vld [vmem:[%s1 + $0x1788] sm:$0xff]
    %v780 = vld [vmem:[%s1 + $0x1790] sm:$0xff]
    %v781 = vld [vmem:[%s1 + $0x1798] sm:$0xff]
    %v782 = vld [vmem:[%s1 + $0x17a0] sm:$0xff]
    %v783 = vld [vmem:[%s1 + $0x17a8] sm:$0xff]
    %v784 = vld [vmem:[%s1 + $0x17b0] sm:$0xff]
    %v785 = vld [vmem:[%s1 + $0x17b8] sm:$0xff]
    %v786 = vld [vmem:[%s1 + $0x17c0] sm:$0xff]
    %v787 = vld [vmem:[%s1 + $0x17c8] sm:$0xff]
    %v788 = vld [vmem:[%s1 + $0x17d0] sm:$0xff]
    %v789 = vld [vmem:[%s1 + $0x17d8] sm:$0xff]
    %v790 = vld [vmem:[%s1 + $0x17e0] sm:$0xff]
    %v791 = vld [vmem:[%s1 + $0x17e8] sm:$0xff]
    %v792 = vld [vmem:[%s1 + $0x17f0] sm:$0xff]
    %v793 = vld [vmem:[%s1 + $0x17f8] sm:$0xff]
    %v794 = vld [vmem:[%s1 + $0x1800] sm:$0xff]
    %v795 = vld [vmem:[%s1 + $0x1808] sm:$0xff]
    %v796 = vld [vmem:[%s1 + $0x1810] sm:$0xff]
    %v797 = vld [vmem:[%s1 + $0x1818] sm:$0xff]
    %v798 = vld [vmem:[%s1 + $0x1820] sm:$0xff]
    %v799 = vld [vmem:[%s1 + $0x1828] sm:$0xff]
    %v800 = vld [vmem:[%s1 + $0x1830] sm:$0xff]
    %v801 = vld [vmem:[%s1 + $0x1838] sm:$0xff]
    %v802 = vld [vmem:[%s1 + $0x1840] sm:$0xff]
    %v803 = vld [vmem:[%s1 + $0x1848] sm:$0xff]
    %v804 = vld [vmem:[%s1 + $0x1850] sm:$0xff]
    %v805 = vld [vmem:[%s1 + $0x1858] sm:$0xff]
    %v806 = vld [vmem:[%s1 + $0x1860] sm:$0xff]
    %v807 = vld [vmem:[%s1 + $0x1868] sm:$0xff]
    %v808 = vld [vmem:[%s1 + $0x1870] sm:$0xff]
    %v809 = vld [vmem:[%s1 + $0x1878] sm:$0xff]
    %v810 = vld [vmem:[%s1 + $0x1880] sm:$0xff]
    %v811 = vld [vmem:[%s1 + $0x1888] sm:$0xff]
    %v812 = vld [vmem:[%s1 + $0x1890] sm:$0xff]
    %v813 = vld [vmem:[%s1 + $0x1898] sm:$0xff]
    %v814 = vld [vmem:[%s1 + $0x18a0] sm:$0xff]
    %v815 = vld [vmem:[%s1 + $0x18a8] sm:$0xff]
    %v816 = vld [vmem:[%s1 + $0x18b0] sm:$0xff]
    %v817 = vld [vmem:[%s1 + $0x18b8] sm:$0xff]
    %v818 = vld [vmem:[%s1 + $0x18c0] sm:$0xff]
    %v819 = vld [vmem:[%s1 + $0x18c8] sm:$0xff]
    %v820 = vld [vmem:[%s1 + $0x18d0] sm:$0xff]
    %v821 = vld [vmem:[%s1 + $0x18d8] sm:$0xff]
    %v822 = vld [vmem:[%s1 + $0x18e0] sm:$0xff]
    %v823 = vld [vmem:[%s1 + $0x18e8] sm:$0xff]
    %v824 = vld [vmem:[%s1 + $0x18f0] sm:$0xff]
    %v825 = vld [vmem:[%s1 + $0x18f8] sm:$0xff]
    %v826 = vld [vmem:[%s1 + $0x1900] sm:$0xff]
    %v827 = vld [vmem:[%s1 + $0x1908] sm:$0xff]
    %v828 = vld [vmem:[%s1 + $0x1910] sm:$0xff]
    %v829 = vld [vmem:[%s1 + $0x1918] sm:$0xff]
    %v830 = vld [vmem:[%s1 + $0x1920] sm:$0xff]
    %v831 = vld [vmem:[%s1 + $0x1928] sm:$0xff]
    %v832 = vld [vmem:[%s1 + $0x1930] sm:$0xff]
    %v833 = vld [vmem:[%s1 + $0x1938] sm:$0xff]
    %v834 = vld [vmem:[%s1 + $0x1940] sm:$0xff]
    %v835 = vld [vmem:[%s1 + $0x1948] sm:$0xff]
    %v836 = vld [vmem:[%s1 + $0x1950] sm:$0xff]
    %v837 = vld [vmem:[%s1 + $0x1958] sm:$0xff]
    %v838 = vld [vmem:[%s1 + $0x1960] sm:$0xff]
    %v839 = vld [vmem:[%s1 + $0x1968] sm:$0xff]
    %v840 = vld [vmem:[%s1 + $0x1970] sm:$0xff]
    %v841 = vld [vmem:[%s1 + $0x1978] sm:$0xff]
    %v842 = vld [vmem:[%s1 + $0x1980] sm:$0xff]
    %v843 = vld [vmem:[%s1 + $0x1988] sm:$0xff]
    %v844 = vld [vmem:[%s1 + $0x1990] sm:$0xff]
    %v845 = vld [vmem:[%s1 + $0x1998] sm:$0xff]
    %v846 = vld [vmem:[%s1 + $0x19a0] sm:$0xff]
    %v847 = vld [vmem:[%s1 + $0x19a8] sm:$0xff]
    %v848 = vld [vmem:[%s1 + $0x19b0] sm:$0xff]
    %v849 = vld [vmem:[%s1 + $0x19b8] sm:$0xff]
    %v850 = vld [vmem:[%s1 + $0x19c0] sm:$0xff]
    %v851 = vld [vmem:[%s1 + $0x19c8] sm:$0xff]
    %v852 = vld [vmem:[%s1 + $0x19d0] sm:$0xff]
    %v853 = vld [vmem:[%s1 + $0x19d8] sm:$0xff]
    %v854 = vld [vmem:[%s1 + $0x19e0] sm:$0xff]
    %v855 = vld [vmem:[%s1 + $0x19e8] sm:$0xff]
    %v856 = vld [vmem:[%s1 + $0x19f0] sm:$0xff]
    %v857 = vld [vmem:[%s1 + $0x19f8] sm:$0xff]
    %v858 = vld [vmem:[%s1 + $0x1a00] sm:$0xff]
    %v859 = vld [vmem:[%s1 + $0x1a08] sm:$0xff]
    %v860 = vld [vmem:[%s1 + $0x1a10] sm:$0xff]
    %v861 = vld [vmem:[%s1 + $0x1a18] sm:$0xff]
    %v862 = vld [vmem:[%s1 + $0x1a20] sm:$0xff]
    %v863 = vld [vmem:[%s1 + $0x1a28] sm:$0xff]
    %v864 = vld [vmem:[%s1 + $0x1a30] sm:$0xff]
    %v865 = vld [vmem:[%s1 + $0x1a38] sm:$0xff]
    %v866 = vld [vmem:[%s1 + $0x1a40] sm:$0xff]
    %v867 = vld [vmem:[%s1 + $0x1a48] sm:$0xff]
    %v868 = vld [vmem:[%s1 + $0x1a50] sm:$0xff]
    %v869 = vld [vmem:[%s1 + $0x1a58] sm:$0xff]
    %v870 = vld [vmem:[%s1 + $0x1a60] sm:$0xff]
    %v871 = vld [vmem:[%s1 + $0x1a68] sm:$0xff]
    %v872 = vld [vmem:[%s1 + $0x1a70] sm:$0xff]
    %v873 = vld [vmem:[%s1 + $0x1a78] sm:$0xff]
    %v874 = vld [vmem:[%s1 + $0x1a80] sm:$0xff]
    %v875 = vld [vmem:[%s1 + $0x1a88] sm:$0xff]
    %v876 = vld [vmem:[%s1 + $0x1a90] sm:$0xff]
    %v877 = vld [vmem:[%s1 + $0x1a98] sm:$0xff]
    %v878 = vld [vmem:[%s1 + $0x1aa0] sm:$0xff]
    %v879 = vld [vmem:[%s1 + $0x1aa8] sm:$0xff]
    %v880 = vld [vmem:[%s1 + $0x1ab0] sm:$0xff]
    %v881 = vld [vmem:[%s1 + $0x1ab8] sm:$0xff]
    %v882 = vld [vmem:[%s1 + $0x1ac0] sm:$0xff]
    %v883 = vld [vmem:[%s1 + $0x1ac8] sm:$0xff]
    %v884 = vld [vmem:[%s1 + $0x1ad0] sm:$0xff]
    %v885 = vld [vmem:[%s1 + $0x1ad8] sm:$0xff]
    %v886 = vld [vmem:[%s1 + $0x1ae0] sm:$0xff]
    %v887 = vld [vmem:[%s1 + $0x1ae8] sm:$0xff]
    %v888 = vld [vmem:[%s1 + $0x1af0] sm:$0xff]
    %v889 = vld [vmem:[%s1 + $0x1af8] sm:$0xff]
    %v890 = vld [vmem:[%s1 + $0x1b00] sm:$0xff]
    %v891 = vld [vmem:[%s1 + $0x1b08] sm:$0xff]
    %v892 = vld [vmem:[%s1 + $0x1b10] sm:$0xff]
    %v893 = vld [vmem:[%s1 + $0x1b18] sm:$0xff]
    %v894 = vld [vmem:[%s1 + $0x1b20] sm:$0xff]
    %v895 = vld [vmem:[%s1 + $0x1b28] sm:$0xff]
    %v896 = vld [vmem:[%s1 + $0x1b30] sm:$0xff]
    %v897 = vld [vmem:[%s1 + $0x1b38] sm:$0xff]
    %v898 = vld [vmem:[%s1 + $0x1b40] sm:$0xff]
    %v899 = vld [vmem:[%s1 + $0x1b48] sm:$0xff]
    %v900 = vld [vmem:[%s1 + $0x1b50] sm:$0xff]
    %v901 = vld [vmem:[%s1 + $0x1b58] sm:$0xff]
    %v902 = vld [vmem:[%s1 + $0x1b60] sm:$0xff]
    %v903 = vld [vmem:[%s1 + $0x1b68] sm:$0xff]
    %v904 = vld [vmem:[%s1 + $0x1b70] sm:$0xff]
    %v905 = vld [vmem:[%s1 + $0x1b78] sm:$0xff]
    %v906 = vld [vmem:[%s1 + $0x1b80] sm:$0xff]
    %v907 = vld [vmem:[%s1 + $0x1b88] sm:$0xff]
    %v908 = vld [vmem:[%s1 + $0x1b90] sm:$0xff]
    %v909 = vld [vmem:[%s1 + $0x1b98] sm:$0xff]
    %v910 = vld [vmem:[%s1 + $0x1ba0] sm:$0xff]
    %v911 = vld [vmem:[%s1 + $0x1ba8] sm:$0xff]
    %v912 = vld [vmem:[%s1 + $0x1bb0] sm:$0xff]
    %v913 = vld [vmem:[%s1 + $0x1bb8] sm:$0xff]
    %v914 = vld [vmem:[%s1 + $0x1bc0] sm:$0xff]
    %v915 = vld [vmem:[%s1 + $0x1bc8] sm:$0xff]
    %v916 = vld [vmem:[%s1 + $0x1bd0] sm:$0xff]
    %v917 = vld [vmem:[%s1 + $0x1bd8] sm:$0xff]
    %v918 = vld [vmem:[%s1 + $0x1be0] sm:$0xff]
    %v919 = vld [vmem:[%s1 + $0x1be8] sm:$0xff]
    %v920 = vld [vmem:[%s1 + $0x1bf0] sm:$0xff]
    %v921 = vld [vmem:[%s1 + $0x1bf8] sm:$0xff]
    %v922 = vld [vmem:[%s1 + $0x1c00] sm:$0xff]
    %v923 = vld [vmem:[%s1 + $0x1c08] sm:$0xff]
    %v924 = vld [vmem:[%s1 + $0x1c10] sm:$0xff]
    %v925 = vld [vmem:[%s1 + $0x1c18] sm:$0xff]
    %v926 = vld [vmem:[%s1 + $0x1c20] sm:$0xff]
    %v927 = vld [vmem:[%s1 + $0x1c28] sm:$0xff]
    %v928 = vld [vmem:[%s1 + $0x1c30] sm:$0xff]
    %v929 = vld [vmem:[%s1 + $0x1c38] sm:$0xff]
    %v930 = vld [vmem:[%s1 + $0x1c40] sm:$0xff]
    %v931 = vld [vmem:[%s1 + $0x1c48] sm:$0xff]
    %v932 = vld [vmem:[%s1 + $0x1c50] sm:$0xff]
    %v933 = vld [vmem:[%s1 + $0x1c58] sm:$0xff]
    %v934 = vld [vmem:[%s1 + $0x1c60] sm:$0xff]
    %v935 = vld [vmem:[%s1 + $0x1c68] sm:$0xff]
    %v936 = vld [vmem:[%s1 + $0x1c70] sm:$0xff]
    %v937 = vld [vmem:[%s1 + $0x1c78] sm:$0xff]
    %v938 = vld [vmem:[%s1 + $0x1c80] sm:$0xff]
    %v939 = vld [vmem:[%s1 + $0x1c88] sm:$0xff]
    %v940 = vld [vmem:[%s1 + $0x1c90] sm:$0xff]
    %v941 = vld [vmem:[%s1 + $0x1c98] sm:$0xff]
    %v942 = vld [vmem:[%s1 + $0x1ca0] sm:$0xff]
    %v943 = vld [vmem:[%s1 + $0x1ca8] sm:$0xff]
    %v944 = vld [vmem:[%s1 + $0x1cb0] sm:$0xff]
    %v945 = vld [vmem:[%s1 + $0x1cb8] sm:$0xff]
    %v946 = vld [vmem:[%s1 + $0x1cc0] sm:$0xff]
    %v947 = vld [vmem:[%s1 + $0x1cc8] sm:$0xff]
    %v948 = vld [vmem:[%s1 + $0x1cd0] sm:$0xff]
    %v949 = vld [vmem:[%s1 + $0x1cd8] sm:$0xff]
    %v950 = vld [vmem:[%s1 + $0x1ce0] sm:$0xff]
    %v951 = vld [vmem:[%s1 + $0x1ce8] sm:$0xff]
    %v952 = vld [vmem:[%s1 + $0x1cf0] sm:$0xff]
    %v953 = vld [vmem:[%s1 + $0x1cf8] sm:$0xff]
    %v954 = vld [vmem:[%s1 + $0x1d00] sm:$0xff]
    %v955 = vld [vmem:[%s1 + $0x1d08] sm:$0xff]
    %v956 = vld [vmem:[%s1 + $0x1d10] sm:$0xff]
    %v957 = vld [vmem:[%s1 + $0x1d18] sm:$0xff]
    %v958 = vld [vmem:[%s1 + $0x1d20] sm:$0xff]
    %v959 = vld [vmem:[%s1 + $0x1d28] sm:$0xff]
    %v960 = vld [vmem:[%s1 + $0x1d30] sm:$0xff]
    %v961 = vld [vmem:[%s1 + $0x1d38] sm:$0xff]
    %v962 = vld [vmem:[%s1 + $0x1d40] sm:$0xff]
    %v963 = vld [vmem:[%s1 + $0x1d48] sm:$0xff]
    %v964 = vld [vmem:[%s1 + $0x1d50] sm:$0xff]
    %v965 = vld [vmem:[%s1 + $0x1d58] sm:$0xff]
    %v966 = vld [vmem:[%s1 + $0x1d60] sm:$0xff]
    %v967 = vld [vmem:[%s1 + $0x1d68] sm:$0xff]
    %v968 = vld [vmem:[%s1 + $0x1d70] sm:$0xff]
    %v969 = vld [vmem:[%s1 + $0x1d78] sm:$0xff]
    %v970 = vld [vmem:[%s1 + $0x1d80] sm:$0xff]
    %v971 = vld [vmem:[%s1 + $0x1d88] sm:$0xff]
    %v972 = vld [vmem:[%s1 + $0x1d90] sm:$0xff]
    %v973 = vld [vmem:[%s1 + $0x1d98] sm:$0xff]
    %v974 = vld [vmem:[%s1 + $0x1da0] sm:$0xff]
    %v975 = vld [vmem:[%s1 + $0x1da8] sm:$0xff]
    %v976 = vld [vmem:[%s1 + $0x1db0] sm:$0xff]
    %v977 = vld [vmem:[%s1 + $0x1db8] sm:$0xff]
    %v978 = vld [vmem:[%s1 + $0x1dc0] sm:$0xff]
    %v979 = vld [vmem:[%s1 + $0x1dc8] sm:$0xff]
    %v980 = vld [vmem:[%s1 + $0x1dd0] sm:$0xff]
    %v981 = vld [vmem:[%s1 + $0x1dd8] sm:$0xff]
    %v982 = vld [vmem:[%s1 + $0x1de0] sm:$0xff]
    %v983 = vld [vmem:[%s1 + $0x1de8] sm:$0xff]
    %v984 = vld [vmem:[%s1 + $0x1df0] sm:$0xff]
    %v985 = vld [vmem:[%s1 + $0x1df8] sm:$0xff]
    %v986 = vld [vmem:[%s1 + $0x1e00] sm:$0xff]
    %v987 = vld [vmem:[%s1 + $0x1e08] sm:$0xff]
    %v988 = vld [vmem:[%s1 + $0x1e10] sm:$0xff]
    %v989 = vld [vmem:[%s1 + $0x1e18] sm:$0xff]
    %v990 = vld [vmem:[%s1 + $0x1e20] sm:$0xff]
    %v991 = vld [vmem:[%s1 + $0x1e28] sm:$0xff]
    %v992 = vld [vmem:[%s1 + $0x1e30] sm:$0xff]
    %v993 = vld [vmem:[%s1 + $0x1e38] sm:$0xff]
    %v994 = vld [vmem:[%s1 + $0x1e40] sm:$0xff]
    %v995 = vld [vmem:[%s1 + $0x1e48] sm:$0xff]
    %v996 = vld [vmem:[%s1 + $0x1e50] sm:$0xff]
    %v997 = vld [vmem:[%s1 + $0x1e58] sm:$0xff]
    %v998 = vld [vmem:[%s1 + $0x1e60] sm:$0xff]
    %v999 = vld [vmem:[%s1 + $0x1e68] sm:$0xff]
    %v1000 = vld [vmem:[%s1 + $0x1e70] sm:$0xff]
    %v1001 = vld [vmem:[%s1 + $0x1e78] sm:$0xff]
    %v1002 = vld [vmem:[%s1 + $0x1e80] sm:$0xff]
    %v1003 = vld [vmem:[%s1 + $0x1e88] sm:$0xff]
    %v1004 = vld [vmem:[%s1 + $0x1e90] sm:$0xff]
    %v1005 = vld [vmem:[%s1 + $0x1e98] sm:$0xff]
    %v1006 = vld [vmem:[%s1 + $0x1ea0] sm:$0xff]
    %v1007 = vld [vmem:[%s1 + $0x1ea8] sm:$0xff]
    %v1008 = vld [vmem:[%s1 + $0x1eb0] sm:$0xff]
    %v1009 = vld [vmem:[%s1 + $0x1eb8] sm:$0xff]
    %v1010 = vld [vmem:[%s1 + $0x1ec0] sm:$0xff]
    %v1011 = vld [vmem:[%s1 + $0x1ec8] sm:$0xff]
    %v1012 = vld [vmem:[%s1 + $0x1ed0] sm:$0xff]
    %v1013 = vld [vmem:[%s1 + $0x1ed8] sm:$0xff]
    %v1014 = vld [vmem:[%s1 + $0x1ee0] sm:$0xff]
    %v1015 = vld [vmem:[%s1 + $0x1ee8] sm:$0xff]
    %v1016 = vld [vmem:[%s1 + $0x1ef0] sm:$0xff]
    %v1017 = vld [vmem:[%s1 + $0x1ef8] sm:$0xff]
    %v1018 = vld [vmem:[%s1 + $0x1f00] sm:$0xff]
    %v1019 = vld [vmem:[%s1 + $0x1f08] sm:$0xff]
    %v1020 = vld [vmem:[%s1 + $0x1f10] sm:$0xff]
    %v1021 = vld [vmem:[%s1 + $0x1f18] sm:$0xff]
    %v1022 = vld [vmem:[%s1 + $0x1f20] sm:$0xff]
    %v1023 = vld [vmem:[%s1 + $0x1f28] sm:$0xff]
    %v1024 = vld [vmem:[%s1 + $0x1f30] sm:$0xff]
    %v1025 = vld [vmem:[%s1 + $0x1f38] sm:$0xff]
    %v1026 = vld [vmem:[%s1 + $0x1f40] sm:$0xff]
    %v1027 = vld [vmem:[%s1 + $0x1f48] sm:$0xff]
    %v1028 = vld [vmem:[%s1 + $0x1f50] sm:$0xff]
    %v1029 = vld [vmem:[%s1 + $0x1f58] sm:$0xff]
    %v1030 = vld [vmem:[%s1 + $0x1f60] sm:$0xff]
    %v1031 = vld [vmem:[%s1 + $0x1f68] sm:$0xff]
    %v1032 = vld [vmem:[%s1 + $0x1f70] sm:$0xff]
    %v1033 = vld [vmem:[%s1 + $0x1f78] sm:$0xff]
    %v1034 = vld [vmem:[%s1 + $0x1f80] sm:$0xff]
    %v1035 = vld [vmem:[%s1 + $0x1f88] sm:$0xff]
    %v1036 = vld [vmem:[%s1 + $0x1f90] sm:$0xff]
    %v1037 = vld [vmem:[%s1 + $0x1f98] sm:$0xff]
    %v1038 = vld [vmem:[%s1 + $0x1fa0] sm:$0xff]
    %v1039 = vld [vmem:[%s1 + $0x1fa8] sm:$0xff]
    %v1040 = vld [vmem:[%s1 + $0x1fb0] sm:$0xff]
    %v1041 = vld [vmem:[%s1 + $0x1fb8] sm:$0xff]
    %v1042 = vld [vmem:[%s1 + $0x1fc0] sm:$0xff]
    %v1043 = vld [vmem:[%s1 + $0x1fc8] sm:$0xff]
    %v1044 = vld [vmem:[%s1 + $0x1fd0] sm:$0xff]
    %v1045 = vld [vmem:[%s1 + $0x1fd8] sm:$0xff]
    %v1046 = vld [vmem:[%s1 + $0x1fe0] sm:$0xff]
    %v1047 = vld [vmem:[%s1 + $0x1fe8] sm:$0xff]
    %v1048 = vld [vmem:[%s1 + $0x1ff0] sm:$0xff]
    %v1049 = vld [vmem:[%s1 + $0x1ff8] sm:$0xff]
    %v1050 = vld [vmem:[%s2] sm:$0xf]
    %v1052 = vlaneseq
    %v1053 = vshrl.u32 %v1052, 7
    %v1054 = vsub.s32 0, %v1053
    %v1055 = vrot.slane %v1050, %v1054
    %v1056 = vlaneseq
    %v1057 = vshrl.u32 %v1056, 7
    %v1058 = vsub.s32 1, %v1057
    %v1059 = vrot.slane %v1050, %v1058
    %v1060 = vlaneseq
    %v1061 = vshrl.u32 %v1060, 7
    %v1062 = vsub.s32 2, %v1061
    %v1063 = vrot.slane %v1050, %v1062
    %v1064 = vlaneseq
    %v1065 = vshrl.u32 %v1064, 7
    %v1066 = vsub.s32 3, %v1065
    %v1067 = vrot.slane %v1050, %v1066
    %v1076 = vcombine.high %v22, %v22
    %v1078 = vunpack.c.l.s4 1966171168
    %v1079 = vunpack.c.0.s8 %v1078
    %v1080 = vlaneseq
    %v1081 = vshrl.u32 %v1080, 7
    %v1082 = vsub.s32 %v1079, %v1081
    %v1083 = vrot.slane %v22, %v1082
    %v1085 = vunpack.c.l.s4 1966171168
    %v1086 = vunpack.c.0.s8 %v1085
    %v1087 = vlaneseq
    %v1088 = vshrl.u32 %v1087, 7
    %v1089 = vsub.s32 %v1086, %v1088
    %v1090 = vrot.slane %v1076, %v1089
    %v1091 = vcombine.high %v1083, %v1083
    %v1092 = vcombine.high %v1090, %v1090
    %v1094 = vunpack.c.l.s4 1966171168
    %v1095 = vunpack.c.0.s8 %v1094
    %v1096 = vlaneseq
    %v1097 = vshrl.u32 %v1096, 7
    %v1098 = vsub.s32 %v1095, %v1097
    %v1099 = vrot.slane %v1083, %v1098
    %v1101 = vunpack.c.l.s4 1966171168
    %v1102 = vunpack.c.0.s8 %v1101
    %v1103 = vlaneseq
    %v1104 = vshrl.u32 %v1103, 7
    %v1105 = vsub.s32 %v1102, %v1104
    %v1106 = vrot.slane %v1090, %v1105
    %v1108 = vunpack.c.l.s4 1966171168
    %v1109 = vunpack.c.0.s8 %v1108
    %v1110 = vlaneseq
    %v1111 = vshrl.u32 %v1110, 7
    %v1112 = vsub.s32 %v1109, %v1111
    %v1113 = vrot.slane %v1091, %v1112
    %v1115 = vunpack.c.l.s4 1966171168
    %v1116 = vunpack.c.0.s8 %v1115
    %v1117 = vlaneseq
    %v1118 = vshrl.u32 %v1117, 7
    %v1119 = vsub.s32 %v1116, %v1118
    %v1120 = vrot.slane %v1092, %v1119
    %v1121 = vcombine.high %v1099, %v1099
    %v1122 = vcombine.high %v1106, %v1106
    %v1123 = vcombine.high %v1113, %v1113
    %v1124 = vcombine.high %v1120, %v1120
    %v1125 = vcombine.high %v23, %v23
    %v1127 = vunpack.c.l.s4 1966171168
    %v1128 = vunpack.c.0.s8 %v1127
    %v1129 = vlaneseq
    %v1130 = vshrl.u32 %v1129, 7
    %v1131 = vsub.s32 %v1128, %v1130
    %v1132 = vrot.slane %v23, %v1131
    %v1134 = vunpack.c.l.s4 1966171168
    %v1135 = vunpack.c.0.s8 %v1134
    %v1136 = vlaneseq
    %v1137 = vshrl.u32 %v1136, 7
    %v1138 = vsub.s32 %v1135, %v1137
    %v1139 = vrot.slane %v1125, %v1138
    %v1140 = vcombine.high %v1132, %v1132
    %v1141 = vcombine.high %v1139, %v1139
    %v1143 = vunpack.c.l.s4 1966171168
    %v1144 = vunpack.c.0.s8 %v1143
    %v1145 = vlaneseq
    %v1146 = vshrl.u32 %v1145, 7
    %v1147 = vsub.s32 %v1144, %v1146
    %v1148 = vrot.slane %v1132, %v1147
    %v1150 = vunpack.c.l.s4 1966171168
    %v1151 = vunpack.c.0.s8 %v1150
    %v1152 = vlaneseq
    %v1153 = vshrl.u32 %v1152, 7
    %v1154 = vsub.s32 %v1151, %v1153
    %v1155 = vrot.slane %v1139, %v1154
    %v1157 = vunpack.c.l.s4 1966171168
    %v1158 = vunpack.c.0.s8 %v1157
    %v1159 = vlaneseq
    %v1160 = vshrl.u32 %v1159, 7
    %v1161 = vsub.s32 %v1158, %v1160
    %v1162 = vrot.slane %v1140, %v1161
    %v1164 = vunpack.c.l.s4 1966171168
    %v1165 = vunpack.c.0.s8 %v1164
    %v1166 = vlaneseq
    %v1167 = vshrl.u32 %v1166, 7
    %v1168 = vsub.s32 %v1165, %v1167
    %v1169 = vrot.slane %v1141, %v1168
    %v1170 = vcombine.high %v1148, %v1148
    %v1171 = vcombine.high %v1155, %v1155
    %v1172 = vcombine.high %v1162, %v1162
    %v1173 = vcombine.high %v1169, %v1169
    %v1174 = vcombine.high %v24, %v24
    %v1176 = vunpack.c.l.s4 1966171168
    %v1177 = vunpack.c.0.s8 %v1176
    %v1178 = vlaneseq
    %v1179 = vshrl.u32 %v1178, 7
    %v1180 = vsub.s32 %v1177, %v1179
    %v1181 = vrot.slane %v24, %v1180
    %v1183 = vunpack.c.l.s4 1966171168
    %v1184 = vunpack.c.0.s8 %v1183
    %v1185 = vlaneseq
    %v1186 = vshrl.u32 %v1185, 7
    %v1187 = vsub.s32 %v1184, %v1186
    %v1188 = vrot.slane %v1174, %v1187
    %v1189 = vcombine.high %v1181, %v1181
    %v1190 = vcombine.high %v1188, %v1188
    %v1192 = vunpack.c.l.s4 1966171168
    %v1193 = vunpack.c.0.s8 %v1192
    %v1194 = vlaneseq
    %v1195 = vshrl.u32 %v1194, 7
    %v1196 = vsub.s32 %v1193, %v1195
    %v1197 = vrot.slane %v1181, %v1196
    %v1199 = vunpack.c.l.s4 1966171168
    %v1200 = vunpack.c.0.s8 %v1199
    %v1201 = vlaneseq
    %v1202 = vshrl.u32 %v1201, 7
    %v1203 = vsub.s32 %v1200, %v1202
    %v1204 = vrot.slane %v1188, %v1203
    %v1206 = vunpack.c.l.s4 1966171168
    %v1207 = vunpack.c.0.s8 %v1206
    %v1208 = vlaneseq
    %v1209 = vshrl.u32 %v1208, 7
    %v1210 = vsub.s32 %v1207, %v1209
    %v1211 = vrot.slane %v1189, %v1210
    %v1213 = vunpack.c.l.s4 1966171168
    %v1214 = vunpack.c.0.s8 %v1213
    %v1215 = vlaneseq
    %v1216 = vshrl.u32 %v1215, 7
    %v1217 = vsub.s32 %v1214, %v1216
    %v1218 = vrot.slane %v1190, %v1217
    %v1219 = vcombine.high %v1197, %v1197
    %v1220 = vcombine.high %v1204, %v1204
    %v1221 = vcombine.high %v1211, %v1211
    %v1222 = vcombine.high %v1218, %v1218
    %v1223 = vcombine.high %v25, %v25
    %v1225 = vunpack.c.l.s4 1966171168
    %v1226 = vunpack.c.0.s8 %v1225
    %v1227 = vlaneseq
    %v1228 = vshrl.u32 %v1227, 7
    %v1229 = vsub.s32 %v1226, %v1228
    %v1230 = vrot.slane %v25, %v1229
    %v1232 = vunpack.c.l.s4 1966171168
    %v1233 = vunpack.c.0.s8 %v1232
    %v1234 = vlaneseq
    %v1235 = vshrl.u32 %v1234, 7
    %v1236 = vsub.s32 %v1233, %v1235
    %v1237 = vrot.slane %v1223, %v1236
    %v1238 = vcombine.high %v1230, %v1230
    %v1239 = vcombine.high %v1237, %v1237
    %v1241 = vunpack.c.l.s4 1966171168
    %v1242 = vunpack.c.0.s8 %v1241
    %v1243 = vlaneseq
    %v1244 = vshrl.u32 %v1243, 7
    %v1245 = vsub.s32 %v1242, %v1244
    %v1246 = vrot.slane %v1230, %v1245
    %v1248 = vunpack.c.l.s4 1966171168
    %v1249 = vunpack.c.0.s8 %v1248
    %v1250 = vlaneseq
    %v1251 = vshrl.u32 %v1250, 7
    %v1252 = vsub.s32 %v1249, %v1251
    %v1253 = vrot.slane %v1237, %v1252
    %v1255 = vunpack.c.l.s4 1966171168
    %v1256 = vunpack.c.0.s8 %v1255
    %v1257 = vlaneseq
    %v1258 = vshrl.u32 %v1257, 7
    %v1259 = vsub.s32 %v1256, %v1258
    %v1260 = vrot.slane %v1238, %v1259
    %v1262 = vunpack.c.l.s4 1966171168
    %v1263 = vunpack.c.0.s8 %v1262
    %v1264 = vlaneseq
    %v1265 = vshrl.u32 %v1264, 7
    %v1266 = vsub.s32 %v1263, %v1265
    %v1267 = vrot.slane %v1239, %v1266
    %v1268 = vcombine.high %v1246, %v1246
    %v1269 = vcombine.high %v1253, %v1253
    %v1270 = vcombine.high %v1260, %v1260
    %v1271 = vcombine.high %v1267, %v1267
    %v2328 = vunpack.c.l.b16 %v26
    %v2329 = vunpack.c.h.b16 %v26
    %v2330 = vunpack.c.l.b16 %v27
    %v2331 = vunpack.c.h.b16 %v27
    %v2332 = vunpack.c.l.b16 %v28
    %v2333 = vunpack.c.h.b16 %v28
    %v2334 = vunpack.c.l.b16 %v29
    %v2335 = vunpack.c.h.b16 %v29
    %v2336 = vunpack.c.l.b16 %v30
    %v2337 = vunpack.c.h.b16 %v30
    %v2338 = vunpack.c.l.b16 %v31
    %v2339 = vunpack.c.h.b16 %v31
    %v2340 = vunpack.c.l.b16 %v32
    %v2341 = vunpack.c.h.b16 %v32
    %v2342 = vunpack.c.l.b16 %v33
    %v2343 = vunpack.c.h.b16 %v33
    %v2344 = vunpack.c.l.b16 %v34
    %v2345 = vunpack.c.h.b16 %v34
    %v2346 = vunpack.c.l.b16 %v35
    %v2347 = vunpack.c.h.b16 %v35
    %v2348 = vunpack.c.l.b16 %v36
    %v2349 = vunpack.c.h.b16 %v36
    %v2350 = vunpack.c.l.b16 %v37
    %v2351 = vunpack.c.h.b16 %v37
    %v2352 = vunpack.c.l.b16 %v38
    %v2353 = vunpack.c.h.b16 %v38
    %v2354 = vunpack.c.l.b16 %v39
    %v2355 = vunpack.c.h.b16 %v39
    %v2356 = vunpack.c.l.b16 %v40
    %v2357 = vunpack.c.h.b16 %v40
    %v2358 = vunpack.c.l.b16 %v41
    %v2359 = vunpack.c.h.b16 %v41
    %v2360 = vunpack.c.l.b16 %v42
    %v2361 = vunpack.c.h.b16 %v42
    %v2362 = vunpack.c.l.b16 %v43
    %v2363 = vunpack.c.h.b16 %v43
    %v2364 = vunpack.c.l.b16 %v44
    %v2365 = vunpack.c.h.b16 %v44
    %v2366 = vunpack.c.l.b16 %v45
    %v2367 = vunpack.c.h.b16 %v45
    %v2368 = vunpack.c.l.b16 %v46
    %v2369 = vunpack.c.h.b16 %v46
    %v2370 = vunpack.c.l.b16 %v47
    %v2371 = vunpack.c.h.b16 %v47
    %v2372 = vunpack.c.l.b16 %v48
    %v2373 = vunpack.c.h.b16 %v48
    %v2374 = vunpack.c.l.b16 %v49
    %v2375 = vunpack.c.h.b16 %v49
    %v2376 = vunpack.c.l.b16 %v50
    %v2377 = vunpack.c.h.b16 %v50
    %v2378 = vunpack.c.l.b16 %v51
    %v2379 = vunpack.c.h.b16 %v51
    %v2380 = vunpack.c.l.b16 %v52
    %v2381 = vunpack.c.h.b16 %v52
    %v2382 = vunpack.c.l.b16 %v53
    %v2383 = vunpack.c.h.b16 %v53
    %v2384 = vunpack.c.l.b16 %v54
    %v2385 = vunpack.c.h.b16 %v54
    %v2386 = vunpack.c.l.b16 %v55
    %v2387 = vunpack.c.h.b16 %v55
    %v2388 = vunpack.c.l.b16 %v56
    %v2389 = vunpack.c.h.b16 %v56
    %v2390 = vunpack.c.l.b16 %v57
    %v2391 = vunpack.c.h.b16 %v57
    %v2392 = vunpack.c.l.b16 %v58
    %v2393 = vunpack.c.h.b16 %v58
    %v2394 = vunpack.c.l.b16 %v59
    %v2395 = vunpack.c.h.b16 %v59
    %v2396 = vunpack.c.l.b16 %v60
    %v2397 = vunpack.c.h.b16 %v60
    %v2398 = vunpack.c.l.b16 %v61
    %v2399 = vunpack.c.h.b16 %v61
    %v2400 = vunpack.c.l.b16 %v62
    %v2401 = vunpack.c.h.b16 %v62
    %v2402 = vunpack.c.l.b16 %v63
    %v2403 = vunpack.c.h.b16 %v63
    %v2404 = vunpack.c.l.b16 %v64
    %v2405 = vunpack.c.h.b16 %v64
    %v2406 = vunpack.c.l.b16 %v65
    %v2407 = vunpack.c.h.b16 %v65
    %v2408 = vunpack.c.l.b16 %v66
    %v2409 = vunpack.c.h.b16 %v66
    %v2410 = vunpack.c.l.b16 %v67
    %v2411 = vunpack.c.h.b16 %v67
    %v2412 = vunpack.c.l.b16 %v68
    %v2413 = vunpack.c.h.b16 %v68
    %v2414 = vunpack.c.l.b16 %v69
    %v2415 = vunpack.c.h.b16 %v69
    %v2416 = vunpack.c.l.b16 %v70
    %v2417 = vunpack.c.h.b16 %v70
    %v2418 = vunpack.c.l.b16 %v71
    %v2419 = vunpack.c.h.b16 %v71
    %v2420 = vunpack.c.l.b16 %v72
    %v2421 = vunpack.c.h.b16 %v72
    %v2422 = vunpack.c.l.b16 %v73
    %v2423 = vunpack.c.h.b16 %v73
    %v2424 = vunpack.c.l.b16 %v74
    %v2425 = vunpack.c.h.b16 %v74
    %v2426 = vunpack.c.l.b16 %v75
    %v2427 = vunpack.c.h.b16 %v75
    %v2428 = vunpack.c.l.b16 %v76
    %v2429 = vunpack.c.h.b16 %v76
    %v2430 = vunpack.c.l.b16 %v77
    %v2431 = vunpack.c.h.b16 %v77
    %v2432 = vunpack.c.l.b16 %v78
    %v2433 = vunpack.c.h.b16 %v78
    %v2434 = vunpack.c.l.b16 %v79
    %v2435 = vunpack.c.h.b16 %v79
    %v2436 = vunpack.c.l.b16 %v80
    %v2437 = vunpack.c.h.b16 %v80
    %v2438 = vunpack.c.l.b16 %v81
    %v2439 = vunpack.c.h.b16 %v81
    %v2440 = vunpack.c.l.b16 %v82
    %v2441 = vunpack.c.h.b16 %v82
    %v2442 = vunpack.c.l.b16 %v83
    %v2443 = vunpack.c.h.b16 %v83
    %v2444 = vunpack.c.l.b16 %v84
    %v2445 = vunpack.c.h.b16 %v84
    %v2446 = vunpack.c.l.b16 %v85
    %v2447 = vunpack.c.h.b16 %v85
    %v2448 = vunpack.c.l.b16 %v86
    %v2449 = vunpack.c.h.b16 %v86
    %v2450 = vunpack.c.l.b16 %v87
    %v2451 = vunpack.c.h.b16 %v87
    %v2452 = vunpack.c.l.b16 %v88
    %v2453 = vunpack.c.h.b16 %v88
    %v2454 = vunpack.c.l.b16 %v89
    %v2455 = vunpack.c.h.b16 %v89
    %v2456 = vunpack.c.l.b16 %v90
    %v2457 = vunpack.c.h.b16 %v90
    %v2458 = vunpack.c.l.b16 %v91
    %v2459 = vunpack.c.h.b16 %v91
    %v2460 = vunpack.c.l.b16 %v92
    %v2461 = vunpack.c.h.b16 %v92
    %v2462 = vunpack.c.l.b16 %v93
    %v2463 = vunpack.c.h.b16 %v93
    %v2464 = vunpack.c.l.b16 %v94
    %v2465 = vunpack.c.h.b16 %v94
    %v2466 = vunpack.c.l.b16 %v95
    %v2467 = vunpack.c.h.b16 %v95
    %v2468 = vunpack.c.l.b16 %v96
    %v2469 = vunpack.c.h.b16 %v96
    %v2470 = vunpack.c.l.b16 %v97
    %v2471 = vunpack.c.h.b16 %v97
    %v2472 = vunpack.c.l.b16 %v98
    %v2473 = vunpack.c.h.b16 %v98
    %v2474 = vunpack.c.l.b16 %v99
    %v2475 = vunpack.c.h.b16 %v99
    %v2476 = vunpack.c.l.b16 %v100
    %v2477 = vunpack.c.h.b16 %v100
    %v2478 = vunpack.c.l.b16 %v101
    %v2479 = vunpack.c.h.b16 %v101
    %v2480 = vunpack.c.l.b16 %v102
    %v2481 = vunpack.c.h.b16 %v102
    %v2482 = vunpack.c.l.b16 %v103
    %v2483 = vunpack.c.h.b16 %v103
    %v2484 = vunpack.c.l.b16 %v104
    %v2485 = vunpack.c.h.b16 %v104
    %v2486 = vunpack.c.l.b16 %v105
    %v2487 = vunpack.c.h.b16 %v105
    %v2488 = vunpack.c.l.b16 %v106
    %v2489 = vunpack.c.h.b16 %v106
    %v2490 = vunpack.c.l.b16 %v107
    %v2491 = vunpack.c.h.b16 %v107
    %v2492 = vunpack.c.l.b16 %v108
    %v2493 = vunpack.c.h.b16 %v108
    %v2494 = vunpack.c.l.b16 %v109
    %v2495 = vunpack.c.h.b16 %v109
    %v2496 = vunpack.c.l.b16 %v110
    %v2497 = vunpack.c.h.b16 %v110
    %v2498 = vunpack.c.l.b16 %v111
    %v2499 = vunpack.c.h.b16 %v111
    %v2500 = vunpack.c.l.b16 %v112
    %v2501 = vunpack.c.h.b16 %v112
    %v2502 = vunpack.c.l.b16 %v113
    %v2503 = vunpack.c.h.b16 %v113
    %v2504 = vunpack.c.l.b16 %v114
    %v2505 = vunpack.c.h.b16 %v114
    %v2506 = vunpack.c.l.b16 %v115
    %v2507 = vunpack.c.h.b16 %v115
    %v2508 = vunpack.c.l.b16 %v116
    %v2509 = vunpack.c.h.b16 %v116
    %v2510 = vunpack.c.l.b16 %v117
    %v2511 = vunpack.c.h.b16 %v117
    %v2512 = vunpack.c.l.b16 %v118
    %v2513 = vunpack.c.h.b16 %v118
    %v2514 = vunpack.c.l.b16 %v119
    %v2515 = vunpack.c.h.b16 %v119
    %v2516 = vunpack.c.l.b16 %v120
    %v2517 = vunpack.c.h.b16 %v120
    %v2518 = vunpack.c.l.b16 %v121
    %v2519 = vunpack.c.h.b16 %v121
    %v2520 = vunpack.c.l.b16 %v122
    %v2521 = vunpack.c.h.b16 %v122
    %v2522 = vunpack.c.l.b16 %v123
    %v2523 = vunpack.c.h.b16 %v123
    %v2524 = vunpack.c.l.b16 %v124
    %v2525 = vunpack.c.h.b16 %v124
    %v2526 = vunpack.c.l.b16 %v125
    %v2527 = vunpack.c.h.b16 %v125
    %v2528 = vunpack.c.l.b16 %v126
    %v2529 = vunpack.c.h.b16 %v126
    %v2530 = vunpack.c.l.b16 %v127
    %v2531 = vunpack.c.h.b16 %v127
    %v2532 = vunpack.c.l.b16 %v128
    %v2533 = vunpack.c.h.b16 %v128
    %v2534 = vunpack.c.l.b16 %v129
    %v2535 = vunpack.c.h.b16 %v129
    %v2536 = vunpack.c.l.b16 %v130
    %v2537 = vunpack.c.h.b16 %v130
    %v2538 = vunpack.c.l.b16 %v131
    %v2539 = vunpack.c.h.b16 %v131
    %v2540 = vunpack.c.l.b16 %v132
    %v2541 = vunpack.c.h.b16 %v132
    %v2542 = vunpack.c.l.b16 %v133
    %v2543 = vunpack.c.h.b16 %v133
    %v2544 = vunpack.c.l.b16 %v134
    %v2545 = vunpack.c.h.b16 %v134
    %v2546 = vunpack.c.l.b16 %v135
    %v2547 = vunpack.c.h.b16 %v135
    %v2548 = vunpack.c.l.b16 %v136
    %v2549 = vunpack.c.h.b16 %v136
    %v2550 = vunpack.c.l.b16 %v137
    %v2551 = vunpack.c.h.b16 %v137
    %v2552 = vunpack.c.l.b16 %v138
    %v2553 = vunpack.c.h.b16 %v138
    %v2554 = vunpack.c.l.b16 %v139
    %v2555 = vunpack.c.h.b16 %v139
    %v2556 = vunpack.c.l.b16 %v140
    %v2557 = vunpack.c.h.b16 %v140
    %v2558 = vunpack.c.l.b16 %v141
    %v2559 = vunpack.c.h.b16 %v141
    %v2560 = vunpack.c.l.b16 %v142
    %v2561 = vunpack.c.h.b16 %v142
    %v2562 = vunpack.c.l.b16 %v143
    %v2563 = vunpack.c.h.b16 %v143
    %v2564 = vunpack.c.l.b16 %v144
    %v2565 = vunpack.c.h.b16 %v144
    %v2566 = vunpack.c.l.b16 %v145
    %v2567 = vunpack.c.h.b16 %v145
    %v2568 = vunpack.c.l.b16 %v146
    %v2569 = vunpack.c.h.b16 %v146
    %v2570 = vunpack.c.l.b16 %v147
    %v2571 = vunpack.c.h.b16 %v147
    %v2572 = vunpack.c.l.b16 %v148
    %v2573 = vunpack.c.h.b16 %v148
    %v2574 = vunpack.c.l.b16 %v149
    %v2575 = vunpack.c.h.b16 %v149
    %v2576 = vunpack.c.l.b16 %v150
    %v2577 = vunpack.c.h.b16 %v150
    %v2578 = vunpack.c.l.b16 %v151
    %v2579 = vunpack.c.h.b16 %v151
    %v2580 = vunpack.c.l.b16 %v152
    %v2581 = vunpack.c.h.b16 %v152
    %v2582 = vunpack.c.l.b16 %v153
    %v2583 = vunpack.c.h.b16 %v153
    %v2584 = vunpack.c.l.b16 %v154
    %v2585 = vunpack.c.h.b16 %v154
    %v2586 = vunpack.c.l.b16 %v155
    %v2587 = vunpack.c.h.b16 %v155
    %v2588 = vunpack.c.l.b16 %v156
    %v2589 = vunpack.c.h.b16 %v156
    %v2590 = vunpack.c.l.b16 %v157
    %v2591 = vunpack.c.h.b16 %v157
    %v2592 = vunpack.c.l.b16 %v158
    %v2593 = vunpack.c.h.b16 %v158
    %v2594 = vunpack.c.l.b16 %v159
    %v2595 = vunpack.c.h.b16 %v159
    %v2596 = vunpack.c.l.b16 %v160
    %v2597 = vunpack.c.h.b16 %v160
    %v2598 = vunpack.c.l.b16 %v161
    %v2599 = vunpack.c.h.b16 %v161
    %v2600 = vunpack.c.l.b16 %v162
    %v2601 = vunpack.c.h.b16 %v162
    %v2602 = vunpack.c.l.b16 %v163
    %v2603 = vunpack.c.h.b16 %v163
    %v2604 = vunpack.c.l.b16 %v164
    %v2605 = vunpack.c.h.b16 %v164
    %v2606 = vunpack.c.l.b16 %v165
    %v2607 = vunpack.c.h.b16 %v165
    %v2608 = vunpack.c.l.b16 %v166
    %v2609 = vunpack.c.h.b16 %v166
    %v2610 = vunpack.c.l.b16 %v167
    %v2611 = vunpack.c.h.b16 %v167
    %v2612 = vunpack.c.l.b16 %v168
    %v2613 = vunpack.c.h.b16 %v168
    %v2614 = vunpack.c.l.b16 %v169
    %v2615 = vunpack.c.h.b16 %v169
    %v2616 = vunpack.c.l.b16 %v170
    %v2617 = vunpack.c.h.b16 %v170
    %v2618 = vunpack.c.l.b16 %v171
    %v2619 = vunpack.c.h.b16 %v171
    %v2620 = vunpack.c.l.b16 %v172
    %v2621 = vunpack.c.h.b16 %v172
    %v2622 = vunpack.c.l.b16 %v173
    %v2623 = vunpack.c.h.b16 %v173
    %v2624 = vunpack.c.l.b16 %v174
    %v2625 = vunpack.c.h.b16 %v174
    %v2626 = vunpack.c.l.b16 %v175
    %v2627 = vunpack.c.h.b16 %v175
    %v2628 = vunpack.c.l.b16 %v176
    %v2629 = vunpack.c.h.b16 %v176
    %v2630 = vunpack.c.l.b16 %v177
    %v2631 = vunpack.c.h.b16 %v177
    %v2632 = vunpack.c.l.b16 %v178
    %v2633 = vunpack.c.h.b16 %v178
    %v2634 = vunpack.c.l.b16 %v179
    %v2635 = vunpack.c.h.b16 %v179
    %v2636 = vunpack.c.l.b16 %v180
    %v2637 = vunpack.c.h.b16 %v180
    %v2638 = vunpack.c.l.b16 %v181
    %v2639 = vunpack.c.h.b16 %v181
    %v2640 = vunpack.c.l.b16 %v182
    %v2641 = vunpack.c.h.b16 %v182
    %v2642 = vunpack.c.l.b16 %v183
    %v2643 = vunpack.c.h.b16 %v183
    %v2644 = vunpack.c.l.b16 %v184
    %v2645 = vunpack.c.h.b16 %v184
    %v2646 = vunpack.c.l.b16 %v185
    %v2647 = vunpack.c.h.b16 %v185
    %v2648 = vunpack.c.l.b16 %v186
    %v2649 = vunpack.c.h.b16 %v186
    %v2650 = vunpack.c.l.b16 %v187
    %v2651 = vunpack.c.h.b16 %v187
    %v2652 = vunpack.c.l.b16 %v188
    %v2653 = vunpack.c.h.b16 %v188
    %v2654 = vunpack.c.l.b16 %v189
    %v2655 = vunpack.c.h.b16 %v189
    %v2656 = vunpack.c.l.b16 %v190
    %v2657 = vunpack.c.h.b16 %v190
    %v2658 = vunpack.c.l.b16 %v191
    %v2659 = vunpack.c.h.b16 %v191
    %v2660 = vunpack.c.l.b16 %v192
    %v2661 = vunpack.c.h.b16 %v192
    %v2662 = vunpack.c.l.b16 %v193
    %v2663 = vunpack.c.h.b16 %v193
    %v2664 = vunpack.c.l.b16 %v194
    %v2665 = vunpack.c.h.b16 %v194
    %v2666 = vunpack.c.l.b16 %v195
    %v2667 = vunpack.c.h.b16 %v195
    %v2668 = vunpack.c.l.b16 %v196
    %v2669 = vunpack.c.h.b16 %v196
    %v2670 = vunpack.c.l.b16 %v197
    %v2671 = vunpack.c.h.b16 %v197
    %v2672 = vunpack.c.l.b16 %v198
    %v2673 = vunpack.c.h.b16 %v198
    %v2674 = vunpack.c.l.b16 %v199
    %v2675 = vunpack.c.h.b16 %v199
    %v2676 = vunpack.c.l.b16 %v200
    %v2677 = vunpack.c.h.b16 %v200
    %v2678 = vunpack.c.l.b16 %v201
    %v2679 = vunpack.c.h.b16 %v201
    %v2680 = vunpack.c.l.b16 %v202
    %v2681 = vunpack.c.h.b16 %v202
    %v2682 = vunpack.c.l.b16 %v203
    %v2683 = vunpack.c.h.b16 %v203
    %v2684 = vunpack.c.l.b16 %v204
    %v2685 = vunpack.c.h.b16 %v204
    %v2686 = vunpack.c.l.b16 %v205
    %v2687 = vunpack.c.h.b16 %v205
    %v2688 = vunpack.c.l.b16 %v206
    %v2689 = vunpack.c.h.b16 %v206
    %v2690 = vunpack.c.l.b16 %v207
    %v2691 = vunpack.c.h.b16 %v207
    %v2692 = vunpack.c.l.b16 %v208
    %v2693 = vunpack.c.h.b16 %v208
    %v2694 = vunpack.c.l.b16 %v209
    %v2695 = vunpack.c.h.b16 %v209
    %v2696 = vunpack.c.l.b16 %v210
    %v2697 = vunpack.c.h.b16 %v210
    %v2698 = vunpack.c.l.b16 %v211
    %v2699 = vunpack.c.h.b16 %v211
    %v2700 = vunpack.c.l.b16 %v212
    %v2701 = vunpack.c.h.b16 %v212
    %v2702 = vunpack.c.l.b16 %v213
    %v2703 = vunpack.c.h.b16 %v213
    %v2704 = vunpack.c.l.b16 %v214
    %v2705 = vunpack.c.h.b16 %v214
    %v2706 = vunpack.c.l.b16 %v215
    %v2707 = vunpack.c.h.b16 %v215
    %v2708 = vunpack.c.l.b16 %v216
    %v2709 = vunpack.c.h.b16 %v216
    %v2710 = vunpack.c.l.b16 %v217
    %v2711 = vunpack.c.h.b16 %v217
    %v2712 = vunpack.c.l.b16 %v218
    %v2713 = vunpack.c.h.b16 %v218
    %v2714 = vunpack.c.l.b16 %v219
    %v2715 = vunpack.c.h.b16 %v219
    %v2716 = vunpack.c.l.b16 %v220
    %v2717 = vunpack.c.h.b16 %v220
    %v2718 = vunpack.c.l.b16 %v221
    %v2719 = vunpack.c.h.b16 %v221
    %v2720 = vunpack.c.l.b16 %v222
    %v2721 = vunpack.c.h.b16 %v222
    %v2722 = vunpack.c.l.b16 %v223
    %v2723 = vunpack.c.h.b16 %v223
    %v2724 = vunpack.c.l.b16 %v224
    %v2725 = vunpack.c.h.b16 %v224
    %v2726 = vunpack.c.l.b16 %v225
    %v2727 = vunpack.c.h.b16 %v225
    %v2728 = vunpack.c.l.b16 %v226
    %v2729 = vunpack.c.h.b16 %v226
    %v2730 = vunpack.c.l.b16 %v227
    %v2731 = vunpack.c.h.b16 %v227
    %v2732 = vunpack.c.l.b16 %v228
    %v2733 = vunpack.c.h.b16 %v228
    %v2734 = vunpack.c.l.b16 %v229
    %v2735 = vunpack.c.h.b16 %v229
    %v2736 = vunpack.c.l.b16 %v230
    %v2737 = vunpack.c.h.b16 %v230
    %v2738 = vunpack.c.l.b16 %v231
    %v2739 = vunpack.c.h.b16 %v231
    %v2740 = vunpack.c.l.b16 %v232
    %v2741 = vunpack.c.h.b16 %v232
    %v2742 = vunpack.c.l.b16 %v233
    %v2743 = vunpack.c.h.b16 %v233
    %v2744 = vunpack.c.l.b16 %v234
    %v2745 = vunpack.c.h.b16 %v234
    %v2746 = vunpack.c.l.b16 %v235
    %v2747 = vunpack.c.h.b16 %v235
    %v2748 = vunpack.c.l.b16 %v236
    %v2749 = vunpack.c.h.b16 %v236
    %v2750 = vunpack.c.l.b16 %v237
    %v2751 = vunpack.c.h.b16 %v237
    %v2752 = vunpack.c.l.b16 %v238
    %v2753 = vunpack.c.h.b16 %v238
    %v2754 = vunpack.c.l.b16 %v239
    %v2755 = vunpack.c.h.b16 %v239
    %v2756 = vunpack.c.l.b16 %v240
    %v2757 = vunpack.c.h.b16 %v240
    %v2758 = vunpack.c.l.b16 %v241
    %v2759 = vunpack.c.h.b16 %v241
    %v2760 = vunpack.c.l.b16 %v242
    %v2761 = vunpack.c.h.b16 %v242
    %v2762 = vunpack.c.l.b16 %v243
    %v2763 = vunpack.c.h.b16 %v243
    %v2764 = vunpack.c.l.b16 %v244
    %v2765 = vunpack.c.h.b16 %v244
    %v2766 = vunpack.c.l.b16 %v245
    %v2767 = vunpack.c.h.b16 %v245
    %v2768 = vunpack.c.l.b16 %v246
    %v2769 = vunpack.c.h.b16 %v246
    %v2770 = vunpack.c.l.b16 %v247
    %v2771 = vunpack.c.h.b16 %v247
    %v2772 = vunpack.c.l.b16 %v248
    %v2773 = vunpack.c.h.b16 %v248
    %v2774 = vunpack.c.l.b16 %v249
    %v2775 = vunpack.c.h.b16 %v249
    %v2776 = vunpack.c.l.b16 %v250
    %v2777 = vunpack.c.h.b16 %v250
    %v2778 = vunpack.c.l.b16 %v251
    %v2779 = vunpack.c.h.b16 %v251
    %v2780 = vunpack.c.l.b16 %v252
    %v2781 = vunpack.c.h.b16 %v252
    %v2782 = vunpack.c.l.b16 %v253
    %v2783 = vunpack.c.h.b16 %v253
    %v2784 = vunpack.c.l.b16 %v254
    %v2785 = vunpack.c.h.b16 %v254
    %v2786 = vunpack.c.l.b16 %v255
    %v2787 = vunpack.c.h.b16 %v255
    %v2788 = vunpack.c.l.b16 %v256
    %v2789 = vunpack.c.h.b16 %v256
    %v2790 = vunpack.c.l.b16 %v257
    %v2791 = vunpack.c.h.b16 %v257
    %v2792 = vunpack.c.l.b16 %v258
    %v2793 = vunpack.c.h.b16 %v258
    %v2794 = vunpack.c.l.b16 %v259
    %v2795 = vunpack.c.h.b16 %v259
    %v2796 = vunpack.c.l.b16 %v260
    %v2797 = vunpack.c.h.b16 %v260
    %v2798 = vunpack.c.l.b16 %v261
    %v2799 = vunpack.c.h.b16 %v261
    %v2800 = vunpack.c.l.b16 %v262
    %v2801 = vunpack.c.h.b16 %v262
    %v2802 = vunpack.c.l.b16 %v263
    %v2803 = vunpack.c.h.b16 %v263
    %v2804 = vunpack.c.l.b16 %v264
    %v2805 = vunpack.c.h.b16 %v264
    %v2806 = vunpack.c.l.b16 %v265
    %v2807 = vunpack.c.h.b16 %v265
    %v2808 = vunpack.c.l.b16 %v266
    %v2809 = vunpack.c.h.b16 %v266
    %v2810 = vunpack.c.l.b16 %v267
    %v2811 = vunpack.c.h.b16 %v267
    %v2812 = vunpack.c.l.b16 %v268
    %v2813 = vunpack.c.h.b16 %v268
    %v2814 = vunpack.c.l.b16 %v269
    %v2815 = vunpack.c.h.b16 %v269
    %v2816 = vunpack.c.l.b16 %v270
    %v2817 = vunpack.c.h.b16 %v270
    %v2818 = vunpack.c.l.b16 %v271
    %v2819 = vunpack.c.h.b16 %v271
    %v2820 = vunpack.c.l.b16 %v272
    %v2821 = vunpack.c.h.b16 %v272
    %v2822 = vunpack.c.l.b16 %v273
    %v2823 = vunpack.c.h.b16 %v273
    %v2824 = vunpack.c.l.b16 %v274
    %v2825 = vunpack.c.h.b16 %v274
    %v2826 = vunpack.c.l.b16 %v275
    %v2827 = vunpack.c.h.b16 %v275
    %v2828 = vunpack.c.l.b16 %v276
    %v2829 = vunpack.c.h.b16 %v276
    %v2830 = vunpack.c.l.b16 %v277
    %v2831 = vunpack.c.h.b16 %v277
    %v2832 = vunpack.c.l.b16 %v278
    %v2833 = vunpack.c.h.b16 %v278
    %v2834 = vunpack.c.l.b16 %v279
    %v2835 = vunpack.c.h.b16 %v279
    %v2836 = vunpack.c.l.b16 %v280
    %v2837 = vunpack.c.h.b16 %v280
    %v2838 = vunpack.c.l.b16 %v281
    %v2839 = vunpack.c.h.b16 %v281
    %v2840 = vunpack.c.l.b16 %v282
    %v2841 = vunpack.c.h.b16 %v282
    %v2842 = vunpack.c.l.b16 %v283
    %v2843 = vunpack.c.h.b16 %v283
    %v2844 = vunpack.c.l.b16 %v284
    %v2845 = vunpack.c.h.b16 %v284
    %v2846 = vunpack.c.l.b16 %v285
    %v2847 = vunpack.c.h.b16 %v285
    %v2848 = vunpack.c.l.b16 %v286
    %v2849 = vunpack.c.h.b16 %v286
    %v2850 = vunpack.c.l.b16 %v287
    %v2851 = vunpack.c.h.b16 %v287
    %v2852 = vunpack.c.l.b16 %v288
    %v2853 = vunpack.c.h.b16 %v288
    %v2854 = vunpack.c.l.b16 %v289
    %v2855 = vunpack.c.h.b16 %v289
    %v2856 = vunpack.c.l.b16 %v290
    %v2857 = vunpack.c.h.b16 %v290
    %v2858 = vunpack.c.l.b16 %v291
    %v2859 = vunpack.c.h.b16 %v291
    %v2860 = vunpack.c.l.b16 %v292
    %v2861 = vunpack.c.h.b16 %v292
    %v2862 = vunpack.c.l.b16 %v293
    %v2863 = vunpack.c.h.b16 %v293
    %v2864 = vunpack.c.l.b16 %v294
    %v2865 = vunpack.c.h.b16 %v294
    %v2866 = vunpack.c.l.b16 %v295
    %v2867 = vunpack.c.h.b16 %v295
    %v2868 = vunpack.c.l.b16 %v296
    %v2869 = vunpack.c.h.b16 %v296
    %v2870 = vunpack.c.l.b16 %v297
    %v2871 = vunpack.c.h.b16 %v297
    %v2872 = vunpack.c.l.b16 %v298
    %v2873 = vunpack.c.h.b16 %v298
    %v2874 = vunpack.c.l.b16 %v299
    %v2875 = vunpack.c.h.b16 %v299
    %v2876 = vunpack.c.l.b16 %v300
    %v2877 = vunpack.c.h.b16 %v300
    %v2878 = vunpack.c.l.b16 %v301
    %v2879 = vunpack.c.h.b16 %v301
    %v2880 = vunpack.c.l.b16 %v302
    %v2881 = vunpack.c.h.b16 %v302
    %v2882 = vunpack.c.l.b16 %v303
    %v2883 = vunpack.c.h.b16 %v303
    %v2884 = vunpack.c.l.b16 %v304
    %v2885 = vunpack.c.h.b16 %v304
    %v2886 = vunpack.c.l.b16 %v305
    %v2887 = vunpack.c.h.b16 %v305
    %v2888 = vunpack.c.l.b16 %v306
    %v2889 = vunpack.c.h.b16 %v306
    %v2890 = vunpack.c.l.b16 %v307
    %v2891 = vunpack.c.h.b16 %v307
    %v2892 = vunpack.c.l.b16 %v308
    %v2893 = vunpack.c.h.b16 %v308
    %v2894 = vunpack.c.l.b16 %v309
    %v2895 = vunpack.c.h.b16 %v309
    %v2896 = vunpack.c.l.b16 %v310
    %v2897 = vunpack.c.h.b16 %v310
    %v2898 = vunpack.c.l.b16 %v311
    %v2899 = vunpack.c.h.b16 %v311
    %v2900 = vunpack.c.l.b16 %v312
    %v2901 = vunpack.c.h.b16 %v312
    %v2902 = vunpack.c.l.b16 %v313
    %v2903 = vunpack.c.h.b16 %v313
    %v2904 = vunpack.c.l.b16 %v314
    %v2905 = vunpack.c.h.b16 %v314
    %v2906 = vunpack.c.l.b16 %v315
    %v2907 = vunpack.c.h.b16 %v315
    %v2908 = vunpack.c.l.b16 %v316
    %v2909 = vunpack.c.h.b16 %v316
    %v2910 = vunpack.c.l.b16 %v317
    %v2911 = vunpack.c.h.b16 %v317
    %v2912 = vunpack.c.l.b16 %v318
    %v2913 = vunpack.c.h.b16 %v318
    %v2914 = vunpack.c.l.b16 %v319
    %v2915 = vunpack.c.h.b16 %v319
    %v2916 = vunpack.c.l.b16 %v320
    %v2917 = vunpack.c.h.b16 %v320
    %v2918 = vunpack.c.l.b16 %v321
    %v2919 = vunpack.c.h.b16 %v321
    %v2920 = vunpack.c.l.b16 %v322
    %v2921 = vunpack.c.h.b16 %v322
    %v2922 = vunpack.c.l.b16 %v323
    %v2923 = vunpack.c.h.b16 %v323
    %v2924 = vunpack.c.l.b16 %v324
    %v2925 = vunpack.c.h.b16 %v324
    %v2926 = vunpack.c.l.b16 %v325
    %v2927 = vunpack.c.h.b16 %v325
    %v2928 = vunpack.c.l.b16 %v326
    %v2929 = vunpack.c.h.b16 %v326
    %v2930 = vunpack.c.l.b16 %v327
    %v2931 = vunpack.c.h.b16 %v327
    %v2932 = vunpack.c.l.b16 %v328
    %v2933 = vunpack.c.h.b16 %v328
    %v2934 = vunpack.c.l.b16 %v329
    %v2935 = vunpack.c.h.b16 %v329
    %v2936 = vunpack.c.l.b16 %v330
    %v2937 = vunpack.c.h.b16 %v330
    %v2938 = vunpack.c.l.b16 %v331
    %v2939 = vunpack.c.h.b16 %v331
    %v2940 = vunpack.c.l.b16 %v332
    %v2941 = vunpack.c.h.b16 %v332
    %v2942 = vunpack.c.l.b16 %v333
    %v2943 = vunpack.c.h.b16 %v333
    %v2944 = vunpack.c.l.b16 %v334
    %v2945 = vunpack.c.h.b16 %v334
    %v2946 = vunpack.c.l.b16 %v335
    %v2947 = vunpack.c.h.b16 %v335
    %v2948 = vunpack.c.l.b16 %v336
    %v2949 = vunpack.c.h.b16 %v336
    %v2950 = vunpack.c.l.b16 %v337
    %v2951 = vunpack.c.h.b16 %v337
    %v2952 = vunpack.c.l.b16 %v338
    %v2953 = vunpack.c.h.b16 %v338
    %v2954 = vunpack.c.l.b16 %v339
    %v2955 = vunpack.c.h.b16 %v339
    %v2956 = vunpack.c.l.b16 %v340
    %v2957 = vunpack.c.h.b16 %v340
    %v2958 = vunpack.c.l.b16 %v341
    %v2959 = vunpack.c.h.b16 %v341
    %v2960 = vunpack.c.l.b16 %v342
    %v2961 = vunpack.c.h.b16 %v342
    %v2962 = vunpack.c.l.b16 %v343
    %v2963 = vunpack.c.h.b16 %v343
    %v2964 = vunpack.c.l.b16 %v344
    %v2965 = vunpack.c.h.b16 %v344
    %v2966 = vunpack.c.l.b16 %v345
    %v2967 = vunpack.c.h.b16 %v345
    %v2968 = vunpack.c.l.b16 %v346
    %v2969 = vunpack.c.h.b16 %v346
    %v2970 = vunpack.c.l.b16 %v347
    %v2971 = vunpack.c.h.b16 %v347
    %v2972 = vunpack.c.l.b16 %v348
    %v2973 = vunpack.c.h.b16 %v348
    %v2974 = vunpack.c.l.b16 %v349
    %v2975 = vunpack.c.h.b16 %v349
    %v2976 = vunpack.c.l.b16 %v350
    %v2977 = vunpack.c.h.b16 %v350
    %v2978 = vunpack.c.l.b16 %v351
    %v2979 = vunpack.c.h.b16 %v351
    %v2980 = vunpack.c.l.b16 %v352
    %v2981 = vunpack.c.h.b16 %v352
    %v2982 = vunpack.c.l.b16 %v353
    %v2983 = vunpack.c.h.b16 %v353
    %v2984 = vunpack.c.l.b16 %v354
    %v2985 = vunpack.c.h.b16 %v354
    %v2986 = vunpack.c.l.b16 %v355
    %v2987 = vunpack.c.h.b16 %v355
    %v2988 = vunpack.c.l.b16 %v356
    %v2989 = vunpack.c.h.b16 %v356
    %v2990 = vunpack.c.l.b16 %v357
    %v2991 = vunpack.c.h.b16 %v357
    %v2992 = vunpack.c.l.b16 %v358
    %v2993 = vunpack.c.h.b16 %v358
    %v2994 = vunpack.c.l.b16 %v359
    %v2995 = vunpack.c.h.b16 %v359
    %v2996 = vunpack.c.l.b16 %v360
    %v2997 = vunpack.c.h.b16 %v360
    %v2998 = vunpack.c.l.b16 %v361
    %v2999 = vunpack.c.h.b16 %v361
    %v3000 = vunpack.c.l.b16 %v362
    %v3001 = vunpack.c.h.b16 %v362
    %v3002 = vunpack.c.l.b16 %v363
    %v3003 = vunpack.c.h.b16 %v363
    %v3004 = vunpack.c.l.b16 %v364
    %v3005 = vunpack.c.h.b16 %v364
    %v3006 = vunpack.c.l.b16 %v365
    %v3007 = vunpack.c.h.b16 %v365
    %v3008 = vunpack.c.l.b16 %v366
    %v3009 = vunpack.c.h.b16 %v366
    %v3010 = vunpack.c.l.b16 %v367
    %v3011 = vunpack.c.h.b16 %v367
    %v3012 = vunpack.c.l.b16 %v368
    %v3013 = vunpack.c.h.b16 %v368
    %v3014 = vunpack.c.l.b16 %v369
    %v3015 = vunpack.c.h.b16 %v369
    %v3016 = vunpack.c.l.b16 %v370
    %v3017 = vunpack.c.h.b16 %v370
    %v3018 = vunpack.c.l.b16 %v371
    %v3019 = vunpack.c.h.b16 %v371
    %v3020 = vunpack.c.l.b16 %v372
    %v3021 = vunpack.c.h.b16 %v372
    %v3022 = vunpack.c.l.b16 %v373
    %v3023 = vunpack.c.h.b16 %v373
    %v3024 = vunpack.c.l.b16 %v374
    %v3025 = vunpack.c.h.b16 %v374
    %v3026 = vunpack.c.l.b16 %v375
    %v3027 = vunpack.c.h.b16 %v375
    %v3028 = vunpack.c.l.b16 %v376
    %v3029 = vunpack.c.h.b16 %v376
    %v3030 = vunpack.c.l.b16 %v377
    %v3031 = vunpack.c.h.b16 %v377
    %v3032 = vunpack.c.l.b16 %v378
    %v3033 = vunpack.c.h.b16 %v378
    %v3034 = vunpack.c.l.b16 %v379
    %v3035 = vunpack.c.h.b16 %v379
    %v3036 = vunpack.c.l.b16 %v380
    %v3037 = vunpack.c.h.b16 %v380
    %v3038 = vunpack.c.l.b16 %v381
    %v3039 = vunpack.c.h.b16 %v381
    %v3040 = vunpack.c.l.b16 %v382
    %v3041 = vunpack.c.h.b16 %v382
    %v3042 = vunpack.c.l.b16 %v383
    %v3043 = vunpack.c.h.b16 %v383
    %v3044 = vunpack.c.l.b16 %v384
    %v3045 = vunpack.c.h.b16 %v384
    %v3046 = vunpack.c.l.b16 %v385
    %v3047 = vunpack.c.h.b16 %v385
    %v3048 = vunpack.c.l.b16 %v386
    %v3049 = vunpack.c.h.b16 %v386
    %v3050 = vunpack.c.l.b16 %v387
    %v3051 = vunpack.c.h.b16 %v387
    %v3052 = vunpack.c.l.b16 %v388
    %v3053 = vunpack.c.h.b16 %v388
    %v3054 = vunpack.c.l.b16 %v389
    %v3055 = vunpack.c.h.b16 %v389
    %v3056 = vunpack.c.l.b16 %v390
    %v3057 = vunpack.c.h.b16 %v390
    %v3058 = vunpack.c.l.b16 %v391
    %v3059 = vunpack.c.h.b16 %v391
    %v3060 = vunpack.c.l.b16 %v392
    %v3061 = vunpack.c.h.b16 %v392
    %v3062 = vunpack.c.l.b16 %v393
    %v3063 = vunpack.c.h.b16 %v393
    %v3064 = vunpack.c.l.b16 %v394
    %v3065 = vunpack.c.h.b16 %v394
    %v3066 = vunpack.c.l.b16 %v395
    %v3067 = vunpack.c.h.b16 %v395
    %v3068 = vunpack.c.l.b16 %v396
    %v3069 = vunpack.c.h.b16 %v396
    %v3070 = vunpack.c.l.b16 %v397
    %v3071 = vunpack.c.h.b16 %v397
    %v3072 = vunpack.c.l.b16 %v398
    %v3073 = vunpack.c.h.b16 %v398
    %v3074 = vunpack.c.l.b16 %v399
    %v3075 = vunpack.c.h.b16 %v399
    %v3076 = vunpack.c.l.b16 %v400
    %v3077 = vunpack.c.h.b16 %v400
    %v3078 = vunpack.c.l.b16 %v401
    %v3079 = vunpack.c.h.b16 %v401
    %v3080 = vunpack.c.l.b16 %v402
    %v3081 = vunpack.c.h.b16 %v402
    %v3082 = vunpack.c.l.b16 %v403
    %v3083 = vunpack.c.h.b16 %v403
    %v3084 = vunpack.c.l.b16 %v404
    %v3085 = vunpack.c.h.b16 %v404
    %v3086 = vunpack.c.l.b16 %v405
    %v3087 = vunpack.c.h.b16 %v405
    %v3088 = vunpack.c.l.b16 %v406
    %v3089 = vunpack.c.h.b16 %v406
    %v3090 = vunpack.c.l.b16 %v407
    %v3091 = vunpack.c.h.b16 %v407
    %v3092 = vunpack.c.l.b16 %v408
    %v3093 = vunpack.c.h.b16 %v408
    %v3094 = vunpack.c.l.b16 %v409
    %v3095 = vunpack.c.h.b16 %v409
    %v3096 = vunpack.c.l.b16 %v410
    %v3097 = vunpack.c.h.b16 %v410
    %v3098 = vunpack.c.l.b16 %v411
    %v3099 = vunpack.c.h.b16 %v411
    %v3100 = vunpack.c.l.b16 %v412
    %v3101 = vunpack.c.h.b16 %v412
    %v3102 = vunpack.c.l.b16 %v413
    %v3103 = vunpack.c.h.b16 %v413
    %v3104 = vunpack.c.l.b16 %v414
    %v3105 = vunpack.c.h.b16 %v414
    %v3106 = vunpack.c.l.b16 %v415
    %v3107 = vunpack.c.h.b16 %v415
    %v3108 = vunpack.c.l.b16 %v416
    %v3109 = vunpack.c.h.b16 %v416
    %v3110 = vunpack.c.l.b16 %v417
    %v3111 = vunpack.c.h.b16 %v417
    %v3112 = vunpack.c.l.b16 %v418
    %v3113 = vunpack.c.h.b16 %v418
    %v3114 = vunpack.c.l.b16 %v419
    %v3115 = vunpack.c.h.b16 %v419
    %v3116 = vunpack.c.l.b16 %v420
    %v3117 = vunpack.c.h.b16 %v420
    %v3118 = vunpack.c.l.b16 %v421
    %v3119 = vunpack.c.h.b16 %v421
    %v3120 = vunpack.c.l.b16 %v422
    %v3121 = vunpack.c.h.b16 %v422
    %v3122 = vunpack.c.l.b16 %v423
    %v3123 = vunpack.c.h.b16 %v423
    %v3124 = vunpack.c.l.b16 %v424
    %v3125 = vunpack.c.h.b16 %v424
    %v3126 = vunpack.c.l.b16 %v425
    %v3127 = vunpack.c.h.b16 %v425
    %v3128 = vunpack.c.l.b16 %v426
    %v3129 = vunpack.c.h.b16 %v426
    %v3130 = vunpack.c.l.b16 %v427
    %v3131 = vunpack.c.h.b16 %v427
    %v3132 = vunpack.c.l.b16 %v428
    %v3133 = vunpack.c.h.b16 %v428
    %v3134 = vunpack.c.l.b16 %v429
    %v3135 = vunpack.c.h.b16 %v429
    %v3136 = vunpack.c.l.b16 %v430
    %v3137 = vunpack.c.h.b16 %v430
    %v3138 = vunpack.c.l.b16 %v431
    %v3139 = vunpack.c.h.b16 %v431
    %v3140 = vunpack.c.l.b16 %v432
    %v3141 = vunpack.c.h.b16 %v432
    %v3142 = vunpack.c.l.b16 %v433
    %v3143 = vunpack.c.h.b16 %v433
    %v3144 = vunpack.c.l.b16 %v434
    %v3145 = vunpack.c.h.b16 %v434
    %v3146 = vunpack.c.l.b16 %v435
    %v3147 = vunpack.c.h.b16 %v435
    %v3148 = vunpack.c.l.b16 %v436
    %v3149 = vunpack.c.h.b16 %v436
    %v3150 = vunpack.c.l.b16 %v437
    %v3151 = vunpack.c.h.b16 %v437
    %v3152 = vunpack.c.l.b16 %v438
    %v3153 = vunpack.c.h.b16 %v438
    %v3154 = vunpack.c.l.b16 %v439
    %v3155 = vunpack.c.h.b16 %v439
    %v3156 = vunpack.c.l.b16 %v440
    %v3157 = vunpack.c.h.b16 %v440
    %v3158 = vunpack.c.l.b16 %v441
    %v3159 = vunpack.c.h.b16 %v441
    %v3160 = vunpack.c.l.b16 %v442
    %v3161 = vunpack.c.h.b16 %v442
    %v3162 = vunpack.c.l.b16 %v443
    %v3163 = vunpack.c.h.b16 %v443
    %v3164 = vunpack.c.l.b16 %v444
    %v3165 = vunpack.c.h.b16 %v444
    %v3166 = vunpack.c.l.b16 %v445
    %v3167 = vunpack.c.h.b16 %v445
    %v3168 = vunpack.c.l.b16 %v446
    %v3169 = vunpack.c.h.b16 %v446
    %v3170 = vunpack.c.l.b16 %v447
    %v3171 = vunpack.c.h.b16 %v447
    %v3172 = vunpack.c.l.b16 %v448
    %v3173 = vunpack.c.h.b16 %v448
    %v3174 = vunpack.c.l.b16 %v449
    %v3175 = vunpack.c.h.b16 %v449
    %v3176 = vunpack.c.l.b16 %v450
    %v3177 = vunpack.c.h.b16 %v450
    %v3178 = vunpack.c.l.b16 %v451
    %v3179 = vunpack.c.h.b16 %v451
    %v3180 = vunpack.c.l.b16 %v452
    %v3181 = vunpack.c.h.b16 %v452
    %v3182 = vunpack.c.l.b16 %v453
    %v3183 = vunpack.c.h.b16 %v453
    %v3184 = vunpack.c.l.b16 %v454
    %v3185 = vunpack.c.h.b16 %v454
    %v3186 = vunpack.c.l.b16 %v455
    %v3187 = vunpack.c.h.b16 %v455
    %v3188 = vunpack.c.l.b16 %v456
    %v3189 = vunpack.c.h.b16 %v456
    %v3190 = vunpack.c.l.b16 %v457
    %v3191 = vunpack.c.h.b16 %v457
    %v3192 = vunpack.c.l.b16 %v458
    %v3193 = vunpack.c.h.b16 %v458
    %v3194 = vunpack.c.l.b16 %v459
    %v3195 = vunpack.c.h.b16 %v459
    %v3196 = vunpack.c.l.b16 %v460
    %v3197 = vunpack.c.h.b16 %v460
    %v3198 = vunpack.c.l.b16 %v461
    %v3199 = vunpack.c.h.b16 %v461
    %v3200 = vunpack.c.l.b16 %v462
    %v3201 = vunpack.c.h.b16 %v462
    %v3202 = vunpack.c.l.b16 %v463
    %v3203 = vunpack.c.h.b16 %v463
    %v3204 = vunpack.c.l.b16 %v464
    %v3205 = vunpack.c.h.b16 %v464
    %v3206 = vunpack.c.l.b16 %v465
    %v3207 = vunpack.c.h.b16 %v465
    %v3208 = vunpack.c.l.b16 %v466
    %v3209 = vunpack.c.h.b16 %v466
    %v3210 = vunpack.c.l.b16 %v467
    %v3211 = vunpack.c.h.b16 %v467
    %v3212 = vunpack.c.l.b16 %v468
    %v3213 = vunpack.c.h.b16 %v468
    %v3214 = vunpack.c.l.b16 %v469
    %v3215 = vunpack.c.h.b16 %v469
    %v3216 = vunpack.c.l.b16 %v470
    %v3217 = vunpack.c.h.b16 %v470
    %v3218 = vunpack.c.l.b16 %v471
    %v3219 = vunpack.c.h.b16 %v471
    %v3220 = vunpack.c.l.b16 %v472
    %v3221 = vunpack.c.h.b16 %v472
    %v3222 = vunpack.c.l.b16 %v473
    %v3223 = vunpack.c.h.b16 %v473
    %v3224 = vunpack.c.l.b16 %v474
    %v3225 = vunpack.c.h.b16 %v474
    %v3226 = vunpack.c.l.b16 %v475
    %v3227 = vunpack.c.h.b16 %v475
    %v3228 = vunpack.c.l.b16 %v476
    %v3229 = vunpack.c.h.b16 %v476
    %v3230 = vunpack.c.l.b16 %v477
    %v3231 = vunpack.c.h.b16 %v477
    %v3232 = vunpack.c.l.b16 %v478
    %v3233 = vunpack.c.h.b16 %v478
    %v3234 = vunpack.c.l.b16 %v479
    %v3235 = vunpack.c.h.b16 %v479
    %v3236 = vunpack.c.l.b16 %v480
    %v3237 = vunpack.c.h.b16 %v480
    %v3238 = vunpack.c.l.b16 %v481
    %v3239 = vunpack.c.h.b16 %v481
    %v3240 = vunpack.c.l.b16 %v482
    %v3241 = vunpack.c.h.b16 %v482
    %v3242 = vunpack.c.l.b16 %v483
    %v3243 = vunpack.c.h.b16 %v483
    %v3244 = vunpack.c.l.b16 %v484
    %v3245 = vunpack.c.h.b16 %v484
    %v3246 = vunpack.c.l.b16 %v485
    %v3247 = vunpack.c.h.b16 %v485
    %v3248 = vunpack.c.l.b16 %v486
    %v3249 = vunpack.c.h.b16 %v486
    %v3250 = vunpack.c.l.b16 %v487
    %v3251 = vunpack.c.h.b16 %v487
    %v3252 = vunpack.c.l.b16 %v488
    %v3253 = vunpack.c.h.b16 %v488
    %v3254 = vunpack.c.l.b16 %v489
    %v3255 = vunpack.c.h.b16 %v489
    %v3256 = vunpack.c.l.b16 %v490
    %v3257 = vunpack.c.h.b16 %v490
    %v3258 = vunpack.c.l.b16 %v491
    %v3259 = vunpack.c.h.b16 %v491
    %v3260 = vunpack.c.l.b16 %v492
    %v3261 = vunpack.c.h.b16 %v492
    %v3262 = vunpack.c.l.b16 %v493
    %v3263 = vunpack.c.h.b16 %v493
    %v3264 = vunpack.c.l.b16 %v494
    %v3265 = vunpack.c.h.b16 %v494
    %v3266 = vunpack.c.l.b16 %v495
    %v3267 = vunpack.c.h.b16 %v495
    %v3268 = vunpack.c.l.b16 %v496
    %v3269 = vunpack.c.h.b16 %v496
    %v3270 = vunpack.c.l.b16 %v497
    %v3271 = vunpack.c.h.b16 %v497
    %v3272 = vunpack.c.l.b16 %v498
    %v3273 = vunpack.c.h.b16 %v498
    %v3274 = vunpack.c.l.b16 %v499
    %v3275 = vunpack.c.h.b16 %v499
    %v3276 = vunpack.c.l.b16 %v500
    %v3277 = vunpack.c.h.b16 %v500
    %v3278 = vunpack.c.l.b16 %v501
    %v3279 = vunpack.c.h.b16 %v501
    %v3280 = vunpack.c.l.b16 %v502
    %v3281 = vunpack.c.h.b16 %v502
    %v3282 = vunpack.c.l.b16 %v503
    %v3283 = vunpack.c.h.b16 %v503
    %v3284 = vunpack.c.l.b16 %v504
    %v3285 = vunpack.c.h.b16 %v504
    %v3286 = vunpack.c.l.b16 %v505
    %v3287 = vunpack.c.h.b16 %v505
    %v3288 = vunpack.c.l.b16 %v506
    %v3289 = vunpack.c.h.b16 %v506
    %v3290 = vunpack.c.l.b16 %v507
    %v3291 = vunpack.c.h.b16 %v507
    %v3292 = vunpack.c.l.b16 %v508
    %v3293 = vunpack.c.h.b16 %v508
    %v3294 = vunpack.c.l.b16 %v509
    %v3295 = vunpack.c.h.b16 %v509
    %v3296 = vunpack.c.l.b16 %v510
    %v3297 = vunpack.c.h.b16 %v510
    %v3298 = vunpack.c.l.b16 %v511
    %v3299 = vunpack.c.h.b16 %v511
    %v3300 = vunpack.c.l.b16 %v512
    %v3301 = vunpack.c.h.b16 %v512
    %v3302 = vunpack.c.l.b16 %v513
    %v3303 = vunpack.c.h.b16 %v513
    %v3304 = vunpack.c.l.b16 %v514
    %v3305 = vunpack.c.h.b16 %v514
    %v3306 = vunpack.c.l.b16 %v515
    %v3307 = vunpack.c.h.b16 %v515
    %v3308 = vunpack.c.l.b16 %v516
    %v3309 = vunpack.c.h.b16 %v516
    %v3310 = vunpack.c.l.b16 %v517
    %v3311 = vunpack.c.h.b16 %v517
    %v3312 = vunpack.c.l.b16 %v518
    %v3313 = vunpack.c.h.b16 %v518
    %v3314 = vunpack.c.l.b16 %v519
    %v3315 = vunpack.c.h.b16 %v519
    %v3316 = vunpack.c.l.b16 %v520
    %v3317 = vunpack.c.h.b16 %v520
    %v3318 = vunpack.c.l.b16 %v521
    %v3319 = vunpack.c.h.b16 %v521
    %v3320 = vunpack.c.l.b16 %v522
    %v3321 = vunpack.c.h.b16 %v522
    %v3322 = vunpack.c.l.b16 %v523
    %v3323 = vunpack.c.h.b16 %v523
    %v3324 = vunpack.c.l.b16 %v524
    %v3325 = vunpack.c.h.b16 %v524
    %v3326 = vunpack.c.l.b16 %v525
    %v3327 = vunpack.c.h.b16 %v525
    %v3328 = vunpack.c.l.b16 %v526
    %v3329 = vunpack.c.h.b16 %v526
    %v3330 = vunpack.c.l.b16 %v527
    %v3331 = vunpack.c.h.b16 %v527
    %v3332 = vunpack.c.l.b16 %v528
    %v3333 = vunpack.c.h.b16 %v528
    %v3334 = vunpack.c.l.b16 %v529
    %v3335 = vunpack.c.h.b16 %v529
    %v3336 = vunpack.c.l.b16 %v530
    %v3337 = vunpack.c.h.b16 %v530
    %v3338 = vunpack.c.l.b16 %v531
    %v3339 = vunpack.c.h.b16 %v531
    %v3340 = vunpack.c.l.b16 %v532
    %v3341 = vunpack.c.h.b16 %v532
    %v3342 = vunpack.c.l.b16 %v533
    %v3343 = vunpack.c.h.b16 %v533
    %v3344 = vunpack.c.l.b16 %v534
    %v3345 = vunpack.c.h.b16 %v534
    %v3346 = vunpack.c.l.b16 %v535
    %v3347 = vunpack.c.h.b16 %v535
    %v3348 = vunpack.c.l.b16 %v536
    %v3349 = vunpack.c.h.b16 %v536
    %v3350 = vunpack.c.l.b16 %v537
    %v3351 = vunpack.c.h.b16 %v537
    %v3352 = vunpack.c.l.b16 %v538
    %v3353 = vunpack.c.h.b16 %v538
    %v3354 = vunpack.c.l.b16 %v539
    %v3355 = vunpack.c.h.b16 %v539
    %v3356 = vunpack.c.l.b16 %v540
    %v3357 = vunpack.c.h.b16 %v540
    %v3358 = vunpack.c.l.b16 %v541
    %v3359 = vunpack.c.h.b16 %v541
    %v3360 = vunpack.c.l.b16 %v542
    %v3361 = vunpack.c.h.b16 %v542
    %v3362 = vunpack.c.l.b16 %v543
    %v3363 = vunpack.c.h.b16 %v543
    %v3364 = vunpack.c.l.b16 %v544
    %v3365 = vunpack.c.h.b16 %v544
    %v3366 = vunpack.c.l.b16 %v545
    %v3367 = vunpack.c.h.b16 %v545
    %v3368 = vunpack.c.l.b16 %v546
    %v3369 = vunpack.c.h.b16 %v546
    %v3370 = vunpack.c.l.b16 %v547
    %v3371 = vunpack.c.h.b16 %v547
    %v3372 = vunpack.c.l.b16 %v548
    %v3373 = vunpack.c.h.b16 %v548
    %v3374 = vunpack.c.l.b16 %v549
    %v3375 = vunpack.c.h.b16 %v549
    %v3376 = vunpack.c.l.b16 %v550
    %v3377 = vunpack.c.h.b16 %v550
    %v3378 = vunpack.c.l.b16 %v551
    %v3379 = vunpack.c.h.b16 %v551
    %v3380 = vunpack.c.l.b16 %v552
    %v3381 = vunpack.c.h.b16 %v552
    %v3382 = vunpack.c.l.b16 %v553
    %v3383 = vunpack.c.h.b16 %v553
    %v3384 = vunpack.c.l.b16 %v554
    %v3385 = vunpack.c.h.b16 %v554
    %v3386 = vunpack.c.l.b16 %v555
    %v3387 = vunpack.c.h.b16 %v555
    %v3388 = vunpack.c.l.b16 %v556
    %v3389 = vunpack.c.h.b16 %v556
    %v3390 = vunpack.c.l.b16 %v557
    %v3391 = vunpack.c.h.b16 %v557
    %v3392 = vunpack.c.l.b16 %v558
    %v3393 = vunpack.c.h.b16 %v558
    %v3394 = vunpack.c.l.b16 %v559
    %v3395 = vunpack.c.h.b16 %v559
    %v3396 = vunpack.c.l.b16 %v560
    %v3397 = vunpack.c.h.b16 %v560
    %v3398 = vunpack.c.l.b16 %v561
    %v3399 = vunpack.c.h.b16 %v561
    %v3400 = vunpack.c.l.b16 %v562
    %v3401 = vunpack.c.h.b16 %v562
    %v3402 = vunpack.c.l.b16 %v563
    %v3403 = vunpack.c.h.b16 %v563
    %v3404 = vunpack.c.l.b16 %v564
    %v3405 = vunpack.c.h.b16 %v564
    %v3406 = vunpack.c.l.b16 %v565
    %v3407 = vunpack.c.h.b16 %v565
    %v3408 = vunpack.c.l.b16 %v566
    %v3409 = vunpack.c.h.b16 %v566
    %v3410 = vunpack.c.l.b16 %v567
    %v3411 = vunpack.c.h.b16 %v567
    %v3412 = vunpack.c.l.b16 %v568
    %v3413 = vunpack.c.h.b16 %v568
    %v3414 = vunpack.c.l.b16 %v569
    %v3415 = vunpack.c.h.b16 %v569
    %v3416 = vunpack.c.l.b16 %v570
    %v3417 = vunpack.c.h.b16 %v570
    %v3418 = vunpack.c.l.b16 %v571
    %v3419 = vunpack.c.h.b16 %v571
    %v3420 = vunpack.c.l.b16 %v572
    %v3421 = vunpack.c.h.b16 %v572
    %v3422 = vunpack.c.l.b16 %v573
    %v3423 = vunpack.c.h.b16 %v573
    %v3424 = vunpack.c.l.b16 %v574
    %v3425 = vunpack.c.h.b16 %v574
    %v3426 = vunpack.c.l.b16 %v575
    %v3427 = vunpack.c.h.b16 %v575
    %v3428 = vunpack.c.l.b16 %v576
    %v3429 = vunpack.c.h.b16 %v576
    %v3430 = vunpack.c.l.b16 %v577
    %v3431 = vunpack.c.h.b16 %v577
    %v3432 = vunpack.c.l.b16 %v578
    %v3433 = vunpack.c.h.b16 %v578
    %v3434 = vunpack.c.l.b16 %v579
    %v3435 = vunpack.c.h.b16 %v579
    %v3436 = vunpack.c.l.b16 %v580
    %v3437 = vunpack.c.h.b16 %v580
    %v3438 = vunpack.c.l.b16 %v581
    %v3439 = vunpack.c.h.b16 %v581
    %v3440 = vunpack.c.l.b16 %v582
    %v3441 = vunpack.c.h.b16 %v582
    %v3442 = vunpack.c.l.b16 %v583
    %v3443 = vunpack.c.h.b16 %v583
    %v3444 = vunpack.c.l.b16 %v584
    %v3445 = vunpack.c.h.b16 %v584
    %v3446 = vunpack.c.l.b16 %v585
    %v3447 = vunpack.c.h.b16 %v585
    %v3448 = vunpack.c.l.b16 %v586
    %v3449 = vunpack.c.h.b16 %v586
    %v3450 = vunpack.c.l.b16 %v587
    %v3451 = vunpack.c.h.b16 %v587
    %v3452 = vunpack.c.l.b16 %v588
    %v3453 = vunpack.c.h.b16 %v588
    %v3454 = vunpack.c.l.b16 %v589
    %v3455 = vunpack.c.h.b16 %v589
    %v3456 = vunpack.c.l.b16 %v590
    %v3457 = vunpack.c.h.b16 %v590
    %v3458 = vunpack.c.l.b16 %v591
    %v3459 = vunpack.c.h.b16 %v591
    %v3460 = vunpack.c.l.b16 %v592
    %v3461 = vunpack.c.h.b16 %v592
    %v3462 = vunpack.c.l.b16 %v593
    %v3463 = vunpack.c.h.b16 %v593
    %v3464 = vunpack.c.l.b16 %v594
    %v3465 = vunpack.c.h.b16 %v594
    %v3466 = vunpack.c.l.b16 %v595
    %v3467 = vunpack.c.h.b16 %v595
    %v3468 = vunpack.c.l.b16 %v596
    %v3469 = vunpack.c.h.b16 %v596
    %v3470 = vunpack.c.l.b16 %v597
    %v3471 = vunpack.c.h.b16 %v597
    %v3472 = vunpack.c.l.b16 %v598
    %v3473 = vunpack.c.h.b16 %v598
    %v3474 = vunpack.c.l.b16 %v599
    %v3475 = vunpack.c.h.b16 %v599
    %v3476 = vunpack.c.l.b16 %v600
    %v3477 = vunpack.c.h.b16 %v600
    %v3478 = vunpack.c.l.b16 %v601
    %v3479 = vunpack.c.h.b16 %v601
    %v3480 = vunpack.c.l.b16 %v602
    %v3481 = vunpack.c.h.b16 %v602
    %v3482 = vunpack.c.l.b16 %v603
    %v3483 = vunpack.c.h.b16 %v603
    %v3484 = vunpack.c.l.b16 %v604
    %v3485 = vunpack.c.h.b16 %v604
    %v3486 = vunpack.c.l.b16 %v605
    %v3487 = vunpack.c.h.b16 %v605
    %v3488 = vunpack.c.l.b16 %v606
    %v3489 = vunpack.c.h.b16 %v606
    %v3490 = vunpack.c.l.b16 %v607
    %v3491 = vunpack.c.h.b16 %v607
    %v3492 = vunpack.c.l.b16 %v608
    %v3493 = vunpack.c.h.b16 %v608
    %v3494 = vunpack.c.l.b16 %v609
    %v3495 = vunpack.c.h.b16 %v609
    %v3496 = vunpack.c.l.b16 %v610
    %v3497 = vunpack.c.h.b16 %v610
    %v3498 = vunpack.c.l.b16 %v611
    %v3499 = vunpack.c.h.b16 %v611
    %v3500 = vunpack.c.l.b16 %v612
    %v3501 = vunpack.c.h.b16 %v612
    %v3502 = vunpack.c.l.b16 %v613
    %v3503 = vunpack.c.h.b16 %v613
    %v3504 = vunpack.c.l.b16 %v614
    %v3505 = vunpack.c.h.b16 %v614
    %v3506 = vunpack.c.l.b16 %v615
    %v3507 = vunpack.c.h.b16 %v615
    %v3508 = vunpack.c.l.b16 %v616
    %v3509 = vunpack.c.h.b16 %v616
    %v3510 = vunpack.c.l.b16 %v617
    %v3511 = vunpack.c.h.b16 %v617
    %v3512 = vunpack.c.l.b16 %v618
    %v3513 = vunpack.c.h.b16 %v618
    %v3514 = vunpack.c.l.b16 %v619
    %v3515 = vunpack.c.h.b16 %v619
    %v3516 = vunpack.c.l.b16 %v620
    %v3517 = vunpack.c.h.b16 %v620
    %v3518 = vunpack.c.l.b16 %v621
    %v3519 = vunpack.c.h.b16 %v621
    %v3520 = vunpack.c.l.b16 %v622
    %v3521 = vunpack.c.h.b16 %v622
    %v3522 = vunpack.c.l.b16 %v623
    %v3523 = vunpack.c.h.b16 %v623
    %v3524 = vunpack.c.l.b16 %v624
    %v3525 = vunpack.c.h.b16 %v624
    %v3526 = vunpack.c.l.b16 %v625
    %v3527 = vunpack.c.h.b16 %v625
    %v3528 = vunpack.c.l.b16 %v626
    %v3529 = vunpack.c.h.b16 %v626
    %v3530 = vunpack.c.l.b16 %v627
    %v3531 = vunpack.c.h.b16 %v627
    %v3532 = vunpack.c.l.b16 %v628
    %v3533 = vunpack.c.h.b16 %v628
    %v3534 = vunpack.c.l.b16 %v629
    %v3535 = vunpack.c.h.b16 %v629
    %v3536 = vunpack.c.l.b16 %v630
    %v3537 = vunpack.c.h.b16 %v630
    %v3538 = vunpack.c.l.b16 %v631
    %v3539 = vunpack.c.h.b16 %v631
    %v3540 = vunpack.c.l.b16 %v632
    %v3541 = vunpack.c.h.b16 %v632
    %v3542 = vunpack.c.l.b16 %v633
    %v3543 = vunpack.c.h.b16 %v633
    %v3544 = vunpack.c.l.b16 %v634
    %v3545 = vunpack.c.h.b16 %v634
    %v3546 = vunpack.c.l.b16 %v635
    %v3547 = vunpack.c.h.b16 %v635
    %v3548 = vunpack.c.l.b16 %v636
    %v3549 = vunpack.c.h.b16 %v636
    %v3550 = vunpack.c.l.b16 %v637
    %v3551 = vunpack.c.h.b16 %v637
    %v3552 = vunpack.c.l.b16 %v638
    %v3553 = vunpack.c.h.b16 %v638
    %v3554 = vunpack.c.l.b16 %v639
    %v3555 = vunpack.c.h.b16 %v639
    %v3556 = vunpack.c.l.b16 %v640
    %v3557 = vunpack.c.h.b16 %v640
    %v3558 = vunpack.c.l.b16 %v641
    %v3559 = vunpack.c.h.b16 %v641
    %v3560 = vunpack.c.l.b16 %v642
    %v3561 = vunpack.c.h.b16 %v642
    %v3562 = vunpack.c.l.b16 %v643
    %v3563 = vunpack.c.h.b16 %v643
    %v3564 = vunpack.c.l.b16 %v644
    %v3565 = vunpack.c.h.b16 %v644
    %v3566 = vunpack.c.l.b16 %v645
    %v3567 = vunpack.c.h.b16 %v645
    %v3568 = vunpack.c.l.b16 %v646
    %v3569 = vunpack.c.h.b16 %v646
    %v3570 = vunpack.c.l.b16 %v647
    %v3571 = vunpack.c.h.b16 %v647
    %v3572 = vunpack.c.l.b16 %v648
    %v3573 = vunpack.c.h.b16 %v648
    %v3574 = vunpack.c.l.b16 %v649
    %v3575 = vunpack.c.h.b16 %v649
    %v3576 = vunpack.c.l.b16 %v650
    %v3577 = vunpack.c.h.b16 %v650
    %v3578 = vunpack.c.l.b16 %v651
    %v3579 = vunpack.c.h.b16 %v651
    %v3580 = vunpack.c.l.b16 %v652
    %v3581 = vunpack.c.h.b16 %v652
    %v3582 = vunpack.c.l.b16 %v653
    %v3583 = vunpack.c.h.b16 %v653
    %v3584 = vunpack.c.l.b16 %v654
    %v3585 = vunpack.c.h.b16 %v654
    %v3586 = vunpack.c.l.b16 %v655
    %v3587 = vunpack.c.h.b16 %v655
    %v3588 = vunpack.c.l.b16 %v656
    %v3589 = vunpack.c.h.b16 %v656
    %v3590 = vunpack.c.l.b16 %v657
    %v3591 = vunpack.c.h.b16 %v657
    %v3592 = vunpack.c.l.b16 %v658
    %v3593 = vunpack.c.h.b16 %v658
    %v3594 = vunpack.c.l.b16 %v659
    %v3595 = vunpack.c.h.b16 %v659
    %v3596 = vunpack.c.l.b16 %v660
    %v3597 = vunpack.c.h.b16 %v660
    %v3598 = vunpack.c.l.b16 %v661
    %v3599 = vunpack.c.h.b16 %v661
    %v3600 = vunpack.c.l.b16 %v662
    %v3601 = vunpack.c.h.b16 %v662
    %v3602 = vunpack.c.l.b16 %v663
    %v3603 = vunpack.c.h.b16 %v663
    %v3604 = vunpack.c.l.b16 %v664
    %v3605 = vunpack.c.h.b16 %v664
    %v3606 = vunpack.c.l.b16 %v665
    %v3607 = vunpack.c.h.b16 %v665
    %v3608 = vunpack.c.l.b16 %v666
    %v3609 = vunpack.c.h.b16 %v666
    %v3610 = vunpack.c.l.b16 %v667
    %v3611 = vunpack.c.h.b16 %v667
    %v3612 = vunpack.c.l.b16 %v668
    %v3613 = vunpack.c.h.b16 %v668
    %v3614 = vunpack.c.l.b16 %v669
    %v3615 = vunpack.c.h.b16 %v669
    %v3616 = vunpack.c.l.b16 %v670
    %v3617 = vunpack.c.h.b16 %v670
    %v3618 = vunpack.c.l.b16 %v671
    %v3619 = vunpack.c.h.b16 %v671
    %v3620 = vunpack.c.l.b16 %v672
    %v3621 = vunpack.c.h.b16 %v672
    %v3622 = vunpack.c.l.b16 %v673
    %v3623 = vunpack.c.h.b16 %v673
    %v3624 = vunpack.c.l.b16 %v674
    %v3625 = vunpack.c.h.b16 %v674
    %v3626 = vunpack.c.l.b16 %v675
    %v3627 = vunpack.c.h.b16 %v675
    %v3628 = vunpack.c.l.b16 %v676
    %v3629 = vunpack.c.h.b16 %v676
    %v3630 = vunpack.c.l.b16 %v677
    %v3631 = vunpack.c.h.b16 %v677
    %v3632 = vunpack.c.l.b16 %v678
    %v3633 = vunpack.c.h.b16 %v678
    %v3634 = vunpack.c.l.b16 %v679
    %v3635 = vunpack.c.h.b16 %v679
    %v3636 = vunpack.c.l.b16 %v680
    %v3637 = vunpack.c.h.b16 %v680
    %v3638 = vunpack.c.l.b16 %v681
    %v3639 = vunpack.c.h.b16 %v681
    %v3640 = vunpack.c.l.b16 %v682
    %v3641 = vunpack.c.h.b16 %v682
    %v3642 = vunpack.c.l.b16 %v683
    %v3643 = vunpack.c.h.b16 %v683
    %v3644 = vunpack.c.l.b16 %v684
    %v3645 = vunpack.c.h.b16 %v684
    %v3646 = vunpack.c.l.b16 %v685
    %v3647 = vunpack.c.h.b16 %v685
    %v3648 = vunpack.c.l.b16 %v686
    %v3649 = vunpack.c.h.b16 %v686
    %v3650 = vunpack.c.l.b16 %v687
    %v3651 = vunpack.c.h.b16 %v687
    %v3652 = vunpack.c.l.b16 %v688
    %v3653 = vunpack.c.h.b16 %v688
    %v3654 = vunpack.c.l.b16 %v689
    %v3655 = vunpack.c.h.b16 %v689
    %v3656 = vunpack.c.l.b16 %v690
    %v3657 = vunpack.c.h.b16 %v690
    %v3658 = vunpack.c.l.b16 %v691
    %v3659 = vunpack.c.h.b16 %v691
    %v3660 = vunpack.c.l.b16 %v692
    %v3661 = vunpack.c.h.b16 %v692
    %v3662 = vunpack.c.l.b16 %v693
    %v3663 = vunpack.c.h.b16 %v693
    %v3664 = vunpack.c.l.b16 %v694
    %v3665 = vunpack.c.h.b16 %v694
    %v3666 = vunpack.c.l.b16 %v695
    %v3667 = vunpack.c.h.b16 %v695
    %v3668 = vunpack.c.l.b16 %v696
    %v3669 = vunpack.c.h.b16 %v696
    %v3670 = vunpack.c.l.b16 %v697
    %v3671 = vunpack.c.h.b16 %v697
    %v3672 = vunpack.c.l.b16 %v698
    %v3673 = vunpack.c.h.b16 %v698
    %v3674 = vunpack.c.l.b16 %v699
    %v3675 = vunpack.c.h.b16 %v699
    %v3676 = vunpack.c.l.b16 %v700
    %v3677 = vunpack.c.h.b16 %v700
    %v3678 = vunpack.c.l.b16 %v701
    %v3679 = vunpack.c.h.b16 %v701
    %v3680 = vunpack.c.l.b16 %v702
    %v3681 = vunpack.c.h.b16 %v702
    %v3682 = vunpack.c.l.b16 %v703
    %v3683 = vunpack.c.h.b16 %v703
    %v3684 = vunpack.c.l.b16 %v704
    %v3685 = vunpack.c.h.b16 %v704
    %v3686 = vunpack.c.l.b16 %v705
    %v3687 = vunpack.c.h.b16 %v705
    %v3688 = vunpack.c.l.b16 %v706
    %v3689 = vunpack.c.h.b16 %v706
    %v3690 = vunpack.c.l.b16 %v707
    %v3691 = vunpack.c.h.b16 %v707
    %v3692 = vunpack.c.l.b16 %v708
    %v3693 = vunpack.c.h.b16 %v708
    %v3694 = vunpack.c.l.b16 %v709
    %v3695 = vunpack.c.h.b16 %v709
    %v3696 = vunpack.c.l.b16 %v710
    %v3697 = vunpack.c.h.b16 %v710
    %v3698 = vunpack.c.l.b16 %v711
    %v3699 = vunpack.c.h.b16 %v711
    %v3700 = vunpack.c.l.b16 %v712
    %v3701 = vunpack.c.h.b16 %v712
    %v3702 = vunpack.c.l.b16 %v713
    %v3703 = vunpack.c.h.b16 %v713
    %v3704 = vunpack.c.l.b16 %v714
    %v3705 = vunpack.c.h.b16 %v714
    %v3706 = vunpack.c.l.b16 %v715
    %v3707 = vunpack.c.h.b16 %v715
    %v3708 = vunpack.c.l.b16 %v716
    %v3709 = vunpack.c.h.b16 %v716
    %v3710 = vunpack.c.l.b16 %v717
    %v3711 = vunpack.c.h.b16 %v717
    %v3712 = vunpack.c.l.b16 %v718
    %v3713 = vunpack.c.h.b16 %v718
    %v3714 = vunpack.c.l.b16 %v719
    %v3715 = vunpack.c.h.b16 %v719
    %v3716 = vunpack.c.l.b16 %v720
    %v3717 = vunpack.c.h.b16 %v720
    %v3718 = vunpack.c.l.b16 %v721
    %v3719 = vunpack.c.h.b16 %v721
    %v3720 = vunpack.c.l.b16 %v722
    %v3721 = vunpack.c.h.b16 %v722
    %v3722 = vunpack.c.l.b16 %v723
    %v3723 = vunpack.c.h.b16 %v723
    %v3724 = vunpack.c.l.b16 %v724
    %v3725 = vunpack.c.h.b16 %v724
    %v3726 = vunpack.c.l.b16 %v725
    %v3727 = vunpack.c.h.b16 %v725
    %v3728 = vunpack.c.l.b16 %v726
    %v3729 = vunpack.c.h.b16 %v726
    %v3730 = vunpack.c.l.b16 %v727
    %v3731 = vunpack.c.h.b16 %v727
    %v3732 = vunpack.c.l.b16 %v728
    %v3733 = vunpack.c.h.b16 %v728
    %v3734 = vunpack.c.l.b16 %v729
    %v3735 = vunpack.c.h.b16 %v729
    %v3736 = vunpack.c.l.b16 %v730
    %v3737 = vunpack.c.h.b16 %v730
    %v3738 = vunpack.c.l.b16 %v731
    %v3739 = vunpack.c.h.b16 %v731
    %v3740 = vunpack.c.l.b16 %v732
    %v3741 = vunpack.c.h.b16 %v732
    %v3742 = vunpack.c.l.b16 %v733
    %v3743 = vunpack.c.h.b16 %v733
    %v3744 = vunpack.c.l.b16 %v734
    %v3745 = vunpack.c.h.b16 %v734
    %v3746 = vunpack.c.l.b16 %v735
    %v3747 = vunpack.c.h.b16 %v735
    %v3748 = vunpack.c.l.b16 %v736
    %v3749 = vunpack.c.h.b16 %v736
    %v3750 = vunpack.c.l.b16 %v737
    %v3751 = vunpack.c.h.b16 %v737
    %v3752 = vunpack.c.l.b16 %v738
    %v3753 = vunpack.c.h.b16 %v738
    %v3754 = vunpack.c.l.b16 %v739
    %v3755 = vunpack.c.h.b16 %v739
    %v3756 = vunpack.c.l.b16 %v740
    %v3757 = vunpack.c.h.b16 %v740
    %v3758 = vunpack.c.l.b16 %v741
    %v3759 = vunpack.c.h.b16 %v741
    %v3760 = vunpack.c.l.b16 %v742
    %v3761 = vunpack.c.h.b16 %v742
    %v3762 = vunpack.c.l.b16 %v743
    %v3763 = vunpack.c.h.b16 %v743
    %v3764 = vunpack.c.l.b16 %v744
    %v3765 = vunpack.c.h.b16 %v744
    %v3766 = vunpack.c.l.b16 %v745
    %v3767 = vunpack.c.h.b16 %v745
    %v3768 = vunpack.c.l.b16 %v746
    %v3769 = vunpack.c.h.b16 %v746
    %v3770 = vunpack.c.l.b16 %v747
    %v3771 = vunpack.c.h.b16 %v747
    %v3772 = vunpack.c.l.b16 %v748
    %v3773 = vunpack.c.h.b16 %v748
    %v3774 = vunpack.c.l.b16 %v749
    %v3775 = vunpack.c.h.b16 %v749
    %v3776 = vunpack.c.l.b16 %v750
    %v3777 = vunpack.c.h.b16 %v750
    %v3778 = vunpack.c.l.b16 %v751
    %v3779 = vunpack.c.h.b16 %v751
    %v3780 = vunpack.c.l.b16 %v752
    %v3781 = vunpack.c.h.b16 %v752
    %v3782 = vunpack.c.l.b16 %v753
    %v3783 = vunpack.c.h.b16 %v753
    %v3784 = vunpack.c.l.b16 %v754
    %v3785 = vunpack.c.h.b16 %v754
    %v3786 = vunpack.c.l.b16 %v755
    %v3787 = vunpack.c.h.b16 %v755
    %v3788 = vunpack.c.l.b16 %v756
    %v3789 = vunpack.c.h.b16 %v756
    %v3790 = vunpack.c.l.b16 %v757
    %v3791 = vunpack.c.h.b16 %v757
    %v3792 = vunpack.c.l.b16 %v758
    %v3793 = vunpack.c.h.b16 %v758
    %v3794 = vunpack.c.l.b16 %v759
    %v3795 = vunpack.c.h.b16 %v759
    %v3796 = vunpack.c.l.b16 %v760
    %v3797 = vunpack.c.h.b16 %v760
    %v3798 = vunpack.c.l.b16 %v761
    %v3799 = vunpack.c.h.b16 %v761
    %v3800 = vunpack.c.l.b16 %v762
    %v3801 = vunpack.c.h.b16 %v762
    %v3802 = vunpack.c.l.b16 %v763
    %v3803 = vunpack.c.h.b16 %v763
    %v3804 = vunpack.c.l.b16 %v764
    %v3805 = vunpack.c.h.b16 %v764
    %v3806 = vunpack.c.l.b16 %v765
    %v3807 = vunpack.c.h.b16 %v765
    %v3808 = vunpack.c.l.b16 %v766
    %v3809 = vunpack.c.h.b16 %v766
    %v3810 = vunpack.c.l.b16 %v767
    %v3811 = vunpack.c.h.b16 %v767
    %v3812 = vunpack.c.l.b16 %v768
    %v3813 = vunpack.c.h.b16 %v768
    %v3814 = vunpack.c.l.b16 %v769
    %v3815 = vunpack.c.h.b16 %v769
    %v3816 = vunpack.c.l.b16 %v770
    %v3817 = vunpack.c.h.b16 %v770
    %v3818 = vunpack.c.l.b16 %v771
    %v3819 = vunpack.c.h.b16 %v771
    %v3820 = vunpack.c.l.b16 %v772
    %v3821 = vunpack.c.h.b16 %v772
    %v3822 = vunpack.c.l.b16 %v773
    %v3823 = vunpack.c.h.b16 %v773
    %v3824 = vunpack.c.l.b16 %v774
    %v3825 = vunpack.c.h.b16 %v774
    %v3826 = vunpack.c.l.b16 %v775
    %v3827 = vunpack.c.h.b16 %v775
    %v3828 = vunpack.c.l.b16 %v776
    %v3829 = vunpack.c.h.b16 %v776
    %v3830 = vunpack.c.l.b16 %v777
    %v3831 = vunpack.c.h.b16 %v777
    %v3832 = vunpack.c.l.b16 %v778
    %v3833 = vunpack.c.h.b16 %v778
    %v3834 = vunpack.c.l.b16 %v779
    %v3835 = vunpack.c.h.b16 %v779
    %v3836 = vunpack.c.l.b16 %v780
    %v3837 = vunpack.c.h.b16 %v780
    %v3838 = vunpack.c.l.b16 %v781
    %v3839 = vunpack.c.h.b16 %v781
    %v3840 = vunpack.c.l.b16 %v782
    %v3841 = vunpack.c.h.b16 %v782
    %v3842 = vunpack.c.l.b16 %v783
    %v3843 = vunpack.c.h.b16 %v783
    %v3844 = vunpack.c.l.b16 %v784
    %v3845 = vunpack.c.h.b16 %v784
    %v3846 = vunpack.c.l.b16 %v785
    %v3847 = vunpack.c.h.b16 %v785
    %v3848 = vunpack.c.l.b16 %v786
    %v3849 = vunpack.c.h.b16 %v786
    %v3850 = vunpack.c.l.b16 %v787
    %v3851 = vunpack.c.h.b16 %v787
    %v3852 = vunpack.c.l.b16 %v788
    %v3853 = vunpack.c.h.b16 %v788
    %v3854 = vunpack.c.l.b16 %v789
    %v3855 = vunpack.c.h.b16 %v789
    %v3856 = vunpack.c.l.b16 %v790
    %v3857 = vunpack.c.h.b16 %v790
    %v3858 = vunpack.c.l.b16 %v791
    %v3859 = vunpack.c.h.b16 %v791
    %v3860 = vunpack.c.l.b16 %v792
    %v3861 = vunpack.c.h.b16 %v792
    %v3862 = vunpack.c.l.b16 %v793
    %v3863 = vunpack.c.h.b16 %v793
    %v3864 = vunpack.c.l.b16 %v794
    %v3865 = vunpack.c.h.b16 %v794
    %v3866 = vunpack.c.l.b16 %v795
    %v3867 = vunpack.c.h.b16 %v795
    %v3868 = vunpack.c.l.b16 %v796
    %v3869 = vunpack.c.h.b16 %v796
    %v3870 = vunpack.c.l.b16 %v797
    %v3871 = vunpack.c.h.b16 %v797
    %v3872 = vunpack.c.l.b16 %v798
    %v3873 = vunpack.c.h.b16 %v798
    %v3874 = vunpack.c.l.b16 %v799
    %v3875 = vunpack.c.h.b16 %v799
    %v3876 = vunpack.c.l.b16 %v800
    %v3877 = vunpack.c.h.b16 %v800
    %v3878 = vunpack.c.l.b16 %v801
    %v3879 = vunpack.c.h.b16 %v801
    %v3880 = vunpack.c.l.b16 %v802
    %v3881 = vunpack.c.h.b16 %v802
    %v3882 = vunpack.c.l.b16 %v803
    %v3883 = vunpack.c.h.b16 %v803
    %v3884 = vunpack.c.l.b16 %v804
    %v3885 = vunpack.c.h.b16 %v804
    %v3886 = vunpack.c.l.b16 %v805
    %v3887 = vunpack.c.h.b16 %v805
    %v3888 = vunpack.c.l.b16 %v806
    %v3889 = vunpack.c.h.b16 %v806
    %v3890 = vunpack.c.l.b16 %v807
    %v3891 = vunpack.c.h.b16 %v807
    %v3892 = vunpack.c.l.b16 %v808
    %v3893 = vunpack.c.h.b16 %v808
    %v3894 = vunpack.c.l.b16 %v809
    %v3895 = vunpack.c.h.b16 %v809
    %v3896 = vunpack.c.l.b16 %v810
    %v3897 = vunpack.c.h.b16 %v810
    %v3898 = vunpack.c.l.b16 %v811
    %v3899 = vunpack.c.h.b16 %v811
    %v3900 = vunpack.c.l.b16 %v812
    %v3901 = vunpack.c.h.b16 %v812
    %v3902 = vunpack.c.l.b16 %v813
    %v3903 = vunpack.c.h.b16 %v813
    %v3904 = vunpack.c.l.b16 %v814
    %v3905 = vunpack.c.h.b16 %v814
    %v3906 = vunpack.c.l.b16 %v815
    %v3907 = vunpack.c.h.b16 %v815
    %v3908 = vunpack.c.l.b16 %v816
    %v3909 = vunpack.c.h.b16 %v816
    %v3910 = vunpack.c.l.b16 %v817
    %v3911 = vunpack.c.h.b16 %v817
    %v3912 = vunpack.c.l.b16 %v818
    %v3913 = vunpack.c.h.b16 %v818
    %v3914 = vunpack.c.l.b16 %v819
    %v3915 = vunpack.c.h.b16 %v819
    %v3916 = vunpack.c.l.b16 %v820
    %v3917 = vunpack.c.h.b16 %v820
    %v3918 = vunpack.c.l.b16 %v821
    %v3919 = vunpack.c.h.b16 %v821
    %v3920 = vunpack.c.l.b16 %v822
    %v3921 = vunpack.c.h.b16 %v822
    %v3922 = vunpack.c.l.b16 %v823
    %v3923 = vunpack.c.h.b16 %v823
    %v3924 = vunpack.c.l.b16 %v824
    %v3925 = vunpack.c.h.b16 %v824
    %v3926 = vunpack.c.l.b16 %v825
    %v3927 = vunpack.c.h.b16 %v825
    %v3928 = vunpack.c.l.b16 %v826
    %v3929 = vunpack.c.h.b16 %v826
    %v3930 = vunpack.c.l.b16 %v827
    %v3931 = vunpack.c.h.b16 %v827
    %v3932 = vunpack.c.l.b16 %v828
    %v3933 = vunpack.c.h.b16 %v828
    %v3934 = vunpack.c.l.b16 %v829
    %v3935 = vunpack.c.h.b16 %v829
    %v3936 = vunpack.c.l.b16 %v830
    %v3937 = vunpack.c.h.b16 %v830
    %v3938 = vunpack.c.l.b16 %v831
    %v3939 = vunpack.c.h.b16 %v831
    %v3940 = vunpack.c.l.b16 %v832
    %v3941 = vunpack.c.h.b16 %v832
    %v3942 = vunpack.c.l.b16 %v833
    %v3943 = vunpack.c.h.b16 %v833
    %v3944 = vunpack.c.l.b16 %v834
    %v3945 = vunpack.c.h.b16 %v834
    %v3946 = vunpack.c.l.b16 %v835
    %v3947 = vunpack.c.h.b16 %v835
    %v3948 = vunpack.c.l.b16 %v836
    %v3949 = vunpack.c.h.b16 %v836
    %v3950 = vunpack.c.l.b16 %v837
    %v3951 = vunpack.c.h.b16 %v837
    %v3952 = vunpack.c.l.b16 %v838
    %v3953 = vunpack.c.h.b16 %v838
    %v3954 = vunpack.c.l.b16 %v839
    %v3955 = vunpack.c.h.b16 %v839
    %v3956 = vunpack.c.l.b16 %v840
    %v3957 = vunpack.c.h.b16 %v840
    %v3958 = vunpack.c.l.b16 %v841
    %v3959 = vunpack.c.h.b16 %v841
    %v3960 = vunpack.c.l.b16 %v842
    %v3961 = vunpack.c.h.b16 %v842
    %v3962 = vunpack.c.l.b16 %v843
    %v3963 = vunpack.c.h.b16 %v843
    %v3964 = vunpack.c.l.b16 %v844
    %v3965 = vunpack.c.h.b16 %v844
    %v3966 = vunpack.c.l.b16 %v845
    %v3967 = vunpack.c.h.b16 %v845
    %v3968 = vunpack.c.l.b16 %v846
    %v3969 = vunpack.c.h.b16 %v846
    %v3970 = vunpack.c.l.b16 %v847
    %v3971 = vunpack.c.h.b16 %v847
    %v3972 = vunpack.c.l.b16 %v848
    %v3973 = vunpack.c.h.b16 %v848
    %v3974 = vunpack.c.l.b16 %v849
    %v3975 = vunpack.c.h.b16 %v849
    %v3976 = vunpack.c.l.b16 %v850
    %v3977 = vunpack.c.h.b16 %v850
    %v3978 = vunpack.c.l.b16 %v851
    %v3979 = vunpack.c.h.b16 %v851
    %v3980 = vunpack.c.l.b16 %v852
    %v3981 = vunpack.c.h.b16 %v852
    %v3982 = vunpack.c.l.b16 %v853
    %v3983 = vunpack.c.h.b16 %v853
    %v3984 = vunpack.c.l.b16 %v854
    %v3985 = vunpack.c.h.b16 %v854
    %v3986 = vunpack.c.l.b16 %v855
    %v3987 = vunpack.c.h.b16 %v855
    %v3988 = vunpack.c.l.b16 %v856
    %v3989 = vunpack.c.h.b16 %v856
    %v3990 = vunpack.c.l.b16 %v857
    %v3991 = vunpack.c.h.b16 %v857
    %v3992 = vunpack.c.l.b16 %v858
    %v3993 = vunpack.c.h.b16 %v858
    %v3994 = vunpack.c.l.b16 %v859
    %v3995 = vunpack.c.h.b16 %v859
    %v3996 = vunpack.c.l.b16 %v860
    %v3997 = vunpack.c.h.b16 %v860
    %v3998 = vunpack.c.l.b16 %v861
    %v3999 = vunpack.c.h.b16 %v861
    %v4000 = vunpack.c.l.b16 %v862
    %v4001 = vunpack.c.h.b16 %v862
    %v4002 = vunpack.c.l.b16 %v863
    %v4003 = vunpack.c.h.b16 %v863
    %v4004 = vunpack.c.l.b16 %v864
    %v4005 = vunpack.c.h.b16 %v864
    %v4006 = vunpack.c.l.b16 %v865
    %v4007 = vunpack.c.h.b16 %v865
    %v4008 = vunpack.c.l.b16 %v866
    %v4009 = vunpack.c.h.b16 %v866
    %v4010 = vunpack.c.l.b16 %v867
    %v4011 = vunpack.c.h.b16 %v867
    %v4012 = vunpack.c.l.b16 %v868
    %v4013 = vunpack.c.h.b16 %v868
    %v4014 = vunpack.c.l.b16 %v869
    %v4015 = vunpack.c.h.b16 %v869
    %v4016 = vunpack.c.l.b16 %v870
    %v4017 = vunpack.c.h.b16 %v870
    %v4018 = vunpack.c.l.b16 %v871
    %v4019 = vunpack.c.h.b16 %v871
    %v4020 = vunpack.c.l.b16 %v872
    %v4021 = vunpack.c.h.b16 %v872
    %v4022 = vunpack.c.l.b16 %v873
    %v4023 = vunpack.c.h.b16 %v873
    %v4024 = vunpack.c.l.b16 %v874
    %v4025 = vunpack.c.h.b16 %v874
    %v4026 = vunpack.c.l.b16 %v875
    %v4027 = vunpack.c.h.b16 %v875
    %v4028 = vunpack.c.l.b16 %v876
    %v4029 = vunpack.c.h.b16 %v876
    %v4030 = vunpack.c.l.b16 %v877
    %v4031 = vunpack.c.h.b16 %v877
    %v4032 = vunpack.c.l.b16 %v878
    %v4033 = vunpack.c.h.b16 %v878
    %v4034 = vunpack.c.l.b16 %v879
    %v4035 = vunpack.c.h.b16 %v879
    %v4036 = vunpack.c.l.b16 %v880
    %v4037 = vunpack.c.h.b16 %v880
    %v4038 = vunpack.c.l.b16 %v881
    %v4039 = vunpack.c.h.b16 %v881
    %v4040 = vunpack.c.l.b16 %v882
    %v4041 = vunpack.c.h.b16 %v882
    %v4042 = vunpack.c.l.b16 %v883
    %v4043 = vunpack.c.h.b16 %v883
    %v4044 = vunpack.c.l.b16 %v884
    %v4045 = vunpack.c.h.b16 %v884
    %v4046 = vunpack.c.l.b16 %v885
    %v4047 = vunpack.c.h.b16 %v885
    %v4048 = vunpack.c.l.b16 %v886
    %v4049 = vunpack.c.h.b16 %v886
    %v4050 = vunpack.c.l.b16 %v887
    %v4051 = vunpack.c.h.b16 %v887
    %v4052 = vunpack.c.l.b16 %v888
    %v4053 = vunpack.c.h.b16 %v888
    %v4054 = vunpack.c.l.b16 %v889
    %v4055 = vunpack.c.h.b16 %v889
    %v4056 = vunpack.c.l.b16 %v890
    %v4057 = vunpack.c.h.b16 %v890
    %v4058 = vunpack.c.l.b16 %v891
    %v4059 = vunpack.c.h.b16 %v891
    %v4060 = vunpack.c.l.b16 %v892
    %v4061 = vunpack.c.h.b16 %v892
    %v4062 = vunpack.c.l.b16 %v893
    %v4063 = vunpack.c.h.b16 %v893
    %v4064 = vunpack.c.l.b16 %v894
    %v4065 = vunpack.c.h.b16 %v894
    %v4066 = vunpack.c.l.b16 %v895
    %v4067 = vunpack.c.h.b16 %v895
    %v4068 = vunpack.c.l.b16 %v896
    %v4069 = vunpack.c.h.b16 %v896
    %v4070 = vunpack.c.l.b16 %v897
    %v4071 = vunpack.c.h.b16 %v897
    %v4072 = vunpack.c.l.b16 %v898
    %v4073 = vunpack.c.h.b16 %v898
    %v4074 = vunpack.c.l.b16 %v899
    %v4075 = vunpack.c.h.b16 %v899
    %v4076 = vunpack.c.l.b16 %v900
    %v4077 = vunpack.c.h.b16 %v900
    %v4078 = vunpack.c.l.b16 %v901
    %v4079 = vunpack.c.h.b16 %v901
    %v4080 = vunpack.c.l.b16 %v902
    %v4081 = vunpack.c.h.b16 %v902
    %v4082 = vunpack.c.l.b16 %v903
    %v4083 = vunpack.c.h.b16 %v903
    %v4084 = vunpack.c.l.b16 %v904
    %v4085 = vunpack.c.h.b16 %v904
    %v4086 = vunpack.c.l.b16 %v905
    %v4087 = vunpack.c.h.b16 %v905
    %v4088 = vunpack.c.l.b16 %v906
    %v4089 = vunpack.c.h.b16 %v906
    %v4090 = vunpack.c.l.b16 %v907
    %v4091 = vunpack.c.h.b16 %v907
    %v4092 = vunpack.c.l.b16 %v908
    %v4093 = vunpack.c.h.b16 %v908
    %v4094 = vunpack.c.l.b16 %v909
    %v4095 = vunpack.c.h.b16 %v909
    %v4096 = vunpack.c.l.b16 %v910
    %v4097 = vunpack.c.h.b16 %v910
    %v4098 = vunpack.c.l.b16 %v911
    %v4099 = vunpack.c.h.b16 %v911
    %v4100 = vunpack.c.l.b16 %v912
    %v4101 = vunpack.c.h.b16 %v912
    %v4102 = vunpack.c.l.b16 %v913
    %v4103 = vunpack.c.h.b16 %v913
    %v4104 = vunpack.c.l.b16 %v914
    %v4105 = vunpack.c.h.b16 %v914
    %v4106 = vunpack.c.l.b16 %v915
    %v4107 = vunpack.c.h.b16 %v915
    %v4108 = vunpack.c.l.b16 %v916
    %v4109 = vunpack.c.h.b16 %v916
    %v4110 = vunpack.c.l.b16 %v917
    %v4111 = vunpack.c.h.b16 %v917
    %v4112 = vunpack.c.l.b16 %v918
    %v4113 = vunpack.c.h.b16 %v918
    %v4114 = vunpack.c.l.b16 %v919
    %v4115 = vunpack.c.h.b16 %v919
    %v4116 = vunpack.c.l.b16 %v920
    %v4117 = vunpack.c.h.b16 %v920
    %v4118 = vunpack.c.l.b16 %v921
    %v4119 = vunpack.c.h.b16 %v921
    %v4120 = vunpack.c.l.b16 %v922
    %v4121 = vunpack.c.h.b16 %v922
    %v4122 = vunpack.c.l.b16 %v923
    %v4123 = vunpack.c.h.b16 %v923
    %v4124 = vunpack.c.l.b16 %v924
    %v4125 = vunpack.c.h.b16 %v924
    %v4126 = vunpack.c.l.b16 %v925
    %v4127 = vunpack.c.h.b16 %v925
    %v4128 = vunpack.c.l.b16 %v926
    %v4129 = vunpack.c.h.b16 %v926
    %v4130 = vunpack.c.l.b16 %v927
    %v4131 = vunpack.c.h.b16 %v927
    %v4132 = vunpack.c.l.b16 %v928
    %v4133 = vunpack.c.h.b16 %v928
    %v4134 = vunpack.c.l.b16 %v929
    %v4135 = vunpack.c.h.b16 %v929
    %v4136 = vunpack.c.l.b16 %v930
    %v4137 = vunpack.c.h.b16 %v930
    %v4138 = vunpack.c.l.b16 %v931
    %v4139 = vunpack.c.h.b16 %v931
    %v4140 = vunpack.c.l.b16 %v932
    %v4141 = vunpack.c.h.b16 %v932
    %v4142 = vunpack.c.l.b16 %v933
    %v4143 = vunpack.c.h.b16 %v933
    %v4144 = vunpack.c.l.b16 %v934
    %v4145 = vunpack.c.h.b16 %v934
    %v4146 = vunpack.c.l.b16 %v935
    %v4147 = vunpack.c.h.b16 %v935
    %v4148 = vunpack.c.l.b16 %v936
    %v4149 = vunpack.c.h.b16 %v936
    %v4150 = vunpack.c.l.b16 %v937
    %v4151 = vunpack.c.h.b16 %v937
    %v4152 = vunpack.c.l.b16 %v938
    %v4153 = vunpack.c.h.b16 %v938
    %v4154 = vunpack.c.l.b16 %v939
    %v4155 = vunpack.c.h.b16 %v939
    %v4156 = vunpack.c.l.b16 %v940
    %v4157 = vunpack.c.h.b16 %v940
    %v4158 = vunpack.c.l.b16 %v941
    %v4159 = vunpack.c.h.b16 %v941
    %v4160 = vunpack.c.l.b16 %v942
    %v4161 = vunpack.c.h.b16 %v942
    %v4162 = vunpack.c.l.b16 %v943
    %v4163 = vunpack.c.h.b16 %v943
    %v4164 = vunpack.c.l.b16 %v944
    %v4165 = vunpack.c.h.b16 %v944
    %v4166 = vunpack.c.l.b16 %v945
    %v4167 = vunpack.c.h.b16 %v945
    %v4168 = vunpack.c.l.b16 %v946
    %v4169 = vunpack.c.h.b16 %v946
    %v4170 = vunpack.c.l.b16 %v947
    %v4171 = vunpack.c.h.b16 %v947
    %v4172 = vunpack.c.l.b16 %v948
    %v4173 = vunpack.c.h.b16 %v948
    %v4174 = vunpack.c.l.b16 %v949
    %v4175 = vunpack.c.h.b16 %v949
    %v4176 = vunpack.c.l.b16 %v950
    %v4177 = vunpack.c.h.b16 %v950
    %v4178 = vunpack.c.l.b16 %v951
    %v4179 = vunpack.c.h.b16 %v951
    %v4180 = vunpack.c.l.b16 %v952
    %v4181 = vunpack.c.h.b16 %v952
    %v4182 = vunpack.c.l.b16 %v953
    %v4183 = vunpack.c.h.b16 %v953
    %v4184 = vunpack.c.l.b16 %v954
    %v4185 = vunpack.c.h.b16 %v954
    %v4186 = vunpack.c.l.b16 %v955
    %v4187 = vunpack.c.h.b16 %v955
    %v4188 = vunpack.c.l.b16 %v956
    %v4189 = vunpack.c.h.b16 %v956
    %v4190 = vunpack.c.l.b16 %v957
    %v4191 = vunpack.c.h.b16 %v957
    %v4192 = vunpack.c.l.b16 %v958
    %v4193 = vunpack.c.h.b16 %v958
    %v4194 = vunpack.c.l.b16 %v959
    %v4195 = vunpack.c.h.b16 %v959
    %v4196 = vunpack.c.l.b16 %v960
    %v4197 = vunpack.c.h.b16 %v960
    %v4198 = vunpack.c.l.b16 %v961
    %v4199 = vunpack.c.h.b16 %v961
    %v4200 = vunpack.c.l.b16 %v962
    %v4201 = vunpack.c.h.b16 %v962
    %v4202 = vunpack.c.l.b16 %v963
    %v4203 = vunpack.c.h.b16 %v963
    %v4204 = vunpack.c.l.b16 %v964
    %v4205 = vunpack.c.h.b16 %v964
    %v4206 = vunpack.c.l.b16 %v965
    %v4207 = vunpack.c.h.b16 %v965
    %v4208 = vunpack.c.l.b16 %v966
    %v4209 = vunpack.c.h.b16 %v966
    %v4210 = vunpack.c.l.b16 %v967
    %v4211 = vunpack.c.h.b16 %v967
    %v4212 = vunpack.c.l.b16 %v968
    %v4213 = vunpack.c.h.b16 %v968
    %v4214 = vunpack.c.l.b16 %v969
    %v4215 = vunpack.c.h.b16 %v969
    %v4216 = vunpack.c.l.b16 %v970
    %v4217 = vunpack.c.h.b16 %v970
    %v4218 = vunpack.c.l.b16 %v971
    %v4219 = vunpack.c.h.b16 %v971
    %v4220 = vunpack.c.l.b16 %v972
    %v4221 = vunpack.c.h.b16 %v972
    %v4222 = vunpack.c.l.b16 %v973
    %v4223 = vunpack.c.h.b16 %v973
    %v4224 = vunpack.c.l.b16 %v974
    %v4225 = vunpack.c.h.b16 %v974
    %v4226 = vunpack.c.l.b16 %v975
    %v4227 = vunpack.c.h.b16 %v975
    %v4228 = vunpack.c.l.b16 %v976
    %v4229 = vunpack.c.h.b16 %v976
    %v4230 = vunpack.c.l.b16 %v977
    %v4231 = vunpack.c.h.b16 %v977
    %v4232 = vunpack.c.l.b16 %v978
    %v4233 = vunpack.c.h.b16 %v978
    %v4234 = vunpack.c.l.b16 %v979
    %v4235 = vunpack.c.h.b16 %v979
    %v4236 = vunpack.c.l.b16 %v980
    %v4237 = vunpack.c.h.b16 %v980
    %v4238 = vunpack.c.l.b16 %v981
    %v4239 = vunpack.c.h.b16 %v981
    %v4240 = vunpack.c.l.b16 %v982
    %v4241 = vunpack.c.h.b16 %v982
    %v4242 = vunpack.c.l.b16 %v983
    %v4243 = vunpack.c.h.b16 %v983
    %v4244 = vunpack.c.l.b16 %v984
    %v4245 = vunpack.c.h.b16 %v984
    %v4246 = vunpack.c.l.b16 %v985
    %v4247 = vunpack.c.h.b16 %v985
    %v4248 = vunpack.c.l.b16 %v986
    %v4249 = vunpack.c.h.b16 %v986
    %v4250 = vunpack.c.l.b16 %v987
    %v4251 = vunpack.c.h.b16 %v987
    %v4252 = vunpack.c.l.b16 %v988
    %v4253 = vunpack.c.h.b16 %v988
    %v4254 = vunpack.c.l.b16 %v989
    %v4255 = vunpack.c.h.b16 %v989
    %v4256 = vunpack.c.l.b16 %v990
    %v4257 = vunpack.c.h.b16 %v990
    %v4258 = vunpack.c.l.b16 %v991
    %v4259 = vunpack.c.h.b16 %v991
    %v4260 = vunpack.c.l.b16 %v992
    %v4261 = vunpack.c.h.b16 %v992
    %v4262 = vunpack.c.l.b16 %v993
    %v4263 = vunpack.c.h.b16 %v993
    %v4264 = vunpack.c.l.b16 %v994
    %v4265 = vunpack.c.h.b16 %v994
    %v4266 = vunpack.c.l.b16 %v995
    %v4267 = vunpack.c.h.b16 %v995
    %v4268 = vunpack.c.l.b16 %v996
    %v4269 = vunpack.c.h.b16 %v996
    %v4270 = vunpack.c.l.b16 %v997
    %v4271 = vunpack.c.h.b16 %v997
    %v4272 = vunpack.c.l.b16 %v998
    %v4273 = vunpack.c.h.b16 %v998
    %v4274 = vunpack.c.l.b16 %v999
    %v4275 = vunpack.c.h.b16 %v999
    %v4276 = vunpack.c.l.b16 %v1000
    %v4277 = vunpack.c.h.b16 %v1000
    %v4278 = vunpack.c.l.b16 %v1001
    %v4279 = vunpack.c.h.b16 %v1001
    %v4280 = vunpack.c.l.b16 %v1002
    %v4281 = vunpack.c.h.b16 %v1002
    %v4282 = vunpack.c.l.b16 %v1003
    %v4283 = vunpack.c.h.b16 %v1003
    %v4284 = vunpack.c.l.b16 %v1004
    %v4285 = vunpack.c.h.b16 %v1004
    %v4286 = vunpack.c.l.b16 %v1005
    %v4287 = vunpack.c.h.b16 %v1005
    %v4288 = vunpack.c.l.b16 %v1006
    %v4289 = vunpack.c.h.b16 %v1006
    %v4290 = vunpack.c.l.b16 %v1007
    %v4291 = vunpack.c.h.b16 %v1007
    %v4292 = vunpack.c.l.b16 %v1008
    %v4293 = vunpack.c.h.b16 %v1008
    %v4294 = vunpack.c.l.b16 %v1009
    %v4295 = vunpack.c.h.b16 %v1009
    %v4296 = vunpack.c.l.b16 %v1010
    %v4297 = vunpack.c.h.b16 %v1010
    %v4298 = vunpack.c.l.b16 %v1011
    %v4299 = vunpack.c.h.b16 %v1011
    %v4300 = vunpack.c.l.b16 %v1012
    %v4301 = vunpack.c.h.b16 %v1012
    %v4302 = vunpack.c.l.b16 %v1013
    %v4303 = vunpack.c.h.b16 %v1013
    %v4304 = vunpack.c.l.b16 %v1014
    %v4305 = vunpack.c.h.b16 %v1014
    %v4306 = vunpack.c.l.b16 %v1015
    %v4307 = vunpack.c.h.b16 %v1015
    %v4308 = vunpack.c.l.b16 %v1016
    %v4309 = vunpack.c.h.b16 %v1016
    %v4310 = vunpack.c.l.b16 %v1017
    %v4311 = vunpack.c.h.b16 %v1017
    %v4312 = vunpack.c.l.b16 %v1018
    %v4313 = vunpack.c.h.b16 %v1018
    %v4314 = vunpack.c.l.b16 %v1019
    %v4315 = vunpack.c.h.b16 %v1019
    %v4316 = vunpack.c.l.b16 %v1020
    %v4317 = vunpack.c.h.b16 %v1020
    %v4318 = vunpack.c.l.b16 %v1021
    %v4319 = vunpack.c.h.b16 %v1021
    %v4320 = vunpack.c.l.b16 %v1022
    %v4321 = vunpack.c.h.b16 %v1022
    %v4322 = vunpack.c.l.b16 %v1023
    %v4323 = vunpack.c.h.b16 %v1023
    %v4324 = vunpack.c.l.b16 %v1024
    %v4325 = vunpack.c.h.b16 %v1024
    %v4326 = vunpack.c.l.b16 %v1025
    %v4327 = vunpack.c.h.b16 %v1025
    %v4328 = vunpack.c.l.b16 %v1026
    %v4329 = vunpack.c.h.b16 %v1026
    %v4330 = vunpack.c.l.b16 %v1027
    %v4331 = vunpack.c.h.b16 %v1027
    %v4332 = vunpack.c.l.b16 %v1028
    %v4333 = vunpack.c.h.b16 %v1028
    %v4334 = vunpack.c.l.b16 %v1029
    %v4335 = vunpack.c.h.b16 %v1029
    %v4336 = vunpack.c.l.b16 %v1030
    %v4337 = vunpack.c.h.b16 %v1030
    %v4338 = vunpack.c.l.b16 %v1031
    %v4339 = vunpack.c.h.b16 %v1031
    %v4340 = vunpack.c.l.b16 %v1032
    %v4341 = vunpack.c.h.b16 %v1032
    %v4342 = vunpack.c.l.b16 %v1033
    %v4343 = vunpack.c.h.b16 %v1033
    %v4344 = vunpack.c.l.b16 %v1034
    %v4345 = vunpack.c.h.b16 %v1034
    %v4346 = vunpack.c.l.b16 %v1035
    %v4347 = vunpack.c.h.b16 %v1035
    %v4348 = vunpack.c.l.b16 %v1036
    %v4349 = vunpack.c.h.b16 %v1036
    %v4350 = vunpack.c.l.b16 %v1037
    %v4351 = vunpack.c.h.b16 %v1037
    %v4352 = vunpack.c.l.b16 %v1038
    %v4353 = vunpack.c.h.b16 %v1038
    %v4354 = vunpack.c.l.b16 %v1039
    %v4355 = vunpack.c.h.b16 %v1039
    %v4356 = vunpack.c.l.b16 %v1040
    %v4357 = vunpack.c.h.b16 %v1040
    %v4358 = vunpack.c.l.b16 %v1041
    %v4359 = vunpack.c.h.b16 %v1041
    %v4360 = vunpack.c.l.b16 %v1042
    %v4361 = vunpack.c.h.b16 %v1042
    %v4362 = vunpack.c.l.b16 %v1043
    %v4363 = vunpack.c.h.b16 %v1043
    %v4364 = vunpack.c.l.b16 %v1044
    %v4365 = vunpack.c.h.b16 %v1044
    %v4366 = vunpack.c.l.b16 %v1045
    %v4367 = vunpack.c.h.b16 %v1045
    %v4368 = vunpack.c.l.b16 %v1046
    %v4369 = vunpack.c.h.b16 %v1046
    %v4370 = vunpack.c.l.b16 %v1047
    %v4371 = vunpack.c.h.b16 %v1047
    %v4372 = vunpack.c.l.b16 %v1048
    %v4373 = vunpack.c.h.b16 %v1048
    %v4374 = vunpack.c.l.b16 %v1049
    %v4375 = vunpack.c.h.b16 %v1049
    %v4376 = vpack.c.b16 %v2332, %v2328
    %v4377 = vpack.c.b16 %v2333, %v2329
    %v4378 = vpack.c.b16 %v2334, %v2330
    %v4379 = vpack.c.b16 %v2335, %v2331
    %v4380 = vpack.c.b16 %v2340, %v2336
    %v4381 = vpack.c.b16 %v2341, %v2337
    %v4382 = vpack.c.b16 %v2342, %v2338
    %v4383 = vpack.c.b16 %v2343, %v2339
    %v4384 = vpack.c.b16 %v2348, %v2344
    %v4385 = vpack.c.b16 %v2349, %v2345
    %v4386 = vpack.c.b16 %v2350, %v2346
    %v4387 = vpack.c.b16 %v2351, %v2347
    %v4388 = vpack.c.b16 %v2356, %v2352
    %v4389 = vpack.c.b16 %v2357, %v2353
    %v4390 = vpack.c.b16 %v2358, %v2354
    %v4391 = vpack.c.b16 %v2359, %v2355
    %v4392 = vpack.c.b16 %v2364, %v2360
    %v4393 = vpack.c.b16 %v2365, %v2361
    %v4394 = vpack.c.b16 %v2366, %v2362
    %v4395 = vpack.c.b16 %v2367, %v2363
    %v4396 = vpack.c.b16 %v2372, %v2368
    %v4397 = vpack.c.b16 %v2373, %v2369
    %v4398 = vpack.c.b16 %v2374, %v2370
    %v4399 = vpack.c.b16 %v2375, %v2371
    %v4400 = vpack.c.b16 %v2380, %v2376
    %v4401 = vpack.c.b16 %v2381, %v2377
    %v4402 = vpack.c.b16 %v2382, %v2378
    %v4403 = vpack.c.b16 %v2383, %v2379
    %v4404 = vpack.c.b16 %v2388, %v2384
    %v4405 = vpack.c.b16 %v2389, %v2385
    %v4406 = vpack.c.b16 %v2390, %v2386
    %v4407 = vpack.c.b16 %v2391, %v2387
    %v4408 = vpack.c.b16 %v2396, %v2392
    %v4409 = vpack.c.b16 %v2397, %v2393
    %v4410 = vpack.c.b16 %v2398, %v2394
    %v4411 = vpack.c.b16 %v2399, %v2395
    %v4412 = vpack.c.b16 %v2404, %v2400
    %v4413 = vpack.c.b16 %v2405, %v2401
    %v4414 = vpack.c.b16 %v2406, %v2402
    %v4415 = vpack.c.b16 %v2407, %v2403
    %v4416 = vpack.c.b16 %v2412, %v2408
    %v4417 = vpack.c.b16 %v2413, %v2409
    %v4418 = vpack.c.b16 %v2414, %v2410
    %v4419 = vpack.c.b16 %v2415, %v2411
    %v4420 = vpack.c.b16 %v2420, %v2416
    %v4421 = vpack.c.b16 %v2421, %v2417
    %v4422 = vpack.c.b16 %v2422, %v2418
    %v4423 = vpack.c.b16 %v2423, %v2419
    %v4424 = vpack.c.b16 %v2428, %v2424
    %v4425 = vpack.c.b16 %v2429, %v2425
    %v4426 = vpack.c.b16 %v2430, %v2426
    %v4427 = vpack.c.b16 %v2431, %v2427
    %v4428 = vpack.c.b16 %v2436, %v2432
    %v4429 = vpack.c.b16 %v2437, %v2433
    %v4430 = vpack.c.b16 %v2438, %v2434
    %v4431 = vpack.c.b16 %v2439, %v2435
    %v4432 = vpack.c.b16 %v2444, %v2440
    %v4433 = vpack.c.b16 %v2445, %v2441
    %v4434 = vpack.c.b16 %v2446, %v2442
    %v4435 = vpack.c.b16 %v2447, %v2443
    %v4436 = vpack.c.b16 %v2452, %v2448
    %v4437 = vpack.c.b16 %v2453, %v2449
    %v4438 = vpack.c.b16 %v2454, %v2450
    %v4439 = vpack.c.b16 %v2455, %v2451
    %v4440 = vpack.c.b16 %v2460, %v2456
    %v4441 = vpack.c.b16 %v2461, %v2457
    %v4442 = vpack.c.b16 %v2462, %v2458
    %v4443 = vpack.c.b16 %v2463, %v2459
    %v4444 = vpack.c.b16 %v2468, %v2464
    %v4445 = vpack.c.b16 %v2469, %v2465
    %v4446 = vpack.c.b16 %v2470, %v2466
    %v4447 = vpack.c.b16 %v2471, %v2467
    %v4448 = vpack.c.b16 %v2476, %v2472
    %v4449 = vpack.c.b16 %v2477, %v2473
    %v4450 = vpack.c.b16 %v2478, %v2474
    %v4451 = vpack.c.b16 %v2479, %v2475
    %v4452 = vpack.c.b16 %v2484, %v2480
    %v4453 = vpack.c.b16 %v2485, %v2481
    %v4454 = vpack.c.b16 %v2486, %v2482
    %v4455 = vpack.c.b16 %v2487, %v2483
    %v4456 = vpack.c.b16 %v2492, %v2488
    %v4457 = vpack.c.b16 %v2493, %v2489
    %v4458 = vpack.c.b16 %v2494, %v2490
    %v4459 = vpack.c.b16 %v2495, %v2491
    %v4460 = vpack.c.b16 %v2500, %v2496
    %v4461 = vpack.c.b16 %v2501, %v2497
    %v4462 = vpack.c.b16 %v2502, %v2498
    %v4463 = vpack.c.b16 %v2503, %v2499
    %v4464 = vpack.c.b16 %v2508, %v2504
    %v4465 = vpack.c.b16 %v2509, %v2505
    %v4466 = vpack.c.b16 %v2510, %v2506
    %v4467 = vpack.c.b16 %v2511, %v2507
    %v4468 = vpack.c.b16 %v2516, %v2512
    %v4469 = vpack.c.b16 %v2517, %v2513
    %v4470 = vpack.c.b16 %v2518, %v2514
    %v4471 = vpack.c.b16 %v2519, %v2515
    %v4472 = vpack.c.b16 %v2524, %v2520
    %v4473 = vpack.c.b16 %v2525, %v2521
    %v4474 = vpack.c.b16 %v2526, %v2522
    %v4475 = vpack.c.b16 %v2527, %v2523
    %v4476 = vpack.c.b16 %v2532, %v2528
    %v4477 = vpack.c.b16 %v2533, %v2529
    %v4478 = vpack.c.b16 %v2534, %v2530
    %v4479 = vpack.c.b16 %v2535, %v2531
    %v4480 = vpack.c.b16 %v2540, %v2536
    %v4481 = vpack.c.b16 %v2541, %v2537
    %v4482 = vpack.c.b16 %v2542, %v2538
    %v4483 = vpack.c.b16 %v2543, %v2539
    %v4484 = vpack.c.b16 %v2548, %v2544
    %v4485 = vpack.c.b16 %v2549, %v2545
    %v4486 = vpack.c.b16 %v2550, %v2546
    %v4487 = vpack.c.b16 %v2551, %v2547
    %v4488 = vpack.c.b16 %v2556, %v2552
    %v4489 = vpack.c.b16 %v2557, %v2553
    %v4490 = vpack.c.b16 %v2558, %v2554
    %v4491 = vpack.c.b16 %v2559, %v2555
    %v4492 = vpack.c.b16 %v2564, %v2560
    %v4493 = vpack.c.b16 %v2565, %v2561
    %v4494 = vpack.c.b16 %v2566, %v2562
    %v4495 = vpack.c.b16 %v2567, %v2563
    %v4496 = vpack.c.b16 %v2572, %v2568
    %v4497 = vpack.c.b16 %v2573, %v2569
    %v4498 = vpack.c.b16 %v2574, %v2570
    %v4499 = vpack.c.b16 %v2575, %v2571
    %v4500 = vpack.c.b16 %v2580, %v2576
    %v4501 = vpack.c.b16 %v2581, %v2577
    %v4502 = vpack.c.b16 %v2582, %v2578
    %v4503 = vpack.c.b16 %v2583, %v2579
    %v4504 = vpack.c.b16 %v2588, %v2584
    %v4505 = vpack.c.b16 %v2589, %v2585
    %v4506 = vpack.c.b16 %v2590, %v2586
    %v4507 = vpack.c.b16 %v2591, %v2587
    %v4508 = vpack.c.b16 %v2596, %v2592
    %v4509 = vpack.c.b16 %v2597, %v2593
    %v4510 = vpack.c.b16 %v2598, %v2594
    %v4511 = vpack.c.b16 %v2599, %v2595
    %v4512 = vpack.c.b16 %v2604, %v2600
    %v4513 = vpack.c.b16 %v2605, %v2601
    %v4514 = vpack.c.b16 %v2606, %v2602
    %v4515 = vpack.c.b16 %v2607, %v2603
    %v4516 = vpack.c.b16 %v2612, %v2608
    %v4517 = vpack.c.b16 %v2613, %v2609
    %v4518 = vpack.c.b16 %v2614, %v2610
    %v4519 = vpack.c.b16 %v2615, %v2611
    %v4520 = vpack.c.b16 %v2620, %v2616
    %v4521 = vpack.c.b16 %v2621, %v2617
    %v4522 = vpack.c.b16 %v2622, %v2618
    %v4523 = vpack.c.b16 %v2623, %v2619
    %v4524 = vpack.c.b16 %v2628, %v2624
    %v4525 = vpack.c.b16 %v2629, %v2625
    %v4526 = vpack.c.b16 %v2630, %v2626
    %v4527 = vpack.c.b16 %v2631, %v2627
    %v4528 = vpack.c.b16 %v2636, %v2632
    %v4529 = vpack.c.b16 %v2637, %v2633
    %v4530 = vpack.c.b16 %v2638, %v2634
    %v4531 = vpack.c.b16 %v2639, %v2635
    %v4532 = vpack.c.b16 %v2644, %v2640
    %v4533 = vpack.c.b16 %v2645, %v2641
    %v4534 = vpack.c.b16 %v2646, %v2642
    %v4535 = vpack.c.b16 %v2647, %v2643
    %v4536 = vpack.c.b16 %v2652, %v2648
    %v4537 = vpack.c.b16 %v2653, %v2649
    %v4538 = vpack.c.b16 %v2654, %v2650
    %v4539 = vpack.c.b16 %v2655, %v2651
    %v4540 = vpack.c.b16 %v2660, %v2656
    %v4541 = vpack.c.b16 %v2661, %v2657
    %v4542 = vpack.c.b16 %v2662, %v2658
    %v4543 = vpack.c.b16 %v2663, %v2659
    %v4544 = vpack.c.b16 %v2668, %v2664
    %v4545 = vpack.c.b16 %v2669, %v2665
    %v4546 = vpack.c.b16 %v2670, %v2666
    %v4547 = vpack.c.b16 %v2671, %v2667
    %v4548 = vpack.c.b16 %v2676, %v2672
    %v4549 = vpack.c.b16 %v2677, %v2673
    %v4550 = vpack.c.b16 %v2678, %v2674
    %v4551 = vpack.c.b16 %v2679, %v2675
    %v4552 = vpack.c.b16 %v2684, %v2680
    %v4553 = vpack.c.b16 %v2685, %v2681
    %v4554 = vpack.c.b16 %v2686, %v2682
    %v4555 = vpack.c.b16 %v2687, %v2683
    %v4556 = vpack.c.b16 %v2692, %v2688
    %v4557 = vpack.c.b16 %v2693, %v2689
    %v4558 = vpack.c.b16 %v2694, %v2690
    %v4559 = vpack.c.b16 %v2695, %v2691
    %v4560 = vpack.c.b16 %v2700, %v2696
    %v4561 = vpack.c.b16 %v2701, %v2697
    %v4562 = vpack.c.b16 %v2702, %v2698
    %v4563 = vpack.c.b16 %v2703, %v2699
    %v4564 = vpack.c.b16 %v2708, %v2704
    %v4565 = vpack.c.b16 %v2709, %v2705
    %v4566 = vpack.c.b16 %v2710, %v2706
    %v4567 = vpack.c.b16 %v2711, %v2707
    %v4568 = vpack.c.b16 %v2716, %v2712
    %v4569 = vpack.c.b16 %v2717, %v2713
    %v4570 = vpack.c.b16 %v2718, %v2714
    %v4571 = vpack.c.b16 %v2719, %v2715
    %v4572 = vpack.c.b16 %v2724, %v2720
    %v4573 = vpack.c.b16 %v2725, %v2721
    %v4574 = vpack.c.b16 %v2726, %v2722
    %v4575 = vpack.c.b16 %v2727, %v2723
    %v4576 = vpack.c.b16 %v2732, %v2728
    %v4577 = vpack.c.b16 %v2733, %v2729
    %v4578 = vpack.c.b16 %v2734, %v2730
    %v4579 = vpack.c.b16 %v2735, %v2731
    %v4580 = vpack.c.b16 %v2740, %v2736
    %v4581 = vpack.c.b16 %v2741, %v2737
    %v4582 = vpack.c.b16 %v2742, %v2738
    %v4583 = vpack.c.b16 %v2743, %v2739
    %v4584 = vpack.c.b16 %v2748, %v2744
    %v4585 = vpack.c.b16 %v2749, %v2745
    %v4586 = vpack.c.b16 %v2750, %v2746
    %v4587 = vpack.c.b16 %v2751, %v2747
    %v4588 = vpack.c.b16 %v2756, %v2752
    %v4589 = vpack.c.b16 %v2757, %v2753
    %v4590 = vpack.c.b16 %v2758, %v2754
    %v4591 = vpack.c.b16 %v2759, %v2755
    %v4592 = vpack.c.b16 %v2764, %v2760
    %v4593 = vpack.c.b16 %v2765, %v2761
    %v4594 = vpack.c.b16 %v2766, %v2762
    %v4595 = vpack.c.b16 %v2767, %v2763
    %v4596 = vpack.c.b16 %v2772, %v2768
    %v4597 = vpack.c.b16 %v2773, %v2769
    %v4598 = vpack.c.b16 %v2774, %v2770
    %v4599 = vpack.c.b16 %v2775, %v2771
    %v4600 = vpack.c.b16 %v2780, %v2776
    %v4601 = vpack.c.b16 %v2781, %v2777
    %v4602 = vpack.c.b16 %v2782, %v2778
    %v4603 = vpack.c.b16 %v2783, %v2779
    %v4604 = vpack.c.b16 %v2788, %v2784
    %v4605 = vpack.c.b16 %v2789, %v2785
    %v4606 = vpack.c.b16 %v2790, %v2786
    %v4607 = vpack.c.b16 %v2791, %v2787
    %v4608 = vpack.c.b16 %v2796, %v2792
    %v4609 = vpack.c.b16 %v2797, %v2793
    %v4610 = vpack.c.b16 %v2798, %v2794
    %v4611 = vpack.c.b16 %v2799, %v2795
    %v4612 = vpack.c.b16 %v2804, %v2800
    %v4613 = vpack.c.b16 %v2805, %v2801
    %v4614 = vpack.c.b16 %v2806, %v2802
    %v4615 = vpack.c.b16 %v2807, %v2803
    %v4616 = vpack.c.b16 %v2812, %v2808
    %v4617 = vpack.c.b16 %v2813, %v2809
    %v4618 = vpack.c.b16 %v2814, %v2810
    %v4619 = vpack.c.b16 %v2815, %v2811
    %v4620 = vpack.c.b16 %v2820, %v2816
    %v4621 = vpack.c.b16 %v2821, %v2817
    %v4622 = vpack.c.b16 %v2822, %v2818
    %v4623 = vpack.c.b16 %v2823, %v2819
    %v4624 = vpack.c.b16 %v2828, %v2824
    %v4625 = vpack.c.b16 %v2829, %v2825
    %v4626 = vpack.c.b16 %v2830, %v2826
    %v4627 = vpack.c.b16 %v2831, %v2827
    %v4628 = vpack.c.b16 %v2836, %v2832
    %v4629 = vpack.c.b16 %v2837, %v2833
    %v4630 = vpack.c.b16 %v2838, %v2834
    %v4631 = vpack.c.b16 %v2839, %v2835
    %v4632 = vpack.c.b16 %v2844, %v2840
    %v4633 = vpack.c.b16 %v2845, %v2841
    %v4634 = vpack.c.b16 %v2846, %v2842
    %v4635 = vpack.c.b16 %v2847, %v2843
    %v4636 = vpack.c.b16 %v2852, %v2848
    %v4637 = vpack.c.b16 %v2853, %v2849
    %v4638 = vpack.c.b16 %v2854, %v2850
    %v4639 = vpack.c.b16 %v2855, %v2851
    %v4640 = vpack.c.b16 %v2860, %v2856
    %v4641 = vpack.c.b16 %v2861, %v2857
    %v4642 = vpack.c.b16 %v2862, %v2858
    %v4643 = vpack.c.b16 %v2863, %v2859
    %v4644 = vpack.c.b16 %v2868, %v2864
    %v4645 = vpack.c.b16 %v2869, %v2865
    %v4646 = vpack.c.b16 %v2870, %v2866
    %v4647 = vpack.c.b16 %v2871, %v2867
    %v4648 = vpack.c.b16 %v2876, %v2872
    %v4649 = vpack.c.b16 %v2877, %v2873
    %v4650 = vpack.c.b16 %v2878, %v2874
    %v4651 = vpack.c.b16 %v2879, %v2875
    %v4652 = vpack.c.b16 %v2884, %v2880
    %v4653 = vpack.c.b16 %v2885, %v2881
    %v4654 = vpack.c.b16 %v2886, %v2882
    %v4655 = vpack.c.b16 %v2887, %v2883
    %v4656 = vpack.c.b16 %v2892, %v2888
    %v4657 = vpack.c.b16 %v2893, %v2889
    %v4658 = vpack.c.b16 %v2894, %v2890
    %v4659 = vpack.c.b16 %v2895, %v2891
    %v4660 = vpack.c.b16 %v2900, %v2896
    %v4661 = vpack.c.b16 %v2901, %v2897
    %v4662 = vpack.c.b16 %v2902, %v2898
    %v4663 = vpack.c.b16 %v2903, %v2899
    %v4664 = vpack.c.b16 %v2908, %v2904
    %v4665 = vpack.c.b16 %v2909, %v2905
    %v4666 = vpack.c.b16 %v2910, %v2906
    %v4667 = vpack.c.b16 %v2911, %v2907
    %v4668 = vpack.c.b16 %v2916, %v2912
    %v4669 = vpack.c.b16 %v2917, %v2913
    %v4670 = vpack.c.b16 %v2918, %v2914
    %v4671 = vpack.c.b16 %v2919, %v2915
    %v4672 = vpack.c.b16 %v2924, %v2920
    %v4673 = vpack.c.b16 %v2925, %v2921
    %v4674 = vpack.c.b16 %v2926, %v2922
    %v4675 = vpack.c.b16 %v2927, %v2923
    %v4676 = vpack.c.b16 %v2932, %v2928
    %v4677 = vpack.c.b16 %v2933, %v2929
    %v4678 = vpack.c.b16 %v2934, %v2930
    %v4679 = vpack.c.b16 %v2935, %v2931
    %v4680 = vpack.c.b16 %v2940, %v2936
    %v4681 = vpack.c.b16 %v2941, %v2937
    %v4682 = vpack.c.b16 %v2942, %v2938
    %v4683 = vpack.c.b16 %v2943, %v2939
    %v4684 = vpack.c.b16 %v2948, %v2944
    %v4685 = vpack.c.b16 %v2949, %v2945
    %v4686 = vpack.c.b16 %v2950, %v2946
    %v4687 = vpack.c.b16 %v2951, %v2947
    %v4688 = vpack.c.b16 %v2956, %v2952
    %v4689 = vpack.c.b16 %v2957, %v2953
    %v4690 = vpack.c.b16 %v2958, %v2954
    %v4691 = vpack.c.b16 %v2959, %v2955
    %v4692 = vpack.c.b16 %v2964, %v2960
    %v4693 = vpack.c.b16 %v2965, %v2961
    %v4694 = vpack.c.b16 %v2966, %v2962
    %v4695 = vpack.c.b16 %v2967, %v2963
    %v4696 = vpack.c.b16 %v2972, %v2968
    %v4697 = vpack.c.b16 %v2973, %v2969
    %v4698 = vpack.c.b16 %v2974, %v2970
    %v4699 = vpack.c.b16 %v2975, %v2971
    %v4700 = vpack.c.b16 %v2980, %v2976
    %v4701 = vpack.c.b16 %v2981, %v2977
    %v4702 = vpack.c.b16 %v2982, %v2978
    %v4703 = vpack.c.b16 %v2983, %v2979
    %v4704 = vpack.c.b16 %v2988, %v2984
    %v4705 = vpack.c.b16 %v2989, %v2985
    %v4706 = vpack.c.b16 %v2990, %v2986
    %v4707 = vpack.c.b16 %v2991, %v2987
    %v4708 = vpack.c.b16 %v2996, %v2992
    %v4709 = vpack.c.b16 %v2997, %v2993
    %v4710 = vpack.c.b16 %v2998, %v2994
    %v4711 = vpack.c.b16 %v2999, %v2995
    %v4712 = vpack.c.b16 %v3004, %v3000
    %v4713 = vpack.c.b16 %v3005, %v3001
    %v4714 = vpack.c.b16 %v3006, %v3002
    %v4715 = vpack.c.b16 %v3007, %v3003
    %v4716 = vpack.c.b16 %v3012, %v3008
    %v4717 = vpack.c.b16 %v3013, %v3009
    %v4718 = vpack.c.b16 %v3014, %v3010
    %v4719 = vpack.c.b16 %v3015, %v3011
    %v4720 = vpack.c.b16 %v3020, %v3016
    %v4721 = vpack.c.b16 %v3021, %v3017
    %v4722 = vpack.c.b16 %v3022, %v3018
    %v4723 = vpack.c.b16 %v3023, %v3019
    %v4724 = vpack.c.b16 %v3028, %v3024
    %v4725 = vpack.c.b16 %v3029, %v3025
    %v4726 = vpack.c.b16 %v3030, %v3026
    %v4727 = vpack.c.b16 %v3031, %v3027
    %v4728 = vpack.c.b16 %v3036, %v3032
    %v4729 = vpack.c.b16 %v3037, %v3033
    %v4730 = vpack.c.b16 %v3038, %v3034
    %v4731 = vpack.c.b16 %v3039, %v3035
    %v4732 = vpack.c.b16 %v3044, %v3040
    %v4733 = vpack.c.b16 %v3045, %v3041
    %v4734 = vpack.c.b16 %v3046, %v3042
    %v4735 = vpack.c.b16 %v3047, %v3043
    %v4736 = vpack.c.b16 %v3052, %v3048
    %v4737 = vpack.c.b16 %v3053, %v3049
    %v4738 = vpack.c.b16 %v3054, %v3050
    %v4739 = vpack.c.b16 %v3055, %v3051
    %v4740 = vpack.c.b16 %v3060, %v3056
    %v4741 = vpack.c.b16 %v3061, %v3057
    %v4742 = vpack.c.b16 %v3062, %v3058
    %v4743 = vpack.c.b16 %v3063, %v3059
    %v4744 = vpack.c.b16 %v3068, %v3064
    %v4745 = vpack.c.b16 %v3069, %v3065
    %v4746 = vpack.c.b16 %v3070, %v3066
    %v4747 = vpack.c.b16 %v3071, %v3067
    %v4748 = vpack.c.b16 %v3076, %v3072
    %v4749 = vpack.c.b16 %v3077, %v3073
    %v4750 = vpack.c.b16 %v3078, %v3074
    %v4751 = vpack.c.b16 %v3079, %v3075
    %v4752 = vpack.c.b16 %v3084, %v3080
    %v4753 = vpack.c.b16 %v3085, %v3081
    %v4754 = vpack.c.b16 %v3086, %v3082
    %v4755 = vpack.c.b16 %v3087, %v3083
    %v4756 = vpack.c.b16 %v3092, %v3088
    %v4757 = vpack.c.b16 %v3093, %v3089
    %v4758 = vpack.c.b16 %v3094, %v3090
    %v4759 = vpack.c.b16 %v3095, %v3091
    %v4760 = vpack.c.b16 %v3100, %v3096
    %v4761 = vpack.c.b16 %v3101, %v3097
    %v4762 = vpack.c.b16 %v3102, %v3098
    %v4763 = vpack.c.b16 %v3103, %v3099
    %v4764 = vpack.c.b16 %v3108, %v3104
    %v4765 = vpack.c.b16 %v3109, %v3105
    %v4766 = vpack.c.b16 %v3110, %v3106
    %v4767 = vpack.c.b16 %v3111, %v3107
    %v4768 = vpack.c.b16 %v3116, %v3112
    %v4769 = vpack.c.b16 %v3117, %v3113
    %v4770 = vpack.c.b16 %v3118, %v3114
    %v4771 = vpack.c.b16 %v3119, %v3115
    %v4772 = vpack.c.b16 %v3124, %v3120
    %v4773 = vpack.c.b16 %v3125, %v3121
    %v4774 = vpack.c.b16 %v3126, %v3122
    %v4775 = vpack.c.b16 %v3127, %v3123
    %v4776 = vpack.c.b16 %v3132, %v3128
    %v4777 = vpack.c.b16 %v3133, %v3129
    %v4778 = vpack.c.b16 %v3134, %v3130
    %v4779 = vpack.c.b16 %v3135, %v3131
    %v4780 = vpack.c.b16 %v3140, %v3136
    %v4781 = vpack.c.b16 %v3141, %v3137
    %v4782 = vpack.c.b16 %v3142, %v3138
    %v4783 = vpack.c.b16 %v3143, %v3139
    %v4784 = vpack.c.b16 %v3148, %v3144
    %v4785 = vpack.c.b16 %v3149, %v3145
    %v4786 = vpack.c.b16 %v3150, %v3146
    %v4787 = vpack.c.b16 %v3151, %v3147
    %v4788 = vpack.c.b16 %v3156, %v3152
    %v4789 = vpack.c.b16 %v3157, %v3153
    %v4790 = vpack.c.b16 %v3158, %v3154
    %v4791 = vpack.c.b16 %v3159, %v3155
    %v4792 = vpack.c.b16 %v3164, %v3160
    %v4793 = vpack.c.b16 %v3165, %v3161
    %v4794 = vpack.c.b16 %v3166, %v3162
    %v4795 = vpack.c.b16 %v3167, %v3163
    %v4796 = vpack.c.b16 %v3172, %v3168
    %v4797 = vpack.c.b16 %v3173, %v3169
    %v4798 = vpack.c.b16 %v3174, %v3170
    %v4799 = vpack.c.b16 %v3175, %v3171
    %v4800 = vpack.c.b16 %v3180, %v3176
    %v4801 = vpack.c.b16 %v3181, %v3177
    %v4802 = vpack.c.b16 %v3182, %v3178
    %v4803 = vpack.c.b16 %v3183, %v3179
    %v4804 = vpack.c.b16 %v3188, %v3184
    %v4805 = vpack.c.b16 %v3189, %v3185
    %v4806 = vpack.c.b16 %v3190, %v3186
    %v4807 = vpack.c.b16 %v3191, %v3187
    %v4808 = vpack.c.b16 %v3196, %v3192
    %v4809 = vpack.c.b16 %v3197, %v3193
    %v4810 = vpack.c.b16 %v3198, %v3194
    %v4811 = vpack.c.b16 %v3199, %v3195
    %v4812 = vpack.c.b16 %v3204, %v3200
    %v4813 = vpack.c.b16 %v3205, %v3201
    %v4814 = vpack.c.b16 %v3206, %v3202
    %v4815 = vpack.c.b16 %v3207, %v3203
    %v4816 = vpack.c.b16 %v3212, %v3208
    %v4817 = vpack.c.b16 %v3213, %v3209
    %v4818 = vpack.c.b16 %v3214, %v3210
    %v4819 = vpack.c.b16 %v3215, %v3211
    %v4820 = vpack.c.b16 %v3220, %v3216
    %v4821 = vpack.c.b16 %v3221, %v3217
    %v4822 = vpack.c.b16 %v3222, %v3218
    %v4823 = vpack.c.b16 %v3223, %v3219
    %v4824 = vpack.c.b16 %v3228, %v3224
    %v4825 = vpack.c.b16 %v3229, %v3225
    %v4826 = vpack.c.b16 %v3230, %v3226
    %v4827 = vpack.c.b16 %v3231, %v3227
    %v4828 = vpack.c.b16 %v3236, %v3232
    %v4829 = vpack.c.b16 %v3237, %v3233
    %v4830 = vpack.c.b16 %v3238, %v3234
    %v4831 = vpack.c.b16 %v3239, %v3235
    %v4832 = vpack.c.b16 %v3244, %v3240
    %v4833 = vpack.c.b16 %v3245, %v3241
    %v4834 = vpack.c.b16 %v3246, %v3242
    %v4835 = vpack.c.b16 %v3247, %v3243
    %v4836 = vpack.c.b16 %v3252, %v3248
    %v4837 = vpack.c.b16 %v3253, %v3249
    %v4838 = vpack.c.b16 %v3254, %v3250
    %v4839 = vpack.c.b16 %v3255, %v3251
    %v4840 = vpack.c.b16 %v3260, %v3256
    %v4841 = vpack.c.b16 %v3261, %v3257
    %v4842 = vpack.c.b16 %v3262, %v3258
    %v4843 = vpack.c.b16 %v3263, %v3259
    %v4844 = vpack.c.b16 %v3268, %v3264
    %v4845 = vpack.c.b16 %v3269, %v3265
    %v4846 = vpack.c.b16 %v3270, %v3266
    %v4847 = vpack.c.b16 %v3271, %v3267
    %v4848 = vpack.c.b16 %v3276, %v3272
    %v4849 = vpack.c.b16 %v3277, %v3273
    %v4850 = vpack.c.b16 %v3278, %v3274
    %v4851 = vpack.c.b16 %v3279, %v3275
    %v4852 = vpack.c.b16 %v3284, %v3280
    %v4853 = vpack.c.b16 %v3285, %v3281
    %v4854 = vpack.c.b16 %v3286, %v3282
    %v4855 = vpack.c.b16 %v3287, %v3283
    %v4856 = vpack.c.b16 %v3292, %v3288
    %v4857 = vpack.c.b16 %v3293, %v3289
    %v4858 = vpack.c.b16 %v3294, %v3290
    %v4859 = vpack.c.b16 %v3295, %v3291
    %v4860 = vpack.c.b16 %v3300, %v3296
    %v4861 = vpack.c.b16 %v3301, %v3297
    %v4862 = vpack.c.b16 %v3302, %v3298
    %v4863 = vpack.c.b16 %v3303, %v3299
    %v4864 = vpack.c.b16 %v3308, %v3304
    %v4865 = vpack.c.b16 %v3309, %v3305
    %v4866 = vpack.c.b16 %v3310, %v3306
    %v4867 = vpack.c.b16 %v3311, %v3307
    %v4868 = vpack.c.b16 %v3316, %v3312
    %v4869 = vpack.c.b16 %v3317, %v3313
    %v4870 = vpack.c.b16 %v3318, %v3314
    %v4871 = vpack.c.b16 %v3319, %v3315
    %v4872 = vpack.c.b16 %v3324, %v3320
    %v4873 = vpack.c.b16 %v3325, %v3321
    %v4874 = vpack.c.b16 %v3326, %v3322
    %v4875 = vpack.c.b16 %v3327, %v3323
    %v4876 = vpack.c.b16 %v3332, %v3328
    %v4877 = vpack.c.b16 %v3333, %v3329
    %v4878 = vpack.c.b16 %v3334, %v3330
    %v4879 = vpack.c.b16 %v3335, %v3331
    %v4880 = vpack.c.b16 %v3340, %v3336
    %v4881 = vpack.c.b16 %v3341, %v3337
    %v4882 = vpack.c.b16 %v3342, %v3338
    %v4883 = vpack.c.b16 %v3343, %v3339
    %v4884 = vpack.c.b16 %v3348, %v3344
    %v4885 = vpack.c.b16 %v3349, %v3345
    %v4886 = vpack.c.b16 %v3350, %v3346
    %v4887 = vpack.c.b16 %v3351, %v3347
    %v4888 = vpack.c.b16 %v3356, %v3352
    %v4889 = vpack.c.b16 %v3357, %v3353
    %v4890 = vpack.c.b16 %v3358, %v3354
    %v4891 = vpack.c.b16 %v3359, %v3355
    %v4892 = vpack.c.b16 %v3364, %v3360
    %v4893 = vpack.c.b16 %v3365, %v3361
    %v4894 = vpack.c.b16 %v3366, %v3362
    %v4895 = vpack.c.b16 %v3367, %v3363
    %v4896 = vpack.c.b16 %v3372, %v3368
    %v4897 = vpack.c.b16 %v3373, %v3369
    %v4898 = vpack.c.b16 %v3374, %v3370
    %v4899 = vpack.c.b16 %v3375, %v3371
    %v4900 = vpack.c.b16 %v3380, %v3376
    %v4901 = vpack.c.b16 %v3381, %v3377
    %v4902 = vpack.c.b16 %v3382, %v3378
    %v4903 = vpack.c.b16 %v3383, %v3379
    %v4904 = vpack.c.b16 %v3388, %v3384
    %v4905 = vpack.c.b16 %v3389, %v3385
    %v4906 = vpack.c.b16 %v3390, %v3386
    %v4907 = vpack.c.b16 %v3391, %v3387
    %v4908 = vpack.c.b16 %v3396, %v3392
    %v4909 = vpack.c.b16 %v3397, %v3393
    %v4910 = vpack.c.b16 %v3398, %v3394
    %v4911 = vpack.c.b16 %v3399, %v3395
    %v4912 = vpack.c.b16 %v3404, %v3400
    %v4913 = vpack.c.b16 %v3405, %v3401
    %v4914 = vpack.c.b16 %v3406, %v3402
    %v4915 = vpack.c.b16 %v3407, %v3403
    %v4916 = vpack.c.b16 %v3412, %v3408
    %v4917 = vpack.c.b16 %v3413, %v3409
    %v4918 = vpack.c.b16 %v3414, %v3410
    %v4919 = vpack.c.b16 %v3415, %v3411
    %v4920 = vpack.c.b16 %v3420, %v3416
    %v4921 = vpack.c.b16 %v3421, %v3417
    %v4922 = vpack.c.b16 %v3422, %v3418
    %v4923 = vpack.c.b16 %v3423, %v3419
    %v4924 = vpack.c.b16 %v3428, %v3424
    %v4925 = vpack.c.b16 %v3429, %v3425
    %v4926 = vpack.c.b16 %v3430, %v3426
    %v4927 = vpack.c.b16 %v3431, %v3427
    %v4928 = vpack.c.b16 %v3436, %v3432
    %v4929 = vpack.c.b16 %v3437, %v3433
    %v4930 = vpack.c.b16 %v3438, %v3434
    %v4931 = vpack.c.b16 %v3439, %v3435
    %v4932 = vpack.c.b16 %v3444, %v3440
    %v4933 = vpack.c.b16 %v3445, %v3441
    %v4934 = vpack.c.b16 %v3446, %v3442
    %v4935 = vpack.c.b16 %v3447, %v3443
    %v4936 = vpack.c.b16 %v3452, %v3448
    %v4937 = vpack.c.b16 %v3453, %v3449
    %v4938 = vpack.c.b16 %v3454, %v3450
    %v4939 = vpack.c.b16 %v3455, %v3451
    %v4940 = vpack.c.b16 %v3460, %v3456
    %v4941 = vpack.c.b16 %v3461, %v3457
    %v4942 = vpack.c.b16 %v3462, %v3458
    %v4943 = vpack.c.b16 %v3463, %v3459
    %v4944 = vpack.c.b16 %v3468, %v3464
    %v4945 = vpack.c.b16 %v3469, %v3465
    %v4946 = vpack.c.b16 %v3470, %v3466
    %v4947 = vpack.c.b16 %v3471, %v3467
    %v4948 = vpack.c.b16 %v3476, %v3472
    %v4949 = vpack.c.b16 %v3477, %v3473
    %v4950 = vpack.c.b16 %v3478, %v3474
    %v4951 = vpack.c.b16 %v3479, %v3475
    %v4952 = vpack.c.b16 %v3484, %v3480
    %v4953 = vpack.c.b16 %v3485, %v3481
    %v4954 = vpack.c.b16 %v3486, %v3482
    %v4955 = vpack.c.b16 %v3487, %v3483
    %v4956 = vpack.c.b16 %v3492, %v3488
    %v4957 = vpack.c.b16 %v3493, %v3489
    %v4958 = vpack.c.b16 %v3494, %v3490
    %v4959 = vpack.c.b16 %v3495, %v3491
    %v4960 = vpack.c.b16 %v3500, %v3496
    %v4961 = vpack.c.b16 %v3501, %v3497
    %v4962 = vpack.c.b16 %v3502, %v3498
    %v4963 = vpack.c.b16 %v3503, %v3499
    %v4964 = vpack.c.b16 %v3508, %v3504
    %v4965 = vpack.c.b16 %v3509, %v3505
    %v4966 = vpack.c.b16 %v3510, %v3506
    %v4967 = vpack.c.b16 %v3511, %v3507
    %v4968 = vpack.c.b16 %v3516, %v3512
    %v4969 = vpack.c.b16 %v3517, %v3513
    %v4970 = vpack.c.b16 %v3518, %v3514
    %v4971 = vpack.c.b16 %v3519, %v3515
    %v4972 = vpack.c.b16 %v3524, %v3520
    %v4973 = vpack.c.b16 %v3525, %v3521
    %v4974 = vpack.c.b16 %v3526, %v3522
    %v4975 = vpack.c.b16 %v3527, %v3523
    %v4976 = vpack.c.b16 %v3532, %v3528
    %v4977 = vpack.c.b16 %v3533, %v3529
    %v4978 = vpack.c.b16 %v3534, %v3530
    %v4979 = vpack.c.b16 %v3535, %v3531
    %v4980 = vpack.c.b16 %v3540, %v3536
    %v4981 = vpack.c.b16 %v3541, %v3537
    %v4982 = vpack.c.b16 %v3542, %v3538
    %v4983 = vpack.c.b16 %v3543, %v3539
    %v4984 = vpack.c.b16 %v3548, %v3544
    %v4985 = vpack.c.b16 %v3549, %v3545
    %v4986 = vpack.c.b16 %v3550, %v3546
    %v4987 = vpack.c.b16 %v3551, %v3547
    %v4988 = vpack.c.b16 %v3556, %v3552
    %v4989 = vpack.c.b16 %v3557, %v3553
    %v4990 = vpack.c.b16 %v3558, %v3554
    %v4991 = vpack.c.b16 %v3559, %v3555
    %v4992 = vpack.c.b16 %v3564, %v3560
    %v4993 = vpack.c.b16 %v3565, %v3561
    %v4994 = vpack.c.b16 %v3566, %v3562
    %v4995 = vpack.c.b16 %v3567, %v3563
    %v4996 = vpack.c.b16 %v3572, %v3568
    %v4997 = vpack.c.b16 %v3573, %v3569
    %v4998 = vpack.c.b16 %v3574, %v3570
    %v4999 = vpack.c.b16 %v3575, %v3571
    %v5000 = vpack.c.b16 %v3580, %v3576
    %v5001 = vpack.c.b16 %v3581, %v3577
    %v5002 = vpack.c.b16 %v3582, %v3578
    %v5003 = vpack.c.b16 %v3583, %v3579
    %v5004 = vpack.c.b16 %v3588, %v3584
    %v5005 = vpack.c.b16 %v3589, %v3585
    %v5006 = vpack.c.b16 %v3590, %v3586
    %v5007 = vpack.c.b16 %v3591, %v3587
    %v5008 = vpack.c.b16 %v3596, %v3592
    %v5009 = vpack.c.b16 %v3597, %v3593
    %v5010 = vpack.c.b16 %v3598, %v3594
    %v5011 = vpack.c.b16 %v3599, %v3595
    %v5012 = vpack.c.b16 %v3604, %v3600
    %v5013 = vpack.c.b16 %v3605, %v3601
    %v5014 = vpack.c.b16 %v3606, %v3602
    %v5015 = vpack.c.b16 %v3607, %v3603
    %v5016 = vpack.c.b16 %v3612, %v3608
    %v5017 = vpack.c.b16 %v3613, %v3609
    %v5018 = vpack.c.b16 %v3614, %v3610
    %v5019 = vpack.c.b16 %v3615, %v3611
    %v5020 = vpack.c.b16 %v3620, %v3616
    %v5021 = vpack.c.b16 %v3621, %v3617
    %v5022 = vpack.c.b16 %v3622, %v3618
    %v5023 = vpack.c.b16 %v3623, %v3619
    %v5024 = vpack.c.b16 %v3628, %v3624
    %v5025 = vpack.c.b16 %v3629, %v3625
    %v5026 = vpack.c.b16 %v3630, %v3626
    %v5027 = vpack.c.b16 %v3631, %v3627
    %v5028 = vpack.c.b16 %v3636, %v3632
    %v5029 = vpack.c.b16 %v3637, %v3633
    %v5030 = vpack.c.b16 %v3638, %v3634
    %v5031 = vpack.c.b16 %v3639, %v3635
    %v5032 = vpack.c.b16 %v3644, %v3640
    %v5033 = vpack.c.b16 %v3645, %v3641
    %v5034 = vpack.c.b16 %v3646, %v3642
    %v5035 = vpack.c.b16 %v3647, %v3643
    %v5036 = vpack.c.b16 %v3652, %v3648
    %v5037 = vpack.c.b16 %v3653, %v3649
    %v5038 = vpack.c.b16 %v3654, %v3650
    %v5039 = vpack.c.b16 %v3655, %v3651
    %v5040 = vpack.c.b16 %v3660, %v3656
    %v5041 = vpack.c.b16 %v3661, %v3657
    %v5042 = vpack.c.b16 %v3662, %v3658
    %v5043 = vpack.c.b16 %v3663, %v3659
    %v5044 = vpack.c.b16 %v3668, %v3664
    %v5045 = vpack.c.b16 %v3669, %v3665
    %v5046 = vpack.c.b16 %v3670, %v3666
    %v5047 = vpack.c.b16 %v3671, %v3667
    %v5048 = vpack.c.b16 %v3676, %v3672
    %v5049 = vpack.c.b16 %v3677, %v3673
    %v5050 = vpack.c.b16 %v3678, %v3674
    %v5051 = vpack.c.b16 %v3679, %v3675
    %v5052 = vpack.c.b16 %v3684, %v3680
    %v5053 = vpack.c.b16 %v3685, %v3681
    %v5054 = vpack.c.b16 %v3686, %v3682
    %v5055 = vpack.c.b16 %v3687, %v3683
    %v5056 = vpack.c.b16 %v3692, %v3688
    %v5057 = vpack.c.b16 %v3693, %v3689
    %v5058 = vpack.c.b16 %v3694, %v3690
    %v5059 = vpack.c.b16 %v3695, %v3691
    %v5060 = vpack.c.b16 %v3700, %v3696
    %v5061 = vpack.c.b16 %v3701, %v3697
    %v5062 = vpack.c.b16 %v3702, %v3698
    %v5063 = vpack.c.b16 %v3703, %v3699
    %v5064 = vpack.c.b16 %v3708, %v3704
    %v5065 = vpack.c.b16 %v3709, %v3705
    %v5066 = vpack.c.b16 %v3710, %v3706
    %v5067 = vpack.c.b16 %v3711, %v3707
    %v5068 = vpack.c.b16 %v3716, %v3712
    %v5069 = vpack.c.b16 %v3717, %v3713
    %v5070 = vpack.c.b16 %v3718, %v3714
    %v5071 = vpack.c.b16 %v3719, %v3715
    %v5072 = vpack.c.b16 %v3724, %v3720
    %v5073 = vpack.c.b16 %v3725, %v3721
    %v5074 = vpack.c.b16 %v3726, %v3722
    %v5075 = vpack.c.b16 %v3727, %v3723
    %v5076 = vpack.c.b16 %v3732, %v3728
    %v5077 = vpack.c.b16 %v3733, %v3729
    %v5078 = vpack.c.b16 %v3734, %v3730
    %v5079 = vpack.c.b16 %v3735, %v3731
    %v5080 = vpack.c.b16 %v3740, %v3736
    %v5081 = vpack.c.b16 %v3741, %v3737
    %v5082 = vpack.c.b16 %v3742, %v3738
    %v5083 = vpack.c.b16 %v3743, %v3739
    %v5084 = vpack.c.b16 %v3748, %v3744
    %v5085 = vpack.c.b16 %v3749, %v3745
    %v5086 = vpack.c.b16 %v3750, %v3746
    %v5087 = vpack.c.b16 %v3751, %v3747
    %v5088 = vpack.c.b16 %v3756, %v3752
    %v5089 = vpack.c.b16 %v3757, %v3753
    %v5090 = vpack.c.b16 %v3758, %v3754
    %v5091 = vpack.c.b16 %v3759, %v3755
    %v5092 = vpack.c.b16 %v3764, %v3760
    %v5093 = vpack.c.b16 %v3765, %v3761
    %v5094 = vpack.c.b16 %v3766, %v3762
    %v5095 = vpack.c.b16 %v3767, %v3763
    %v5096 = vpack.c.b16 %v3772, %v3768
    %v5097 = vpack.c.b16 %v3773, %v3769
    %v5098 = vpack.c.b16 %v3774, %v3770
    %v5099 = vpack.c.b16 %v3775, %v3771
    %v5100 = vpack.c.b16 %v3780, %v3776
    %v5101 = vpack.c.b16 %v3781, %v3777
    %v5102 = vpack.c.b16 %v3782, %v3778
    %v5103 = vpack.c.b16 %v3783, %v3779
    %v5104 = vpack.c.b16 %v3788, %v3784
    %v5105 = vpack.c.b16 %v3789, %v3785
    %v5106 = vpack.c.b16 %v3790, %v3786
    %v5107 = vpack.c.b16 %v3791, %v3787
    %v5108 = vpack.c.b16 %v3796, %v3792
    %v5109 = vpack.c.b16 %v3797, %v3793
    %v5110 = vpack.c.b16 %v3798, %v3794
    %v5111 = vpack.c.b16 %v3799, %v3795
    %v5112 = vpack.c.b16 %v3804, %v3800
    %v5113 = vpack.c.b16 %v3805, %v3801
    %v5114 = vpack.c.b16 %v3806, %v3802
    %v5115 = vpack.c.b16 %v3807, %v3803
    %v5116 = vpack.c.b16 %v3812, %v3808
    %v5117 = vpack.c.b16 %v3813, %v3809
    %v5118 = vpack.c.b16 %v3814, %v3810
    %v5119 = vpack.c.b16 %v3815, %v3811
    %v5120 = vpack.c.b16 %v3820, %v3816
    %v5121 = vpack.c.b16 %v3821, %v3817
    %v5122 = vpack.c.b16 %v3822, %v3818
    %v5123 = vpack.c.b16 %v3823, %v3819
    %v5124 = vpack.c.b16 %v3828, %v3824
    %v5125 = vpack.c.b16 %v3829, %v3825
    %v5126 = vpack.c.b16 %v3830, %v3826
    %v5127 = vpack.c.b16 %v3831, %v3827
    %v5128 = vpack.c.b16 %v3836, %v3832
    %v5129 = vpack.c.b16 %v3837, %v3833
    %v5130 = vpack.c.b16 %v3838, %v3834
    %v5131 = vpack.c.b16 %v3839, %v3835
    %v5132 = vpack.c.b16 %v3844, %v3840
    %v5133 = vpack.c.b16 %v3845, %v3841
    %v5134 = vpack.c.b16 %v3846, %v3842
    %v5135 = vpack.c.b16 %v3847, %v3843
    %v5136 = vpack.c.b16 %v3852, %v3848
    %v5137 = vpack.c.b16 %v3853, %v3849
    %v5138 = vpack.c.b16 %v3854, %v3850
    %v5139 = vpack.c.b16 %v3855, %v3851
    %v5140 = vpack.c.b16 %v3860, %v3856
    %v5141 = vpack.c.b16 %v3861, %v3857
    %v5142 = vpack.c.b16 %v3862, %v3858
    %v5143 = vpack.c.b16 %v3863, %v3859
    %v5144 = vpack.c.b16 %v3868, %v3864
    %v5145 = vpack.c.b16 %v3869, %v3865
    %v5146 = vpack.c.b16 %v3870, %v3866
    %v5147 = vpack.c.b16 %v3871, %v3867
    %v5148 = vpack.c.b16 %v3876, %v3872
    %v5149 = vpack.c.b16 %v3877, %v3873
    %v5150 = vpack.c.b16 %v3878, %v3874
    %v5151 = vpack.c.b16 %v3879, %v3875
    %v5152 = vpack.c.b16 %v3884, %v3880
    %v5153 = vpack.c.b16 %v3885, %v3881
    %v5154 = vpack.c.b16 %v3886, %v3882
    %v5155 = vpack.c.b16 %v3887, %v3883
    %v5156 = vpack.c.b16 %v3892, %v3888
    %v5157 = vpack.c.b16 %v3893, %v3889
    %v5158 = vpack.c.b16 %v3894, %v3890
    %v5159 = vpack.c.b16 %v3895, %v3891
    %v5160 = vpack.c.b16 %v3900, %v3896
    %v5161 = vpack.c.b16 %v3901, %v3897
    %v5162 = vpack.c.b16 %v3902, %v3898
    %v5163 = vpack.c.b16 %v3903, %v3899
    %v5164 = vpack.c.b16 %v3908, %v3904
    %v5165 = vpack.c.b16 %v3909, %v3905
    %v5166 = vpack.c.b16 %v3910, %v3906
    %v5167 = vpack.c.b16 %v3911, %v3907
    %v5168 = vpack.c.b16 %v3916, %v3912
    %v5169 = vpack.c.b16 %v3917, %v3913
    %v5170 = vpack.c.b16 %v3918, %v3914
    %v5171 = vpack.c.b16 %v3919, %v3915
    %v5172 = vpack.c.b16 %v3924, %v3920
    %v5173 = vpack.c.b16 %v3925, %v3921
    %v5174 = vpack.c.b16 %v3926, %v3922
    %v5175 = vpack.c.b16 %v3927, %v3923
    %v5176 = vpack.c.b16 %v3932, %v3928
    %v5177 = vpack.c.b16 %v3933, %v3929
    %v5178 = vpack.c.b16 %v3934, %v3930
    %v5179 = vpack.c.b16 %v3935, %v3931
    %v5180 = vpack.c.b16 %v3940, %v3936
    %v5181 = vpack.c.b16 %v3941, %v3937
    %v5182 = vpack.c.b16 %v3942, %v3938
    %v5183 = vpack.c.b16 %v3943, %v3939
    %v5184 = vpack.c.b16 %v3948, %v3944
    %v5185 = vpack.c.b16 %v3949, %v3945
    %v5186 = vpack.c.b16 %v3950, %v3946
    %v5187 = vpack.c.b16 %v3951, %v3947
    %v5188 = vpack.c.b16 %v3956, %v3952
    %v5189 = vpack.c.b16 %v3957, %v3953
    %v5190 = vpack.c.b16 %v3958, %v3954
    %v5191 = vpack.c.b16 %v3959, %v3955
    %v5192 = vpack.c.b16 %v3964, %v3960
    %v5193 = vpack.c.b16 %v3965, %v3961
    %v5194 = vpack.c.b16 %v3966, %v3962
    %v5195 = vpack.c.b16 %v3967, %v3963
    %v5196 = vpack.c.b16 %v3972, %v3968
    %v5197 = vpack.c.b16 %v3973, %v3969
    %v5198 = vpack.c.b16 %v3974, %v3970
    %v5199 = vpack.c.b16 %v3975, %v3971
    %v5200 = vpack.c.b16 %v3980, %v3976
    %v5201 = vpack.c.b16 %v3981, %v3977
    %v5202 = vpack.c.b16 %v3982, %v3978
    %v5203 = vpack.c.b16 %v3983, %v3979
    %v5204 = vpack.c.b16 %v3988, %v3984
    %v5205 = vpack.c.b16 %v3989, %v3985
    %v5206 = vpack.c.b16 %v3990, %v3986
    %v5207 = vpack.c.b16 %v3991, %v3987
    %v5208 = vpack.c.b16 %v3996, %v3992
    %v5209 = vpack.c.b16 %v3997, %v3993
    %v5210 = vpack.c.b16 %v3998, %v3994
    %v5211 = vpack.c.b16 %v3999, %v3995
    %v5212 = vpack.c.b16 %v4004, %v4000
    %v5213 = vpack.c.b16 %v4005, %v4001
    %v5214 = vpack.c.b16 %v4006, %v4002
    %v5215 = vpack.c.b16 %v4007, %v4003
    %v5216 = vpack.c.b16 %v4012, %v4008
    %v5217 = vpack.c.b16 %v4013, %v4009
    %v5218 = vpack.c.b16 %v4014, %v4010
    %v5219 = vpack.c.b16 %v4015, %v4011
    %v5220 = vpack.c.b16 %v4020, %v4016
    %v5221 = vpack.c.b16 %v4021, %v4017
    %v5222 = vpack.c.b16 %v4022, %v4018
    %v5223 = vpack.c.b16 %v4023, %v4019
    %v5224 = vpack.c.b16 %v4028, %v4024
    %v5225 = vpack.c.b16 %v4029, %v4025
    %v5226 = vpack.c.b16 %v4030, %v4026
    %v5227 = vpack.c.b16 %v4031, %v4027
    %v5228 = vpack.c.b16 %v4036, %v4032
    %v5229 = vpack.c.b16 %v4037, %v4033
    %v5230 = vpack.c.b16 %v4038, %v4034
    %v5231 = vpack.c.b16 %v4039, %v4035
    %v5232 = vpack.c.b16 %v4044, %v4040
    %v5233 = vpack.c.b16 %v4045, %v4041
    %v5234 = vpack.c.b16 %v4046, %v4042
    %v5235 = vpack.c.b16 %v4047, %v4043
    %v5236 = vpack.c.b16 %v4052, %v4048
    %v5237 = vpack.c.b16 %v4053, %v4049
    %v5238 = vpack.c.b16 %v4054, %v4050
    %v5239 = vpack.c.b16 %v4055, %v4051
    %v5240 = vpack.c.b16 %v4060, %v4056
    %v5241 = vpack.c.b16 %v4061, %v4057
    %v5242 = vpack.c.b16 %v4062, %v4058
    %v5243 = vpack.c.b16 %v4063, %v4059
    %v5244 = vpack.c.b16 %v4068, %v4064
    %v5245 = vpack.c.b16 %v4069, %v4065
    %v5246 = vpack.c.b16 %v4070, %v4066
    %v5247 = vpack.c.b16 %v4071, %v4067
    %v5248 = vpack.c.b16 %v4076, %v4072
    %v5249 = vpack.c.b16 %v4077, %v4073
    %v5250 = vpack.c.b16 %v4078, %v4074
    %v5251 = vpack.c.b16 %v4079, %v4075
    %v5252 = vpack.c.b16 %v4084, %v4080
    %v5253 = vpack.c.b16 %v4085, %v4081
    %v5254 = vpack.c.b16 %v4086, %v4082
    %v5255 = vpack.c.b16 %v4087, %v4083
    %v5256 = vpack.c.b16 %v4092, %v4088
    %v5257 = vpack.c.b16 %v4093, %v4089
    %v5258 = vpack.c.b16 %v4094, %v4090
    %v5259 = vpack.c.b16 %v4095, %v4091
    %v5260 = vpack.c.b16 %v4100, %v4096
    %v5261 = vpack.c.b16 %v4101, %v4097
    %v5262 = vpack.c.b16 %v4102, %v4098
    %v5263 = vpack.c.b16 %v4103, %v4099
    %v5264 = vpack.c.b16 %v4108, %v4104
    %v5265 = vpack.c.b16 %v4109, %v4105
    %v5266 = vpack.c.b16 %v4110, %v4106
    %v5267 = vpack.c.b16 %v4111, %v4107
    %v5268 = vpack.c.b16 %v4116, %v4112
    %v5269 = vpack.c.b16 %v4117, %v4113
    %v5270 = vpack.c.b16 %v4118, %v4114
    %v5271 = vpack.c.b16 %v4119, %v4115
    %v5272 = vpack.c.b16 %v4124, %v4120
    %v5273 = vpack.c.b16 %v4125, %v4121
    %v5274 = vpack.c.b16 %v4126, %v4122
    %v5275 = vpack.c.b16 %v4127, %v4123
    %v5276 = vpack.c.b16 %v4132, %v4128
    %v5277 = vpack.c.b16 %v4133, %v4129
    %v5278 = vpack.c.b16 %v4134, %v4130
    %v5279 = vpack.c.b16 %v4135, %v4131
    %v5280 = vpack.c.b16 %v4140, %v4136
    %v5281 = vpack.c.b16 %v4141, %v4137
    %v5282 = vpack.c.b16 %v4142, %v4138
    %v5283 = vpack.c.b16 %v4143, %v4139
    %v5284 = vpack.c.b16 %v4148, %v4144
    %v5285 = vpack.c.b16 %v4149, %v4145
    %v5286 = vpack.c.b16 %v4150, %v4146
    %v5287 = vpack.c.b16 %v4151, %v4147
    %v5288 = vpack.c.b16 %v4156, %v4152
    %v5289 = vpack.c.b16 %v4157, %v4153
    %v5290 = vpack.c.b16 %v4158, %v4154
    %v5291 = vpack.c.b16 %v4159, %v4155
    %v5292 = vpack.c.b16 %v4164, %v4160
    %v5293 = vpack.c.b16 %v4165, %v4161
    %v5294 = vpack.c.b16 %v4166, %v4162
    %v5295 = vpack.c.b16 %v4167, %v4163
    %v5296 = vpack.c.b16 %v4172, %v4168
    %v5297 = vpack.c.b16 %v4173, %v4169
    %v5298 = vpack.c.b16 %v4174, %v4170
    %v5299 = vpack.c.b16 %v4175, %v4171
    %v5300 = vpack.c.b16 %v4180, %v4176
    %v5301 = vpack.c.b16 %v4181, %v4177
    %v5302 = vpack.c.b16 %v4182, %v4178
    %v5303 = vpack.c.b16 %v4183, %v4179
    %v5304 = vpack.c.b16 %v4188, %v4184
    %v5305 = vpack.c.b16 %v4189, %v4185
    %v5306 = vpack.c.b16 %v4190, %v4186
    %v5307 = vpack.c.b16 %v4191, %v4187
    %v5308 = vpack.c.b16 %v4196, %v4192
    %v5309 = vpack.c.b16 %v4197, %v4193
    %v5310 = vpack.c.b16 %v4198, %v4194
    %v5311 = vpack.c.b16 %v4199, %v4195
    %v5312 = vpack.c.b16 %v4204, %v4200
    %v5313 = vpack.c.b16 %v4205, %v4201
    %v5314 = vpack.c.b16 %v4206, %v4202
    %v5315 = vpack.c.b16 %v4207, %v4203
    %v5316 = vpack.c.b16 %v4212, %v4208
    %v5317 = vpack.c.b16 %v4213, %v4209
    %v5318 = vpack.c.b16 %v4214, %v4210
    %v5319 = vpack.c.b16 %v4215, %v4211
    %v5320 = vpack.c.b16 %v4220, %v4216
    %v5321 = vpack.c.b16 %v4221, %v4217
    %v5322 = vpack.c.b16 %v4222, %v4218
    %v5323 = vpack.c.b16 %v4223, %v4219
    %v5324 = vpack.c.b16 %v4228, %v4224
    %v5325 = vpack.c.b16 %v4229, %v4225
    %v5326 = vpack.c.b16 %v4230, %v4226
    %v5327 = vpack.c.b16 %v4231, %v4227
    %v5328 = vpack.c.b16 %v4236, %v4232
    %v5329 = vpack.c.b16 %v4237, %v4233
    %v5330 = vpack.c.b16 %v4238, %v4234
    %v5331 = vpack.c.b16 %v4239, %v4235
    %v5332 = vpack.c.b16 %v4244, %v4240
    %v5333 = vpack.c.b16 %v4245, %v4241
    %v5334 = vpack.c.b16 %v4246, %v4242
    %v5335 = vpack.c.b16 %v4247, %v4243
    %v5336 = vpack.c.b16 %v4252, %v4248
    %v5337 = vpack.c.b16 %v4253, %v4249
    %v5338 = vpack.c.b16 %v4254, %v4250
    %v5339 = vpack.c.b16 %v4255, %v4251
    %v5340 = vpack.c.b16 %v4260, %v4256
    %v5341 = vpack.c.b16 %v4261, %v4257
    %v5342 = vpack.c.b16 %v4262, %v4258
    %v5343 = vpack.c.b16 %v4263, %v4259
    %v5344 = vpack.c.b16 %v4268, %v4264
    %v5345 = vpack.c.b16 %v4269, %v4265
    %v5346 = vpack.c.b16 %v4270, %v4266
    %v5347 = vpack.c.b16 %v4271, %v4267
    %v5348 = vpack.c.b16 %v4276, %v4272
    %v5349 = vpack.c.b16 %v4277, %v4273
    %v5350 = vpack.c.b16 %v4278, %v4274
    %v5351 = vpack.c.b16 %v4279, %v4275
    %v5352 = vpack.c.b16 %v4284, %v4280
    %v5353 = vpack.c.b16 %v4285, %v4281
    %v5354 = vpack.c.b16 %v4286, %v4282
    %v5355 = vpack.c.b16 %v4287, %v4283
    %v5356 = vpack.c.b16 %v4292, %v4288
    %v5357 = vpack.c.b16 %v4293, %v4289
    %v5358 = vpack.c.b16 %v4294, %v4290
    %v5359 = vpack.c.b16 %v4295, %v4291
    %v5360 = vpack.c.b16 %v4300, %v4296
    %v5361 = vpack.c.b16 %v4301, %v4297
    %v5362 = vpack.c.b16 %v4302, %v4298
    %v5363 = vpack.c.b16 %v4303, %v4299
    %v5364 = vpack.c.b16 %v4308, %v4304
    %v5365 = vpack.c.b16 %v4309, %v4305
    %v5366 = vpack.c.b16 %v4310, %v4306
    %v5367 = vpack.c.b16 %v4311, %v4307
    %v5368 = vpack.c.b16 %v4316, %v4312
    %v5369 = vpack.c.b16 %v4317, %v4313
    %v5370 = vpack.c.b16 %v4318, %v4314
    %v5371 = vpack.c.b16 %v4319, %v4315
    %v5372 = vpack.c.b16 %v4324, %v4320
    %v5373 = vpack.c.b16 %v4325, %v4321
    %v5374 = vpack.c.b16 %v4326, %v4322
    %v5375 = vpack.c.b16 %v4327, %v4323
    %v5376 = vpack.c.b16 %v4332, %v4328
    %v5377 = vpack.c.b16 %v4333, %v4329
    %v5378 = vpack.c.b16 %v4334, %v4330
    %v5379 = vpack.c.b16 %v4335, %v4331
    %v5380 = vpack.c.b16 %v4340, %v4336
    %v5381 = vpack.c.b16 %v4341, %v4337
    %v5382 = vpack.c.b16 %v4342, %v4338
    %v5383 = vpack.c.b16 %v4343, %v4339
    %v5384 = vpack.c.b16 %v4348, %v4344
    %v5385 = vpack.c.b16 %v4349, %v4345
    %v5386 = vpack.c.b16 %v4350, %v4346
    %v5387 = vpack.c.b16 %v4351, %v4347
    %v5388 = vpack.c.b16 %v4356, %v4352
    %v5389 = vpack.c.b16 %v4357, %v4353
    %v5390 = vpack.c.b16 %v4358, %v4354
    %v5391 = vpack.c.b16 %v4359, %v4355
    %v5392 = vpack.c.b16 %v4364, %v4360
    %v5393 = vpack.c.b16 %v4365, %v4361
    %v5394 = vpack.c.b16 %v4366, %v4362
    %v5395 = vpack.c.b16 %v4367, %v4363
    %v5396 = vpack.c.b16 %v4372, %v4368
    %v5397 = vpack.c.b16 %v4373, %v4369
    %v5398 = vpack.c.b16 %v4374, %v4370
    %v5399 = vpack.c.b16 %v4375, %v4371
    %6424 = vmatprep.subr.bf16.mxu0 %v4377
    %6425 = vmatpush1.bf16.msra.mxu0 %v4376
    %6426 = vmatprep.subr.bf16.mxu0 %v4381
    %6427 = vmatpush1.bf16.msra.mxu0 %v4380
    %6428 = vmatprep.subr.bf16.mxu0 %v4385
    %6429 = vmatpush1.bf16.msra.mxu0 %v4384
    %6430 = vmatprep.subr.bf16.mxu0 %v4389
    %6431 = vmatpush1.bf16.msra.mxu0 %v4388
    %6432 = vmatprep.subr.bf16.mxu0 %v4393
    %6433 = vmatpush1.bf16.msra.mxu0 %v4392
    %6434 = vmatprep.subr.bf16.mxu0 %v4397
    %6435 = vmatpush1.bf16.msra.mxu0 %v4396
    %6436 = vmatprep.subr.bf16.mxu0 %v4401
    %6437 = vmatpush1.bf16.msra.mxu0 %v4400
    %6438 = vmatprep.subr.bf16.mxu0 %v4405
    %6439 = vmatpush1.bf16.msra.mxu0 %v4404
    %6440 = vmatprep.subr.bf16.mxu0 %v4409
    %6441 = vmatpush1.bf16.msra.mxu0 %v4408
    %6442 = vmatprep.subr.bf16.mxu0 %v4413
    %6443 = vmatpush1.bf16.msra.mxu0 %v4412
    %6444 = vmatprep.subr.bf16.mxu0 %v4417
    %6445 = vmatpush1.bf16.msra.mxu0 %v4416
    %6446 = vmatprep.subr.bf16.mxu0 %v4421
    %6447 = vmatpush1.bf16.msra.mxu0 %v4420
    %6448 = vmatprep.subr.bf16.mxu0 %v4425
    %6449 = vmatpush1.bf16.msra.mxu0 %v4424
    %6450 = vmatprep.subr.bf16.mxu0 %v4429
    %6451 = vmatpush1.bf16.msra.mxu0 %v4428
    %6452 = vmatprep.subr.bf16.mxu0 %v4433
    %6453 = vmatpush1.bf16.msra.mxu0 %v4432
    %6454 = vmatprep.subr.bf16.mxu0 %v4437
    %6455 = vmatpush1.bf16.msra.mxu0 %v4436
    %6456 = vmatprep.mubr.bf16.mxu0 %v1113
    %6457 = vmatmul.mubr.bf16.gmra.mrb[0].mxu0 %v1099
    %v6458 = vpop.f32.mrb[0].mxu0
    %v6459 = vadd.f32 %v1055, %v6458
    %v6460 = vpop.f32.mrb[0].mxu0
    %v6461 = vadd.f32 %v1059, %v6460
    %v6462 = vpop.f32.mrb[0].mxu0
    %v6463 = vpop.f32.mrb[0].mxu0
    %6464 = vdwg.mxu0
    %6465 = vmatprep.subr.bf16.mxu0 %v4441
    %6466 = vmatpush1.bf16.msra.mxu0 %v4440
    %6467 = vmatprep.subr.bf16.mxu0 %v4445
    %6468 = vmatpush1.bf16.msra.mxu0 %v4444
    %6469 = vmatprep.subr.bf16.mxu0 %v4449
    %6470 = vmatpush1.bf16.msra.mxu0 %v4448
    %6471 = vmatprep.subr.bf16.mxu0 %v4453
    %6472 = vmatpush1.bf16.msra.mxu0 %v4452
    %6473 = vmatprep.subr.bf16.mxu0 %v4457
    %6474 = vmatpush1.bf16.msra.mxu0 %v4456
    %6475 = vmatprep.subr.bf16.mxu0 %v4461
    %6476 = vmatpush1.bf16.msra.mxu0 %v4460
    %6477 = vmatprep.subr.bf16.mxu0 %v4465
    %6478 = vmatpush1.bf16.msra.mxu0 %v4464
    %6479 = vmatprep.subr.bf16.mxu0 %v4469
    %6480 = vmatpush1.bf16.msra.mxu0 %v4468
    %6481 = vmatprep.subr.bf16.mxu0 %v4473
    %6482 = vmatpush1.bf16.msra.mxu0 %v4472
    %6483 = vmatprep.subr.bf16.mxu0 %v4477
    %6484 = vmatpush1.bf16.msra.mxu0 %v4476
    %6485 = vmatprep.subr.bf16.mxu0 %v4481
    %6486 = vmatpush1.bf16.msra.mxu0 %v4480
    %6487 = vmatprep.subr.bf16.mxu0 %v4485
    %6488 = vmatpush1.bf16.msra.mxu0 %v4484
    %6489 = vmatprep.subr.bf16.mxu0 %v4489
    %6490 = vmatpush1.bf16.msra.mxu0 %v4488
    %6491 = vmatprep.subr.bf16.mxu0 %v4493
    %6492 = vmatpush1.bf16.msra.mxu0 %v4492
    %6493 = vmatprep.subr.bf16.mxu0 %v4497
    %6494 = vmatpush1.bf16.msra.mxu0 %v4496
    %6495 = vmatprep.subr.bf16.mxu0 %v4501
    %6496 = vmatpush1.bf16.msra.mxu0 %v4500
    %6497 = vmatprep.mubr.bf16.mxu0 %v1123
    %6498 = vmatmul.mubr.bf16.gmra.mrb[0].mxu0 %v1121
    %v6499 = vpop.f32.mrb[0].mxu0
    %v6500 = vadd.f32 %v6459, %v6499
    %v6501 = vpop.f32.mrb[0].mxu0
    %v6502 = vadd.f32 %v6461, %v6501
    %v6503 = vpop.f32.mrb[0].mxu0
    %v6504 = vpop.f32.mrb[0].mxu0
    %6505 = vdwg.mxu0
    %6506 = vmatprep.subr.bf16.mxu0 %v4505
    %6507 = vmatpush1.bf16.msra.mxu0 %v4504
    %6508 = vmatprep.subr.bf16.mxu0 %v4509
    %6509 = vmatpush1.bf16.msra.mxu0 %v4508
    %6510 = vmatprep.subr.bf16.mxu0 %v4513
    %6511 = vmatpush1.bf16.msra.mxu0 %v4512
    %6512 = vmatprep.subr.bf16.mxu0 %v4517
    %6513 = vmatpush1.bf16.msra.mxu0 %v4516
    %6514 = vmatprep.subr.bf16.mxu0 %v4521
    %6515 = vmatpush1.bf16.msra.mxu0 %v4520
    %6516 = vmatprep.subr.bf16.mxu0 %v4525
    %6517 = vmatpush1.bf16.msra.mxu0 %v4524
    %6518 = vmatprep.subr.bf16.mxu0 %v4529
    %6519 = vmatpush1.bf16.msra.mxu0 %v4528
    %6520 = vmatprep.subr.bf16.mxu0 %v4533
    %6521 = vmatpush1.bf16.msra.mxu0 %v4532
    %6522 = vmatprep.subr.bf16.mxu0 %v4537
    %6523 = vmatpush1.bf16.msra.mxu0 %v4536
    %6524 = vmatprep.subr.bf16.mxu0 %v4541
    %6525 = vmatpush1.bf16.msra.mxu0 %v4540
    %6526 = vmatprep.subr.bf16.mxu0 %v4545
    %6527 = vmatpush1.bf16.msra.mxu0 %v4544
    %6528 = vmatprep.subr.bf16.mxu0 %v4549
    %6529 = vmatpush1.bf16.msra.mxu0 %v4548
    %6530 = vmatprep.subr.bf16.mxu0 %v4553
    %6531 = vmatpush1.bf16.msra.mxu0 %v4552
    %6532 = vmatprep.subr.bf16.mxu0 %v4557
    %6533 = vmatpush1.bf16.msra.mxu0 %v4556
    %6534 = vmatprep.subr.bf16.mxu0 %v4561
    %6535 = vmatpush1.bf16.msra.mxu0 %v4560
    %6536 = vmatprep.subr.bf16.mxu0 %v4565
    %6537 = vmatpush1.bf16.msra.mxu0 %v4564
    %6538 = vmatprep.mubr.bf16.mxu0 %v1120
    %6539 = vmatmul.mubr.bf16.gmra.mrb[0].mxu0 %v1106
    %v6540 = vpop.f32.mrb[0].mxu0
    %v6541 = vadd.f32 %v6500, %v6540
    %v6542 = vpop.f32.mrb[0].mxu0
    %v6543 = vadd.f32 %v6502, %v6542
    %v6544 = vpop.f32.mrb[0].mxu0
    %v6545 = vpop.f32.mrb[0].mxu0
    %6546 = vdwg.mxu0
    %6547 = vmatprep.subr.bf16.mxu0 %v4569
    %6548 = vmatpush1.bf16.msra.mxu0 %v4568
    %6549 = vmatprep.subr.bf16.mxu0 %v4573
    %6550 = vmatpush1.bf16.msra.mxu0 %v4572
    %6551 = vmatprep.subr.bf16.mxu0 %v4577
    %6552 = vmatpush1.bf16.msra.mxu0 %v4576
    %6553 = vmatprep.subr.bf16.mxu0 %v4581
    %6554 = vmatpush1.bf16.msra.mxu0 %v4580
    %6555 = vmatprep.subr.bf16.mxu0 %v4585
    %6556 = vmatpush1.bf16.msra.mxu0 %v4584
    %6557 = vmatprep.subr.bf16.mxu0 %v4589
    %6558 = vmatpush1.bf16.msra.mxu0 %v4588
    %6559 = vmatprep.subr.bf16.mxu0 %v4593
    %6560 = vmatpush1.bf16.msra.mxu0 %v4592
    %6561 = vmatprep.subr.bf16.mxu0 %v4597
    %6562 = vmatpush1.bf16.msra.mxu0 %v4596
    %6563 = vmatprep.subr.bf16.mxu0 %v4601
    %6564 = vmatpush1.bf16.msra.mxu0 %v4600
    %6565 = vmatprep.subr.bf16.mxu0 %v4605
    %6566 = vmatpush1.bf16.msra.mxu0 %v4604
    %6567 = vmatprep.subr.bf16.mxu0 %v4609
    %6568 = vmatpush1.bf16.msra.mxu0 %v4608
    %6569 = vmatprep.subr.bf16.mxu0 %v4613
    %6570 = vmatpush1.bf16.msra.mxu0 %v4612
    %6571 = vmatprep.subr.bf16.mxu0 %v4617
    %6572 = vmatpush1.bf16.msra.mxu0 %v4616
    %6573 = vmatprep.subr.bf16.mxu0 %v4621
    %6574 = vmatpush1.bf16.msra.mxu0 %v4620
    %6575 = vmatprep.subr.bf16.mxu0 %v4625
    %6576 = vmatpush1.bf16.msra.mxu0 %v4624
    %6577 = vmatprep.subr.bf16.mxu0 %v4629
    %6578 = vmatpush1.bf16.msra.mxu0 %v4628
    %6579 = vmatprep.mubr.bf16.mxu0 %v1124
    %6580 = vmatmul.mubr.bf16.gmra.mrb[0].mxu0 %v1122
    %v6581 = vpop.f32.mrb[0].mxu0
    %v6582 = vadd.f32 %v6541, %v6581
    %v6583 = vpop.f32.mrb[0].mxu0
    %v6584 = vadd.f32 %v6543, %v6583
    %v6585 = vpop.f32.mrb[0].mxu0
    %v6586 = vpop.f32.mrb[0].mxu0
    %6587 = vdwg.mxu0
    %6588 = vmatprep.subr.bf16.mxu0 %v4633
    %6589 = vmatpush1.bf16.msra.mxu0 %v4632
    %6590 = vmatprep.subr.bf16.mxu0 %v4637
    %6591 = vmatpush1.bf16.msra.mxu0 %v4636
    %6592 = vmatprep.subr.bf16.mxu0 %v4641
    %6593 = vmatpush1.bf16.msra.mxu0 %v4640
    %6594 = vmatprep.subr.bf16.mxu0 %v4645
    %6595 = vmatpush1.bf16.msra.mxu0 %v4644
    %6596 = vmatprep.subr.bf16.mxu0 %v4649
    %6597 = vmatpush1.bf16.msra.mxu0 %v4648
    %6598 = vmatprep.subr.bf16.mxu0 %v4653
    %6599 = vmatpush1.bf16.msra.mxu0 %v4652
    %6600 = vmatprep.subr.bf16.mxu0 %v4657
    %6601 = vmatpush1.bf16.msra.mxu0 %v4656
    %6602 = vmatprep.subr.bf16.mxu0 %v4661
    %6603 = vmatpush1.bf16.msra.mxu0 %v4660
    %6604 = vmatprep.subr.bf16.mxu0 %v4665
    %6605 = vmatpush1.bf16.msra.mxu0 %v4664
    %6606 = vmatprep.subr.bf16.mxu0 %v4669
    %6607 = vmatpush1.bf16.msra.mxu0 %v4668
    %6608 = vmatprep.subr.bf16.mxu0 %v4673
    %6609 = vmatpush1.bf16.msra.mxu0 %v4672
    %6610 = vmatprep.subr.bf16.mxu0 %v4677
    %6611 = vmatpush1.bf16.msra.mxu0 %v4676
    %6612 = vmatprep.subr.bf16.mxu0 %v4681
    %6613 = vmatpush1.bf16.msra.mxu0 %v4680
    %6614 = vmatprep.subr.bf16.mxu0 %v4685
    %6615 = vmatpush1.bf16.msra.mxu0 %v4684
    %6616 = vmatprep.subr.bf16.mxu0 %v4689
    %6617 = vmatpush1.bf16.msra.mxu0 %v4688
    %6618 = vmatprep.subr.bf16.mxu0 %v4693
    %6619 = vmatpush1.bf16.msra.mxu0 %v4692
    %6620 = vmatprep.mubr.bf16.mxu0 %v1162
    %6621 = vmatmul.mubr.bf16.gmra.mrb[0].mxu0 %v1148
    %v6622 = vpop.f32.mrb[0].mxu0
    %v6623 = vadd.f32 %v6582, %v6622
    %v6624 = vpop.f32.mrb[0].mxu0
    %v6625 = vadd.f32 %v6584, %v6624
    %v6626 = vpop.f32.mrb[0].mxu0
    %v6627 = vpop.f32.mrb[0].mxu0
    %6628 = vdwg.mxu0
    %6629 = vmatprep.subr.bf16.mxu0 %v4697
    %6630 = vmatpush1.bf16.msra.mxu0 %v4696
    %6631 = vmatprep.subr.bf16.mxu0 %v4701
    %6632 = vmatpush1.bf16.msra.mxu0 %v4700
    %6633 = vmatprep.subr.bf16.mxu0 %v4705
    %6634 = vmatpush1.bf16.msra.mxu0 %v4704
    %6635 = vmatprep.subr.bf16.mxu0 %v4709
    %6636 = vmatpush1.bf16.msra.mxu0 %v4708
    %6637 = vmatprep.subr.bf16.mxu0 %v4713
    %6638 = vmatpush1.bf16.msra.mxu0 %v4712
    %6639 = vmatprep.subr.bf16.mxu0 %v4717
    %6640 = vmatpush1.bf16.msra.mxu0 %v4716
    %6641 = vmatprep.subr.bf16.mxu0 %v4721
    %6642 = vmatpush1.bf16.msra.mxu0 %v4720
    %6643 = vmatprep.subr.bf16.mxu0 %v4725
    %6644 = vmatpush1.bf16.msra.mxu0 %v4724
    %6645 = vmatprep.subr.bf16.mxu0 %v4729
    %6646 = vmatpush1.bf16.msra.mxu0 %v4728
    %6647 = vmatprep.subr.bf16.mxu0 %v4733
    %6648 = vmatpush1.bf16.msra.mxu0 %v4732
    %6649 = vmatprep.subr.bf16.mxu0 %v4737
    %6650 = vmatpush1.bf16.msra.mxu0 %v4736
    %6651 = vmatprep.subr.bf16.mxu0 %v4741
    %6652 = vmatpush1.bf16.msra.mxu0 %v4740
    %6653 = vmatprep.subr.bf16.mxu0 %v4745
    %6654 = vmatpush1.bf16.msra.mxu0 %v4744
    %6655 = vmatprep.subr.bf16.mxu0 %v4749
    %6656 = vmatpush1.bf16.msra.mxu0 %v4748
    %6657 = vmatprep.subr.bf16.mxu0 %v4753
    %6658 = vmatpush1.bf16.msra.mxu0 %v4752
    %6659 = vmatprep.subr.bf16.mxu0 %v4757
    %6660 = vmatpush1.bf16.msra.mxu0 %v4756
    %6661 = vmatprep.mubr.bf16.mxu0 %v1172
    %6662 = vmatmul.mubr.bf16.gmra.mrb[0].mxu0 %v1170
    %v6663 = vpop.f32.mrb[0].mxu0
    %v6664 = vadd.f32 %v6623, %v6663
    %v6665 = vpop.f32.mrb[0].mxu0
    %v6666 = vadd.f32 %v6625, %v6665
    %v6667 = vpop.f32.mrb[0].mxu0
    %v6668 = vpop.f32.mrb[0].mxu0
    %6669 = vdwg.mxu0
    %6670 = vmatprep.subr.bf16.mxu0 %v4761
    %6671 = vmatpush1.bf16.msra.mxu0 %v4760
    %6672 = vmatprep.subr.bf16.mxu0 %v4765
    %6673 = vmatpush1.bf16.msra.mxu0 %v4764
    %6674 = vmatprep.subr.bf16.mxu0 %v4769
    %6675 = vmatpush1.bf16.msra.mxu0 %v4768
    %6676 = vmatprep.subr.bf16.mxu0 %v4773
    %6677 = vmatpush1.bf16.msra.mxu0 %v4772
    %6678 = vmatprep.subr.bf16.mxu0 %v4777
    %6679 = vmatpush1.bf16.msra.mxu0 %v4776
    %6680 = vmatprep.subr.bf16.mxu0 %v4781
    %6681 = vmatpush1.bf16.msra.mxu0 %v4780
    %6682 = vmatprep.subr.bf16.mxu0 %v4785
    %6683 = vmatpush1.bf16.msra.mxu0 %v4784
    %6684 = vmatprep.subr.bf16.mxu0 %v4789
    %6685 = vmatpush1.bf16.msra.mxu0 %v4788
    %6686 = vmatprep.subr.bf16.mxu0 %v4793
    %6687 = vmatpush1.bf16.msra.mxu0 %v4792
    %6688 = vmatprep.subr.bf16.mxu0 %v4797
    %6689 = vmatpush1.bf16.msra.mxu0 %v4796
    %6690 = vmatprep.subr.bf16.mxu0 %v4801
    %6691 = vmatpush1.bf16.msra.mxu0 %v4800
    %6692 = vmatprep.subr.bf16.mxu0 %v4805
    %6693 = vmatpush1.bf16.msra.mxu0 %v4804
    %6694 = vmatprep.subr.bf16.mxu0 %v4809
    %6695 = vmatpush1.bf16.msra.mxu0 %v4808
    %6696 = vmatprep.subr.bf16.mxu0 %v4813
    %6697 = vmatpush1.bf16.msra.mxu0 %v4812
    %6698 = vmatprep.subr.bf16.mxu0 %v4817
    %6699 = vmatpush1.bf16.msra.mxu0 %v4816
    %6700 = vmatprep.subr.bf16.mxu0 %v4821
    %6701 = vmatpush1.bf16.msra.mxu0 %v4820
    %6702 = vmatprep.mubr.bf16.mxu0 %v1169
    %6703 = vmatmul.mubr.bf16.gmra.mrb[0].mxu0 %v1155
    %v6704 = vpop.f32.mrb[0].mxu0
    %v6705 = vadd.f32 %v6664, %v6704
    %v6706 = vpop.f32.mrb[0].mxu0
    %v6707 = vadd.f32 %v6666, %v6706
    %v6708 = vpop.f32.mrb[0].mxu0
    %v6709 = vpop.f32.mrb[0].mxu0
    %6710 = vdwg.mxu0
    %6711 = vmatprep.subr.bf16.mxu0 %v4825
    %6712 = vmatpush1.bf16.msra.mxu0 %v4824
    %6713 = vmatprep.subr.bf16.mxu0 %v4829
    %6714 = vmatpush1.bf16.msra.mxu0 %v4828
    %6715 = vmatprep.subr.bf16.mxu0 %v4833
    %6716 = vmatpush1.bf16.msra.mxu0 %v4832
    %6717 = vmatprep.subr.bf16.mxu0 %v4837
    %6718 = vmatpush1.bf16.msra.mxu0 %v4836
    %6719 = vmatprep.subr.bf16.mxu0 %v4841
    %6720 = vmatpush1.bf16.msra.mxu0 %v4840
    %6721 = vmatprep.subr.bf16.mxu0 %v4845
    %6722 = vmatpush1.bf16.msra.mxu0 %v4844
    %6723 = vmatprep.subr.bf16.mxu0 %v4849
    %6724 = vmatpush1.bf16.msra.mxu0 %v4848
    %6725 = vmatprep.subr.bf16.mxu0 %v4853
    %6726 = vmatpush1.bf16.msra.mxu0 %v4852
    %6727 = vmatprep.subr.bf16.mxu0 %v4857
    %6728 = vmatpush1.bf16.msra.mxu0 %v4856
    %6729 = vmatprep.subr.bf16.mxu0 %v4861
    %6730 = vmatpush1.bf16.msra.mxu0 %v4860
    %6731 = vmatprep.subr.bf16.mxu0 %v4865
    %6732 = vmatpush1.bf16.msra.mxu0 %v4864
    %6733 = vmatprep.subr.bf16.mxu0 %v4869
    %6734 = vmatpush1.bf16.msra.mxu0 %v4868
    %6735 = vmatprep.subr.bf16.mxu0 %v4873
    %6736 = vmatpush1.bf16.msra.mxu0 %v4872
    %6737 = vmatprep.subr.bf16.mxu0 %v4877
    %6738 = vmatpush1.bf16.msra.mxu0 %v4876
    %6739 = vmatprep.subr.bf16.mxu0 %v4881
    %6740 = vmatpush1.bf16.msra.mxu0 %v4880
    %6741 = vmatprep.subr.bf16.mxu0 %v4885
    %6742 = vmatpush1.bf16.msra.mxu0 %v4884
    %6743 = vmatprep.mubr.bf16.mxu0 %v1173
    %6744 = vmatmul.mubr.bf16.gmra.mrb[0].mxu0 %v1171
    %v6745 = vpop.f32.mrb[0].mxu0
    %v6746 = vadd.f32 %v6705, %v6745
    %v6747 = vpop.f32.mrb[0].mxu0
    %v6748 = vadd.f32 %v6707, %v6747
    %v6749 = vpop.f32.mrb[0].mxu0
    %v6750 = vpop.f32.mrb[0].mxu0
    %6751 = vdwg.mxu0
    %6752 = vmatprep.subr.bf16.mxu0 %v4889
    %6753 = vmatpush1.bf16.msra.mxu0 %v4888
    %6754 = vmatprep.subr.bf16.mxu0 %v4893
    %6755 = vmatpush1.bf16.msra.mxu0 %v4892
    %6756 = vmatprep.subr.bf16.mxu0 %v4897
    %6757 = vmatpush1.bf16.msra.mxu0 %v4896
    %6758 = vmatprep.subr.bf16.mxu0 %v4901
    %6759 = vmatpush1.bf16.msra.mxu0 %v4900
    %6760 = vmatprep.subr.bf16.mxu0 %v4905
    %6761 = vmatpush1.bf16.msra.mxu0 %v4904
    %6762 = vmatprep.subr.bf16.mxu0 %v4909
    %6763 = vmatpush1.bf16.msra.mxu0 %v4908
    %6764 = vmatprep.subr.bf16.mxu0 %v4913
    %6765 = vmatpush1.bf16.msra.mxu0 %v4912
    %6766 = vmatprep.subr.bf16.mxu0 %v4917
    %6767 = vmatpush1.bf16.msra.mxu0 %v4916
    %6768 = vmatprep.subr.bf16.mxu0 %v4921
    %6769 = vmatpush1.bf16.msra.mxu0 %v4920
    %6770 = vmatprep.subr.bf16.mxu0 %v4925
    %6771 = vmatpush1.bf16.msra.mxu0 %v4924
    %6772 = vmatprep.subr.bf16.mxu0 %v4929
    %6773 = vmatpush1.bf16.msra.mxu0 %v4928
    %6774 = vmatprep.subr.bf16.mxu0 %v4933
    %6775 = vmatpush1.bf16.msra.mxu0 %v4932
    %6776 = vmatprep.subr.bf16.mxu0 %v4937
    %6777 = vmatpush1.bf16.msra.mxu0 %v4936
    %6778 = vmatprep.subr.bf16.mxu0 %v4941
    %6779 = vmatpush1.bf16.msra.mxu0 %v4940
    %6780 = vmatprep.subr.bf16.mxu0 %v4945
    %6781 = vmatpush1.bf16.msra.mxu0 %v4944
    %6782 = vmatprep.subr.bf16.mxu0 %v4949
    %6783 = vmatpush1.bf16.msra.mxu0 %v4948
    %6784 = vmatprep.mubr.bf16.mxu0 %v1211
    %6785 = vmatmul.mubr.bf16.gmra.mrb[0].mxu0 %v1197
    %v6786 = vpop.f32.mrb[0].mxu0
    %v6787 = vadd.f32 %v6746, %v6786
    %v6788 = vpop.f32.mrb[0].mxu0
    %v6789 = vadd.f32 %v6748, %v6788
    %v6790 = vpop.f32.mrb[0].mxu0
    %v6791 = vpop.f32.mrb[0].mxu0
    %6792 = vdwg.mxu0
    %6793 = vmatprep.subr.bf16.mxu0 %v4953
    %6794 = vmatpush1.bf16.msra.mxu0 %v4952
    %6795 = vmatprep.subr.bf16.mxu0 %v4957
    %6796 = vmatpush1.bf16.msra.mxu0 %v4956
    %6797 = vmatprep.subr.bf16.mxu0 %v4961
    %6798 = vmatpush1.bf16.msra.mxu0 %v4960
    %6799 = vmatprep.subr.bf16.mxu0 %v4965
    %6800 = vmatpush1.bf16.msra.mxu0 %v4964
    %6801 = vmatprep.subr.bf16.mxu0 %v4969
    %6802 = vmatpush1.bf16.msra.mxu0 %v4968
    %6803 = vmatprep.subr.bf16.mxu0 %v4973
    %6804 = vmatpush1.bf16.msra.mxu0 %v4972
    %6805 = vmatprep.subr.bf16.mxu0 %v4977
    %6806 = vmatpush1.bf16.msra.mxu0 %v4976
    %6807 = vmatprep.subr.bf16.mxu0 %v4981
    %6808 = vmatpush1.bf16.msra.mxu0 %v4980
    %6809 = vmatprep.subr.bf16.mxu0 %v4985
    %6810 = vmatpush1.bf16.msra.mxu0 %v4984
    %6811 = vmatprep.subr.bf16.mxu0 %v4989
    %6812 = vmatpush1.bf16.msra.mxu0 %v4988
    %6813 = vmatprep.subr.bf16.mxu0 %v4993
    %6814 = vmatpush1.bf16.msra.mxu0 %v4992
    %6815 = vmatprep.subr.bf16.mxu0 %v4997
    %6816 = vmatpush1.bf16.msra.mxu0 %v4996
    %6817 = vmatprep.subr.bf16.mxu0 %v5001
    %6818 = vmatpush1.bf16.msra.mxu0 %v5000
    %6819 = vmatprep.subr.bf16.mxu0 %v5005
    %6820 = vmatpush1.bf16.msra.mxu0 %v5004
    %6821 = vmatprep.subr.bf16.mxu0 %v5009
    %6822 = vmatpush1.bf16.msra.mxu0 %v5008
    %6823 = vmatprep.subr.bf16.mxu0 %v5013
    %6824 = vmatpush1.bf16.msra.mxu0 %v5012
    %6825 = vmatprep.mubr.bf16.mxu0 %v1221
    %6826 = vmatmul.mubr.bf16.gmra.mrb[0].mxu0 %v1219
    %v6827 = vpop.f32.mrb[0].mxu0
    %v6828 = vadd.f32 %v6787, %v6827
    %v6829 = vpop.f32.mrb[0].mxu0
    %v6830 = vadd.f32 %v6789, %v6829
    %v6831 = vpop.f32.mrb[0].mxu0
    %v6832 = vpop.f32.mrb[0].mxu0
    %6833 = vdwg.mxu0
    %6834 = vmatprep.subr.bf16.mxu0 %v5017
    %6835 = vmatpush1.bf16.msra.mxu0 %v5016
    %6836 = vmatprep.subr.bf16.mxu0 %v5021
    %6837 = vmatpush1.bf16.msra.mxu0 %v5020
    %6838 = vmatprep.subr.bf16.mxu0 %v5025
    %6839 = vmatpush1.bf16.msra.mxu0 %v5024
    %6840 = vmatprep.subr.bf16.mxu0 %v5029
    %6841 = vmatpush1.bf16.msra.mxu0 %v5028
    %6842 = vmatprep.subr.bf16.mxu0 %v5033
    %6843 = vmatpush1.bf16.msra.mxu0 %v5032
    %6844 = vmatprep.subr.bf16.mxu0 %v5037
    %6845 = vmatpush1.bf16.msra.mxu0 %v5036
    %6846 = vmatprep.subr.bf16.mxu0 %v5041
    %6847 = vmatpush1.bf16.msra.mxu0 %v5040
    %6848 = vmatprep.subr.bf16.mxu0 %v5045
    %6849 = vmatpush1.bf16.msra.mxu0 %v5044
    %6850 = vmatprep.subr.bf16.mxu0 %v5049
    %6851 = vmatpush1.bf16.msra.mxu0 %v5048
    %6852 = vmatprep.subr.bf16.mxu0 %v5053
    %6853 = vmatpush1.bf16.msra.mxu0 %v5052
    %6854 = vmatprep.subr.bf16.mxu0 %v5057
    %6855 = vmatpush1.bf16.msra.mxu0 %v5056
    %6856 = vmatprep.subr.bf16.mxu0 %v5061
    %6857 = vmatpush1.bf16.msra.mxu0 %v5060
    %6858 = vmatprep.subr.bf16.mxu0 %v5065
    %6859 = vmatpush1.bf16.msra.mxu0 %v5064
    %6860 = vmatprep.subr.bf16.mxu0 %v5069
    %6861 = vmatpush1.bf16.msra.mxu0 %v5068
    %6862 = vmatprep.subr.bf16.mxu0 %v5073
    %6863 = vmatpush1.bf16.msra.mxu0 %v5072
    %6864 = vmatprep.subr.bf16.mxu0 %v5077
    %6865 = vmatpush1.bf16.msra.mxu0 %v5076
    %6866 = vmatprep.mubr.bf16.mxu0 %v1218
    %6867 = vmatmul.mubr.bf16.gmra.mrb[0].mxu0 %v1204
    %v6868 = vpop.f32.mrb[0].mxu0
    %v6869 = vadd.f32 %v6828, %v6868
    %v6870 = vpop.f32.mrb[0].mxu0
    %v6871 = vadd.f32 %v6830, %v6870
    %v6872 = vpop.f32.mrb[0].mxu0
    %v6873 = vpop.f32.mrb[0].mxu0
    %6874 = vdwg.mxu0
    %6875 = vmatprep.subr.bf16.mxu0 %v5081
    %6876 = vmatpush1.bf16.msra.mxu0 %v5080
    %6877 = vmatprep.subr.bf16.mxu0 %v5085
    %6878 = vmatpush1.bf16.msra.mxu0 %v5084
    %6879 = vmatprep.subr.bf16.mxu0 %v5089
    %6880 = vmatpush1.bf16.msra.mxu0 %v5088
    %6881 = vmatprep.subr.bf16.mxu0 %v5093
    %6882 = vmatpush1.bf16.msra.mxu0 %v5092
    %6883 = vmatprep.subr.bf16.mxu0 %v5097
    %6884 = vmatpush1.bf16.msra.mxu0 %v5096
    %6885 = vmatprep.subr.bf16.mxu0 %v5101
    %6886 = vmatpush1.bf16.msra.mxu0 %v5100
    %6887 = vmatprep.subr.bf16.mxu0 %v5105
    %6888 = vmatpush1.bf16.msra.mxu0 %v5104
    %6889 = vmatprep.subr.bf16.mxu0 %v5109
    %6890 = vmatpush1.bf16.msra.mxu0 %v5108
    %6891 = vmatprep.subr.bf16.mxu0 %v5113
    %6892 = vmatpush1.bf16.msra.mxu0 %v5112
    %6893 = vmatprep.subr.bf16.mxu0 %v5117
    %6894 = vmatpush1.bf16.msra.mxu0 %v5116
    %6895 = vmatprep.subr.bf16.mxu0 %v5121
    %6896 = vmatpush1.bf16.msra.mxu0 %v5120
    %6897 = vmatprep.subr.bf16.mxu0 %v5125
    %6898 = vmatpush1.bf16.msra.mxu0 %v5124
    %6899 = vmatprep.subr.bf16.mxu0 %v5129
    %6900 = vmatpush1.bf16.msra.mxu0 %v5128
    %6901 = vmatprep.subr.bf16.mxu0 %v5133
    %6902 = vmatpush1.bf16.msra.mxu0 %v5132
    %6903 = vmatprep.subr.bf16.mxu0 %v5137
    %6904 = vmatpush1.bf16.msra.mxu0 %v5136
    %6905 = vmatprep.subr.bf16.mxu0 %v5141
    %6906 = vmatpush1.bf16.msra.mxu0 %v5140
    %6907 = vmatprep.mubr.bf16.mxu0 %v1222
    %6908 = vmatmul.mubr.bf16.gmra.mrb[0].mxu0 %v1220
    %v6909 = vpop.f32.mrb[0].mxu0
    %v6910 = vadd.f32 %v6869, %v6909
    %v6911 = vpop.f32.mrb[0].mxu0
    %v6912 = vadd.f32 %v6871, %v6911
    %v6913 = vpop.f32.mrb[0].mxu0
    %v6914 = vpop.f32.mrb[0].mxu0
    %6915 = vdwg.mxu0
    %6916 = vmatprep.subr.bf16.mxu0 %v5145
    %6917 = vmatpush1.bf16.msra.mxu0 %v5144
    %6918 = vmatprep.subr.bf16.mxu0 %v5149
    %6919 = vmatpush1.bf16.msra.mxu0 %v5148
    %6920 = vmatprep.subr.bf16.mxu0 %v5153
    %6921 = vmatpush1.bf16.msra.mxu0 %v5152
    %6922 = vmatprep.subr.bf16.mxu0 %v5157
    %6923 = vmatpush1.bf16.msra.mxu0 %v5156
    %6924 = vmatprep.subr.bf16.mxu0 %v5161
    %6925 = vmatpush1.bf16.msra.mxu0 %v5160
    %6926 = vmatprep.subr.bf16.mxu0 %v5165
    %6927 = vmatpush1.bf16.msra.mxu0 %v5164
    %6928 = vmatprep.subr.bf16.mxu0 %v5169
    %6929 = vmatpush1.bf16.msra.mxu0 %v5168
    %6930 = vmatprep.subr.bf16.mxu0 %v5173
    %6931 = vmatpush1.bf16.msra.mxu0 %v5172
    %6932 = vmatprep.subr.bf16.mxu0 %v5177
    %6933 = vmatpush1.bf16.msra.mxu0 %v5176
    %6934 = vmatprep.subr.bf16.mxu0 %v5181
    %6935 = vmatpush1.bf16.msra.mxu0 %v5180
    %6936 = vmatprep.subr.bf16.mxu0 %v5185
    %6937 = vmatpush1.bf16.msra.mxu0 %v5184
    %6938 = vmatprep.subr.bf16.mxu0 %v5189
    %6939 = vmatpush1.bf16.msra.mxu0 %v5188
    %6940 = vmatprep.subr.bf16.mxu0 %v5193
    %6941 = vmatpush1.bf16.msra.mxu0 %v5192
    %6942 = vmatprep.subr.bf16.mxu0 %v5197
    %6943 = vmatpush1.bf16.msra.mxu0 %v5196
    %6944 = vmatprep.subr.bf16.mxu0 %v5201
    %6945 = vmatpush1.bf16.msra.mxu0 %v5200
    %6946 = vmatprep.subr.bf16.mxu0 %v5205
    %6947 = vmatpush1.bf16.msra.mxu0 %v5204
    %6948 = vmatprep.mubr.bf16.mxu0 %v1260
    %6949 = vmatmul.mubr.bf16.gmra.mrb[0].mxu0 %v1246
    %v6950 = vpop.f32.mrb[0].mxu0
    %v6951 = vadd.f32 %v6910, %v6950
    %v6952 = vpop.f32.mrb[0].mxu0
    %v6953 = vadd.f32 %v6912, %v6952
    %v6954 = vpop.f32.mrb[0].mxu0
    %v6955 = vpop.f32.mrb[0].mxu0
    %6956 = vdwg.mxu0
    %6957 = vmatprep.subr.bf16.mxu0 %v5209
    %6958 = vmatpush1.bf16.msra.mxu0 %v5208
    %6959 = vmatprep.subr.bf16.mxu0 %v5213
    %6960 = vmatpush1.bf16.msra.mxu0 %v5212
    %6961 = vmatprep.subr.bf16.mxu0 %v5217
    %6962 = vmatpush1.bf16.msra.mxu0 %v5216
    %6963 = vmatprep.subr.bf16.mxu0 %v5221
    %6964 = vmatpush1.bf16.msra.mxu0 %v5220
    %6965 = vmatprep.subr.bf16.mxu0 %v5225
    %6966 = vmatpush1.bf16.msra.mxu0 %v5224
    %6967 = vmatprep.subr.bf16.mxu0 %v5229
    %6968 = vmatpush1.bf16.msra.mxu0 %v5228
    %6969 = vmatprep.subr.bf16.mxu0 %v5233
    %6970 = vmatpush1.bf16.msra.mxu0 %v5232
    %6971 = vmatprep.subr.bf16.mxu0 %v5237
    %6972 = vmatpush1.bf16.msra.mxu0 %v5236
    %6973 = vmatprep.subr.bf16.mxu0 %v5241
    %6974 = vmatpush1.bf16.msra.mxu0 %v5240
    %6975 = vmatprep.subr.bf16.mxu0 %v5245
    %6976 = vmatpush1.bf16.msra.mxu0 %v5244
    %6977 = vmatprep.subr.bf16.mxu0 %v5249
    %6978 = vmatpush1.bf16.msra.mxu0 %v5248
    %6979 = vmatprep.subr.bf16.mxu0 %v5253
    %6980 = vmatpush1.bf16.msra.mxu0 %v5252
    %6981 = vmatprep.subr.bf16.mxu0 %v5257
    %6982 = vmatpush1.bf16.msra.mxu0 %v5256
    %6983 = vmatprep.subr.bf16.mxu0 %v5261
    %6984 = vmatpush1.bf16.msra.mxu0 %v5260
    %6985 = vmatprep.subr.bf16.mxu0 %v5265
    %6986 = vmatpush1.bf16.msra.mxu0 %v5264
    %6987 = vmatprep.subr.bf16.mxu0 %v5269
    %6988 = vmatpush1.bf16.msra.mxu0 %v5268
    %6989 = vmatprep.mubr.bf16.mxu0 %v1270
    %6990 = vmatmul.mubr.bf16.gmra.mrb[0].mxu0 %v1268
    %v6991 = vpop.f32.mrb[0].mxu0
    %v6992 = vadd.f32 %v6951, %v6991
    %v6993 = vpop.f32.mrb[0].mxu0
    %v6994 = vadd.f32 %v6953, %v6993
    %v6995 = vpop.f32.mrb[0].mxu0
    %v6996 = vpop.f32.mrb[0].mxu0
    %6997 = vdwg.mxu0
    %6998 = vmatprep.subr.bf16.mxu0 %v5273
    %6999 = vmatpush1.bf16.msra.mxu0 %v5272
    %7000 = vmatprep.subr.bf16.mxu0 %v5277
    %7001 = vmatpush1.bf16.msra.mxu0 %v5276
    %7002 = vmatprep.subr.bf16.mxu0 %v5281
    %7003 = vmatpush1.bf16.msra.mxu0 %v5280
    %7004 = vmatprep.subr.bf16.mxu0 %v5285
    %7005 = vmatpush1.bf16.msra.mxu0 %v5284
    %7006 = vmatprep.subr.bf16.mxu0 %v5289
    %7007 = vmatpush1.bf16.msra.mxu0 %v5288
    %7008 = vmatprep.subr.bf16.mxu0 %v5293
    %7009 = vmatpush1.bf16.msra.mxu0 %v5292
    %7010 = vmatprep.subr.bf16.mxu0 %v5297
    %7011 = vmatpush1.bf16.msra.mxu0 %v5296
    %7012 = vmatprep.subr.bf16.mxu0 %v5301
    %7013 = vmatpush1.bf16.msra.mxu0 %v5300
    %7014 = vmatprep.subr.bf16.mxu0 %v5305
    %7015 = vmatpush1.bf16.msra.mxu0 %v5304
    %7016 = vmatprep.subr.bf16.mxu0 %v5309
    %7017 = vmatpush1.bf16.msra.mxu0 %v5308
    %7018 = vmatprep.subr.bf16.mxu0 %v5313
    %7019 = vmatpush1.bf16.msra.mxu0 %v5312
    %7020 = vmatprep.subr.bf16.mxu0 %v5317
    %7021 = vmatpush1.bf16.msra.mxu0 %v5316
    %7022 = vmatprep.subr.bf16.mxu0 %v5321
    %7023 = vmatpush1.bf16.msra.mxu0 %v5320
    %7024 = vmatprep.subr.bf16.mxu0 %v5325
    %7025 = vmatpush1.bf16.msra.mxu0 %v5324
    %7026 = vmatprep.subr.bf16.mxu0 %v5329
    %7027 = vmatpush1.bf16.msra.mxu0 %v5328
    %7028 = vmatprep.subr.bf16.mxu0 %v5333
    %7029 = vmatpush1.bf16.msra.mxu0 %v5332
    %7030 = vmatprep.mubr.bf16.mxu0 %v1267
    %7031 = vmatmul.mubr.bf16.gmra.mrb[0].mxu0 %v1253
    %v7032 = vpop.f32.mrb[0].mxu0
    %v7033 = vadd.f32 %v6992, %v7032
    %v7034 = vpop.f32.mrb[0].mxu0
    %v7035 = vadd.f32 %v6994, %v7034
    %v7036 = vpop.f32.mrb[0].mxu0
    %v7037 = vpop.f32.mrb[0].mxu0
    %7038 = vdwg.mxu0
    %7039 = vmatprep.subr.bf16.mxu0 %v5337
    %7040 = vmatpush1.bf16.msra.mxu0 %v5336
    %7041 = vmatprep.subr.bf16.mxu0 %v5341
    %7042 = vmatpush1.bf16.msra.mxu0 %v5340
    %7043 = vmatprep.subr.bf16.mxu0 %v5345
    %7044 = vmatpush1.bf16.msra.mxu0 %v5344
    %7045 = vmatprep.subr.bf16.mxu0 %v5349
    %7046 = vmatpush1.bf16.msra.mxu0 %v5348
    %7047 = vmatprep.subr.bf16.mxu0 %v5353
    %7048 = vmatpush1.bf16.msra.mxu0 %v5352
    %7049 = vmatprep.subr.bf16.mxu0 %v5357
    %7050 = vmatpush1.bf16.msra.mxu0 %v5356
    %7051 = vmatprep.subr.bf16.mxu0 %v5361
    %7052 = vmatpush1.bf16.msra.mxu0 %v5360
    %7053 = vmatprep.subr.bf16.mxu0 %v5365
    %7054 = vmatpush1.bf16.msra.mxu0 %v5364
    %7055 = vmatprep.subr.bf16.mxu0 %v5369
    %7056 = vmatpush1.bf16.msra.mxu0 %v5368
    %7057 = vmatprep.subr.bf16.mxu0 %v5373
    %7058 = vmatpush1.bf16.msra.mxu0 %v5372
    %7059 = vmatprep.subr.bf16.mxu0 %v5377
    %7060 = vmatpush1.bf16.msra.mxu0 %v5376
    %7061 = vmatprep.subr.bf16.mxu0 %v5381
    %7062 = vmatpush1.bf16.msra.mxu0 %v5380
    %7063 = vmatprep.subr.bf16.mxu0 %v5385
    %7064 = vmatpush1.bf16.msra.mxu0 %v5384
    %7065 = vmatprep.subr.bf16.mxu0 %v5389
    %7066 = vmatpush1.bf16.msra.mxu0 %v5388
    %7067 = vmatprep.subr.bf16.mxu0 %v5393
    %7068 = vmatpush1.bf16.msra.mxu0 %v5392
    %7069 = vmatprep.subr.bf16.mxu0 %v5397
    %7070 = vmatpush1.bf16.msra.mxu0 %v5396
    %7071 = vmatprep.mubr.bf16.mxu0 %v1271
    %7072 = vmatmul.mubr.bf16.gmra.mrb[0].mxu0 %v1269
    %v7073 = vpop.f32.mrb[0].mxu0
    %v7074 = vadd.f32 %v7033, %v7073
    %v7075 = vpop.f32.mrb[0].mxu0
    %v7076 = vadd.f32 %v7035, %v7075
    %v7077 = vpop.f32.mrb[0].mxu0
    %v7078 = vpop.f32.mrb[0].mxu0
    %7079 = vdwg.mxu0
    %7080 = vmatprep.subr.bf16.mxu0 %v4379
    %7081 = vmatpush1.bf16.msra.mxu0 %v4378
    %7082 = vmatprep.subr.bf16.mxu0 %v4383
    %7083 = vmatpush1.bf16.msra.mxu0 %v4382
    %7084 = vmatprep.subr.bf16.mxu0 %v4387
    %7085 = vmatpush1.bf16.msra.mxu0 %v4386
    %7086 = vmatprep.subr.bf16.mxu0 %v4391
    %7087 = vmatpush1.bf16.msra.mxu0 %v4390
    %7088 = vmatprep.subr.bf16.mxu0 %v4395
    %7089 = vmatpush1.bf16.msra.mxu0 %v4394
    %7090 = vmatprep.subr.bf16.mxu0 %v4399
    %7091 = vmatpush1.bf16.msra.mxu0 %v4398
    %7092 = vmatprep.subr.bf16.mxu0 %v4403
    %7093 = vmatpush1.bf16.msra.mxu0 %v4402
    %7094 = vmatprep.subr.bf16.mxu0 %v4407
    %7095 = vmatpush1.bf16.msra.mxu0 %v4406
    %7096 = vmatprep.subr.bf16.mxu0 %v4411
    %7097 = vmatpush1.bf16.msra.mxu0 %v4410
    %7098 = vmatprep.subr.bf16.mxu0 %v4415
    %7099 = vmatpush1.bf16.msra.mxu0 %v4414
    %7100 = vmatprep.subr.bf16.mxu0 %v4419
    %7101 = vmatpush1.bf16.msra.mxu0 %v4418
    %7102 = vmatprep.subr.bf16.mxu0 %v4423
    %7103 = vmatpush1.bf16.msra.mxu0 %v4422
    %7104 = vmatprep.subr.bf16.mxu0 %v4427
    %7105 = vmatpush1.bf16.msra.mxu0 %v4426
    %7106 = vmatprep.subr.bf16.mxu0 %v4431
    %7107 = vmatpush1.bf16.msra.mxu0 %v4430
    %7108 = vmatprep.subr.bf16.mxu0 %v4435
    %7109 = vmatpush1.bf16.msra.mxu0 %v4434
    %7110 = vmatprep.subr.bf16.mxu0 %v4439
    %7111 = vmatpush1.bf16.msra.mxu0 %v4438
    %7112 = vmatprep.mubr.bf16.mxu0 %v1113
    %7113 = vmatmul.mubr.bf16.gmra.mrb[0].mxu0 %v1099
    %v7114 = vpop.f32.mrb[0].mxu0
    %v7115 = vadd.f32 %v1063, %v7114
    %v7116 = vpop.f32.mrb[0].mxu0
    %v7117 = vadd.f32 %v1067, %v7116
    %v7118 = vpop.f32.mrb[0].mxu0
    %v7119 = vpop.f32.mrb[0].mxu0
    %7120 = vdwg.mxu0
    %7121 = vmatprep.subr.bf16.mxu0 %v4443
    %7122 = vmatpush1.bf16.msra.mxu0 %v4442
    %7123 = vmatprep.subr.bf16.mxu0 %v4447
    %7124 = vmatpush1.bf16.msra.mxu0 %v4446
    %7125 = vmatprep.subr.bf16.mxu0 %v4451
    %7126 = vmatpush1.bf16.msra.mxu0 %v4450
    %7127 = vmatprep.subr.bf16.mxu0 %v4455
    %7128 = vmatpush1.bf16.msra.mxu0 %v4454
    %7129 = vmatprep.subr.bf16.mxu0 %v4459
    %7130 = vmatpush1.bf16.msra.mxu0 %v4458
    %7131 = vmatprep.subr.bf16.mxu0 %v4463
    %7132 = vmatpush1.bf16.msra.mxu0 %v4462
    %7133 = vmatprep.subr.bf16.mxu0 %v4467
    %7134 = vmatpush1.bf16.msra.mxu0 %v4466
    %7135 = vmatprep.subr.bf16.mxu0 %v4471
    %7136 = vmatpush1.bf16.msra.mxu0 %v4470
    %7137 = vmatprep.subr.bf16.mxu0 %v4475
    %7138 = vmatpush1.bf16.msra.mxu0 %v4474
    %7139 = vmatprep.subr.bf16.mxu0 %v4479
    %7140 = vmatpush1.bf16.msra.mxu0 %v4478
    %7141 = vmatprep.subr.bf16.mxu0 %v4483
    %7142 = vmatpush1.bf16.msra.mxu0 %v4482
    %7143 = vmatprep.subr.bf16.mxu0 %v4487
    %7144 = vmatpush1.bf16.msra.mxu0 %v4486
    %7145 = vmatprep.subr.bf16.mxu0 %v4491
    %7146 = vmatpush1.bf16.msra.mxu0 %v4490
    %7147 = vmatprep.subr.bf16.mxu0 %v4495
    %7148 = vmatpush1.bf16.msra.mxu0 %v4494
    %7149 = vmatprep.subr.bf16.mxu0 %v4499
    %7150 = vmatpush1.bf16.msra.mxu0 %v4498
    %7151 = vmatprep.subr.bf16.mxu0 %v4503
    %7152 = vmatpush1.bf16.msra.mxu0 %v4502
    %7153 = vmatprep.mubr.bf16.mxu0 %v1123
    %7154 = vmatmul.mubr.bf16.gmra.mrb[0].mxu0 %v1121
    %v7155 = vpop.f32.mrb[0].mxu0
    %v7156 = vadd.f32 %v7115, %v7155
    %v7157 = vpop.f32.mrb[0].mxu0
    %v7158 = vadd.f32 %v7117, %v7157
    %v7159 = vpop.f32.mrb[0].mxu0
    %v7160 = vpop.f32.mrb[0].mxu0
    %7161 = vdwg.mxu0
    %7162 = vmatprep.subr.bf16.mxu0 %v4507
    %7163 = vmatpush1.bf16.msra.mxu0 %v4506
    %7164 = vmatprep.subr.bf16.mxu0 %v4511
    %7165 = vmatpush1.bf16.msra.mxu0 %v4510
    %7166 = vmatprep.subr.bf16.mxu0 %v4515
    %7167 = vmatpush1.bf16.msra.mxu0 %v4514
    %7168 = vmatprep.subr.bf16.mxu0 %v4519
    %7169 = vmatpush1.bf16.msra.mxu0 %v4518
    %7170 = vmatprep.subr.bf16.mxu0 %v4523
    %7171 = vmatpush1.bf16.msra.mxu0 %v4522
    %7172 = vmatprep.subr.bf16.mxu0 %v4527
    %7173 = vmatpush1.bf16.msra.mxu0 %v4526
    %7174 = vmatprep.subr.bf16.mxu0 %v4531
    %7175 = vmatpush1.bf16.msra.mxu0 %v4530
    %7176 = vmatprep.subr.bf16.mxu0 %v4535
    %7177 = vmatpush1.bf16.msra.mxu0 %v4534
    %7178 = vmatprep.subr.bf16.mxu0 %v4539
    %7179 = vmatpush1.bf16.msra.mxu0 %v4538
    %7180 = vmatprep.subr.bf16.mxu0 %v4543
    %7181 = vmatpush1.bf16.msra.mxu0 %v4542
    %7182 = vmatprep.subr.bf16.mxu0 %v4547
    %7183 = vmatpush1.bf16.msra.mxu0 %v4546
    %7184 = vmatprep.subr.bf16.mxu0 %v4551
    %7185 = vmatpush1.bf16.msra.mxu0 %v4550
    %7186 = vmatprep.subr.bf16.mxu0 %v4555
    %7187 = vmatpush1.bf16.msra.mxu0 %v4554
    %7188 = vmatprep.subr.bf16.mxu0 %v4559
    %7189 = vmatpush1.bf16.msra.mxu0 %v4558
    %7190 = vmatprep.subr.bf16.mxu0 %v4563
    %7191 = vmatpush1.bf16.msra.mxu0 %v4562
    %7192 = vmatprep.subr.bf16.mxu0 %v4567
    %7193 = vmatpush1.bf16.msra.mxu0 %v4566
    %7194 = vmatprep.mubr.bf16.mxu0 %v1120
    %7195 = vmatmul.mubr.bf16.gmra.mrb[0].mxu0 %v1106
    %v7196 = vpop.f32.mrb[0].mxu0
    %v7197 = vadd.f32 %v7156, %v7196
    %v7198 = vpop.f32.mrb[0].mxu0
    %v7199 = vadd.f32 %v7158, %v7198
    %v7200 = vpop.f32.mrb[0].mxu0
    %v7201 = vpop.f32.mrb[0].mxu0
    %7202 = vdwg.mxu0
    %7203 = vmatprep.subr.bf16.mxu0 %v4571
    %7204 = vmatpush1.bf16.msra.mxu0 %v4570
    %7205 = vmatprep.subr.bf16.mxu0 %v4575
    %7206 = vmatpush1.bf16.msra.mxu0 %v4574
    %7207 = vmatprep.subr.bf16.mxu0 %v4579
    %7208 = vmatpush1.bf16.msra.mxu0 %v4578
    %7209 = vmatprep.subr.bf16.mxu0 %v4583
    %7210 = vmatpush1.bf16.msra.mxu0 %v4582
    %7211 = vmatprep.subr.bf16.mxu0 %v4587
    %7212 = vmatpush1.bf16.msra.mxu0 %v4586
    %7213 = vmatprep.subr.bf16.mxu0 %v4591
    %7214 = vmatpush1.bf16.msra.mxu0 %v4590
    %7215 = vmatprep.subr.bf16.mxu0 %v4595
    %7216 = vmatpush1.bf16.msra.mxu0 %v4594
    %7217 = vmatprep.subr.bf16.mxu0 %v4599
    %7218 = vmatpush1.bf16.msra.mxu0 %v4598
    %7219 = vmatprep.subr.bf16.mxu0 %v4603
    %7220 = vmatpush1.bf16.msra.mxu0 %v4602
    %7221 = vmatprep.subr.bf16.mxu0 %v4607
    %7222 = vmatpush1.bf16.msra.mxu0 %v4606
    %7223 = vmatprep.subr.bf16.mxu0 %v4611
    %7224 = vmatpush1.bf16.msra.mxu0 %v4610
    %7225 = vmatprep.subr.bf16.mxu0 %v4615
    %7226 = vmatpush1.bf16.msra.mxu0 %v4614
    %7227 = vmatprep.subr.bf16.mxu0 %v4619
    %7228 = vmatpush1.bf16.msra.mxu0 %v4618
    %7229 = vmatprep.subr.bf16.mxu0 %v4623
    %7230 = vmatpush1.bf16.msra.mxu0 %v4622
    %7231 = vmatprep.subr.bf16.mxu0 %v4627
    %7232 = vmatpush1.bf16.msra.mxu0 %v4626
    %7233 = vmatprep.subr.bf16.mxu0 %v4631
    %7234 = vmatpush1.bf16.msra.mxu0 %v4630
    %7235 = vmatprep.mubr.bf16.mxu0 %v1124
    %7236 = vmatmul.mubr.bf16.gmra.mrb[0].mxu0 %v1122
    %v7237 = vpop.f32.mrb[0].mxu0
    %v7238 = vadd.f32 %v7197, %v7237
    %v7239 = vpop.f32.mrb[0].mxu0
    %v7240 = vadd.f32 %v7199, %v7239
    %v7241 = vpop.f32.mrb[0].mxu0
    %v7242 = vpop.f32.mrb[0].mxu0
    %7243 = vdwg.mxu0
    %7244 = vmatprep.subr.bf16.mxu0 %v4635
    %7245 = vmatpush1.bf16.msra.mxu0 %v4634
    %7246 = vmatprep.subr.bf16.mxu0 %v4639
    %7247 = vmatpush1.bf16.msra.mxu0 %v4638
    %7248 = vmatprep.subr.bf16.mxu0 %v4643
    %7249 = vmatpush1.bf16.msra.mxu0 %v4642
    %7250 = vmatprep.subr.bf16.mxu0 %v4647
    %7251 = vmatpush1.bf16.msra.mxu0 %v4646
    %7252 = vmatprep.subr.bf16.mxu0 %v4651
    %7253 = vmatpush1.bf16.msra.mxu0 %v4650
    %7254 = vmatprep.subr.bf16.mxu0 %v4655
    %7255 = vmatpush1.bf16.msra.mxu0 %v4654
    %7256 = vmatprep.subr.bf16.mxu0 %v4659
    %7257 = vmatpush1.bf16.msra.mxu0 %v4658
    %7258 = vmatprep.subr.bf16.mxu0 %v4663
    %7259 = vmatpush1.bf16.msra.mxu0 %v4662
    %7260 = vmatprep.subr.bf16.mxu0 %v4667
    %7261 = vmatpush1.bf16.msra.mxu0 %v4666
    %7262 = vmatprep.subr.bf16.mxu0 %v4671
    %7263 = vmatpush1.bf16.msra.mxu0 %v4670
    %7264 = vmatprep.subr.bf16.mxu0 %v4675
    %7265 = vmatpush1.bf16.msra.mxu0 %v4674
    %7266 = vmatprep.subr.bf16.mxu0 %v4679
    %7267 = vmatpush1.bf16.msra.mxu0 %v4678
    %7268 = vmatprep.subr.bf16.mxu0 %v4683
    %7269 = vmatpush1.bf16.msra.mxu0 %v4682
    %7270 = vmatprep.subr.bf16.mxu0 %v4687
    %7271 = vmatpush1.bf16.msra.mxu0 %v4686
    %7272 = vmatprep.subr.bf16.mxu0 %v4691
    %7273 = vmatpush1.bf16.msra.mxu0 %v4690
    %7274 = vmatprep.subr.bf16.mxu0 %v4695
    %7275 = vmatpush1.bf16.msra.mxu0 %v4694
    %7276 = vmatprep.mubr.bf16.mxu0 %v1162
    %7277 = vmatmul.mubr.bf16.gmra.mrb[0].mxu0 %v1148
    %v7278 = vpop.f32.mrb[0].mxu0
    %v7279 = vadd.f32 %v7238, %v7278
    %v7280 = vpop.f32.mrb[0].mxu0
    %v7281 = vadd.f32 %v7240, %v7280
    %v7282 = vpop.f32.mrb[0].mxu0
    %v7283 = vpop.f32.mrb[0].mxu0
    %7284 = vdwg.mxu0
    %7285 = vmatprep.subr.bf16.mxu0 %v4699
    %7286 = vmatpush1.bf16.msra.mxu0 %v4698
    %7287 = vmatprep.subr.bf16.mxu0 %v4703
    %7288 = vmatpush1.bf16.msra.mxu0 %v4702
    %7289 = vmatprep.subr.bf16.mxu0 %v4707
    %7290 = vmatpush1.bf16.msra.mxu0 %v4706
    %7291 = vmatprep.subr.bf16.mxu0 %v4711
    %7292 = vmatpush1.bf16.msra.mxu0 %v4710
    %7293 = vmatprep.subr.bf16.mxu0 %v4715
    %7294 = vmatpush1.bf16.msra.mxu0 %v4714
    %7295 = vmatprep.subr.bf16.mxu0 %v4719
    %7296 = vmatpush1.bf16.msra.mxu0 %v4718
    %7297 = vmatprep.subr.bf16.mxu0 %v4723
    %7298 = vmatpush1.bf16.msra.mxu0 %v4722
    %7299 = vmatprep.subr.bf16.mxu0 %v4727
    %7300 = vmatpush1.bf16.msra.mxu0 %v4726
    %7301 = vmatprep.subr.bf16.mxu0 %v4731
    %7302 = vmatpush1.bf16.msra.mxu0 %v4730
    %7303 = vmatprep.subr.bf16.mxu0 %v4735
    %7304 = vmatpush1.bf16.msra.mxu0 %v4734
    %7305 = vmatprep.subr.bf16.mxu0 %v4739
    %7306 = vmatpush1.bf16.msra.mxu0 %v4738
    %7307 = vmatprep.subr.bf16.mxu0 %v4743
    %7308 = vmatpush1.bf16.msra.mxu0 %v4742
    %7309 = vmatprep.subr.bf16.mxu0 %v4747
    %7310 = vmatpush1.bf16.msra.mxu0 %v4746
    %7311 = vmatprep.subr.bf16.mxu0 %v4751
    %7312 = vmatpush1.bf16.msra.mxu0 %v4750
    %7313 = vmatprep.subr.bf16.mxu0 %v4755
    %7314 = vmatpush1.bf16.msra.mxu0 %v4754
    %7315 = vmatprep.subr.bf16.mxu0 %v4759
    %7316 = vmatpush1.bf16.msra.mxu0 %v4758
    %7317 = vmatprep.mubr.bf16.mxu0 %v1172
    %7318 = vmatmul.mubr.bf16.gmra.mrb[0].mxu0 %v1170
    %v7319 = vpop.f32.mrb[0].mxu0
    %v7320 = vadd.f32 %v7279, %v7319
    %v7321 = vpop.f32.mrb[0].mxu0
    %v7322 = vadd.f32 %v7281, %v7321
    %v7323 = vpop.f32.mrb[0].mxu0
    %v7324 = vpop.f32.mrb[0].mxu0
    %7325 = vdwg.mxu0
    %7326 = vmatprep.subr.bf16.mxu0 %v4763
    %7327 = vmatpush1.bf16.msra.mxu0 %v4762
    %7328 = vmatprep.subr.bf16.mxu0 %v4767
    %7329 = vmatpush1.bf16.msra.mxu0 %v4766
    %7330 = vmatprep.subr.bf16.mxu0 %v4771
    %7331 = vmatpush1.bf16.msra.mxu0 %v4770
    %7332 = vmatprep.subr.bf16.mxu0 %v4775
    %7333 = vmatpush1.bf16.msra.mxu0 %v4774
    %7334 = vmatprep.subr.bf16.mxu0 %v4779
    %7335 = vmatpush1.bf16.msra.mxu0 %v4778
    %7336 = vmatprep.subr.bf16.mxu0 %v4783
    %7337 = vmatpush1.bf16.msra.mxu0 %v4782
    %7338 = vmatprep.subr.bf16.mxu0 %v4787
    %7339 = vmatpush1.bf16.msra.mxu0 %v4786
    %7340 = vmatprep.subr.bf16.mxu0 %v4791
    %7341 = vmatpush1.bf16.msra.mxu0 %v4790
    %7342 = vmatprep.subr.bf16.mxu0 %v4795
    %7343 = vmatpush1.bf16.msra.mxu0 %v4794
    %7344 = vmatprep.subr.bf16.mxu0 %v4799
    %7345 = vmatpush1.bf16.msra.mxu0 %v4798
    %7346 = vmatprep.subr.bf16.mxu0 %v4803
    %7347 = vmatpush1.bf16.msra.mxu0 %v4802
    %7348 = vmatprep.subr.bf16.mxu0 %v4807
    %7349 = vmatpush1.bf16.msra.mxu0 %v4806
    %7350 = vmatprep.subr.bf16.mxu0 %v4811
    %7351 = vmatpush1.bf16.msra.mxu0 %v4810
    %7352 = vmatprep.subr.bf16.mxu0 %v4815
    %7353 = vmatpush1.bf16.msra.mxu0 %v4814
    %7354 = vmatprep.subr.bf16.mxu0 %v4819
    %7355 = vmatpush1.bf16.msra.mxu0 %v4818
    %7356 = vmatprep.subr.bf16.mxu0 %v4823
    %7357 = vmatpush1.bf16.msra.mxu0 %v4822
    %7358 = vmatprep.mubr.bf16.mxu0 %v1169
    %7359 = vmatmul.mubr.bf16.gmra.mrb[0].mxu0 %v1155
    %v7360 = vpop.f32.mrb[0].mxu0
    %v7361 = vadd.f32 %v7320, %v7360
    %v7362 = vpop.f32.mrb[0].mxu0
    %v7363 = vadd.f32 %v7322, %v7362
    %v7364 = vpop.f32.mrb[0].mxu0
    %v7365 = vpop.f32.mrb[0].mxu0
    %7366 = vdwg.mxu0
    %7367 = vmatprep.subr.bf16.mxu0 %v4827
    %7368 = vmatpush1.bf16.msra.mxu0 %v4826
    %7369 = vmatprep.subr.bf16.mxu0 %v4831
    %7370 = vmatpush1.bf16.msra.mxu0 %v4830
    %7371 = vmatprep.subr.bf16.mxu0 %v4835
    %7372 = vmatpush1.bf16.msra.mxu0 %v4834
    %7373 = vmatprep.subr.bf16.mxu0 %v4839
    %7374 = vmatpush1.bf16.msra.mxu0 %v4838
    %7375 = vmatprep.subr.bf16.mxu0 %v4843
    %7376 = vmatpush1.bf16.msra.mxu0 %v4842
    %7377 = vmatprep.subr.bf16.mxu0 %v4847
    %7378 = vmatpush1.bf16.msra.mxu0 %v4846
    %7379 = vmatprep.subr.bf16.mxu0 %v4851
    %7380 = vmatpush1.bf16.msra.mxu0 %v4850
    %7381 = vmatprep.subr.bf16.mxu0 %v4855
    %7382 = vmatpush1.bf16.msra.mxu0 %v4854
    %7383 = vmatprep.subr.bf16.mxu0 %v4859
    %7384 = vmatpush1.bf16.msra.mxu0 %v4858
    %7385 = vmatprep.subr.bf16.mxu0 %v4863
    %7386 = vmatpush1.bf16.msra.mxu0 %v4862
    %7387 = vmatprep.subr.bf16.mxu0 %v4867
    %7388 = vmatpush1.bf16.msra.mxu0 %v4866
    %7389 = vmatprep.subr.bf16.mxu0 %v4871
    %7390 = vmatpush1.bf16.msra.mxu0 %v4870
    %7391 = vmatprep.subr.bf16.mxu0 %v4875
    %7392 = vmatpush1.bf16.msra.mxu0 %v4874
    %7393 = vmatprep.subr.bf16.mxu0 %v4879
    %7394 = vmatpush1.bf16.msra.mxu0 %v4878
    %7395 = vmatprep.subr.bf16.mxu0 %v4883
    %7396 = vmatpush1.bf16.msra.mxu0 %v4882
    %7397 = vmatprep.subr.bf16.mxu0 %v4887
    %7398 = vmatpush1.bf16.msra.mxu0 %v4886
    %7399 = vmatprep.mubr.bf16.mxu0 %v1173
    %7400 = vmatmul.mubr.bf16.gmra.mrb[0].mxu0 %v1171
    %v7401 = vpop.f32.mrb[0].mxu0
    %v7402 = vadd.f32 %v7361, %v7401
    %v7403 = vpop.f32.mrb[0].mxu0
    %v7404 = vadd.f32 %v7363, %v7403
    %v7405 = vpop.f32.mrb[0].mxu0
    %v7406 = vpop.f32.mrb[0].mxu0
    %7407 = vdwg.mxu0
    %7408 = vmatprep.subr.bf16.mxu0 %v4891
    %7409 = vmatpush1.bf16.msra.mxu0 %v4890
    %7410 = vmatprep.subr.bf16.mxu0 %v4895
    %7411 = vmatpush1.bf16.msra.mxu0 %v4894
    %7412 = vmatprep.subr.bf16.mxu0 %v4899
    %7413 = vmatpush1.bf16.msra.mxu0 %v4898
    %7414 = vmatprep.subr.bf16.mxu0 %v4903
    %7415 = vmatpush1.bf16.msra.mxu0 %v4902
    %7416 = vmatprep.subr.bf16.mxu0 %v4907
    %7417 = vmatpush1.bf16.msra.mxu0 %v4906
    %7418 = vmatprep.subr.bf16.mxu0 %v4911
    %7419 = vmatpush1.bf16.msra.mxu0 %v4910
    %7420 = vmatprep.subr.bf16.mxu0 %v4915
    %7421 = vmatpush1.bf16.msra.mxu0 %v4914
    %7422 = vmatprep.subr.bf16.mxu0 %v4919
    %7423 = vmatpush1.bf16.msra.mxu0 %v4918
    %7424 = vmatprep.subr.bf16.mxu0 %v4923
    %7425 = vmatpush1.bf16.msra.mxu0 %v4922
    %7426 = vmatprep.subr.bf16.mxu0 %v4927
    %7427 = vmatpush1.bf16.msra.mxu0 %v4926
    %7428 = vmatprep.subr.bf16.mxu0 %v4931
    %7429 = vmatpush1.bf16.msra.mxu0 %v4930
    %7430 = vmatprep.subr.bf16.mxu0 %v4935
    %7431 = vmatpush1.bf16.msra.mxu0 %v4934
    %7432 = vmatprep.subr.bf16.mxu0 %v4939
    %7433 = vmatpush1.bf16.msra.mxu0 %v4938
    %7434 = vmatprep.subr.bf16.mxu0 %v4943
    %7435 = vmatpush1.bf16.msra.mxu0 %v4942
    %7436 = vmatprep.subr.bf16.mxu0 %v4947
    %7437 = vmatpush1.bf16.msra.mxu0 %v4946
    %7438 = vmatprep.subr.bf16.mxu0 %v4951
    %7439 = vmatpush1.bf16.msra.mxu0 %v4950
    %7440 = vmatprep.mubr.bf16.mxu0 %v1211
    %7441 = vmatmul.mubr.bf16.gmra.mrb[0].mxu0 %v1197
    %v7442 = vpop.f32.mrb[0].mxu0
    %v7443 = vadd.f32 %v7402, %v7442
    %v7444 = vpop.f32.mrb[0].mxu0
    %v7445 = vadd.f32 %v7404, %v7444
    %v7446 = vpop.f32.mrb[0].mxu0
    %v7447 = vpop.f32.mrb[0].mxu0
    %7448 = vdwg.mxu0
    %7449 = vmatprep.subr.bf16.mxu0 %v4955
    %7450 = vmatpush1.bf16.msra.mxu0 %v4954
    %7451 = vmatprep.subr.bf16.mxu0 %v4959
    %7452 = vmatpush1.bf16.msra.mxu0 %v4958
    %7453 = vmatprep.subr.bf16.mxu0 %v4963
    %7454 = vmatpush1.bf16.msra.mxu0 %v4962
    %7455 = vmatprep.subr.bf16.mxu0 %v4967
    %7456 = vmatpush1.bf16.msra.mxu0 %v4966
    %7457 = vmatprep.subr.bf16.mxu0 %v4971
    %7458 = vmatpush1.bf16.msra.mxu0 %v4970
    %7459 = vmatprep.subr.bf16.mxu0 %v4975
    %7460 = vmatpush1.bf16.msra.mxu0 %v4974
    %7461 = vmatprep.subr.bf16.mxu0 %v4979
    %7462 = vmatpush1.bf16.msra.mxu0 %v4978
    %7463 = vmatprep.subr.bf16.mxu0 %v4983
    %7464 = vmatpush1.bf16.msra.mxu0 %v4982
    %7465 = vmatprep.subr.bf16.mxu0 %v4987
    %7466 = vmatpush1.bf16.msra.mxu0 %v4986
    %7467 = vmatprep.subr.bf16.mxu0 %v4991
    %7468 = vmatpush1.bf16.msra.mxu0 %v4990
    %7469 = vmatprep.subr.bf16.mxu0 %v4995
    %7470 = vmatpush1.bf16.msra.mxu0 %v4994
    %7471 = vmatprep.subr.bf16.mxu0 %v4999
    %7472 = vmatpush1.bf16.msra.mxu0 %v4998
    %7473 = vmatprep.subr.bf16.mxu0 %v5003
    %7474 = vmatpush1.bf16.msra.mxu0 %v5002
    %7475 = vmatprep.subr.bf16.mxu0 %v5007
    %7476 = vmatpush1.bf16.msra.mxu0 %v5006
    %7477 = vmatprep.subr.bf16.mxu0 %v5011
    %7478 = vmatpush1.bf16.msra.mxu0 %v5010
    %7479 = vmatprep.subr.bf16.mxu0 %v5015
    %7480 = vmatpush1.bf16.msra.mxu0 %v5014
    %7481 = vmatprep.mubr.bf16.mxu0 %v1221
    %7482 = vmatmul.mubr.bf16.gmra.mrb[0].mxu0 %v1219
    %v7483 = vpop.f32.mrb[0].mxu0
    %v7484 = vadd.f32 %v7443, %v7483
    %v7485 = vpop.f32.mrb[0].mxu0
    %v7486 = vadd.f32 %v7445, %v7485
    %v7487 = vpop.f32.mrb[0].mxu0
    %v7488 = vpop.f32.mrb[0].mxu0
    %7489 = vdwg.mxu0
    %7490 = vmatprep.subr.bf16.mxu0 %v5019
    %7491 = vmatpush1.bf16.msra.mxu0 %v5018
    %7492 = vmatprep.subr.bf16.mxu0 %v5023
    %7493 = vmatpush1.bf16.msra.mxu0 %v5022
    %7494 = vmatprep.subr.bf16.mxu0 %v5027
    %7495 = vmatpush1.bf16.msra.mxu0 %v5026
    %7496 = vmatprep.subr.bf16.mxu0 %v5031
    %7497 = vmatpush1.bf16.msra.mxu0 %v5030
    %7498 = vmatprep.subr.bf16.mxu0 %v5035
    %7499 = vmatpush1.bf16.msra.mxu0 %v5034
    %7500 = vmatprep.subr.bf16.mxu0 %v5039
    %7501 = vmatpush1.bf16.msra.mxu0 %v5038
    %7502 = vmatprep.subr.bf16.mxu0 %v5043
    %7503 = vmatpush1.bf16.msra.mxu0 %v5042
    %7504 = vmatprep.subr.bf16.mxu0 %v5047
    %7505 = vmatpush1.bf16.msra.mxu0 %v5046
    %7506 = vmatprep.subr.bf16.mxu0 %v5051
    %7507 = vmatpush1.bf16.msra.mxu0 %v5050
    %7508 = vmatprep.subr.bf16.mxu0 %v5055
    %7509 = vmatpush1.bf16.msra.mxu0 %v5054
    %7510 = vmatprep.subr.bf16.mxu0 %v5059
    %7511 = vmatpush1.bf16.msra.mxu0 %v5058
    %7512 = vmatprep.subr.bf16.mxu0 %v5063
    %7513 = vmatpush1.bf16.msra.mxu0 %v5062
    %7514 = vmatprep.subr.bf16.mxu0 %v5067
    %7515 = vmatpush1.bf16.msra.mxu0 %v5066
    %7516 = vmatprep.subr.bf16.mxu0 %v5071
    %7517 = vmatpush1.bf16.msra.mxu0 %v5070
    %7518 = vmatprep.subr.bf16.mxu0 %v5075
    %7519 = vmatpush1.bf16.msra.mxu0 %v5074
    %7520 = vmatprep.subr.bf16.mxu0 %v5079
    %7521 = vmatpush1.bf16.msra.mxu0 %v5078
    %7522 = vmatprep.mubr.bf16.mxu0 %v1218
    %7523 = vmatmul.mubr.bf16.gmra.mrb[0].mxu0 %v1204
    %v7524 = vpop.f32.mrb[0].mxu0
    %v7525 = vadd.f32 %v7484, %v7524
    %v7526 = vpop.f32.mrb[0].mxu0
    %v7527 = vadd.f32 %v7486, %v7526
    %v7528 = vpop.f32.mrb[0].mxu0
    %v7529 = vpop.f32.mrb[0].mxu0
    %7530 = vdwg.mxu0
    %7531 = vmatprep.subr.bf16.mxu0 %v5083
    %7532 = vmatpush1.bf16.msra.mxu0 %v5082
    %7533 = vmatprep.subr.bf16.mxu0 %v5087
    %7534 = vmatpush1.bf16.msra.mxu0 %v5086
    %7535 = vmatprep.subr.bf16.mxu0 %v5091
    %7536 = vmatpush1.bf16.msra.mxu0 %v5090
    %7537 = vmatprep.subr.bf16.mxu0 %v5095
    %7538 = vmatpush1.bf16.msra.mxu0 %v5094
    %7539 = vmatprep.subr.bf16.mxu0 %v5099
    %7540 = vmatpush1.bf16.msra.mxu0 %v5098
    %7541 = vmatprep.subr.bf16.mxu0 %v5103
    %7542 = vmatpush1.bf16.msra.mxu0 %v5102
    %7543 = vmatprep.subr.bf16.mxu0 %v5107
    %7544 = vmatpush1.bf16.msra.mxu0 %v5106
    %7545 = vmatprep.subr.bf16.mxu0 %v5111
    %7546 = vmatpush1.bf16.msra.mxu0 %v5110
    %7547 = vmatprep.subr.bf16.mxu0 %v5115
    %7548 = vmatpush1.bf16.msra.mxu0 %v5114
    %7549 = vmatprep.subr.bf16.mxu0 %v5119
    %7550 = vmatpush1.bf16.msra.mxu0 %v5118
    %7551 = vmatprep.subr.bf16.mxu0 %v5123
    %7552 = vmatpush1.bf16.msra.mxu0 %v5122
    %7553 = vmatprep.subr.bf16.mxu0 %v5127
    %7554 = vmatpush1.bf16.msra.mxu0 %v5126
    %7555 = vmatprep.subr.bf16.mxu0 %v5131
    %7556 = vmatpush1.bf16.msra.mxu0 %v5130
    %7557 = vmatprep.subr.bf16.mxu0 %v5135
    %7558 = vmatpush1.bf16.msra.mxu0 %v5134
    %7559 = vmatprep.subr.bf16.mxu0 %v5139
    %7560 = vmatpush1.bf16.msra.mxu0 %v5138
    %7561 = vmatprep.subr.bf16.mxu0 %v5143
    %7562 = vmatpush1.bf16.msra.mxu0 %v5142
    %7563 = vmatprep.mubr.bf16.mxu0 %v1222
    %7564 = vmatmul.mubr.bf16.gmra.mrb[0].mxu0 %v1220
    %v7565 = vpop.f32.mrb[0].mxu0
    %v7566 = vadd.f32 %v7525, %v7565
    %v7567 = vpop.f32.mrb[0].mxu0
    %v7568 = vadd.f32 %v7527, %v7567
    %v7569 = vpop.f32.mrb[0].mxu0
    %v7570 = vpop.f32.mrb[0].mxu0
    %7571 = vdwg.mxu0
    %7572 = vmatprep.subr.bf16.mxu0 %v5147
    %7573 = vmatpush1.bf16.msra.mxu0 %v5146
    %7574 = vmatprep.subr.bf16.mxu0 %v5151
    %7575 = vmatpush1.bf16.msra.mxu0 %v5150
    %7576 = vmatprep.subr.bf16.mxu0 %v5155
    %7577 = vmatpush1.bf16.msra.mxu0 %v5154
    %7578 = vmatprep.subr.bf16.mxu0 %v5159
    %7579 = vmatpush1.bf16.msra.mxu0 %v5158
    %7580 = vmatprep.subr.bf16.mxu0 %v5163
    %7581 = vmatpush1.bf16.msra.mxu0 %v5162
    %7582 = vmatprep.subr.bf16.mxu0 %v5167
    %7583 = vmatpush1.bf16.msra.mxu0 %v5166
    %7584 = vmatprep.subr.bf16.mxu0 %v5171
    %7585 = vmatpush1.bf16.msra.mxu0 %v5170
    %7586 = vmatprep.subr.bf16.mxu0 %v5175
    %7587 = vmatpush1.bf16.msra.mxu0 %v5174
    %7588 = vmatprep.subr.bf16.mxu0 %v5179
    %7589 = vmatpush1.bf16.msra.mxu0 %v5178
    %7590 = vmatprep.subr.bf16.mxu0 %v5183
    %7591 = vmatpush1.bf16.msra.mxu0 %v5182
    %7592 = vmatprep.subr.bf16.mxu0 %v5187
    %7593 = vmatpush1.bf16.msra.mxu0 %v5186
    %7594 = vmatprep.subr.bf16.mxu0 %v5191
    %7595 = vmatpush1.bf16.msra.mxu0 %v5190
    %7596 = vmatprep.subr.bf16.mxu0 %v5195
    %7597 = vmatpush1.bf16.msra.mxu0 %v5194
    %7598 = vmatprep.subr.bf16.mxu0 %v5199
    %7599 = vmatpush1.bf16.msra.mxu0 %v5198
    %7600 = vmatprep.subr.bf16.mxu0 %v5203
    %7601 = vmatpush1.bf16.msra.mxu0 %v5202
    %7602 = vmatprep.subr.bf16.mxu0 %v5207
    %7603 = vmatpush1.bf16.msra.mxu0 %v5206
    %7604 = vmatprep.mubr.bf16.mxu0 %v1260
    %7605 = vmatmul.mubr.bf16.gmra.mrb[0].mxu0 %v1246
    %v7606 = vpop.f32.mrb[0].mxu0
    %v7607 = vadd.f32 %v7566, %v7606
    %v7608 = vpop.f32.mrb[0].mxu0
    %v7609 = vadd.f32 %v7568, %v7608
    %v7610 = vpop.f32.mrb[0].mxu0
    %v7611 = vpop.f32.mrb[0].mxu0
    %7612 = vdwg.mxu0
    %7613 = vmatprep.subr.bf16.mxu0 %v5211
    %7614 = vmatpush1.bf16.msra.mxu0 %v5210
    %7615 = vmatprep.subr.bf16.mxu0 %v5215
    %7616 = vmatpush1.bf16.msra.mxu0 %v5214
    %7617 = vmatprep.subr.bf16.mxu0 %v5219
    %7618 = vmatpush1.bf16.msra.mxu0 %v5218
    %7619 = vmatprep.subr.bf16.mxu0 %v5223
    %7620 = vmatpush1.bf16.msra.mxu0 %v5222
    %7621 = vmatprep.subr.bf16.mxu0 %v5227
    %7622 = vmatpush1.bf16.msra.mxu0 %v5226
    %7623 = vmatprep.subr.bf16.mxu0 %v5231
    %7624 = vmatpush1.bf16.msra.mxu0 %v5230
    %7625 = vmatprep.subr.bf16.mxu0 %v5235
    %7626 = vmatpush1.bf16.msra.mxu0 %v5234
    %7627 = vmatprep.subr.bf16.mxu0 %v5239
    %7628 = vmatpush1.bf16.msra.mxu0 %v5238
    %7629 = vmatprep.subr.bf16.mxu0 %v5243
    %7630 = vmatpush1.bf16.msra.mxu0 %v5242
    %7631 = vmatprep.subr.bf16.mxu0 %v5247
    %7632 = vmatpush1.bf16.msra.mxu0 %v5246
    %7633 = vmatprep.subr.bf16.mxu0 %v5251
    %7634 = vmatpush1.bf16.msra.mxu0 %v5250
    %7635 = vmatprep.subr.bf16.mxu0 %v5255
    %7636 = vmatpush1.bf16.msra.mxu0 %v5254
    %7637 = vmatprep.subr.bf16.mxu0 %v5259
    %7638 = vmatpush1.bf16.msra.mxu0 %v5258
    %7639 = vmatprep.subr.bf16.mxu0 %v5263
    %7640 = vmatpush1.bf16.msra.mxu0 %v5262
    %7641 = vmatprep.subr.bf16.mxu0 %v5267
    %7642 = vmatpush1.bf16.msra.mxu0 %v5266
    %7643 = vmatprep.subr.bf16.mxu0 %v5271
    %7644 = vmatpush1.bf16.msra.mxu0 %v5270
    %7645 = vmatprep.mubr.bf16.mxu0 %v1270
    %7646 = vmatmul.mubr.bf16.gmra.mrb[0].mxu0 %v1268
    %v7647 = vpop.f32.mrb[0].mxu0
    %v7648 = vadd.f32 %v7607, %v7647
    %v7649 = vpop.f32.mrb[0].mxu0
    %v7650 = vadd.f32 %v7609, %v7649
    %v7651 = vpop.f32.mrb[0].mxu0
    %v7652 = vpop.f32.mrb[0].mxu0
    %7653 = vdwg.mxu0
    %7654 = vmatprep.subr.bf16.mxu0 %v5275
    %7655 = vmatpush1.bf16.msra.mxu0 %v5274
    %7656 = vmatprep.subr.bf16.mxu0 %v5279
    %7657 = vmatpush1.bf16.msra.mxu0 %v5278
    %7658 = vmatprep.subr.bf16.mxu0 %v5283
    %7659 = vmatpush1.bf16.msra.mxu0 %v5282
    %7660 = vmatprep.subr.bf16.mxu0 %v5287
    %7661 = vmatpush1.bf16.msra.mxu0 %v5286
    %7662 = vmatprep.subr.bf16.mxu0 %v5291
    %7663 = vmatpush1.bf16.msra.mxu0 %v5290
    %7664 = vmatprep.subr.bf16.mxu0 %v5295
    %7665 = vmatpush1.bf16.msra.mxu0 %v5294
    %7666 = vmatprep.subr.bf16.mxu0 %v5299
    %7667 = vmatpush1.bf16.msra.mxu0 %v5298
    %7668 = vmatprep.subr.bf16.mxu0 %v5303
    %7669 = vmatpush1.bf16.msra.mxu0 %v5302
    %7670 = vmatprep.subr.bf16.mxu0 %v5307
    %7671 = vmatpush1.bf16.msra.mxu0 %v5306
    %7672 = vmatprep.subr.bf16.mxu0 %v5311
    %7673 = vmatpush1.bf16.msra.mxu0 %v5310
    %7674 = vmatprep.subr.bf16.mxu0 %v5315
    %7675 = vmatpush1.bf16.msra.mxu0 %v5314
    %7676 = vmatprep.subr.bf16.mxu0 %v5319
    %7677 = vmatpush1.bf16.msra.mxu0 %v5318
    %7678 = vmatprep.subr.bf16.mxu0 %v5323
    %7679 = vmatpush1.bf16.msra.mxu0 %v5322
    %7680 = vmatprep.subr.bf16.mxu0 %v5327
    %7681 = vmatpush1.bf16.msra.mxu0 %v5326
    %7682 = vmatprep.subr.bf16.mxu0 %v5331
    %7683 = vmatpush1.bf16.msra.mxu0 %v5330
    %7684 = vmatprep.subr.bf16.mxu0 %v5335
    %7685 = vmatpush1.bf16.msra.mxu0 %v5334
    %7686 = vmatprep.mubr.bf16.mxu0 %v1267
    %7687 = vmatmul.mubr.bf16.gmra.mrb[0].mxu0 %v1253
    %v7688 = vpop.f32.mrb[0].mxu0
    %v7689 = vadd.f32 %v7648, %v7688
    %v7690 = vpop.f32.mrb[0].mxu0
    %v7691 = vadd.f32 %v7650, %v7690
    %v7692 = vpop.f32.mrb[0].mxu0
    %v7693 = vpop.f32.mrb[0].mxu0
    %7694 = vdwg.mxu0
    %7695 = vmatprep.subr.bf16.mxu0 %v5339
    %7696 = vmatpush1.bf16.msra.mxu0 %v5338
    %7697 = vmatprep.subr.bf16.mxu0 %v5343
    %7698 = vmatpush1.bf16.msra.mxu0 %v5342
    %7699 = vmatprep.subr.bf16.mxu0 %v5347
    %7700 = vmatpush1.bf16.msra.mxu0 %v5346
    %7701 = vmatprep.subr.bf16.mxu0 %v5351
    %7702 = vmatpush1.bf16.msra.mxu0 %v5350
    %7703 = vmatprep.subr.bf16.mxu0 %v5355
    %7704 = vmatpush1.bf16.msra.mxu0 %v5354
    %7705 = vmatprep.subr.bf16.mxu0 %v5359
    %7706 = vmatpush1.bf16.msra.mxu0 %v5358
    %7707 = vmatprep.subr.bf16.mxu0 %v5363
    %7708 = vmatpush1.bf16.msra.mxu0 %v5362
    %7709 = vmatprep.subr.bf16.mxu0 %v5367
    %7710 = vmatpush1.bf16.msra.mxu0 %v5366
    %7711 = vmatprep.subr.bf16.mxu0 %v5371
    %7712 = vmatpush1.bf16.msra.mxu0 %v5370
    %7713 = vmatprep.subr.bf16.mxu0 %v5375
    %7714 = vmatpush1.bf16.msra.mxu0 %v5374
    %7715 = vmatprep.subr.bf16.mxu0 %v5379
    %7716 = vmatpush1.bf16.msra.mxu0 %v5378
    %7717 = vmatprep.subr.bf16.mxu0 %v5383
    %7718 = vmatpush1.bf16.msra.mxu0 %v5382
    %7719 = vmatprep.subr.bf16.mxu0 %v5387
    %7720 = vmatpush1.bf16.msra.mxu0 %v5386
    %7721 = vmatprep.subr.bf16.mxu0 %v5391
    %7722 = vmatpush1.bf16.msra.mxu0 %v5390
    %7723 = vmatprep.subr.bf16.mxu0 %v5395
    %7724 = vmatpush1.bf16.msra.mxu0 %v5394
    %7725 = vmatprep.subr.bf16.mxu0 %v5399
    %7726 = vmatpush1.bf16.msra.mxu0 %v5398
    %7727 = vmatprep.mubr.bf16.mxu0 %v1271
    %7728 = vmatmul.mubr.bf16.gmra.mrb[0].mxu0 %v1269
    %v7729 = vpop.f32.mrb[0].mxu0
    %v7730 = vadd.f32 %v7689, %v7729
    %v7731 = vpop.f32.mrb[0].mxu0
    %v7732 = vadd.f32 %v7691, %v7731
    %v7733 = vpop.f32.mrb[0].mxu0
    %v7734 = vpop.f32.mrb[0].mxu0
    %7735 = vdwg.mxu0
    %vm7736 = vcmp.gt.f32.partialorder %v7074, 0.0
    %vm7737 = vcmp.gt.f32.partialorder %v7076, 0.0
    %vm7738 = vcmp.gt.f32.partialorder %v7730, 0.0
    %vm7739 = vcmp.gt.f32.partialorder %v7732, 0.0
    %v7740 = vmul.f32 %v7074, 0.01
    %v7741 = vmul.f32 %v7076, 0.01
    %v7742 = vmul.f32 %v7730, 0.01
    %v7743 = vmul.f32 %v7732, 0.01
    %v7744 = vsel %vm7736, %v7074, %v7740
    %v7745 = vsel %vm7737, %v7076, %v7741
    %v7746 = vsel %vm7738, %v7730, %v7742
    %v7747 = vsel %vm7739, %v7732, %v7743
    %v7748 = vpack.c.bf16 %v7744, %v7744
    %v7749 = vpack.c.bf16 %v7745, %v7745
    %v7750 = vpack.c.bf16 %v7746, %v7746
    %v7751 = vpack.c.bf16 %v7747, %v7747
    %v7752 = vld [vmem:[%s3] sm:$0xf]
    %v7753 = vld [vmem:[%s3 + $0x4] sm:$0xf]
    %v7754 = vld [vmem:[%s3 + $0x8] sm:$0xf]
    %v7755 = vld [vmem:[%s3 + $0xc] sm:$0xf]
    %v7756 = vld [vmem:[%s3 + $0x10] sm:$0xf]
    %v7757 = vld [vmem:[%s3 + $0x14] sm:$0xf]
    %v7758 = vld [vmem:[%s3 + $0x18] sm:$0xf]
    %v7759 = vld [vmem:[%s3 + $0x1c] sm:$0xf]
    %v7760 = vld [vmem:[%s3 + $0x20] sm:$0xf]
    %v7761 = vld [vmem:[%s3 + $0x24] sm:$0xf]
    %v7762 = vld [vmem:[%s3 + $0x28] sm:$0xf]
    %v7763 = vld [vmem:[%s3 + $0x2c] sm:$0xf]
    %v7764 = vld [vmem:[%s3 + $0x30] sm:$0xf]
    %v7765 = vld [vmem:[%s3 + $0x34] sm:$0xf]
    %v7766 = vld [vmem:[%s3 + $0x38] sm:$0xf]
    %v7767 = vld [vmem:[%s3 + $0x3c] sm:$0xf]
    %v7768 = vld [vmem:[%s3 + $0x40] sm:$0xf]
    %v7769 = vld [vmem:[%s3 + $0x44] sm:$0xf]
    %v7770 = vld [vmem:[%s3 + $0x48] sm:$0xf]
    %v7771 = vld [vmem:[%s3 + $0x4c] sm:$0xf]
    %v7772 = vld [vmem:[%s3 + $0x50] sm:$0xf]
    %v7773 = vld [vmem:[%s3 + $0x54] sm:$0xf]
    %v7774 = vld [vmem:[%s3 + $0x58] sm:$0xf]
    %v7775 = vld [vmem:[%s3 + $0x5c] sm:$0xf]
    %v7776 = vld [vmem:[%s3 + $0x60] sm:$0xf]
    %v7777 = vld [vmem:[%s3 + $0x64] sm:$0xf]
    %v7778 = vld [vmem:[%s3 + $0x68] sm:$0xf]
    %v7779 = vld [vmem:[%s3 + $0x6c] sm:$0xf]
    %v7780 = vld [vmem:[%s3 + $0x70] sm:$0xf]
    %v7781 = vld [vmem:[%s3 + $0x74] sm:$0xf]
    %v7782 = vld [vmem:[%s3 + $0x78] sm:$0xf]
    %v7783 = vld [vmem:[%s3 + $0x7c] sm:$0xf]
    %v7784 = vld [vmem:[%s3 + $0x80] sm:$0xf]
    %v7785 = vld [vmem:[%s3 + $0x84] sm:$0xf]
    %v7786 = vld [vmem:[%s3 + $0x88] sm:$0xf]
    %v7787 = vld [vmem:[%s3 + $0x8c] sm:$0xf]
    %v7788 = vld [vmem:[%s3 + $0x90] sm:$0xf]
    %v7789 = vld [vmem:[%s3 + $0x94] sm:$0xf]
    %v7790 = vld [vmem:[%s3 + $0x98] sm:$0xf]
    %v7791 = vld [vmem:[%s3 + $0x9c] sm:$0xf]
    %v7792 = vld [vmem:[%s3 + $0xa0] sm:$0xf]
    %v7793 = vld [vmem:[%s3 + $0xa4] sm:$0xf]
    %v7794 = vld [vmem:[%s3 + $0xa8] sm:$0xf]
    %v7795 = vld [vmem:[%s3 + $0xac] sm:$0xf]
    %v7796 = vld [vmem:[%s3 + $0xb0] sm:$0xf]
    %v7797 = vld [vmem:[%s3 + $0xb4] sm:$0xf]
    %v7798 = vld [vmem:[%s3 + $0xb8] sm:$0xf]
    %v7799 = vld [vmem:[%s3 + $0xbc] sm:$0xf]
    %v7800 = vld [vmem:[%s3 + $0xc0] sm:$0xf]
    %v7801 = vld [vmem:[%s3 + $0xc4] sm:$0xf]
    %v7802 = vld [vmem:[%s3 + $0xc8] sm:$0xf]
    %v7803 = vld [vmem:[%s3 + $0xcc] sm:$0xf]
    %v7804 = vld [vmem:[%s3 + $0xd0] sm:$0xf]
    %v7805 = vld [vmem:[%s3 + $0xd4] sm:$0xf]
    %v7806 = vld [vmem:[%s3 + $0xd8] sm:$0xf]
    %v7807 = vld [vmem:[%s3 + $0xdc] sm:$0xf]
    %v7808 = vld [vmem:[%s3 + $0xe0] sm:$0xf]
    %v7809 = vld [vmem:[%s3 + $0xe4] sm:$0xf]
    %v7810 = vld [vmem:[%s3 + $0xe8] sm:$0xf]
    %v7811 = vld [vmem:[%s3 + $0xec] sm:$0xf]
    %v7812 = vld [vmem:[%s3 + $0xf0] sm:$0xf]
    %v7813 = vld [vmem:[%s3 + $0xf4] sm:$0xf]
    %v7814 = vld [vmem:[%s3 + $0xf8] sm:$0xf]
    %v7815 = vld [vmem:[%s3 + $0xfc] sm:$0xf]
    %v7816 = vld [vmem:[%s4] sm:$0x1]
    %v7818 = vlaneseq
    %v7819 = vshrl.u32 %v7818, 7
    %v7820 = vsub.s32 0, %v7819
    %v7821 = vrot.slane %v7816, %v7820
    %v7887 = vunpack.c.l.b16 %v7752
    %v7888 = vunpack.c.l.b16 %v7753
    %v7889 = vunpack.c.l.b16 %v7754
    %v7890 = vunpack.c.l.b16 %v7755
    %v7891 = vunpack.c.l.b16 %v7756
    %v7892 = vunpack.c.l.b16 %v7757
    %v7893 = vunpack.c.l.b16 %v7758
    %v7894 = vunpack.c.l.b16 %v7759
    %v7895 = vunpack.c.l.b16 %v7760
    %v7896 = vunpack.c.l.b16 %v7761
    %v7897 = vunpack.c.l.b16 %v7762
    %v7898 = vunpack.c.l.b16 %v7763
    %v7899 = vunpack.c.l.b16 %v7764
    %v7900 = vunpack.c.l.b16 %v7765
    %v7901 = vunpack.c.l.b16 %v7766
    %v7902 = vunpack.c.l.b16 %v7767
    %v7903 = vunpack.c.l.b16 %v7768
    %v7904 = vunpack.c.l.b16 %v7769
    %v7905 = vunpack.c.l.b16 %v7770
    %v7906 = vunpack.c.l.b16 %v7771
    %v7907 = vunpack.c.l.b16 %v7772
    %v7908 = vunpack.c.l.b16 %v7773
    %v7909 = vunpack.c.l.b16 %v7774
    %v7910 = vunpack.c.l.b16 %v7775
    %v7911 = vunpack.c.l.b16 %v7776
    %v7912 = vunpack.c.l.b16 %v7777
    %v7913 = vunpack.c.l.b16 %v7778
    %v7914 = vunpack.c.l.b16 %v7779
    %v7915 = vunpack.c.l.b16 %v7780
    %v7916 = vunpack.c.l.b16 %v7781
    %v7917 = vunpack.c.l.b16 %v7782
    %v7918 = vunpack.c.l.b16 %v7783
    %v7919 = vunpack.c.l.b16 %v7784
    %v7920 = vunpack.c.l.b16 %v7785
    %v7921 = vunpack.c.l.b16 %v7786
    %v7922 = vunpack.c.l.b16 %v7787
    %v7923 = vunpack.c.l.b16 %v7788
    %v7924 = vunpack.c.l.b16 %v7789
    %v7925 = vunpack.c.l.b16 %v7790
    %v7926 = vunpack.c.l.b16 %v7791
    %v7927 = vunpack.c.l.b16 %v7792
    %v7928 = vunpack.c.l.b16 %v7793
    %v7929 = vunpack.c.l.b16 %v7794
    %v7930 = vunpack.c.l.b16 %v7795
    %v7931 = vunpack.c.l.b16 %v7796
    %v7932 = vunpack.c.l.b16 %v7797
    %v7933 = vunpack.c.l.b16 %v7798
    %v7934 = vunpack.c.l.b16 %v7799
    %v7935 = vunpack.c.l.b16 %v7800
    %v7936 = vunpack.c.l.b16 %v7801
    %v7937 = vunpack.c.l.b16 %v7802
    %v7938 = vunpack.c.l.b16 %v7803
    %v7939 = vunpack.c.l.b16 %v7804
    %v7940 = vunpack.c.l.b16 %v7805
    %v7941 = vunpack.c.l.b16 %v7806
    %v7942 = vunpack.c.l.b16 %v7807
    %v7943 = vunpack.c.l.b16 %v7808
    %v7944 = vunpack.c.l.b16 %v7809
    %v7945 = vunpack.c.l.b16 %v7810
    %v7946 = vunpack.c.l.b16 %v7811
    %v7947 = vunpack.c.l.b16 %v7812
    %v7948 = vunpack.c.l.b16 %v7813
    %v7949 = vunpack.c.l.b16 %v7814
    %v7950 = vunpack.c.l.b16 %v7815
    %v7951 = vpack.c.b16 %v7888, %v7887
    %v7952 = vpack.c.b16 %v7890, %v7889
    %v7953 = vpack.c.b16 %v7892, %v7891
    %v7954 = vpack.c.b16 %v7894, %v7893
    %v7955 = vpack.c.b16 %v7896, %v7895
    %v7956 = vpack.c.b16 %v7898, %v7897
    %v7957 = vpack.c.b16 %v7900, %v7899
    %v7958 = vpack.c.b16 %v7902, %v7901
    %v7959 = vpack.c.b16 %v7904, %v7903
    %v7960 = vpack.c.b16 %v7906, %v7905
    %v7961 = vpack.c.b16 %v7908, %v7907
    %v7962 = vpack.c.b16 %v7910, %v7909
    %v7963 = vpack.c.b16 %v7912, %v7911
    %v7964 = vpack.c.b16 %v7914, %v7913
    %v7965 = vpack.c.b16 %v7916, %v7915
    %v7966 = vpack.c.b16 %v7918, %v7917
    %v7967 = vpack.c.b16 %v7920, %v7919
    %v7968 = vpack.c.b16 %v7922, %v7921
    %v7969 = vpack.c.b16 %v7924, %v7923
    %v7970 = vpack.c.b16 %v7926, %v7925
    %v7971 = vpack.c.b16 %v7928, %v7927
    %v7972 = vpack.c.b16 %v7930, %v7929
    %v7973 = vpack.c.b16 %v7932, %v7931
    %v7974 = vpack.c.b16 %v7934, %v7933
    %v7975 = vpack.c.b16 %v7936, %v7935
    %v7976 = vpack.c.b16 %v7938, %v7937
    %v7977 = vpack.c.b16 %v7940, %v7939
    %v7978 = vpack.c.b16 %v7942, %v7941
    %v7979 = vpack.c.b16 %v7944, %v7943
    %v7980 = vpack.c.b16 %v7946, %v7945
    %v7981 = vpack.c.b16 %v7948, %v7947
    %v7982 = vpack.c.b16 %v7950, %v7949
    %8015 = vmatprep.subr.bf16.mxu0 0
    %8016 = vmatpush1.bf16.msra.mxu0 %v7951
    %8017 = vmatprep.subr.bf16.mxu0 0
    %8018 = vmatpush1.bf16.msra.mxu0 %v7952
    %8019 = vmatprep.subr.bf16.mxu0 0
    %8020 = vmatpush1.bf16.msra.mxu0 %v7953
    %8021 = vmatprep.subr.bf16.mxu0 0
    %8022 = vmatpush1.bf16.msra.mxu0 %v7954
    %8023 = vmatprep.subr.bf16.mxu0 0
    %8024 = vmatpush1.bf16.msra.mxu0 %v7955
    %8025 = vmatprep.subr.bf16.mxu0 0
    %8026 = vmatpush1.bf16.msra.mxu0 %v7956
    %8027 = vmatprep.subr.bf16.mxu0 0
    %8028 = vmatpush1.bf16.msra.mxu0 %v7957
    %8029 = vmatprep.subr.bf16.mxu0 0
    %8030 = vmatpush1.bf16.msra.mxu0 %v7958
    %8031 = vmatprep.subr.bf16.mxu0 0
    %8032 = vmatpush1.bf16.msra.mxu0 %v7959
    %8033 = vmatprep.subr.bf16.mxu0 0
    %8034 = vmatpush1.bf16.msra.mxu0 %v7960
    %8035 = vmatprep.subr.bf16.mxu0 0
    %8036 = vmatpush1.bf16.msra.mxu0 %v7961
    %8037 = vmatprep.subr.bf16.mxu0 0
    %8038 = vmatpush1.bf16.msra.mxu0 %v7962
    %8039 = vmatprep.subr.bf16.mxu0 0
    %8040 = vmatpush1.bf16.msra.mxu0 %v7963
    %8041 = vmatprep.subr.bf16.mxu0 0
    %8042 = vmatpush1.bf16.msra.mxu0 %v7964
    %8043 = vmatprep.subr.bf16.mxu0 0
    %8044 = vmatpush1.bf16.msra.mxu0 %v7965
    %8045 = vmatprep.subr.bf16.mxu0 0
    %8046 = vmatpush1.bf16.msra.mxu0 %v7966
    %8047 = vmatprep.mubr.bf16.mxu0 %v7749
    %8048 = vmatmul.mubr.bf16.gmra.mrb[0].mxu0 %v7748
    %v8049 = vpop.f32.mrb[0].mxu0
    %v8050 = vadd.f32 %v7821, %v8049
    %v8051 = vpop.f32.mrb[0].mxu0
    %v8052 = vpop.f32.mrb[0].mxu0
    %v8053 = vpop.f32.mrb[0].mxu0
    %8054 = vdwg.mxu0
    %8055 = vmatprep.subr.bf16.mxu0 0
    %8056 = vmatpush1.bf16.msra.mxu0 %v7967
    %8057 = vmatprep.subr.bf16.mxu0 0
    %8058 = vmatpush1.bf16.msra.mxu0 %v7968
    %8059 = vmatprep.subr.bf16.mxu0 0
    %8060 = vmatpush1.bf16.msra.mxu0 %v7969
    %8061 = vmatprep.subr.bf16.mxu0 0
    %8062 = vmatpush1.bf16.msra.mxu0 %v7970
    %8063 = vmatprep.subr.bf16.mxu0 0
    %8064 = vmatpush1.bf16.msra.mxu0 %v7971
    %8065 = vmatprep.subr.bf16.mxu0 0
    %8066 = vmatpush1.bf16.msra.mxu0 %v7972
    %8067 = vmatprep.subr.bf16.mxu0 0
    %8068 = vmatpush1.bf16.msra.mxu0 %v7973
    %8069 = vmatprep.subr.bf16.mxu0 0
    %8070 = vmatpush1.bf16.msra.mxu0 %v7974
    %8071 = vmatprep.subr.bf16.mxu0 0
    %8072 = vmatpush1.bf16.msra.mxu0 %v7975
    %8073 = vmatprep.subr.bf16.mxu0 0
    %8074 = vmatpush1.bf16.msra.mxu0 %v7976
    %8075 = vmatprep.subr.bf16.mxu0 0
    %8076 = vmatpush1.bf16.msra.mxu0 %v7977
    %8077 = vmatprep.subr.bf16.mxu0 0
    %8078 = vmatpush1.bf16.msra.mxu0 %v7978
    %8079 = vmatprep.subr.bf16.mxu0 0
    %8080 = vmatpush1.bf16.msra.mxu0 %v7979
    %8081 = vmatprep.subr.bf16.mxu0 0
    %8082 = vmatpush1.bf16.msra.mxu0 %v7980
    %8083 = vmatprep.subr.bf16.mxu0 0
    %8084 = vmatpush1.bf16.msra.mxu0 %v7981
    %8085 = vmatprep.subr.bf16.mxu0 0
    %8086 = vmatpush1.bf16.msra.mxu0 %v7982
    %8087 = vmatprep.mubr.bf16.mxu0 %v7751
    %8088 = vmatmul.mubr.bf16.gmra.mrb[0].mxu0 %v7750
    %v8089 = vpop.f32.mrb[0].mxu0
    %v8090 = vadd.f32 %v8050, %v8089
    %v8091 = vpop.f32.mrb[0].mxu0
    %v8092 = vpop.f32.mrb[0].mxu0
    %v8093 = vpop.f32.mrb[0].mxu0
    %8094 = vdwg.mxu0
    %8095 = vst [vmem:[#allocation2] sm:$0x3] %v8090
    // Predicated region
    $region22: #{cifar10net_forward.13} parent=1 // pred_check
      _
    $region23: #{cifar10net_forward.13} parent=1 // pred_check_branch
      %8097 = sbr.rel (0) target = $region25
    $region24: #{cifar10net_forward.13} parent=1 // pred_region
      %s8099 = ssub.s32 32, 32
      %8100 = vsyncadd [#allocation3], %s8099
      %s8102 = sshll.u32 [#allocation2], 4
      %s8103 = int_to_ptr.vmem [resolvable:$true] %s8102
      %8105 = dma.vmem_to_hbm [thread:$0]  %s8103, 32, %s5, [#allocation3]
    $region25: #{cifar10net_forward.13} parent=1 // pred_fallthru
      _
    // Predicated region
    $region26: #{cifar10net_forward.13} parent=1 // pred_check
      _
    $region27: #{cifar10net_forward.13} parent=1 // pred_check_branch
      %8107 = sbr.rel (0) target = $region29
    $region28: #{cifar10net_forward.13} parent=1 // pred_region
      %8108 = dma.done [#allocation3], 32
    $region29: #{cifar10net_forward.13} parent=1 // pred_fallthru
      _
    %8109 = vsyncpa [#allocation3], 1

</llo_original>
